<compile_context>
chip_gen: v7x
topology: tpu7x:2x2x1
jax: 0.10.0
libtpu: 0.0.40
codegen_flags: <defaults>
</compile_context>

<pallas_src>
import math
import functools

import jax
import jax.numpy as jnp
from jax.experimental import pallas as pl
from jax.experimental.pallas import tpu as pltpu


_VMEM_LIMIT_BYTES = 56 * 1024 * 1024   # <= v7x 64 MiB/TC; >> 16/32 MiB defaults


def _round_up(x, m):
    return ((x + m - 1) // m) * m


def _pick_chunk(t):
    for c in (16, 8, 4, 2, 1):
        if t % c == 0:
            return c
    return 1


def _pick_batch_tile(bp):
    # v7x megacore: shard the (independent) batch axis across 2 TensorCores.
    if bp >= 16 and (bp // 2) % 8 == 0:
        return bp // 2
    return bp


# ---------------------------------------------------------------------------
# Tiled matmul + bias kernel (all non-recurrent projections)
# ---------------------------------------------------------------------------

def _matmul_bias_kernel(x_ref, w_ref, b_ref, o_ref):
    o_ref[...] = (jnp.dot(x_ref[...], w_ref[...],
                          preferred_element_type=jnp.float32) + b_ref[...])


def matmul_bias(x, w_bf16, b, *, tm=256, tn=512):
    """x:[M,K] (cast to bf16 host-side), w:[K,N] bf16, b:[1,N] f32 -> [M,N] f32."""
    M, K = x.shape
    N = w_bf16.shape[1]
    Mp = _round_up(max(M, 8), 8)
    Np = _round_up(N, 128)
    tm = min(tm, Mp)
    tn = min(tn, Np)
    Mp = _round_up(Mp, tm)
    Np = _round_up(Np, tn)
    xp = jnp.pad(x.astype(jnp.bfloat16), ((0, Mp - M), (0, 0)))
    wp = jnp.pad(w_bf16, ((0, 0), (0, Np - N)))
    bp = jnp.pad(b, ((0, 0), (0, Np - N)))
    out = pl.pallas_call(
        _matmul_bias_kernel,
        out_shape=jax.ShapeDtypeStruct((Mp, Np), jnp.float32),
        grid=(Mp // tm, Np // tn),
        in_specs=[pl.BlockSpec((tm, K), lambda i, j: (i, 0)),
                  pl.BlockSpec((K, tn), lambda i, j: (0, j)),
                  pl.BlockSpec((1, tn), lambda i, j: (0, j))],
        out_specs=pl.BlockSpec((tm, tn), lambda i, j: (i, j)),
        compiler_params=pltpu.CompilerParams(
            dimension_semantics=("parallel", "parallel"),
            vmem_limit_bytes=_VMEM_LIMIT_BYTES),
    )(xp, wp, bp)
    return out[:M, :N]


# ---------------------------------------------------------------------------
# Fused multi-layer LSTM kernel (one pallas_call per full sequence)
# ---------------------------------------------------------------------------

def _sigmoid(x):
    return 1.0 / (1.0 + jnp.exp(-x))


def _gates_to_hc(gates, c_prev, H):
    """gates:[B,4H] f32 in PyTorch order [i|f|g|o]; returns new (h, c) f32."""
    i_g = _sigmoid(gates[:, 0:H])
    f_g = _sigmoid(gates[:, H:2 * H])
    g_g = jnp.tanh(gates[:, 2 * H:3 * H])
    o_g = _sigmoid(gates[:, 3 * H:4 * H])
    c_new = f_g * c_prev + i_g * g_g
    h_new = o_g * jnp.tanh(c_new)
    return h_new, c_new


def _make_lstm_kernel(L, H, chunk, fuse_xh):
    def kernel(gx_ref, whh0_ref, wxh_ref, b_ref,
               out_ref, hN_ref, cN_ref, h_sc, c_sc):
        c_idx = pl.program_id(1)

        @pl.when(c_idx == 0)
        def _init():
            h_sc[...] = jnp.zeros_like(h_sc)
            c_sc[...] = jnp.zeros_like(c_sc)

        for s in range(chunk):                      # static unroll over the chunk
            # layer 0: input projection (x @ W_ih + b) precomputed in gx.
            gates = gx_ref[s] + jnp.dot(h_sc[0].astype(jnp.bfloat16), whh0_ref[...],
                                        preferred_element_type=jnp.float32)
            h_new, c_new = _gates_to_hc(gates, c_sc[0], H)
            h_sc[0] = h_new
            c_sc[0] = c_new
            x = h_new

            for l in range(1, L):
                w = wxh_ref[l - 1]                  # [2H, 4H] bf16, gate-fused
                if fuse_xh:
                    # single [B,2H] x [2H,4H] dot (lane-aligned when H % 128 == 0)
                    xh = jnp.concatenate([x, h_sc[l]], axis=-1).astype(jnp.bfloat16)
                    gates = (jnp.dot(xh, w, preferred_element_type=jnp.float32)
                             + b_ref[l - 1])
                else:
                    gates = (jnp.dot(x.astype(jnp.bfloat16), w[:H],
                                     preferred_element_type=jnp.float32)
                             + jnp.dot(h_sc[l].astype(jnp.bfloat16), w[H:],
                                       preferred_element_type=jnp.float32)
                             + b_ref[l - 1])
                h_new, c_new = _gates_to_hc(gates, c_sc[l], H)
                h_sc[l] = h_new
                c_sc[l] = c_new
                x = h_new

            out_ref[s] = x.astype(out_ref.dtype)

        @pl.when(c_idx == pl.num_programs(1) - 1)
        def _finalize():
            hN_ref[...] = h_sc[...]
            cN_ref[...] = c_sc[...]

    return kernel


def run_lstm(gx0, whh0, wxh_rest, b_rest, *, T, Bp, H, L, out_dtype=jnp.bfloat16):
    """gx0:[T,Bp,4H] f32 (precomputed layer-0 input gates incl. bias)."""
    chunk = _pick_chunk(T)
    tb = _pick_batch_tile(Bp)
    Lr = max(L - 1, 1)
    fuse_xh = (H % 128 == 0)
    single = dict(pipeline_mode=pl.Buffered(1))     # resident, never re-fetched

    return pl.pallas_call(
        _make_lstm_kernel(L, H, chunk, fuse_xh),
        out_shape=(jax.ShapeDtypeStruct((T, Bp, H), out_dtype),
                   jax.ShapeDtypeStruct((L, Bp, H), jnp.float32),
                   jax.ShapeDtypeStruct((L, Bp, H), jnp.float32)),
        grid=(Bp // tb, T // chunk),
        in_specs=[pl.BlockSpec((chunk, tb, 4 * H), lambda b, c: (c, b, 0)),
                  pl.BlockSpec((H, 4 * H), lambda b, c: (0, 0), **single),
                  pl.BlockSpec((Lr, 2 * H, 4 * H), lambda b, c: (0, 0, 0), **single),
                  pl.BlockSpec((Lr, 1, 4 * H), lambda b, c: (0, 0, 0), **single)],
        out_specs=(pl.BlockSpec((chunk, tb, H), lambda b, c: (c, b, 0)),
                   pl.BlockSpec((L, tb, H), lambda b, c: (0, b, 0)),
                   pl.BlockSpec((L, tb, H), lambda b, c: (0, b, 0))),
        scratch_shapes=[pltpu.VMEM((L, tb, H), jnp.float32),
                        pltpu.VMEM((L, tb, H), jnp.float32)],
        compiler_params=pltpu.CompilerParams(
            dimension_semantics=("parallel", "arbitrary"),
            vmem_limit_bytes=_VMEM_LIMIT_BYTES),
    )(gx0, whh0, wxh_rest, b_rest)


# ---------------------------------------------------------------------------
# Parameter construction (mirrors the torch module's parameter shapes)
# ---------------------------------------------------------------------------

def init_params(key, nvoc, ninput, nhid, nlayers):
    keys = iter(jax.random.split(key, 64))

    def U(shape, bound):
        return jax.random.uniform(next(keys), shape, jnp.float32, -bound, bound)

    H, L = nhid, nlayers
    params = {"embedding": U((nvoc, ninput), 0.1)}            # uniform(-0.1, 0.1)

    def lstm_block(in_size):
        k = 1.0 / math.sqrt(H)
        w_ih, w_hh, b = [], [], []
        for l in range(L):
            isz = in_size if l == 0 else H
            w_ih.append(U((isz, 4 * H), k))                   # gates [i|f|g|o] along N
            w_hh.append(U((H, 4 * H), k))
            b.append(U((1, 4 * H), k) + U((1, 4 * H), k))     # b_ih + b_hh pre-summed
        return w_ih, w_hh, b

    def pack_rest(w_ih, w_hh, b):
        if L > 1:
            wxh = jnp.stack([jnp.concatenate([w_ih[l], w_hh[l]], axis=0)
                             for l in range(1, L)], 0).astype(jnp.bfloat16)
            br = jnp.stack([b[l] for l in range(1, L)], 0)
            return wxh, br                                    # [L-1,2H,4H], [L-1,1,4H]
        return (jnp.zeros((1, 2 * H, 4 * H), jnp.bfloat16),
                jnp.zeros((1, 1, 4 * H), jnp.float32))

    # ---- encoder ----
    e_wih, e_whh, e_b = lstm_block(ninput)
    wxh_rest, b_rest = pack_rest(e_wih, e_whh, e_b)
    params["enc"] = dict(
        wih0=e_wih[0].astype(jnp.bfloat16),                   # [ninput,4H] (precompute)
        b0=e_b[0],
        whh0=e_whh[0].astype(jnp.bfloat16),                   # [H,4H]
        wxh_rest=wxh_rest, b_rest=b_rest)

    # ---- decoder (input = concat(state[H], emb[ninput])) ----
    d_wih, d_whh, d_b = lstm_block(H + ninput)
    wxh_rest, b_rest = pack_rest(d_wih, d_whh, d_b)
    params["dec"] = dict(
        wih0_state=d_wih[0][:H].astype(jnp.bfloat16),         # [H,4H] (state half)
        wih0_emb=d_wih[0][H:].astype(jnp.bfloat16),           # [ninput,4H] (emb half)
        b0=d_b[0],
        whh0=d_whh[0].astype(jnp.bfloat16),
        wxh_rest=wxh_rest, b_rest=b_rest)

    # ---- attention (kept for structural parity; mathematically inert, see fwd) ----
    ka = 1.0 / math.sqrt(H)
    params["att"] = dict(wh=U((H, H), ka), bh=U((1, H), ka),
                         wi=U((H, H), ka), bi=U((1, H), ka), w=U((1, 1, H), ka))

    # ---- output projection ----
    params["out_w"] = U((H, nvoc), 0.1).astype(jnp.bfloat16)
    params["out_b"] = jnp.zeros((1, nvoc), jnp.float32)       # decoder Linear bias = 0
    return params


# ---------------------------------------------------------------------------
# Forward pass (mirrors LSTMAtt.forward)
# ---------------------------------------------------------------------------

def lstm_att_forward(params, tokens, h_unused, nlayers, nhid):
    # `h_unused` mirrors the torch signature (module re-inits hidden state).
    T, B = tokens.shape
    H, L = nhid, nlayers
    ninput = params["embedding"].shape[1]
    nvoc = params["out_w"].shape[1]
    Bp = _round_up(max(B, 8), 8)                     # pad batch to full sublanes

    tok_p = jnp.pad(tokens, ((0, 0), (0, Bp - B)))
    emb = params["embedding"][tok_p].astype(jnp.bfloat16)     # [T,Bp,ninput] (dropout=id)
    emb_flat = emb.reshape(T * Bp, ninput)

    enc, dec = params["enc"], params["dec"]

    # ---- layer-0 input projections as single big MXU matmuls ----
    gx_enc0 = matmul_bias(emb_flat, enc["wih0"], enc["b0"]).reshape(T, Bp, 4 * H)
    gx_dec_emb = matmul_bias(emb_flat, dec["wih0_emb"], dec["b0"]).reshape(T, Bp, 4 * H)

    # ---- fused encoder over the whole sequence ----
    _enc_out, h_enc, c_enc = run_lstm(gx_enc0, enc["whh0"], enc["wxh_rest"],
                                      enc["b_rest"], T=T, Bp=Bp, H=H, L=L)

    # ---- attention "state": the reference computes energy = softmax over time and
    # state = sum_t energy_t * h_enc_last.  softmax sums to 1 and h_enc_last is
    # time-constant, so state == h_enc_last exactly; the softmax block is elided.
    state = h_enc[L - 1]                                      # [Bp, H] f32

    # state is time-constant -> its layer-0 projection is computed once and folded
    # into the decoder's precomputed gx (zero per-step state dots in the kernel).
    zero_b = jnp.zeros((1, 4 * H), jnp.float32)
    gs_state = matmul_bias(state, dec["wih0_state"], zero_b)  # [Bp, 4H]
    gx_dec0 = gx_dec_emb + gs_state[None, :, :]

    # ---- fused decoder over the whole sequence ----
    preds, h_dec, c_dec = run_lstm(gx_dec0, dec["whh0"], dec["wxh_rest"],
                                   dec["b_rest"], T=T, Bp=Bp, H=H, L=L)

    # ---- vocab projection (tiled, lane-dense / 128-padded output) ----
    decoded = matmul_bias(preds.reshape(T * Bp, H), params["out_w"], params["out_b"])
    decoded = decoded.reshape(T, Bp, nvoc)[:, :B, :]          # [T, B, nvoc]

    hidden = (jnp.stack([h_enc[:, :B], h_dec[:, :B]], 0),     # [2, nlayers, B, nhid]
              jnp.stack([c_enc[:, :B], c_dec[:, :B]], 0))
    return decoded, hidden


# ---------------------------------------------------------------------------

if __name__ == "__main__":
    nvoc, ninput, nhid, nlayers = 50, 16, 32, 2
    T, B = 8, 2

    key = jax.random.PRNGKey(0)
    kp, kt = jax.random.split(key)
    params = init_params(kp, nvoc, ninput, nhid, nlayers)
    tokens = jax.random.randint(kt, (T, B), 0, nvoc)          # [T, B] int token ids

    # `h` argument (ignored by the module's forward, which re-inits hidden state).
    h0 = (jnp.zeros((nlayers, B, nhid), jnp.float32),
          jnp.zeros((nlayers, B, nhid), jnp.float32))

    fwd = jax.jit(functools.partial(lstm_att_forward, nlayers=nlayers, nhid=nhid))
    decoded, hidden = fwd(params, tokens, h0)
    decoded = jax.block_until_ready(decoded)
    hidden = jax.block_until_ready(hidden)

    assert decoded.shape == (T, B, nvoc), decoded.shape
    assert hidden[0].shape == (2, nlayers, B, nhid), hidden[0].shape
    assert hidden[1].shape == (2, nlayers, B, nhid), hidden[1].shape
    assert bool(jnp.all(jnp.isfinite(decoded)))
    print("KERNEL_OK")
</pallas_src>

<mosaic_0001>
module attributes {stable_mosaic.version = 11 : i64} {
  func.func @_matmul_bias_kernel(%arg0: i32, %arg1: i32, %arg2: memref<64x16xbf16, #tpu.memory_space<vmem>>, %arg3: memref<16x128xbf16, #tpu.memory_space<vmem>>, %arg4: memref<1x128xf32, #tpu.memory_space<vmem>>, %arg5: memref<64x128xf32, #tpu.memory_space<vmem>>) attributes {dimension_semantics = [#tpu.dimension_semantics<parallel>, #tpu.dimension_semantics<parallel>], iteration_bounds = array<i64: 1, 1>, scalar_prefetch = 0 : i64, scratch_operands = 0 : i64, tpu.core_type = #tpu.core_type<tc>, window_params = [{transform_indices = @transform_0, window_bounds = array<i64: 64, 16>}, {transform_indices = @transform_1, window_bounds = array<i64: 16, 128>}, {transform_indices = @transform_2, window_bounds = array<i64: 1, 128>}, {transform_indices = @transform_3, window_bounds = array<i64: 64, 128>}]} {
    %c0 = arith.constant 0 : index
    %c0_0 = arith.constant 0 : index
    %0 = vector.load %arg2[%c0, %c0_0] : memref<64x16xbf16, #tpu.memory_space<vmem>>, vector<64x16xbf16>
    %c0_1 = arith.constant 0 : index
    %c0_2 = arith.constant 0 : index
    %1 = vector.load %arg3[%c0_1, %c0_2] : memref<16x128xbf16, #tpu.memory_space<vmem>>, vector<16x128xbf16>
    %cst = arith.constant dense<0.000000e+00> : vector<64x128xf32>
    %2 = tpu.matmul %0, %1, %cst {dimension_numbers = #tpu.dot_dimension_numbers<[1], [0], [0], [1], [0, 0, 1, 1], [], []>} : vector<64x16xbf16>, vector<16x128xbf16>, vector<64x128xf32> -> vector<64x128xf32>
    %c0_3 = arith.constant 0 : index
    %c0_4 = arith.constant 0 : index
    %3 = vector.load %arg4[%c0_3, %c0_4] : memref<1x128xf32, #tpu.memory_space<vmem>>, vector<1x128xf32>
    %4 = vector.broadcast %3 : vector<1x128xf32> to vector<64x128xf32>
    %5 = arith.addf %2, %4 : vector<64x128xf32>
    %c0_5 = arith.constant 0 : index
    %c0_6 = arith.constant 0 : index
    %6 = vector.load %arg5[%c0_5, %c0_6] : memref<64x128xf32, #tpu.memory_space<vmem>>, vector<64x128xf32>
    tpu.vector_store %arg5[%c0_5, %c0_6], %5 {strides = array<i32>} : memref<64x128xf32, #tpu.memory_space<vmem>>, vector<64x128xf32>,
    return
  }
  func.func @transform_0(%arg0: i32, %arg1: i32) -> (i32, i32) {
    %c0_i32 = arith.constant 0 : i32
    %c0_i32_0 = arith.constant 0 : i32
    return %arg0, %c0_i32 : i32, i32
  }
  func.func @transform_1(%arg0: i32, %arg1: i32) -> (i32, i32) {
    %c0_i32 = arith.constant 0 : i32
    %c0_i32_0 = arith.constant 0 : i32
    return %c0_i32, %arg1 : i32, i32
  }
  func.func @transform_2(%arg0: i32, %arg1: i32) -> (i32, i32) {
    %c0_i32 = arith.constant 0 : i32
    %c0_i32_0 = arith.constant 0 : i32
    return %c0_i32, %arg1 : i32, i32
  }
  func.func @transform_3(%arg0: i32, %arg1: i32) -> (i32, i32) {
    %c0_i32 = arith.constant 0 : i32
    return %arg0, %arg1 : i32, i32
  }
}

module attributes {stable_mosaic.version = 11 : i64} {
  func.func @_matmul_bias_kernel(%arg0: i32, %arg1: i32, %arg2: memref<8x32xbf16, #tpu.memory_space<vmem>>, %arg3: memref<32x128xbf16, #tpu.memory_space<vmem>>, %arg4: memref<1x128xf32, #tpu.memory_space<vmem>>, %arg5: memref<8x128xf32, #tpu.memory_space<vmem>>) attributes {dimension_semantics = [#tpu.dimension_semantics<parallel>, #tpu.dimension_semantics<parallel>], iteration_bounds = array<i64: 1, 1>, scalar_prefetch = 0 : i64, scratch_operands = 0 : i64, tpu.core_type = #tpu.core_type<tc>, window_params = [{transform_indices = @transform_0, window_bounds = array<i64: 8, 32>}, {transform_indices = @transform_1, window_bounds = array<i64: 32, 128>}, {transform_indices = @transform_2, window_bounds = array<i64: 1, 128>}, {transform_indices = @transform_3, window_bounds = array<i64: 8, 128>}]} {
    %c0 = arith.constant 0 : index
    %c0_0 = arith.constant 0 : index
    %0 = vector.load %arg2[%c0, %c0_0] : memref<8x32xbf16, #tpu.memory_space<vmem>>, vector<8x32xbf16>
    %c0_1 = arith.constant 0 : index
    %c0_2 = arith.constant 0 : index
    %1 = vector.load %arg3[%c0_1, %c0_2] : memref<32x128xbf16, #tpu.memory_space<vmem>>, vector<32x128xbf16>
    %cst = arith.constant dense<0.000000e+00> : vector<8x128xf32>
    %2 = tpu.matmul %0, %1, %cst {dimension_numbers = #tpu.dot_dimension_numbers<[1], [0], [0], [1], [0, 0, 1, 1], [], []>} : vector<8x32xbf16>, vector<32x128xbf16>, vector<8x128xf32> -> vector<8x128xf32>
    %c0_3 = arith.constant 0 : index
    %c0_4 = arith.constant 0 : index
    %3 = vector.load %arg4[%c0_3, %c0_4] : memref<1x128xf32, #tpu.memory_space<vmem>>, vector<1x128xf32>
    %4 = vector.broadcast %3 : vector<1x128xf32> to vector<8x128xf32>
    %5 = arith.addf %2, %4 : vector<8x128xf32>
    %c0_5 = arith.constant 0 : index
    %c0_6 = arith.constant 0 : index
    %6 = vector.load %arg5[%c0_5, %c0_6] : memref<8x128xf32, #tpu.memory_space<vmem>>, vector<8x128xf32>
    tpu.vector_store %arg5[%c0_5, %c0_6], %5 {strides = array<i32>} : memref<8x128xf32, #tpu.memory_space<vmem>>, vector<8x128xf32>,
    return
  }
  func.func @transform_0(%arg0: i32, %arg1: i32) -> (i32, i32) {
    %c0_i32 = arith.constant 0 : i32
    %c0_i32_0 = arith.constant 0 : i32
    return %arg0, %c0_i32 : i32, i32
  }
  func.func @transform_1(%arg0: i32, %arg1: i32) -> (i32, i32) {
    %c0_i32 = arith.constant 0 : i32
    %c0_i32_0 = arith.constant 0 : i32
    return %c0_i32, %arg1 : i32, i32
  }
  func.func @transform_2(%arg0: i32, %arg1: i32) -> (i32, i32) {
    %c0_i32 = arith.constant 0 : i32
    %c0_i32_0 = arith.constant 0 : i32
    return %c0_i32, %arg1 : i32, i32
  }
  func.func @transform_3(%arg0: i32, %arg1: i32) -> (i32, i32) {
    %c0_i32 = arith.constant 0 : i32
    return %arg0, %arg1 : i32, i32
  }
}

module attributes {stable_mosaic.version = 11 : i64} {
  func.func @kernel(%arg0: i32, %arg1: i32, %arg2: memref<8x8x128xf32, #tpu.memory_space<vmem>>, %arg3: memref<32x128xbf16, #tpu.memory_space<vmem>>, %arg4: memref<1x64x128xbf16, #tpu.memory_space<vmem>>, %arg5: memref<1x1x128xf32, #tpu.memory_space<vmem>>, %arg6: memref<8x8x32xbf16, #tpu.memory_space<vmem>>, %arg7: memref<2x8x32xf32, #tpu.memory_space<vmem>>, %arg8: memref<2x8x32xf32, #tpu.memory_space<vmem>>, %arg9: memref<2x8x32xf32, #tpu.memory_space<vmem>>, %arg10: memref<2x8x32xf32, #tpu.memory_space<vmem>>) attributes {dimension_semantics = [#tpu.dimension_semantics<parallel>, #tpu.dimension_semantics<arbitrary>], iteration_bounds = array<i64: 1, 1>, scalar_prefetch = 0 : i64, scratch_operands = 2 : i64, tpu.core_type = #tpu.core_type<tc>, window_params = [{transform_indices = @transform_0, window_bounds = array<i64: 8, 8, 128>}, {pipeline_mode = #tpu.pipeline_mode<synchronous>, transform_indices = @transform_1, window_bounds = array<i64: 32, 128>}, {pipeline_mode = #tpu.pipeline_mode<synchronous>, transform_indices = @transform_2, window_bounds = array<i64: 1, 64, 128>}, {pipeline_mode = #tpu.pipeline_mode<synchronous>, transform_indices = @transform_3, window_bounds = array<i64: 1, 1, 128>}, {transform_indices = @transform_4, window_bounds = array<i64: 8, 8, 32>}, {transform_indices = @transform_5, window_bounds = array<i64: 2, 8, 32>}, {transform_indices = @transform_6, window_bounds = array<i64: 2, 8, 32>}]} {
    %c0_i32 = arith.constant 0 : i32
    %0 = arith.cmpi eq, %arg1, %c0_i32 : i32
    %1 = arith.extui %0 : i1 to i32
    %c0_i32_0 = arith.constant 0 : i32
    %2 = arith.cmpi ne, %1, %c0_i32_0 : i32
    scf.if %2 {
      %cst_466 = arith.constant 0.000000e+00 : f32
      %846 = vector.broadcast %cst_466 : f32 to vector<2x8x32xf32>
      %c0_467 = arith.constant 0 : index
      %c0_468 = arith.constant 0 : index
      %c0_469 = arith.constant 0 : index
      %847 = vector.load %arg9[%c0_467, %c0_468, %c0_469] : memref<2x8x32xf32, #tpu.memory_space<vmem>>, vector<2x8x32xf32>
      tpu.vector_store %arg9[%c0_467, %c0_468, %c0_469], %846 {strides = array<i32>} : memref<2x8x32xf32, #tpu.memory_space<vmem>>, vector<2x8x32xf32>,
      %cst_470 = arith.constant 0.000000e+00 : f32
      %848 = vector.broadcast %cst_470 : f32 to vector<2x8x32xf32>
      %c0_471 = arith.constant 0 : index
      %c0_472 = arith.constant 0 : index
      %c0_473 = arith.constant 0 : index
      %849 = vector.load %arg10[%c0_471, %c0_472, %c0_473] : memref<2x8x32xf32, #tpu.memory_space<vmem>>, vector<2x8x32xf32>
      tpu.vector_store %arg10[%c0_471, %c0_472, %c0_473], %848 {strides = array<i32>} : memref<2x8x32xf32, #tpu.memory_space<vmem>>, vector<2x8x32xf32>,
    } else {
    }
    %c0 = arith.constant 0 : index
    %c0_1 = arith.constant 0 : index
    %c0_2 = arith.constant 0 : index
    %3 = vector.load %arg2[%c0, %c0_1, %c0_2] : memref<8x8x128xf32, #tpu.memory_space<vmem>>, vector<1x8x128xf32>
    %4 = vector.shape_cast %3 : vector<1x8x128xf32> to vector<8x128xf32>
    %c0_3 = arith.constant 0 : index
    %c0_4 = arith.constant 0 : index
    %c0_5 = arith.constant 0 : index
    %5 = vector.load %arg9[%c0_3, %c0_4, %c0_5] : memref<2x8x32xf32, #tpu.memory_space<vmem>>, vector<1x8x32xf32>
    %6 = vector.shape_cast %5 : vector<1x8x32xf32> to vector<8x32xf32>
    %7 = arith.truncf %6 : vector<8x32xf32> to vector<8x32xbf16>
    %c0_6 = arith.constant 0 : index
    %c0_7 = arith.constant 0 : index
    %8 = vector.load %arg3[%c0_6, %c0_7] : memref<32x128xbf16, #tpu.memory_space<vmem>>, vector<32x128xbf16>
    %cst = arith.constant dense<0.000000e+00> : vector<8x128xf32>
    %9 = tpu.matmul %7, %8, %cst {dimension_numbers = #tpu.dot_dimension_numbers<[1], [0], [0], [1], [0, 0, 1, 1], [], []>} : vector<8x32xbf16>, vector<32x128xbf16>, vector<8x128xf32> -> vector<8x128xf32>
    %10 = arith.addf %4, %9 : vector<8x128xf32>
    %c0_8 = arith.constant 0 : index
    %c0_9 = arith.constant 0 : index
    %c0_10 = arith.constant 0 : index
    %11 = vector.load %arg10[%c0_8, %c0_9, %c0_10] : memref<2x8x32xf32, #tpu.memory_space<vmem>>, vector<1x8x32xf32>
    %12 = vector.shape_cast %11 : vector<1x8x32xf32> to vector<8x32xf32>
    %13 = vector.extract_strided_slice %10 {offsets = [0, 0], sizes = [8, 32], strides = [1, 1]} : vector<8x128xf32> to vector<8x32xf32>
    %cst_11 = arith.constant 0.000000e+00 : f32
    %14 = vector.broadcast %cst_11 : f32 to vector<8x32xf32>
    %15 = arith.subf %14, %13 : vector<8x32xf32>
    %16 = math.exp %15 : vector<8x32xf32>
    %cst_12 = arith.constant 1.000000e+00 : f32
    %17 = vector.broadcast %cst_12 : f32 to vector<8x32xf32>
    %18 = arith.addf %17, %16 : vector<8x32xf32>
    %cst_13 = arith.constant 1.000000e+00 : f32
    %19 = vector.broadcast %cst_13 : f32 to vector<8x32xf32>
    %20 = arith.divf %19, %18 : vector<8x32xf32>
    %21 = vector.extract_strided_slice %10 {offsets = [0, 32], sizes = [8, 32], strides = [1, 1]} : vector<8x128xf32> to vector<8x32xf32>
    %cst_14 = arith.constant 0.000000e+00 : f32
    %22 = vector.broadcast %cst_14 : f32 to vector<8x32xf32>
    %23 = arith.subf %22, %21 : vector<8x32xf32>
    %24 = math.exp %23 : vector<8x32xf32>
    %cst_15 = arith.constant 1.000000e+00 : f32
    %25 = vector.broadcast %cst_15 : f32 to vector<8x32xf32>
    %26 = arith.addf %25, %24 : vector<8x32xf32>
    %cst_16 = arith.constant 1.000000e+00 : f32
    %27 = vector.broadcast %cst_16 : f32 to vector<8x32xf32>
    %28 = arith.divf %27, %26 : vector<8x32xf32>
    %29 = vector.extract_strided_slice %10 {offsets = [0, 64], sizes = [8, 32], strides = [1, 1]} : vector<8x128xf32> to vector<8x32xf32>
    %30 = math.tanh %29 : vector<8x32xf32>
    %31 = vector.extract_strided_slice %10 {offsets = [0, 96], sizes = [8, 32], strides = [1, 1]} : vector<8x128xf32> to vector<8x32xf32>
    %cst_17 = arith.constant 0.000000e+00 : f32
    %32 = vector.broadcast %cst_17 : f32 to vector<8x32xf32>
    %33 = arith.subf %32, %31 : vector<8x32xf32>
    %34 = math.exp %33 : vector<8x32xf32>
    %cst_18 = arith.constant 1.000000e+00 : f32
    %35 = vector.broadcast %cst_18 : f32 to vector<8x32xf32>
    %36 = arith.addf %35, %34 : vector<8x32xf32>
    %cst_19 = arith.constant 1.000000e+00 : f32
    %37 = vector.broadcast %cst_19 : f32 to vector<8x32xf32>
    %38 = arith.divf %37, %36 : vector<8x32xf32>
    %39 = arith.mulf %28, %12 : vector<8x32xf32>
    %40 = arith.mulf %20, %30 : vector<8x32xf32>
    %41 = arith.addf %39, %40 : vector<8x32xf32>
    %42 = math.tanh %41 : vector<8x32xf32>
    %43 = arith.mulf %38, %42 : vector<8x32xf32>
    %c0_20 = arith.constant 0 : index
    %c0_21 = arith.constant 0 : index
    %c0_22 = arith.constant 0 : index
    %44 = vector.load %arg9[%c0_20, %c0_21, %c0_22] : memref<2x8x32xf32, #tpu.memory_space<vmem>>, vector<1x8x32xf32>
    %45 = vector.shape_cast %44 : vector<1x8x32xf32> to vector<8x32xf32>
    %46 = vector.shape_cast %43 : vector<8x32xf32> to vector<1x8x32xf32>
    tpu.vector_store %arg9[%c0_20, %c0_21, %c0_22], %46 {strides = array<i32>} : memref<2x8x32xf32, #tpu.memory_space<vmem>>, vector<1x8x32xf32>,
    %c0_23 = arith.constant 0 : index
    %c0_24 = arith.constant 0 : index
    %c0_25 = arith.constant 0 : index
    %47 = vector.load %arg10[%c0_23, %c0_24, %c0_25] : memref<2x8x32xf32, #tpu.memory_space<vmem>>, vector<1x8x32xf32>
    %48 = vector.shape_cast %47 : vector<1x8x32xf32> to vector<8x32xf32>
    %49 = vector.shape_cast %41 : vector<8x32xf32> to vector<1x8x32xf32>
    tpu.vector_store %arg10[%c0_23, %c0_24, %c0_25], %49 {strides = array<i32>} : memref<2x8x32xf32, #tpu.memory_space<vmem>>, vector<1x8x32xf32>,
    %c0_26 = arith.constant 0 : index
    %c0_27 = arith.constant 0 : index
    %c0_28 = arith.constant 0 : index
    %50 = vector.load %arg4[%c0_26, %c0_27, %c0_28] : memref<1x64x128xbf16, #tpu.memory_space<vmem>>, vector<1x64x128xbf16>
    %51 = vector.shape_cast %50 : vector<1x64x128xbf16> to vector<64x128xbf16>
    %52 = arith.truncf %43 : vector<8x32xf32> to vector<8x32xbf16>
    %53 = vector.extract_strided_slice %51 {offsets = [0, 0], sizes = [32, 128], strides = [1, 1]} : vector<64x128xbf16> to vector<32x128xbf16>
    %cst_29 = arith.constant dense<0.000000e+00> : vector<8x128xf32>
    %54 = tpu.matmul %52, %53, %cst_29 {dimension_numbers = #tpu.dot_dimension_numbers<[1], [0], [0], [1], [0, 0, 1, 1], [], []>} : vector<8x32xbf16>, vector<32x128xbf16>, vector<8x128xf32> -> vector<8x128xf32>
    %c1 = arith.constant 1 : index
    %c0_30 = arith.constant 0 : index
    %c0_31 = arith.constant 0 : index
    %55 = vector.load %arg9[%c1, %c0_30, %c0_31] : memref<2x8x32xf32, #tpu.memory_space<vmem>>, vector<1x8x32xf32>
    %56 = vector.shape_cast %55 : vector<1x8x32xf32> to vector<8x32xf32>
    %57 = arith.truncf %56 : vector<8x32xf32> to vector<8x32xbf16>
    %58 = vector.extract_strided_slice %51 {offsets = [32, 0], sizes = [32, 128], strides = [1, 1]} : vector<64x128xbf16> to vector<32x128xbf16>
    %cst_32 = arith.constant dense<0.000000e+00> : vector<8x128xf32>
    %59 = tpu.matmul %57, %58, %cst_32 {dimension_numbers = #tpu.dot_dimension_numbers<[1], [0], [0], [1], [0, 0, 1, 1], [], []>} : vector<8x32xbf16>, vector<32x128xbf16>, vector<8x128xf32> -> vector<8x128xf32>
    %60 = arith.addf %54, %59 : vector<8x128xf32>
    %c0_33 = arith.constant 0 : index
    %c0_34 = arith.constant 0 : index
    %c0_35 = arith.constant 0 : index
    %61 = vector.load %arg5[%c0_33, %c0_34, %c0_35] : memref<1x1x128xf32, #tpu.memory_space<vmem>>, vector<1x1x128xf32>
    %62 = vector.shape_cast %61 : vector<1x1x128xf32> to vector<1x128xf32>
    %63 = vector.broadcast %62 : vector<1x128xf32> to vector<8x128xf32>
    %64 = arith.addf %60, %63 : vector<8x128xf32>
    %c1_36 = arith.constant 1 : index
    %c0_37 = arith.constant 0 : index
    %c0_38 = arith.constant 0 : index
    %65 = vector.load %arg10[%c1_36, %c0_37, %c0_38] : memref<2x8x32xf32, #tpu.memory_space<vmem>>, vector<1x8x32xf32>
    %66 = vector.shape_cast %65 : vector<1x8x32xf32> to vector<8x32xf32>
    %67 = vector.extract_strided_slice %64 {offsets = [0, 0], sizes = [8, 32], strides = [1, 1]} : vector<8x128xf32> to vector<8x32xf32>
    %cst_39 = arith.constant 0.000000e+00 : f32
    %68 = vector.broadcast %cst_39 : f32 to vector<8x32xf32>
    %69 = arith.subf %68, %67 : vector<8x32xf32>
    %70 = math.exp %69 : vector<8x32xf32>
    %cst_40 = arith.constant 1.000000e+00 : f32
    %71 = vector.broadcast %cst_40 : f32 to vector<8x32xf32>
    %72 = arith.addf %71, %70 : vector<8x32xf32>
    %cst_41 = arith.constant 1.000000e+00 : f32
    %73 = vector.broadcast %cst_41 : f32 to vector<8x32xf32>
    %74 = arith.divf %73, %72 : vector<8x32xf32>
    %75 = vector.extract_strided_slice %64 {offsets = [0, 32], sizes = [8, 32], strides = [1, 1]} : vector<8x128xf32> to vector<8x32xf32>
    %cst_42 = arith.constant 0.000000e+00 : f32
    %76 = vector.broadcast %cst_42 : f32 to vector<8x32xf32>
    %77 = arith.subf %76, %75 : vector<8x32xf32>
    %78 = math.exp %77 : vector<8x32xf32>
    %cst_43 = arith.constant 1.000000e+00 : f32
    %79 = vector.broadcast %cst_43 : f32 to vector<8x32xf32>
    %80 = arith.addf %79, %78 : vector<8x32xf32>
    %cst_44 = arith.constant 1.000000e+00 : f32
    %81 = vector.broadcast %cst_44 : f32 to vector<8x32xf32>
    %82 = arith.divf %81, %80 : vector<8x32xf32>
    %83 = vector.extract_strided_slice %64 {offsets = [0, 64], sizes = [8, 32], strides = [1, 1]} : vector<8x128xf32> to vector<8x32xf32>
    %84 = math.tanh %83 : vector<8x32xf32>
    %85 = vector.extract_strided_slice %64 {offsets = [0, 96], sizes = [8, 32], strides = [1, 1]} : vector<8x128xf32> to vector<8x32xf32>
    %cst_45 = arith.constant 0.000000e+00 : f32
    %86 = vector.broadcast %cst_45 : f32 to vector<8x32xf32>
    %87 = arith.subf %86, %85 : vector<8x32xf32>
    %88 = math.exp %87 : vector<8x32xf32>
    %cst_46 = arith.constant 1.000000e+00 : f32
    %89 = vector.broadcast %cst_46 : f32 to vector<8x32xf32>
    %90 = arith.addf %89, %88 : vector<8x32xf32>
    %cst_47 = arith.constant 1.000000e+00 : f32
    %91 = vector.broadcast %cst_47 : f32 to vector<8x32xf32>
    %92 = arith.divf %91, %90 : vector<8x32xf32>
    %93 = arith.mulf %82, %66 : vector<8x32xf32>
    %94 = arith.mulf %74, %84 : vector<8x32xf32>
    %95 = arith.addf %93, %94 : vector<8x32xf32>
    %96 = math.tanh %95 : vector<8x32xf32>
    %97 = arith.mulf %92, %96 : vector<8x32xf32>
    %c1_48 = arith.constant 1 : index
    %c0_49 = arith.constant 0 : index
    %c0_50 = arith.constant 0 : index
    %98 = vector.load %arg9[%c1_48, %c0_49, %c0_50] : memref<2x8x32xf32, #tpu.memory_space<vmem>>, vector<1x8x32xf32>
    %99 = vector.shape_cast %98 : vector<1x8x32xf32> to vector<8x32xf32>
    %100 = vector.shape_cast %97 : vector<8x32xf32> to vector<1x8x32xf32>
    tpu.vector_store %arg9[%c1_48, %c0_49, %c0_50], %100 {strides = array<i32>} : memref<2x8x32xf32, #tpu.memory_space<vmem>>, vector<1x8x32xf32>,
    %c1_51 = arith.constant 1 : index
    %c0_52 = arith.constant 0 : index
    %c0_53 = arith.constant 0 : index
    %101 = vector.load %arg10[%c1_51, %c0_52, %c0_53] : memref<2x8x32xf32, #tpu.memory_space<vmem>>, vector<1x8x32xf32>
    %102 = vector.shape_cast %101 : vector<1x8x32xf32> to vector<8x32xf32>
    %103 = vector.shape_cast %95 : vector<8x32xf32> to vector<1x8x32xf32>
    tpu.vector_store %arg10[%c1_51, %c0_52, %c0_53], %103 {strides = array<i32>} : memref<2x8x32xf32, #tpu.memory_space<vmem>>, vector<1x8x32xf32>,
    %104 = arith.truncf %97 : vector<8x32xf32> to vector<8x32xbf16>
    %c0_54 = arith.constant 0 : index
    %c0_55 = arith.constant 0 : index
    %c0_56 = arith.constant 0 : index
    %105 = vector.load %arg6[%c0_54, %c0_55, %c0_56] : memref<8x8x32xbf16, #tpu.memory_space<vmem>>, vector<1x8x32xbf16>
    %106 = vector.shape_cast %105 : vector<1x8x32xbf16> to vector<8x32xbf16>
    %107 = vector.shape_cast %104 : vector<8x32xbf16> to vector<1x8x32xbf16>
    tpu.vector_store %arg6[%c0_54, %c0_55, %c0_56], %107 {strides = array<i32>} : memref<8x8x32xbf16, #tpu.memory_space<vmem>>, vector<1x8x32xbf16>,
    %c1_57 = arith.constant 1 : index
    %c0_58 = arith.constant 0 : index
    %c0_59 = arith.constant 0 : index
    %108 = vector.load %arg2[%c1_57, %c0_58, %c0_59] : memref<8x8x128xf32, #tpu.memory_space<vmem>>, vector<1x8x128xf32>
    %109 = vector.shape_cast %108 : vector<1x8x128xf32> to vector<8x128xf32>
    %c0_60 = arith.constant 0 : index
    %c0_61 = arith.constant 0 : index
    %c0_62 = arith.constant 0 : index
    %110 = vector.load %arg9[%c0_60, %c0_61, %c0_62] : memref<2x8x32xf32, #tpu.memory_space<vmem>>, vector<1x8x32xf32>
    %111 = vector.shape_cast %110 : vector<1x8x32xf32> to vector<8x32xf32>
    %112 = arith.truncf %111 : vector<8x32xf32> to vector<8x32xbf16>
    %c0_63 = arith.constant 0 : index
    %c0_64 = arith.constant 0 : index
    %113 = vector.load %arg3[%c0_63, %c0_64] : memref<32x128xbf16, #tpu.memory_space<vmem>>, vector<32x128xbf16>
    %cst_65 = arith.constant dense<0.000000e+00> : vector<8x128xf32>
    %114 = tpu.matmul %112, %113, %cst_65 {dimension_numbers = #tpu.dot_dimension_numbers<[1], [0], [0], [1], [0, 0, 1, 1], [], []>} : vector<8x32xbf16>, vector<32x128xbf16>, vector<8x128xf32> -> vector<8x128xf32>
    %115 = arith.addf %109, %114 : vector<8x128xf32>
    %c0_66 = arith.constant 0 : index
    %c0_67 = arith.constant 0 : index
    %c0_68 = arith.constant 0 : index
    %116 = vector.load %arg10[%c0_66, %c0_67, %c0_68] : memref<2x8x32xf32, #tpu.memory_space<vmem>>, vector<1x8x32xf32>
    %117 = vector.shape_cast %116 : vector<1x8x32xf32> to vector<8x32xf32>
    %118 = vector.extract_strided_slice %115 {offsets = [0, 0], sizes = [8, 32], strides = [1, 1]} : vector<8x128xf32> to vector<8x32xf32>
    %cst_69 = arith.constant 0.000000e+00 : f32
    %119 = vector.broadcast %cst_69 : f32 to vector<8x32xf32>
    %120 = arith.subf %119, %118 : vector<8x32xf32>
    %121 = math.exp %120 : vector<8x32xf32>
    %cst_70 = arith.constant 1.000000e+00 : f32
    %122 = vector.broadcast %cst_70 : f32 to vector<8x32xf32>
    %123 = arith.addf %122, %121 : vector<8x32xf32>
    %cst_71 = arith.constant 1.000000e+00 : f32
    %124 = vector.broadcast %cst_71 : f32 to vector<8x32xf32>
    %125 = arith.divf %124, %123 : vector<8x32xf32>
    %126 = vector.extract_strided_slice %115 {offsets = [0, 32], sizes = [8, 32], strides = [1, 1]} : vector<8x128xf32> to vector<8x32xf32>
    %cst_72 = arith.constant 0.000000e+00 : f32
    %127 = vector.broadcast %cst_72 : f32 to vector<8x32xf32>
    %128 = arith.subf %127, %126 : vector<8x32xf32>
    %129 = math.exp %128 : vector<8x32xf32>
    %cst_73 = arith.constant 1.000000e+00 : f32
    %130 = vector.broadcast %cst_73 : f32 to vector<8x32xf32>
    %131 = arith.addf %130, %129 : vector<8x32xf32>
    %cst_74 = arith.constant 1.000000e+00 : f32
    %132 = vector.broadcast %cst_74 : f32 to vector<8x32xf32>
    %133 = arith.divf %132, %131 : vector<8x32xf32>
    %134 = vector.extract_strided_slice %115 {offsets = [0, 64], sizes = [8, 32], strides = [1, 1]} : vector<8x128xf32> to vector<8x32xf32>
    %135 = math.tanh %134 : vector<8x32xf32>
    %136 = vector.extract_strided_slice %115 {offsets = [0, 96], sizes = [8, 32], strides = [1, 1]} : vector<8x128xf32> to vector<8x32xf32>
    %cst_75 = arith.constant 0.000000e+00 : f32
    %137 = vector.broadcast %cst_75 : f32 to vector<8x32xf32>
    %138 = arith.subf %137, %136 : vector<8x32xf32>
    %139 = math.exp %138 : vector<8x32xf32>
    %cst_76 = arith.constant 1.000000e+00 : f32
    %140 = vector.broadcast %cst_76 : f32 to vector<8x32xf32>
    %141 = arith.addf %140, %139 : vector<8x32xf32>
    %cst_77 = arith.constant 1.000000e+00 : f32
    %142 = vector.broadcast %cst_77 : f32 to vector<8x32xf32>
    %143 = arith.divf %142, %141 : vector<8x32xf32>
    %144 = arith.mulf %133, %117 : vector<8x32xf32>
    %145 = arith.mulf %125, %135 : vector<8x32xf32>
    %146 = arith.addf %144, %145 : vector<8x32xf32>
    %147 = math.tanh %146 : vector<8x32xf32>
    %148 = arith.mulf %143, %147 : vector<8x32xf32>
    %c0_78 = arith.constant 0 : index
    %c0_79 = arith.constant 0 : index
    %c0_80 = arith.constant 0 : index
    %149 = vector.load %arg9[%c0_78, %c0_79, %c0_80] : memref<2x8x32xf32, #tpu.memory_space<vmem>>, vector<1x8x32xf32>
    %150 = vector.shape_cast %149 : vector<1x8x32xf32> to vector<8x32xf32>
    %151 = vector.shape_cast %148 : vector<8x32xf32> to vector<1x8x32xf32>
    tpu.vector_store %arg9[%c0_78, %c0_79, %c0_80], %151 {strides = array<i32>} : memref<2x8x32xf32, #tpu.memory_space<vmem>>, vector<1x8x32xf32>,
    %c0_81 = arith.constant 0 : index
    %c0_82 = arith.constant 0 : index
    %c0_83 = arith.constant 0 : index
    %152 = vector.load %arg10[%c0_81, %c0_82, %c0_83] : memref<2x8x32xf32, #tpu.memory_space<vmem>>, vector<1x8x32xf32>
    %153 = vector.shape_cast %152 : vector<1x8x32xf32> to vector<8x32xf32>
    %154 = vector.shape_cast %146 : vector<8x32xf32> to vector<1x8x32xf32>
    tpu.vector_store %arg10[%c0_81, %c0_82, %c0_83], %154 {strides = array<i32>} : memref<2x8x32xf32, #tpu.memory_space<vmem>>, vector<1x8x32xf32>,
    %c0_84 = arith.constant 0 : index
    %c0_85 = arith.constant 0 : index
    %c0_86 = arith.constant 0 : index
    %155 = vector.load %arg4[%c0_84, %c0_85, %c0_86] : memref<1x64x128xbf16, #tpu.memory_space<vmem>>, vector<1x64x128xbf16>
    %156 = vector.shape_cast %155 : vector<1x64x128xbf16> to vector<64x128xbf16>
    %157 = arith.truncf %148 : vector<8x32xf32> to vector<8x32xbf16>
    %158 = vector.extract_strided_slice %156 {offsets = [0, 0], sizes = [32, 128], strides = [1, 1]} : vector<64x128xbf16> to vector<32x128xbf16>
    %cst_87 = arith.constant dense<0.000000e+00> : vector<8x128xf32>
    %159 = tpu.matmul %157, %158, %cst_87 {dimension_numbers = #tpu.dot_dimension_numbers<[1], [0], [0], [1], [0, 0, 1, 1], [], []>} : vector<8x32xbf16>, vector<32x128xbf16>, vector<8x128xf32> -> vector<8x128xf32>
    %c1_88 = arith.constant 1 : index
    %c0_89 = arith.constant 0 : index
    %c0_90 = arith.constant 0 : index
    %160 = vector.load %arg9[%c1_88, %c0_89, %c0_90] : memref<2x8x32xf32, #tpu.memory_space<vmem>>, vector<1x8x32xf32>
    %161 = vector.shape_cast %160 : vector<1x8x32xf32> to vector<8x32xf32>
    %162 = arith.truncf %161 : vector<8x32xf32> to vector<8x32xbf16>
    %163 = vector.extract_strided_slice %156 {offsets = [32, 0], sizes = [32, 128], strides = [1, 1]} : vector<64x128xbf16> to vector<32x128xbf16>
    %cst_91 = arith.constant dense<0.000000e+00> : vector<8x128xf32>
    %164 = tpu.matmul %162, %163, %cst_91 {dimension_numbers = #tpu.dot_dimension_numbers<[1], [0], [0], [1], [0, 0, 1, 1], [], []>} : vector<8x32xbf16>, vector<32x128xbf16>, vector<8x128xf32> -> vector<8x128xf32>
    %165 = arith.addf %159, %164 : vector<8x128xf32>
    %c0_92 = arith.constant 0 : index
    %c0_93 = arith.constant 0 : index
    %c0_94 = arith.constant 0 : index
    %166 = vector.load %arg5[%c0_92, %c0_93, %c0_94] : memref<1x1x128xf32, #tpu.memory_space<vmem>>, vector<1x1x128xf32>
    %167 = vector.shape_cast %166 : vector<1x1x128xf32> to vector<1x128xf32>
    %168 = vector.broadcast %167 : vector<1x128xf32> to vector<8x128xf32>
    %169 = arith.addf %165, %168 : vector<8x128xf32>
    %c1_95 = arith.constant 1 : index
    %c0_96 = arith.constant 0 : index
    %c0_97 = arith.constant 0 : index
    %170 = vector.load %arg10[%c1_95, %c0_96, %c0_97] : memref<2x8x32xf32, #tpu.memory_space<vmem>>, vector<1x8x32xf32>
    %171 = vector.shape_cast %170 : vector<1x8x32xf32> to vector<8x32xf32>
    %172 = vector.extract_strided_slice %169 {offsets = [0, 0], sizes = [8, 32], strides = [1, 1]} : vector<8x128xf32> to vector<8x32xf32>
    %cst_98 = arith.constant 0.000000e+00 : f32
    %173 = vector.broadcast %cst_98 : f32 to vector<8x32xf32>
    %174 = arith.subf %173, %172 : vector<8x32xf32>
    %175 = math.exp %174 : vector<8x32xf32>
    %cst_99 = arith.constant 1.000000e+00 : f32
    %176 = vector.broadcast %cst_99 : f32 to vector<8x32xf32>
    %177 = arith.addf %176, %175 : vector<8x32xf32>
    %cst_100 = arith.constant 1.000000e+00 : f32
    %178 = vector.broadcast %cst_100 : f32 to vector<8x32xf32>
    %179 = arith.divf %178, %177 : vector<8x32xf32>
    %180 = vector.extract_strided_slice %169 {offsets = [0, 32], sizes = [8, 32], strides = [1, 1]} : vector<8x128xf32> to vector<8x32xf32>
    %cst_101 = arith.constant 0.000000e+00 : f32
    %181 = vector.broadcast %cst_101 : f32 to vector<8x32xf32>
    %182 = arith.subf %181, %180 : vector<8x32xf32>
    %183 = math.exp %182 : vector<8x32xf32>
    %cst_102 = arith.constant 1.000000e+00 : f32
    %184 = vector.broadcast %cst_102 : f32 to vector<8x32xf32>
    %185 = arith.addf %184, %183 : vector<8x32xf32>
    %cst_103 = arith.constant 1.000000e+00 : f32
    %186 = vector.broadcast %cst_103 : f32 to vector<8x32xf32>
    %187 = arith.divf %186, %185 : vector<8x32xf32>
    %188 = vector.extract_strided_slice %169 {offsets = [0, 64], sizes = [8, 32], strides = [1, 1]} : vector<8x128xf32> to vector<8x32xf32>
    %189 = math.tanh %188 : vector<8x32xf32>
    %190 = vector.extract_strided_slice %169 {offsets = [0, 96], sizes = [8, 32], strides = [1, 1]} : vector<8x128xf32> to vector<8x32xf32>
    %cst_104 = arith.constant 0.000000e+00 : f32
    %191 = vector.broadcast %cst_104 : f32 to vector<8x32xf32>
    %192 = arith.subf %191, %190 : vector<8x32xf32>
    %193 = math.exp %192 : vector<8x32xf32>
    %cst_105 = arith.constant 1.000000e+00 : f32
    %194 = vector.broadcast %cst_105 : f32 to vector<8x32xf32>
    %195 = arith.addf %194, %193 : vector<8x32xf32>
    %cst_106 = arith.constant 1.000000e+00 : f32
    %196 = vector.broadcast %cst_106 : f32 to vector<8x32xf32>
    %197 = arith.divf %196, %195 : vector<8x32xf32>
    %198 = arith.mulf %187, %171 : vector<8x32xf32>
    %199 = arith.mulf %179, %189 : vector<8x32xf32>
    %200 = arith.addf %198, %199 : vector<8x32xf32>
    %201 = math.tanh %200 : vector<8x32xf32>
    %202 = arith.mulf %197, %201 : vector<8x32xf32>
    %c1_107 = arith.constant 1 : index
    %c0_108 = arith.constant 0 : index
    %c0_109 = arith.constant 0 : index
    %203 = vector.load %arg9[%c1_107, %c0_108, %c0_109] : memref<2x8x32xf32, #tpu.memory_space<vmem>>, vector<1x8x32xf32>
    %204 = vector.shape_cast %203 : vector<1x8x32xf32> to vector<8x32xf32>
    %205 = vector.shape_cast %202 : vector<8x32xf32> to vector<1x8x32xf32>
    tpu.vector_store %arg9[%c1_107, %c0_108, %c0_109], %205 {strides = array<i32>} : memref<2x8x32xf32, #tpu.memory_space<vmem>>, vector<1x8x32xf32>,
    %c1_110 = arith.constant 1 : index
    %c0_111 = arith.constant 0 : index
    %c0_112 = arith.constant 0 : index
    %206 = vector.load %arg10[%c1_110, %c0_111, %c0_112] : memref<2x8x32xf32, #tpu.memory_space<vmem>>, vector<1x8x32xf32>
    %207 = vector.shape_cast %206 : vector<1x8x32xf32> to vector<8x32xf32>
    %208 = vector.shape_cast %200 : vector<8x32xf32> to vector<1x8x32xf32>
    tpu.vector_store %arg10[%c1_110, %c0_111, %c0_112], %208 {strides = array<i32>} : memref<2x8x32xf32, #tpu.memory_space<vmem>>, vector<1x8x32xf32>,
    %209 = arith.truncf %202 : vector<8x32xf32> to vector<8x32xbf16>
    %c1_113 = arith.constant 1 : index
    %c0_114 = arith.constant 0 : index
    %c0_115 = arith.constant 0 : index
    %210 = vector.load %arg6[%c1_113, %c0_114, %c0_115] : memref<8x8x32xbf16, #tpu.memory_space<vmem>>, vector<1x8x32xbf16>
    %211 = vector.shape_cast %210 : vector<1x8x32xbf16> to vector<8x32xbf16>
    %212 = vector.shape_cast %209 : vector<8x32xbf16> to vector<1x8x32xbf16>
    tpu.vector_store %arg6[%c1_113, %c0_114, %c0_115], %212 {strides = array<i32>} : memref<8x8x32xbf16, #tpu.memory_space<vmem>>, vector<1x8x32xbf16>,
    %c2 = arith.constant 2 : index
    %c0_116 = arith.constant 0 : index
    %c0_117 = arith.constant 0 : index
    %213 = vector.load %arg2[%c2, %c0_116, %c0_117] : memref<8x8x128xf32, #tpu.memory_space<vmem>>, vector<1x8x128xf32>
    %214 = vector.shape_cast %213 : vector<1x8x128xf32> to vector<8x128xf32>
    %c0_118 = arith.constant 0 : index
    %c0_119 = arith.constant 0 : index
    %c0_120 = arith.constant 0 : index
    %215 = vector.load %arg9[%c0_118, %c0_119, %c0_120] : memref<2x8x32xf32, #tpu.memory_space<vmem>>, vector<1x8x32xf32>
    %216 = vector.shape_cast %215 : vector<1x8x32xf32> to vector<8x32xf32>
    %217 = arith.truncf %216 : vector<8x32xf32> to vector<8x32xbf16>
    %c0_121 = arith.constant 0 : index
    %c0_122 = arith.constant 0 : index
    %218 = vector.load %arg3[%c0_121, %c0_122] : memref<32x128xbf16, #tpu.memory_space<vmem>>, vector<32x128xbf16>
    %cst_123 = arith.constant dense<0.000000e+00> : vector<8x128xf32>
    %219 = tpu.matmul %217, %218, %cst_123 {dimension_numbers = #tpu.dot_dimension_numbers<[1], [0], [0], [1], [0, 0, 1, 1], [], []>} : vector<8x32xbf16>, vector<32x128xbf16>, vector<8x128xf32> -> vector<8x128xf32>
    %220 = arith.addf %214, %219 : vector<8x128xf32>
    %c0_124 = arith.constant 0 : index
    %c0_125 = arith.constant 0 : index
    %c0_126 = arith.constant 0 : index
    %221 = vector.load %arg10[%c0_124, %c0_125, %c0_126] : memref<2x8x32xf32, #tpu.memory_space<vmem>>, vector<1x8x32xf32>
    %222 = vector.shape_cast %221 : vector<1x8x32xf32> to vector<8x32xf32>
    %223 = vector.extract_strided_slice %220 {offsets = [0, 0], sizes = [8, 32], strides = [1, 1]} : vector<8x128xf32> to vector<8x32xf32>
    %cst_127 = arith.constant 0.000000e+00 : f32
    %224 = vector.broadcast %cst_127 : f32 to vector<8x32xf32>
    %225 = arith.subf %224, %223 : vector<8x32xf32>
    %226 = math.exp %225 : vector<8x32xf32>
    %cst_128 = arith.constant 1.000000e+00 : f32
    %227 = vector.broadcast %cst_128 : f32 to vector<8x32xf32>
    %228 = arith.addf %227, %226 : vector<8x32xf32>
    %cst_129 = arith.constant 1.000000e+00 : f32
    %229 = vector.broadcast %cst_129 : f32 to vector<8x32xf32>
    %230 = arith.divf %229, %228 : vector<8x32xf32>
    %231 = vector.extract_strided_slice %220 {offsets = [0, 32], sizes = [8, 32], strides = [1, 1]} : vector<8x128xf32> to vector<8x32xf32>
    %cst_130 = arith.constant 0.000000e+00 : f32
    %232 = vector.broadcast %cst_130 : f32 to vector<8x32xf32>
    %233 = arith.subf %232, %231 : vector<8x32xf32>
    %234 = math.exp %233 : vector<8x32xf32>
    %cst_131 = arith.constant 1.000000e+00 : f32
    %235 = vector.broadcast %cst_131 : f32 to vector<8x32xf32>
    %236 = arith.addf %235, %234 : vector<8x32xf32>
    %cst_132 = arith.constant 1.000000e+00 : f32
    %237 = vector.broadcast %cst_132 : f32 to vector<8x32xf32>
    %238 = arith.divf %237, %236 : vector<8x32xf32>
    %239 = vector.extract_strided_slice %220 {offsets = [0, 64], sizes = [8, 32], strides = [1, 1]} : vector<8x128xf32> to vector<8x32xf32>
    %240 = math.tanh %239 : vector<8x32xf32>
    %241 = vector.extract_strided_slice %220 {offsets = [0, 96], sizes = [8, 32], strides = [1, 1]} : vector<8x128xf32> to vector<8x32xf32>
    %cst_133 = arith.constant 0.000000e+00 : f32
    %242 = vector.broadcast %cst_133 : f32 to vector<8x32xf32>
    %243 = arith.subf %242, %241 : vector<8x32xf32>
    %244 = math.exp %243 : vector<8x32xf32>
    %cst_134 = arith.constant 1.000000e+00 : f32
    %245 = vector.broadcast %cst_134 : f32 to vector<8x32xf32>
    %246 = arith.addf %245, %244 : vector<8x32xf32>
    %cst_135 = arith.constant 1.000000e+00 : f32
    %247 = vector.broadcast %cst_135 : f32 to vector<8x32xf32>
    %248 = arith.divf %247, %246 : vector<8x32xf32>
    %249 = arith.mulf %238, %222 : vector<8x32xf32>
    %250 = arith.mulf %230, %240 : vector<8x32xf32>
    %251 = arith.addf %249, %250 : vector<8x32xf32>
    %252 = math.tanh %251 : vector<8x32xf32>
    %253 = arith.mulf %248, %252 : vector<8x32xf32>
    %c0_136 = arith.constant 0 : index
    %c0_137 = arith.constant 0 : index
    %c0_138 = arith.constant 0 : index
    %254 = vector.load %arg9[%c0_136, %c0_137, %c0_138] : memref<2x8x32xf32, #tpu.memory_space<vmem>>, vector<1x8x32xf32>
    %255 = vector.shape_cast %254 : vector<1x8x32xf32> to vector<8x32xf32>
    %256 = vector.shape_cast %253 : vector<8x32xf32> to vector<1x8x32xf32>
    tpu.vector_store %arg9[%c0_136, %c0_137, %c0_138], %256 {strides = array<i32>} : memref<2x8x32xf32, #tpu.memory_space<vmem>>, vector<1x8x32xf32>,
    %c0_139 = arith.constant 0 : index
    %c0_140 = arith.constant 0 : index
    %c0_141 = arith.constant 0 : index
    %257 = vector.load %arg10[%c0_139, %c0_140, %c0_141] : memref<2x8x32xf32, #tpu.memory_space<vmem>>, vector<1x8x32xf32>
    %258 = vector.shape_cast %257 : vector<1x8x32xf32> to vector<8x32xf32>
    %259 = vector.shape_cast %251 : vector<8x32xf32> to vector<1x8x32xf32>
    tpu.vector_store %arg10[%c0_139, %c0_140, %c0_141], %259 {strides = array<i32>} : memref<2x8x32xf32, #tpu.memory_space<vmem>>, vector<1x8x32xf32>,
    %c0_142 = arith.constant 0 : index
    %c0_143 = arith.constant 0 : index
    %c0_144 = arith.constant 0 : index
    %260 = vector.load %arg4[%c0_142, %c0_143, %c0_144] : memref<1x64x128xbf16, #tpu.memory_space<vmem>>, vector<1x64x128xbf16>
    %261 = vector.shape_cast %260 : vector<1x64x128xbf16> to vector<64x128xbf16>
    %262 = arith.truncf %253 : vector<8x32xf32> to vector<8x32xbf16>
    %263 = vector.extract_strided_slice %261 {offsets = [0, 0], sizes = [32, 128], strides = [1, 1]} : vector<64x128xbf16> to vector<32x128xbf16>
    %cst_145 = arith.constant dense<0.000000e+00> : vector<8x128xf32>
    %264 = tpu.matmul %262, %263, %cst_145 {dimension_numbers = #tpu.dot_dimension_numbers<[1], [0], [0], [1], [0, 0, 1, 1], [], []>} : vector<8x32xbf16>, vector<32x128xbf16>, vector<8x128xf32> -> vector<8x128xf32>
    %c1_146 = arith.constant 1 : index
    %c0_147 = arith.constant 0 : index
    %c0_148 = arith.constant 0 : index
    %265 = vector.load %arg9[%c1_146, %c0_147, %c0_148] : memref<2x8x32xf32, #tpu.memory_space<vmem>>, vector<1x8x32xf32>
    %266 = vector.shape_cast %265 : vector<1x8x32xf32> to vector<8x32xf32>
    %267 = arith.truncf %266 : vector<8x32xf32> to vector<8x32xbf16>
    %268 = vector.extract_strided_slice %261 {offsets = [32, 0], sizes = [32, 128], strides = [1, 1]} : vector<64x128xbf16> to vector<32x128xbf16>
    %cst_149 = arith.constant dense<0.000000e+00> : vector<8x128xf32>
    %269 = tpu.matmul %267, %268, %cst_149 {dimension_numbers = #tpu.dot_dimension_numbers<[1], [0], [0], [1], [0, 0, 1, 1], [], []>} : vector<8x32xbf16>, vector<32x128xbf16>, vector<8x128xf32> -> vector<8x128xf32>
    %270 = arith.addf %264, %269 : vector<8x128xf32>
    %c0_150 = arith.constant 0 : index
    %c0_151 = arith.constant 0 : index
    %c0_152 = arith.constant 0 : index
    %271 = vector.load %arg5[%c0_150, %c0_151, %c0_152] : memref<1x1x128xf32, #tpu.memory_space<vmem>>, vector<1x1x128xf32>
    %272 = vector.shape_cast %271 : vector<1x1x128xf32> to vector<1x128xf32>
    %273 = vector.broadcast %272 : vector<1x128xf32> to vector<8x128xf32>
    %274 = arith.addf %270, %273 : vector<8x128xf32>
    %c1_153 = arith.constant 1 : index
    %c0_154 = arith.constant 0 : index
    %c0_155 = arith.constant 0 : index
    %275 = vector.load %arg10[%c1_153, %c0_154, %c0_155] : memref<2x8x32xf32, #tpu.memory_space<vmem>>, vector<1x8x32xf32>
    %276 = vector.shape_cast %275 : vector<1x8x32xf32> to vector<8x32xf32>
    %277 = vector.extract_strided_slice %274 {offsets = [0, 0], sizes = [8, 32], strides = [1, 1]} : vector<8x128xf32> to vector<8x32xf32>
    %cst_156 = arith.constant 0.000000e+00 : f32
    %278 = vector.broadcast %cst_156 : f32 to vector<8x32xf32>
    %279 = arith.subf %278, %277 : vector<8x32xf32>
    %280 = math.exp %279 : vector<8x32xf32>
    %cst_157 = arith.constant 1.000000e+00 : f32
    %281 = vector.broadcast %cst_157 : f32 to vector<8x32xf32>
    %282 = arith.addf %281, %280 : vector<8x32xf32>
    %cst_158 = arith.constant 1.000000e+00 : f32
    %283 = vector.broadcast %cst_158 : f32 to vector<8x32xf32>
    %284 = arith.divf %283, %282 : vector<8x32xf32>
    %285 = vector.extract_strided_slice %274 {offsets = [0, 32], sizes = [8, 32], strides = [1, 1]} : vector<8x128xf32> to vector<8x32xf32>
    %cst_159 = arith.constant 0.000000e+00 : f32
    %286 = vector.broadcast %cst_159 : f32 to vector<8x32xf32>
    %287 = arith.subf %286, %285 : vector<8x32xf32>
    %288 = math.exp %287 : vector<8x32xf32>
    %cst_160 = arith.constant 1.000000e+00 : f32
    %289 = vector.broadcast %cst_160 : f32 to vector<8x32xf32>
    %290 = arith.addf %289, %288 : vector<8x32xf32>
    %cst_161 = arith.constant 1.000000e+00 : f32
    %291 = vector.broadcast %cst_161 : f32 to vector<8x32xf32>
    %292 = arith.divf %291, %290 : vector<8x32xf32>
    %293 = vector.extract_strided_slice %274 {offsets = [0, 64], sizes = [8, 32], strides = [1, 1]} : vector<8x128xf32> to vector<8x32xf32>
    %294 = math.tanh %293 : vector<8x32xf32>
    %295 = vector.extract_strided_slice %274 {offsets = [0, 96], sizes = [8, 32], strides = [1, 1]} : vector<8x128xf32> to vector<8x32xf32>
    %cst_162 = arith.constant 0.000000e+00 : f32
    %296 = vector.broadcast %cst_162 : f32 to vector<8x32xf32>
    %297 = arith.subf %296, %295 : vector<8x32xf32>
    %298 = math.exp %297 : vector<8x32xf32>
    %cst_163 = arith.constant 1.000000e+00 : f32
    %299 = vector.broadcast %cst_163 : f32 to vector<8x32xf32>
    %300 = arith.addf %299, %298 : vector<8x32xf32>
    %cst_164 = arith.constant 1.000000e+00 : f32
    %301 = vector.broadcast %cst_164 : f32 to vector<8x32xf32>
    %302 = arith.divf %301, %300 : vector<8x32xf32>
    %303 = arith.mulf %292, %276 : vector<8x32xf32>
    %304 = arith.mulf %284, %294 : vector<8x32xf32>
    %305 = arith.addf %303, %304 : vector<8x32xf32>
    %306 = math.tanh %305 : vector<8x32xf32>
    %307 = arith.mulf %302, %306 : vector<8x32xf32>
    %c1_165 = arith.constant 1 : index
    %c0_166 = arith.constant 0 : index
    %c0_167 = arith.constant 0 : index
    %308 = vector.load %arg9[%c1_165, %c0_166, %c0_167] : memref<2x8x32xf32, #tpu.memory_space<vmem>>, vector<1x8x32xf32>
    %309 = vector.shape_cast %308 : vector<1x8x32xf32> to vector<8x32xf32>
    %310 = vector.shape_cast %307 : vector<8x32xf32> to vector<1x8x32xf32>
    tpu.vector_store %arg9[%c1_165, %c0_166, %c0_167], %310 {strides = array<i32>} : memref<2x8x32xf32, #tpu.memory_space<vmem>>, vector<1x8x32xf32>,
    %c1_168 = arith.constant 1 : index
    %c0_169 = arith.constant 0 : index
    %c0_170 = arith.constant 0 : index
    %311 = vector.load %arg10[%c1_168, %c0_169, %c0_170] : memref<2x8x32xf32, #tpu.memory_space<vmem>>, vector<1x8x32xf32>
    %312 = vector.shape_cast %311 : vector<1x8x32xf32> to vector<8x32xf32>
    %313 = vector.shape_cast %305 : vector<8x32xf32> to vector<1x8x32xf32>
    tpu.vector_store %arg10[%c1_168, %c0_169, %c0_170], %313 {strides = array<i32>} : memref<2x8x32xf32, #tpu.memory_space<vmem>>, vector<1x8x32xf32>,
    %314 = arith.truncf %307 : vector<8x32xf32> to vector<8x32xbf16>
    %c2_171 = arith.constant 2 : index
    %c0_172 = arith.constant 0 : index
    %c0_173 = arith.constant 0 : index
    %315 = vector.load %arg6[%c2_171, %c0_172, %c0_173] : memref<8x8x32xbf16, #tpu.memory_space<vmem>>, vector<1x8x32xbf16>
    %316 = vector.shape_cast %315 : vector<1x8x32xbf16> to vector<8x32xbf16>
    %317 = vector.shape_cast %314 : vector<8x32xbf16> to vector<1x8x32xbf16>
    tpu.vector_store %arg6[%c2_171, %c0_172, %c0_173], %317 {strides = array<i32>} : memref<8x8x32xbf16, #tpu.memory_space<vmem>>, vector<1x8x32xbf16>,
    %c3 = arith.constant 3 : index
    %c0_174 = arith.constant 0 : index
    %c0_175 = arith.constant 0 : index
    %318 = vector.load %arg2[%c3, %c0_174, %c0_175] : memref<8x8x128xf32, #tpu.memory_space<vmem>>, vector<1x8x128xf32>
    %319 = vector.shape_cast %318 : vector<1x8x128xf32> to vector<8x128xf32>
    %c0_176 = arith.constant 0 : index
    %c0_177 = arith.constant 0 : index
    %c0_178 = arith.constant 0 : index
    %320 = vector.load %arg9[%c0_176, %c0_177, %c0_178] : memref<2x8x32xf32, #tpu.memory_space<vmem>>, vector<1x8x32xf32>
    %321 = vector.shape_cast %320 : vector<1x8x32xf32> to vector<8x32xf32>
    %322 = arith.truncf %321 : vector<8x32xf32> to vector<8x32xbf16>
    %c0_179 = arith.constant 0 : index
    %c0_180 = arith.constant 0 : index
    %323 = vector.load %arg3[%c0_179, %c0_180] : memref<32x128xbf16, #tpu.memory_space<vmem>>, vector<32x128xbf16>
    %cst_181 = arith.constant dense<0.000000e+00> : vector<8x128xf32>
    %324 = tpu.matmul %322, %323, %cst_181 {dimension_numbers = #tpu.dot_dimension_numbers<[1], [0], [0], [1], [0, 0, 1, 1], [], []>} : vector<8x32xbf16>, vector<32x128xbf16>, vector<8x128xf32> -> vector<8x128xf32>
    %325 = arith.addf %319, %324 : vector<8x128xf32>
    %c0_182 = arith.constant 0 : index
    %c0_183 = arith.constant 0 : index
    %c0_184 = arith.constant 0 : index
    %326 = vector.load %arg10[%c0_182, %c0_183, %c0_184] : memref<2x8x32xf32, #tpu.memory_space<vmem>>, vector<1x8x32xf32>
    %327 = vector.shape_cast %326 : vector<1x8x32xf32> to vector<8x32xf32>
    %328 = vector.extract_strided_slice %325 {offsets = [0, 0], sizes = [8, 32], strides = [1, 1]} : vector<8x128xf32> to vector<8x32xf32>
    %cst_185 = arith.constant 0.000000e+00 : f32
    %329 = vector.broadcast %cst_185 : f32 to vector<8x32xf32>
    %330 = arith.subf %329, %328 : vector<8x32xf32>
    %331 = math.exp %330 : vector<8x32xf32>
    %cst_186 = arith.constant 1.000000e+00 : f32
    %332 = vector.broadcast %cst_186 : f32 to vector<8x32xf32>
    %333 = arith.addf %332, %331 : vector<8x32xf32>
    %cst_187 = arith.constant 1.000000e+00 : f32
    %334 = vector.broadcast %cst_187 : f32 to vector<8x32xf32>
    %335 = arith.divf %334, %333 : vector<8x32xf32>
    %336 = vector.extract_strided_slice %325 {offsets = [0, 32], sizes = [8, 32], strides = [1, 1]} : vector<8x128xf32> to vector<8x32xf32>
    %cst_188 = arith.constant 0.000000e+00 : f32
    %337 = vector.broadcast %cst_188 : f32 to vector<8x32xf32>
    %338 = arith.subf %337, %336 : vector<8x32xf32>
    %339 = math.exp %338 : vector<8x32xf32>
    %cst_189 = arith.constant 1.000000e+00 : f32
    %340 = vector.broadcast %cst_189 : f32 to vector<8x32xf32>
    %341 = arith.addf %340, %339 : vector<8x32xf32>
    %cst_190 = arith.constant 1.000000e+00 : f32
    %342 = vector.broadcast %cst_190 : f32 to vector<8x32xf32>
    %343 = arith.divf %342, %341 : vector<8x32xf32>
    %344 = vector.extract_strided_slice %325 {offsets = [0, 64], sizes = [8, 32], strides = [1, 1]} : vector<8x128xf32> to vector<8x32xf32>
    %345 = math.tanh %344 : vector<8x32xf32>
    %346 = vector.extract_strided_slice %325 {offsets = [0, 96], sizes = [8, 32], strides = [1, 1]} : vector<8x128xf32> to vector<8x32xf32>
    %cst_191 = arith.constant 0.000000e+00 : f32
    %347 = vector.broadcast %cst_191 : f32 to vector<8x32xf32>
    %348 = arith.subf %347, %346 : vector<8x32xf32>
    %349 = math.exp %348 : vector<8x32xf32>
    %cst_192 = arith.constant 1.000000e+00 : f32
    %350 = vector.broadcast %cst_192 : f32 to vector<8x32xf32>
    %351 = arith.addf %350, %349 : vector<8x32xf32>
    %cst_193 = arith.constant 1.000000e+00 : f32
    %352 = vector.broadcast %cst_193 : f32 to vector<8x32xf32>
    %353 = arith.divf %352, %351 : vector<8x32xf32>
    %354 = arith.mulf %343, %327 : vector<8x32xf32>
    %355 = arith.mulf %335, %345 : vector<8x32xf32>
    %356 = arith.addf %354, %355 : vector<8x32xf32>
    %357 = math.tanh %356 : vector<8x32xf32>
    %358 = arith.mulf %353, %357 : vector<8x32xf32>
    %c0_194 = arith.constant 0 : index
    %c0_195 = arith.constant 0 : index
    %c0_196 = arith.constant 0 : index
    %359 = vector.load %arg9[%c0_194, %c0_195, %c0_196] : memref<2x8x32xf32, #tpu.memory_space<vmem>>, vector<1x8x32xf32>
    %360 = vector.shape_cast %359 : vector<1x8x32xf32> to vector<8x32xf32>
    %361 = vector.shape_cast %358 : vector<8x32xf32> to vector<1x8x32xf32>
    tpu.vector_store %arg9[%c0_194, %c0_195, %c0_196], %361 {strides = array<i32>} : memref<2x8x32xf32, #tpu.memory_space<vmem>>, vector<1x8x32xf32>,
    %c0_197 = arith.constant 0 : index
    %c0_198 = arith.constant 0 : index
    %c0_199 = arith.constant 0 : index
    %362 = vector.load %arg10[%c0_197, %c0_198, %c0_199] : memref<2x8x32xf32, #tpu.memory_space<vmem>>, vector<1x8x32xf32>
    %363 = vector.shape_cast %362 : vector<1x8x32xf32> to vector<8x32xf32>
    %364 = vector.shape_cast %356 : vector<8x32xf32> to vector<1x8x32xf32>
    tpu.vector_store %arg10[%c0_197, %c0_198, %c0_199], %364 {strides = array<i32>} : memref<2x8x32xf32, #tpu.memory_space<vmem>>, vector<1x8x32xf32>,
    %c0_200 = arith.constant 0 : index
    %c0_201 = arith.constant 0 : index
    %c0_202 = arith.constant 0 : index
    %365 = vector.load %arg4[%c0_200, %c0_201, %c0_202] : memref<1x64x128xbf16, #tpu.memory_space<vmem>>, vector<1x64x128xbf16>
    %366 = vector.shape_cast %365 : vector<1x64x128xbf16> to vector<64x128xbf16>
    %367 = arith.truncf %358 : vector<8x32xf32> to vector<8x32xbf16>
    %368 = vector.extract_strided_slice %366 {offsets = [0, 0], sizes = [32, 128], strides = [1, 1]} : vector<64x128xbf16> to vector<32x128xbf16>
    %cst_203 = arith.constant dense<0.000000e+00> : vector<8x128xf32>
    %369 = tpu.matmul %367, %368, %cst_203 {dimension_numbers = #tpu.dot_dimension_numbers<[1], [0], [0], [1], [0, 0, 1, 1], [], []>} : vector<8x32xbf16>, vector<32x128xbf16>, vector<8x128xf32> -> vector<8x128xf32>
    %c1_204 = arith.constant 1 : index
    %c0_205 = arith.constant 0 : index
    %c0_206 = arith.constant 0 : index
    %370 = vector.load %arg9[%c1_204, %c0_205, %c0_206] : memref<2x8x32xf32, #tpu.memory_space<vmem>>, vector<1x8x32xf32>
    %371 = vector.shape_cast %370 : vector<1x8x32xf32> to vector<8x32xf32>
    %372 = arith.truncf %371 : vector<8x32xf32> to vector<8x32xbf16>
    %373 = vector.extract_strided_slice %366 {offsets = [32, 0], sizes = [32, 128], strides = [1, 1]} : vector<64x128xbf16> to vector<32x128xbf16>
    %cst_207 = arith.constant dense<0.000000e+00> : vector<8x128xf32>
    %374 = tpu.matmul %372, %373, %cst_207 {dimension_numbers = #tpu.dot_dimension_numbers<[1], [0], [0], [1], [0, 0, 1, 1], [], []>} : vector<8x32xbf16>, vector<32x128xbf16>, vector<8x128xf32> -> vector<8x128xf32>
    %375 = arith.addf %369, %374 : vector<8x128xf32>
    %c0_208 = arith.constant 0 : index
    %c0_209 = arith.constant 0 : index
    %c0_210 = arith.constant 0 : index
    %376 = vector.load %arg5[%c0_208, %c0_209, %c0_210] : memref<1x1x128xf32, #tpu.memory_space<vmem>>, vector<1x1x128xf32>
    %377 = vector.shape_cast %376 : vector<1x1x128xf32> to vector<1x128xf32>
    %378 = vector.broadcast %377 : vector<1x128xf32> to vector<8x128xf32>
    %379 = arith.addf %375, %378 : vector<8x128xf32>
    %c1_211 = arith.constant 1 : index
    %c0_212 = arith.constant 0 : index
    %c0_213 = arith.constant 0 : index
    %380 = vector.load %arg10[%c1_211, %c0_212, %c0_213] : memref<2x8x32xf32, #tpu.memory_space<vmem>>, vector<1x8x32xf32>
    %381 = vector.shape_cast %380 : vector<1x8x32xf32> to vector<8x32xf32>
    %382 = vector.extract_strided_slice %379 {offsets = [0, 0], sizes = [8, 32], strides = [1, 1]} : vector<8x128xf32> to vector<8x32xf32>
    %cst_214 = arith.constant 0.000000e+00 : f32
    %383 = vector.broadcast %cst_214 : f32 to vector<8x32xf32>
    %384 = arith.subf %383, %382 : vector<8x32xf32>
    %385 = math.exp %384 : vector<8x32xf32>
    %cst_215 = arith.constant 1.000000e+00 : f32
    %386 = vector.broadcast %cst_215 : f32 to vector<8x32xf32>
    %387 = arith.addf %386, %385 : vector<8x32xf32>
    %cst_216 = arith.constant 1.000000e+00 : f32
    %388 = vector.broadcast %cst_216 : f32 to vector<8x32xf32>
    %389 = arith.divf %388, %387 : vector<8x32xf32>
    %390 = vector.extract_strided_slice %379 {offsets = [0, 32], sizes = [8, 32], strides = [1, 1]} : vector<8x128xf32> to vector<8x32xf32>
    %cst_217 = arith.constant 0.000000e+00 : f32
    %391 = vector.broadcast %cst_217 : f32 to vector<8x32xf32>
    %392 = arith.subf %391, %390 : vector<8x32xf32>
    %393 = math.exp %392 : vector<8x32xf32>
    %cst_218 = arith.constant 1.000000e+00 : f32
    %394 = vector.broadcast %cst_218 : f32 to vector<8x32xf32>
    %395 = arith.addf %394, %393 : vector<8x32xf32>
    %cst_219 = arith.constant 1.000000e+00 : f32
    %396 = vector.broadcast %cst_219 : f32 to vector<8x32xf32>
    %397 = arith.divf %396, %395 : vector<8x32xf32>
    %398 = vector.extract_strided_slice %379 {offsets = [0, 64], sizes = [8, 32], strides = [1, 1]} : vector<8x128xf32> to vector<8x32xf32>
    %399 = math.tanh %398 : vector<8x32xf32>
    %400 = vector.extract_strided_slice %379 {offsets = [0, 96], sizes = [8, 32], strides = [1, 1]} : vector<8x128xf32> to vector<8x32xf32>
    %cst_220 = arith.constant 0.000000e+00 : f32
    %401 = vector.broadcast %cst_220 : f32 to vector<8x32xf32>
    %402 = arith.subf %401, %400 : vector<8x32xf32>
    %403 = math.exp %402 : vector<8x32xf32>
    %cst_221 = arith.constant 1.000000e+00 : f32
    %404 = vector.broadcast %cst_221 : f32 to vector<8x32xf32>
    %405 = arith.addf %404, %403 : vector<8x32xf32>
    %cst_222 = arith.constant 1.000000e+00 : f32
    %406 = vector.broadcast %cst_222 : f32 to vector<8x32xf32>
    %407 = arith.divf %406, %405 : vector<8x32xf32>
    %408 = arith.mulf %397, %381 : vector<8x32xf32>
    %409 = arith.mulf %389, %399 : vector<8x32xf32>
    %410 = arith.addf %408, %409 : vector<8x32xf32>
    %411 = math.tanh %410 : vector<8x32xf32>
    %412 = arith.mulf %407, %411 : vector<8x32xf32>
    %c1_223 = arith.constant 1 : index
    %c0_224 = arith.constant 0 : index
    %c0_225 = arith.constant 0 : index
    %413 = vector.load %arg9[%c1_223, %c0_224, %c0_225] : memref<2x8x32xf32, #tpu.memory_space<vmem>>, vector<1x8x32xf32>
    %414 = vector.shape_cast %413 : vector<1x8x32xf32> to vector<8x32xf32>
    %415 = vector.shape_cast %412 : vector<8x32xf32> to vector<1x8x32xf32>
    tpu.vector_store %arg9[%c1_223, %c0_224, %c0_225], %415 {strides = array<i32>} : memref<2x8x32xf32, #tpu.memory_space<vmem>>, vector<1x8x32xf32>,
    %c1_226 = arith.constant 1 : index
    %c0_227 = arith.constant 0 : index
    %c0_228 = arith.constant 0 : index
    %416 = vector.load %arg10[%c1_226, %c0_227, %c0_228] : memref<2x8x32xf32, #tpu.memory_space<vmem>>, vector<1x8x32xf32>
    %417 = vector.shape_cast %416 : vector<1x8x32xf32> to vector<8x32xf32>
    %418 = vector.shape_cast %410 : vector<8x32xf32> to vector<1x8x32xf32>
    tpu.vector_store %arg10[%c1_226, %c0_227, %c0_228], %418 {strides = array<i32>} : memref<2x8x32xf32, #tpu.memory_space<vmem>>, vector<1x8x32xf32>,
    %419 = arith.truncf %412 : vector<8x32xf32> to vector<8x32xbf16>
    %c3_229 = arith.constant 3 : index
    %c0_230 = arith.constant 0 : index
    %c0_231 = arith.constant 0 : index
    %420 = vector.load %arg6[%c3_229, %c0_230, %c0_231] : memref<8x8x32xbf16, #tpu.memory_space<vmem>>, vector<1x8x32xbf16>
    %421 = vector.shape_cast %420 : vector<1x8x32xbf16> to vector<8x32xbf16>
    %422 = vector.shape_cast %419 : vector<8x32xbf16> to vector<1x8x32xbf16>
    tpu.vector_store %arg6[%c3_229, %c0_230, %c0_231], %422 {strides = array<i32>} : memref<8x8x32xbf16, #tpu.memory_space<vmem>>, vector<1x8x32xbf16>,
    %c4 = arith.constant 4 : index
    %c0_232 = arith.constant 0 : index
    %c0_233 = arith.constant 0 : index
    %423 = vector.load %arg2[%c4, %c0_232, %c0_233] : memref<8x8x128xf32, #tpu.memory_space<vmem>>, vector<1x8x128xf32>
    %424 = vector.shape_cast %423 : vector<1x8x128xf32> to vector<8x128xf32>
    %c0_234 = arith.constant 0 : index
    %c0_235 = arith.constant 0 : index
    %c0_236 = arith.constant 0 : index
    %425 = vector.load %arg9[%c0_234, %c0_235, %c0_236] : memref<2x8x32xf32, #tpu.memory_space<vmem>>, vector<1x8x32xf32>
    %426 = vector.shape_cast %425 : vector<1x8x32xf32> to vector<8x32xf32>
    %427 = arith.truncf %426 : vector<8x32xf32> to vector<8x32xbf16>
    %c0_237 = arith.constant 0 : index
    %c0_238 = arith.constant 0 : index
    %428 = vector.load %arg3[%c0_237, %c0_238] : memref<32x128xbf16, #tpu.memory_space<vmem>>, vector<32x128xbf16>
    %cst_239 = arith.constant dense<0.000000e+00> : vector<8x128xf32>
    %429 = tpu.matmul %427, %428, %cst_239 {dimension_numbers = #tpu.dot_dimension_numbers<[1], [0], [0], [1], [0, 0, 1, 1], [], []>} : vector<8x32xbf16>, vector<32x128xbf16>, vector<8x128xf32> -> vector<8x128xf32>
    %430 = arith.addf %424, %429 : vector<8x128xf32>
    %c0_240 = arith.constant 0 : index
    %c0_241 = arith.constant 0 : index
    %c0_242 = arith.constant 0 : index
    %431 = vector.load %arg10[%c0_240, %c0_241, %c0_242] : memref<2x8x32xf32, #tpu.memory_space<vmem>>, vector<1x8x32xf32>
    %432 = vector.shape_cast %431 : vector<1x8x32xf32> to vector<8x32xf32>
    %433 = vector.extract_strided_slice %430 {offsets = [0, 0], sizes = [8, 32], strides = [1, 1]} : vector<8x128xf32> to vector<8x32xf32>
    %cst_243 = arith.constant 0.000000e+00 : f32
    %434 = vector.broadcast %cst_243 : f32 to vector<8x32xf32>
    %435 = arith.subf %434, %433 : vector<8x32xf32>
    %436 = math.exp %435 : vector<8x32xf32>
    %cst_244 = arith.constant 1.000000e+00 : f32
    %437 = vector.broadcast %cst_244 : f32 to vector<8x32xf32>
    %438 = arith.addf %437, %436 : vector<8x32xf32>
    %cst_245 = arith.constant 1.000000e+00 : f32
    %439 = vector.broadcast %cst_245 : f32 to vector<8x32xf32>
    %440 = arith.divf %439, %438 : vector<8x32xf32>
    %441 = vector.extract_strided_slice %430 {offsets = [0, 32], sizes = [8, 32], strides = [1, 1]} : vector<8x128xf32> to vector<8x32xf32>
    %cst_246 = arith.constant 0.000000e+00 : f32
    %442 = vector.broadcast %cst_246 : f32 to vector<8x32xf32>
    %443 = arith.subf %442, %441 : vector<8x32xf32>
    %444 = math.exp %443 : vector<8x32xf32>
    %cst_247 = arith.constant 1.000000e+00 : f32
    %445 = vector.broadcast %cst_247 : f32 to vector<8x32xf32>
    %446 = arith.addf %445, %444 : vector<8x32xf32>
    %cst_248 = arith.constant 1.000000e+00 : f32
    %447 = vector.broadcast %cst_248 : f32 to vector<8x32xf32>
    %448 = arith.divf %447, %446 : vector<8x32xf32>
    %449 = vector.extract_strided_slice %430 {offsets = [0, 64], sizes = [8, 32], strides = [1, 1]} : vector<8x128xf32> to vector<8x32xf32>
    %450 = math.tanh %449 : vector<8x32xf32>
    %451 = vector.extract_strided_slice %430 {offsets = [0, 96], sizes = [8, 32], strides = [1, 1]} : vector<8x128xf32> to vector<8x32xf32>
    %cst_249 = arith.constant 0.000000e+00 : f32
    %452 = vector.broadcast %cst_249 : f32 to vector<8x32xf32>
    %453 = arith.subf %452, %451 : vector<8x32xf32>
    %454 = math.exp %453 : vector<8x32xf32>
    %cst_250 = arith.constant 1.000000e+00 : f32
    %455 = vector.broadcast %cst_250 : f32 to vector<8x32xf32>
    %456 = arith.addf %455, %454 : vector<8x32xf32>
    %cst_251 = arith.constant 1.000000e+00 : f32
    %457 = vector.broadcast %cst_251 : f32 to vector<8x32xf32>
    %458 = arith.divf %457, %456 : vector<8x32xf32>
    %459 = arith.mulf %448, %432 : vector<8x32xf32>
    %460 = arith.mulf %440, %450 : vector<8x32xf32>
    %461 = arith.addf %459, %460 : vector<8x32xf32>
    %462 = math.tanh %461 : vector<8x32xf32>
    %463 = arith.mulf %458, %462 : vector<8x32xf32>
    %c0_252 = arith.constant 0 : index
    %c0_253 = arith.constant 0 : index
    %c0_254 = arith.constant 0 : index
    %464 = vector.load %arg9[%c0_252, %c0_253, %c0_254] : memref<2x8x32xf32, #tpu.memory_space<vmem>>, vector<1x8x32xf32>
    %465 = vector.shape_cast %464 : vector<1x8x32xf32> to vector<8x32xf32>
    %466 = vector.shape_cast %463 : vector<8x32xf32> to vector<1x8x32xf32>
    tpu.vector_store %arg9[%c0_252, %c0_253, %c0_254], %466 {strides = array<i32>} : memref<2x8x32xf32, #tpu.memory_space<vmem>>, vector<1x8x32xf32>,
    %c0_255 = arith.constant 0 : index
    %c0_256 = arith.constant 0 : index
    %c0_257 = arith.constant 0 : index
    %467 = vector.load %arg10[%c0_255, %c0_256, %c0_257] : memref<2x8x32xf32, #tpu.memory_space<vmem>>, vector<1x8x32xf32>
    %468 = vector.shape_cast %467 : vector<1x8x32xf32> to vector<8x32xf32>
    %469 = vector.shape_cast %461 : vector<8x32xf32> to vector<1x8x32xf32>
    tpu.vector_store %arg10[%c0_255, %c0_256, %c0_257], %469 {strides = array<i32>} : memref<2x8x32xf32, #tpu.memory_space<vmem>>, vector<1x8x32xf32>,
    %c0_258 = arith.constant 0 : index
    %c0_259 = arith.constant 0 : index
    %c0_260 = arith.constant 0 : index
    %470 = vector.load %arg4[%c0_258, %c0_259, %c0_260] : memref<1x64x128xbf16, #tpu.memory_space<vmem>>, vector<1x64x128xbf16>
    %471 = vector.shape_cast %470 : vector<1x64x128xbf16> to vector<64x128xbf16>
    %472 = arith.truncf %463 : vector<8x32xf32> to vector<8x32xbf16>
    %473 = vector.extract_strided_slice %471 {offsets = [0, 0], sizes = [32, 128], strides = [1, 1]} : vector<64x128xbf16> to vector<32x128xbf16>
    %cst_261 = arith.constant dense<0.000000e+00> : vector<8x128xf32>
    %474 = tpu.matmul %472, %473, %cst_261 {dimension_numbers = #tpu.dot_dimension_numbers<[1], [0], [0], [1], [0, 0, 1, 1], [], []>} : vector<8x32xbf16>, vector<32x128xbf16>, vector<8x128xf32> -> vector<8x128xf32>
    %c1_262 = arith.constant 1 : index
    %c0_263 = arith.constant 0 : index
    %c0_264 = arith.constant 0 : index
    %475 = vector.load %arg9[%c1_262, %c0_263, %c0_264] : memref<2x8x32xf32, #tpu.memory_space<vmem>>, vector<1x8x32xf32>
    %476 = vector.shape_cast %475 : vector<1x8x32xf32> to vector<8x32xf32>
    %477 = arith.truncf %476 : vector<8x32xf32> to vector<8x32xbf16>
    %478 = vector.extract_strided_slice %471 {offsets = [32, 0], sizes = [32, 128], strides = [1, 1]} : vector<64x128xbf16> to vector<32x128xbf16>
    %cst_265 = arith.constant dense<0.000000e+00> : vector<8x128xf32>
    %479 = tpu.matmul %477, %478, %cst_265 {dimension_numbers = #tpu.dot_dimension_numbers<[1], [0], [0], [1], [0, 0, 1, 1], [], []>} : vector<8x32xbf16>, vector<32x128xbf16>, vector<8x128xf32> -> vector<8x128xf32>
    %480 = arith.addf %474, %479 : vector<8x128xf32>
    %c0_266 = arith.constant 0 : index
    %c0_267 = arith.constant 0 : index
    %c0_268 = arith.constant 0 : index
    %481 = vector.load %arg5[%c0_266, %c0_267, %c0_268] : memref<1x1x128xf32, #tpu.memory_space<vmem>>, vector<1x1x128xf32>
    %482 = vector.shape_cast %481 : vector<1x1x128xf32> to vector<1x128xf32>
    %483 = vector.broadcast %482 : vector<1x128xf32> to vector<8x128xf32>
    %484 = arith.addf %480, %483 : vector<8x128xf32>
    %c1_269 = arith.constant 1 : index
    %c0_270 = arith.constant 0 : index
    %c0_271 = arith.constant 0 : index
    %485 = vector.load %arg10[%c1_269, %c0_270, %c0_271] : memref<2x8x32xf32, #tpu.memory_space<vmem>>, vector<1x8x32xf32>
    %486 = vector.shape_cast %485 : vector<1x8x32xf32> to vector<8x32xf32>
    %487 = vector.extract_strided_slice %484 {offsets = [0, 0], sizes = [8, 32], strides = [1, 1]} : vector<8x128xf32> to vector<8x32xf32>
    %cst_272 = arith.constant 0.000000e+00 : f32
    %488 = vector.broadcast %cst_272 : f32 to vector<8x32xf32>
    %489 = arith.subf %488, %487 : vector<8x32xf32>
    %490 = math.exp %489 : vector<8x32xf32>
    %cst_273 = arith.constant 1.000000e+00 : f32
    %491 = vector.broadcast %cst_273 : f32 to vector<8x32xf32>
    %492 = arith.addf %491, %490 : vector<8x32xf32>
    %cst_274 = arith.constant 1.000000e+00 : f32
    %493 = vector.broadcast %cst_274 : f32 to vector<8x32xf32>
    %494 = arith.divf %493, %492 : vector<8x32xf32>
    %495 = vector.extract_strided_slice %484 {offsets = [0, 32], sizes = [8, 32], strides = [1, 1]} : vector<8x128xf32> to vector<8x32xf32>
    %cst_275 = arith.constant 0.000000e+00 : f32
    %496 = vector.broadcast %cst_275 : f32 to vector<8x32xf32>
    %497 = arith.subf %496, %495 : vector<8x32xf32>
    %498 = math.exp %497 : vector<8x32xf32>
    %cst_276 = arith.constant 1.000000e+00 : f32
    %499 = vector.broadcast %cst_276 : f32 to vector<8x32xf32>
    %500 = arith.addf %499, %498 : vector<8x32xf32>
    %cst_277 = arith.constant 1.000000e+00 : f32
    %501 = vector.broadcast %cst_277 : f32 to vector<8x32xf32>
    %502 = arith.divf %501, %500 : vector<8x32xf32>
    %503 = vector.extract_strided_slice %484 {offsets = [0, 64], sizes = [8, 32], strides = [1, 1]} : vector<8x128xf32> to vector<8x32xf32>
    %504 = math.tanh %503 : vector<8x32xf32>
    %505 = vector.extract_strided_slice %484 {offsets = [0, 96], sizes = [8, 32], strides = [1, 1]} : vector<8x128xf32> to vector<8x32xf32>
    %cst_278 = arith.constant 0.000000e+00 : f32
    %506 = vector.broadcast %cst_278 : f32 to vector<8x32xf32>
    %507 = arith.subf %506, %505 : vector<8x32xf32>
    %508 = math.exp %507 : vector<8x32xf32>
    %cst_279 = arith.constant 1.000000e+00 : f32
    %509 = vector.broadcast %cst_279 : f32 to vector<8x32xf32>
    %510 = arith.addf %509, %508 : vector<8x32xf32>
    %cst_280 = arith.constant 1.000000e+00 : f32
    %511 = vector.broadcast %cst_280 : f32 to vector<8x32xf32>
    %512 = arith.divf %511, %510 : vector<8x32xf32>
    %513 = arith.mulf %502, %486 : vector<8x32xf32>
    %514 = arith.mulf %494, %504 : vector<8x32xf32>
    %515 = arith.addf %513, %514 : vector<8x32xf32>
    %516 = math.tanh %515 : vector<8x32xf32>
    %517 = arith.mulf %512, %516 : vector<8x32xf32>
    %c1_281 = arith.constant 1 : index
    %c0_282 = arith.constant 0 : index
    %c0_283 = arith.constant 0 : index
    %518 = vector.load %arg9[%c1_281, %c0_282, %c0_283] : memref<2x8x32xf32, #tpu.memory_space<vmem>>, vector<1x8x32xf32>
    %519 = vector.shape_cast %518 : vector<1x8x32xf32> to vector<8x32xf32>
    %520 = vector.shape_cast %517 : vector<8x32xf32> to vector<1x8x32xf32>
    tpu.vector_store %arg9[%c1_281, %c0_282, %c0_283], %520 {strides = array<i32>} : memref<2x8x32xf32, #tpu.memory_space<vmem>>, vector<1x8x32xf32>,
    %c1_284 = arith.constant 1 : index
    %c0_285 = arith.constant 0 : index
    %c0_286 = arith.constant 0 : index
    %521 = vector.load %arg10[%c1_284, %c0_285, %c0_286] : memref<2x8x32xf32, #tpu.memory_space<vmem>>, vector<1x8x32xf32>
    %522 = vector.shape_cast %521 : vector<1x8x32xf32> to vector<8x32xf32>
    %523 = vector.shape_cast %515 : vector<8x32xf32> to vector<1x8x32xf32>
    tpu.vector_store %arg10[%c1_284, %c0_285, %c0_286], %523 {strides = array<i32>} : memref<2x8x32xf32, #tpu.memory_space<vmem>>, vector<1x8x32xf32>,
    %524 = arith.truncf %517 : vector<8x32xf32> to vector<8x32xbf16>
    %c4_287 = arith.constant 4 : index
    %c0_288 = arith.constant 0 : index
    %c0_289 = arith.constant 0 : index
    %525 = vector.load %arg6[%c4_287, %c0_288, %c0_289] : memref<8x8x32xbf16, #tpu.memory_space<vmem>>, vector<1x8x32xbf16>
    %526 = vector.shape_cast %525 : vector<1x8x32xbf16> to vector<8x32xbf16>
    %527 = vector.shape_cast %524 : vector<8x32xbf16> to vector<1x8x32xbf16>
    tpu.vector_store %arg6[%c4_287, %c0_288, %c0_289], %527 {strides = array<i32>} : memref<8x8x32xbf16, #tpu.memory_space<vmem>>, vector<1x8x32xbf16>,
    %c5 = arith.constant 5 : index
    %c0_290 = arith.constant 0 : index
    %c0_291 = arith.constant 0 : index
    %528 = vector.load %arg2[%c5, %c0_290, %c0_291] : memref<8x8x128xf32, #tpu.memory_space<vmem>>, vector<1x8x128xf32>
    %529 = vector.shape_cast %528 : vector<1x8x128xf32> to vector<8x128xf32>
    %c0_292 = arith.constant 0 : index
    %c0_293 = arith.constant 0 : index
    %c0_294 = arith.constant 0 : index
    %530 = vector.load %arg9[%c0_292, %c0_293, %c0_294] : memref<2x8x32xf32, #tpu.memory_space<vmem>>, vector<1x8x32xf32>
    %531 = vector.shape_cast %530 : vector<1x8x32xf32> to vector<8x32xf32>
    %532 = arith.truncf %531 : vector<8x32xf32> to vector<8x32xbf16>
    %c0_295 = arith.constant 0 : index
    %c0_296 = arith.constant 0 : index
    %533 = vector.load %arg3[%c0_295, %c0_296] : memref<32x128xbf16, #tpu.memory_space<vmem>>, vector<32x128xbf16>
    %cst_297 = arith.constant dense<0.000000e+00> : vector<8x128xf32>
    %534 = tpu.matmul %532, %533, %cst_297 {dimension_numbers = #tpu.dot_dimension_numbers<[1], [0], [0], [1], [0, 0, 1, 1], [], []>} : vector<8x32xbf16>, vector<32x128xbf16>, vector<8x128xf32> -> vector<8x128xf32>
    %535 = arith.addf %529, %534 : vector<8x128xf32>
    %c0_298 = arith.constant 0 : index
    %c0_299 = arith.constant 0 : index
    %c0_300 = arith.constant 0 : index
    %536 = vector.load %arg10[%c0_298, %c0_299, %c0_300] : memref<2x8x32xf32, #tpu.memory_space<vmem>>, vector<1x8x32xf32>
    %537 = vector.shape_cast %536 : vector<1x8x32xf32> to vector<8x32xf32>
    %538 = vector.extract_strided_slice %535 {offsets = [0, 0], sizes = [8, 32], strides = [1, 1]} : vector<8x128xf32> to vector<8x32xf32>
    %cst_301 = arith.constant 0.000000e+00 : f32
    %539 = vector.broadcast %cst_301 : f32 to vector<8x32xf32>
    %540 = arith.subf %539, %538 : vector<8x32xf32>
    %541 = math.exp %540 : vector<8x32xf32>
    %cst_302 = arith.constant 1.000000e+00 : f32
    %542 = vector.broadcast %cst_302 : f32 to vector<8x32xf32>
    %543 = arith.addf %542, %541 : vector<8x32xf32>
    %cst_303 = arith.constant 1.000000e+00 : f32
    %544 = vector.broadcast %cst_303 : f32 to vector<8x32xf32>
    %545 = arith.divf %544, %543 : vector<8x32xf32>
    %546 = vector.extract_strided_slice %535 {offsets = [0, 32], sizes = [8, 32], strides = [1, 1]} : vector<8x128xf32> to vector<8x32xf32>
    %cst_304 = arith.constant 0.000000e+00 : f32
    %547 = vector.broadcast %cst_304 : f32 to vector<8x32xf32>
    %548 = arith.subf %547, %546 : vector<8x32xf32>
    %549 = math.exp %548 : vector<8x32xf32>
    %cst_305 = arith.constant 1.000000e+00 : f32
    %550 = vector.broadcast %cst_305 : f32 to vector<8x32xf32>
    %551 = arith.addf %550, %549 : vector<8x32xf32>
    %cst_306 = arith.constant 1.000000e+00 : f32
    %552 = vector.broadcast %cst_306 : f32 to vector<8x32xf32>
    %553 = arith.divf %552, %551 : vector<8x32xf32>
    %554 = vector.extract_strided_slice %535 {offsets = [0, 64], sizes = [8, 32], strides = [1, 1]} : vector<8x128xf32> to vector<8x32xf32>
    %555 = math.tanh %554 : vector<8x32xf32>
    %556 = vector.extract_strided_slice %535 {offsets = [0, 96], sizes = [8, 32], strides = [1, 1]} : vector<8x128xf32> to vector<8x32xf32>
    %cst_307 = arith.constant 0.000000e+00 : f32
    %557 = vector.broadcast %cst_307 : f32 to vector<8x32xf32>
    %558 = arith.subf %557, %556 : vector<8x32xf32>
    %559 = math.exp %558 : vector<8x32xf32>
    %cst_308 = arith.constant 1.000000e+00 : f32
    %560 = vector.broadcast %cst_308 : f32 to vector<8x32xf32>
    %561 = arith.addf %560, %559 : vector<8x32xf32>
    %cst_309 = arith.constant 1.000000e+00 : f32
    %562 = vector.broadcast %cst_309 : f32 to vector<8x32xf32>
    %563 = arith.divf %562, %561 : vector<8x32xf32>
    %564 = arith.mulf %553, %537 : vector<8x32xf32>
    %565 = arith.mulf %545, %555 : vector<8x32xf32>
    %566 = arith.addf %564, %565 : vector<8x32xf32>
    %567 = math.tanh %566 : vector<8x32xf32>
    %568 = arith.mulf %563, %567 : vector<8x32xf32>
    %c0_310 = arith.constant 0 : index
    %c0_311 = arith.constant 0 : index
    %c0_312 = arith.constant 0 : index
    %569 = vector.load %arg9[%c0_310, %c0_311, %c0_312] : memref<2x8x32xf32, #tpu.memory_space<vmem>>, vector<1x8x32xf32>
    %570 = vector.shape_cast %569 : vector<1x8x32xf32> to vector<8x32xf32>
    %571 = vector.shape_cast %568 : vector<8x32xf32> to vector<1x8x32xf32>
    tpu.vector_store %arg9[%c0_310, %c0_311, %c0_312], %571 {strides = array<i32>} : memref<2x8x32xf32, #tpu.memory_space<vmem>>, vector<1x8x32xf32>,
    %c0_313 = arith.constant 0 : index
    %c0_314 = arith.constant 0 : index
    %c0_315 = arith.constant 0 : index
    %572 = vector.load %arg10[%c0_313, %c0_314, %c0_315] : memref<2x8x32xf32, #tpu.memory_space<vmem>>, vector<1x8x32xf32>
    %573 = vector.shape_cast %572 : vector<1x8x32xf32> to vector<8x32xf32>
    %574 = vector.shape_cast %566 : vector<8x32xf32> to vector<1x8x32xf32>
    tpu.vector_store %arg10[%c0_313, %c0_314, %c0_315], %574 {strides = array<i32>} : memref<2x8x32xf32, #tpu.memory_space<vmem>>, vector<1x8x32xf32>,
    %c0_316 = arith.constant 0 : index
    %c0_317 = arith.constant 0 : index
    %c0_318 = arith.constant 0 : index
    %575 = vector.load %arg4[%c0_316, %c0_317, %c0_318] : memref<1x64x128xbf16, #tpu.memory_space<vmem>>, vector<1x64x128xbf16>
    %576 = vector.shape_cast %575 : vector<1x64x128xbf16> to vector<64x128xbf16>
    %577 = arith.truncf %568 : vector<8x32xf32> to vector<8x32xbf16>
    %578 = vector.extract_strided_slice %576 {offsets = [0, 0], sizes = [32, 128], strides = [1, 1]} : vector<64x128xbf16> to vector<32x128xbf16>
    %cst_319 = arith.constant dense<0.000000e+00> : vector<8x128xf32>
    %579 = tpu.matmul %577, %578, %cst_319 {dimension_numbers = #tpu.dot_dimension_numbers<[1], [0], [0], [1], [0, 0, 1, 1], [], []>} : vector<8x32xbf16>, vector<32x128xbf16>, vector<8x128xf32> -> vector<8x128xf32>
    %c1_320 = arith.constant 1 : index
    %c0_321 = arith.constant 0 : index
    %c0_322 = arith.constant 0 : index
    %580 = vector.load %arg9[%c1_320, %c0_321, %c0_322] : memref<2x8x32xf32, #tpu.memory_space<vmem>>, vector<1x8x32xf32>
    %581 = vector.shape_cast %580 : vector<1x8x32xf32> to vector<8x32xf32>
    %582 = arith.truncf %581 : vector<8x32xf32> to vector<8x32xbf16>
    %583 = vector.extract_strided_slice %576 {offsets = [32, 0], sizes = [32, 128], strides = [1, 1]} : vector<64x128xbf16> to vector<32x128xbf16>
    %cst_323 = arith.constant dense<0.000000e+00> : vector<8x128xf32>
    %584 = tpu.matmul %582, %583, %cst_323 {dimension_numbers = #tpu.dot_dimension_numbers<[1], [0], [0], [1], [0, 0, 1, 1], [], []>} : vector<8x32xbf16>, vector<32x128xbf16>, vector<8x128xf32> -> vector<8x128xf32>
    %585 = arith.addf %579, %584 : vector<8x128xf32>
    %c0_324 = arith.constant 0 : index
    %c0_325 = arith.constant 0 : index
    %c0_326 = arith.constant 0 : index
    %586 = vector.load %arg5[%c0_324, %c0_325, %c0_326] : memref<1x1x128xf32, #tpu.memory_space<vmem>>, vector<1x1x128xf32>
    %587 = vector.shape_cast %586 : vector<1x1x128xf32> to vector<1x128xf32>
    %588 = vector.broadcast %587 : vector<1x128xf32> to vector<8x128xf32>
    %589 = arith.addf %585, %588 : vector<8x128xf32>
    %c1_327 = arith.constant 1 : index
    %c0_328 = arith.constant 0 : index
    %c0_329 = arith.constant 0 : index
    %590 = vector.load %arg10[%c1_327, %c0_328, %c0_329] : memref<2x8x32xf32, #tpu.memory_space<vmem>>, vector<1x8x32xf32>
    %591 = vector.shape_cast %590 : vector<1x8x32xf32> to vector<8x32xf32>
    %592 = vector.extract_strided_slice %589 {offsets = [0, 0], sizes = [8, 32], strides = [1, 1]} : vector<8x128xf32> to vector<8x32xf32>
    %cst_330 = arith.constant 0.000000e+00 : f32
    %593 = vector.broadcast %cst_330 : f32 to vector<8x32xf32>
    %594 = arith.subf %593, %592 : vector<8x32xf32>
    %595 = math.exp %594 : vector<8x32xf32>
    %cst_331 = arith.constant 1.000000e+00 : f32
    %596 = vector.broadcast %cst_331 : f32 to vector<8x32xf32>
    %597 = arith.addf %596, %595 : vector<8x32xf32>
    %cst_332 = arith.constant 1.000000e+00 : f32
    %598 = vector.broadcast %cst_332 : f32 to vector<8x32xf32>
    %599 = arith.divf %598, %597 : vector<8x32xf32>
    %600 = vector.extract_strided_slice %589 {offsets = [0, 32], sizes = [8, 32], strides = [1, 1]} : vector<8x128xf32> to vector<8x32xf32>
    %cst_333 = arith.constant 0.000000e+00 : f32
    %601 = vector.broadcast %cst_333 : f32 to vector<8x32xf32>
    %602 = arith.subf %601, %600 : vector<8x32xf32>
    %603 = math.exp %602 : vector<8x32xf32>
    %cst_334 = arith.constant 1.000000e+00 : f32
    %604 = vector.broadcast %cst_334 : f32 to vector<8x32xf32>
    %605 = arith.addf %604, %603 : vector<8x32xf32>
    %cst_335 = arith.constant 1.000000e+00 : f32
    %606 = vector.broadcast %cst_335 : f32 to vector<8x32xf32>
    %607 = arith.divf %606, %605 : vector<8x32xf32>
    %608 = vector.extract_strided_slice %589 {offsets = [0, 64], sizes = [8, 32], strides = [1, 1]} : vector<8x128xf32> to vector<8x32xf32>
    %609 = math.tanh %608 : vector<8x32xf32>
    %610 = vector.extract_strided_slice %589 {offsets = [0, 96], sizes = [8, 32], strides = [1, 1]} : vector<8x128xf32> to vector<8x32xf32>
    %cst_336 = arith.constant 0.000000e+00 : f32
    %611 = vector.broadcast %cst_336 : f32 to vector<8x32xf32>
    %612 = arith.subf %611, %610 : vector<8x32xf32>
    %613 = math.exp %612 : vector<8x32xf32>
    %cst_337 = arith.constant 1.000000e+00 : f32
    %614 = vector.broadcast %cst_337 : f32 to vector<8x32xf32>
    %615 = arith.addf %614, %613 : vector<8x32xf32>
    %cst_338 = arith.constant 1.000000e+00 : f32
    %616 = vector.broadcast %cst_338 : f32 to vector<8x32xf32>
    %617 = arith.divf %616, %615 : vector<8x32xf32>
    %618 = arith.mulf %607, %591 : vector<8x32xf32>
    %619 = arith.mulf %599, %609 : vector<8x32xf32>
    %620 = arith.addf %618, %619 : vector<8x32xf32>
    %621 = math.tanh %620 : vector<8x32xf32>
    %622 = arith.mulf %617, %621 : vector<8x32xf32>
    %c1_339 = arith.constant 1 : index
    %c0_340 = arith.constant 0 : index
    %c0_341 = arith.constant 0 : index
    %623 = vector.load %arg9[%c1_339, %c0_340, %c0_341] : memref<2x8x32xf32, #tpu.memory_space<vmem>>, vector<1x8x32xf32>
    %624 = vector.shape_cast %623 : vector<1x8x32xf32> to vector<8x32xf32>
    %625 = vector.shape_cast %622 : vector<8x32xf32> to vector<1x8x32xf32>
    tpu.vector_store %arg9[%c1_339, %c0_340, %c0_341], %625 {strides = array<i32>} : memref<2x8x32xf32, #tpu.memory_space<vmem>>, vector<1x8x32xf32>,
    %c1_342 = arith.constant 1 : index
    %c0_343 = arith.constant 0 : index
    %c0_344 = arith.constant 0 : index
    %626 = vector.load %arg10[%c1_342, %c0_343, %c0_344] : memref<2x8x32xf32, #tpu.memory_space<vmem>>, vector<1x8x32xf32>
    %627 = vector.shape_cast %626 : vector<1x8x32xf32> to vector<8x32xf32>
    %628 = vector.shape_cast %620 : vector<8x32xf32> to vector<1x8x32xf32>
    tpu.vector_store %arg10[%c1_342, %c0_343, %c0_344], %628 {strides = array<i32>} : memref<2x8x32xf32, #tpu.memory_space<vmem>>, vector<1x8x32xf32>,
    %629 = arith.truncf %622 : vector<8x32xf32> to vector<8x32xbf16>
    %c5_345 = arith.constant 5 : index
    %c0_346 = arith.constant 0 : index
    %c0_347 = arith.constant 0 : index
    %630 = vector.load %arg6[%c5_345, %c0_346, %c0_347] : memref<8x8x32xbf16, #tpu.memory_space<vmem>>, vector<1x8x32xbf16>
    %631 = vector.shape_cast %630 : vector<1x8x32xbf16> to vector<8x32xbf16>
    %632 = vector.shape_cast %629 : vector<8x32xbf16> to vector<1x8x32xbf16>
    tpu.vector_store %arg6[%c5_345, %c0_346, %c0_347], %632 {strides = array<i32>} : memref<8x8x32xbf16, #tpu.memory_space<vmem>>, vector<1x8x32xbf16>,
    %c6 = arith.constant 6 : index
    %c0_348 = arith.constant 0 : index
    %c0_349 = arith.constant 0 : index
    %633 = vector.load %arg2[%c6, %c0_348, %c0_349] : memref<8x8x128xf32, #tpu.memory_space<vmem>>, vector<1x8x128xf32>
    %634 = vector.shape_cast %633 : vector<1x8x128xf32> to vector<8x128xf32>
    %c0_350 = arith.constant 0 : index
    %c0_351 = arith.constant 0 : index
    %c0_352 = arith.constant 0 : index
    %635 = vector.load %arg9[%c0_350, %c0_351, %c0_352] : memref<2x8x32xf32, #tpu.memory_space<vmem>>, vector<1x8x32xf32>
    %636 = vector.shape_cast %635 : vector<1x8x32xf32> to vector<8x32xf32>
    %637 = arith.truncf %636 : vector<8x32xf32> to vector<8x32xbf16>
    %c0_353 = arith.constant 0 : index
    %c0_354 = arith.constant 0 : index
    %638 = vector.load %arg3[%c0_353, %c0_354] : memref<32x128xbf16, #tpu.memory_space<vmem>>, vector<32x128xbf16>
    %cst_355 = arith.constant dense<0.000000e+00> : vector<8x128xf32>
    %639 = tpu.matmul %637, %638, %cst_355 {dimension_numbers = #tpu.dot_dimension_numbers<[1], [0], [0], [1], [0, 0, 1, 1], [], []>} : vector<8x32xbf16>, vector<32x128xbf16>, vector<8x128xf32> -> vector<8x128xf32>
    %640 = arith.addf %634, %639 : vector<8x128xf32>
    %c0_356 = arith.constant 0 : index
    %c0_357 = arith.constant 0 : index
    %c0_358 = arith.constant 0 : index
    %641 = vector.load %arg10[%c0_356, %c0_357, %c0_358] : memref<2x8x32xf32, #tpu.memory_space<vmem>>, vector<1x8x32xf32>
    %642 = vector.shape_cast %641 : vector<1x8x32xf32> to vector<8x32xf32>
    %643 = vector.extract_strided_slice %640 {offsets = [0, 0], sizes = [8, 32], strides = [1, 1]} : vector<8x128xf32> to vector<8x32xf32>
    %cst_359 = arith.constant 0.000000e+00 : f32
    %644 = vector.broadcast %cst_359 : f32 to vector<8x32xf32>
    %645 = arith.subf %644, %643 : vector<8x32xf32>
    %646 = math.exp %645 : vector<8x32xf32>
    %cst_360 = arith.constant 1.000000e+00 : f32
    %647 = vector.broadcast %cst_360 : f32 to vector<8x32xf32>
    %648 = arith.addf %647, %646 : vector<8x32xf32>
    %cst_361 = arith.constant 1.000000e+00 : f32
    %649 = vector.broadcast %cst_361 : f32 to vector<8x32xf32>
    %650 = arith.divf %649, %648 : vector<8x32xf32>
    %651 = vector.extract_strided_slice %640 {offsets = [0, 32], sizes = [8, 32], strides = [1, 1]} : vector<8x128xf32> to vector<8x32xf32>
    %cst_362 = arith.constant 0.000000e+00 : f32
    %652 = vector.broadcast %cst_362 : f32 to vector<8x32xf32>
    %653 = arith.subf %652, %651 : vector<8x32xf32>
    %654 = math.exp %653 : vector<8x32xf32>
    %cst_363 = arith.constant 1.000000e+00 : f32
    %655 = vector.broadcast %cst_363 : f32 to vector<8x32xf32>
    %656 = arith.addf %655, %654 : vector<8x32xf32>
    %cst_364 = arith.constant 1.000000e+00 : f32
    %657 = vector.broadcast %cst_364 : f32 to vector<8x32xf32>
    %658 = arith.divf %657, %656 : vector<8x32xf32>
    %659 = vector.extract_strided_slice %640 {offsets = [0, 64], sizes = [8, 32], strides = [1, 1]} : vector<8x128xf32> to vector<8x32xf32>
    %660 = math.tanh %659 : vector<8x32xf32>
    %661 = vector.extract_strided_slice %640 {offsets = [0, 96], sizes = [8, 32], strides = [1, 1]} : vector<8x128xf32> to vector<8x32xf32>
    %cst_365 = arith.constant 0.000000e+00 : f32
    %662 = vector.broadcast %cst_365 : f32 to vector<8x32xf32>
    %663 = arith.subf %662, %661 : vector<8x32xf32>
    %664 = math.exp %663 : vector<8x32xf32>
    %cst_366 = arith.constant 1.000000e+00 : f32
    %665 = vector.broadcast %cst_366 : f32 to vector<8x32xf32>
    %666 = arith.addf %665, %664 : vector<8x32xf32>
    %cst_367 = arith.constant 1.000000e+00 : f32
    %667 = vector.broadcast %cst_367 : f32 to vector<8x32xf32>
    %668 = arith.divf %667, %666 : vector<8x32xf32>
    %669 = arith.mulf %658, %642 : vector<8x32xf32>
    %670 = arith.mulf %650, %660 : vector<8x32xf32>
    %671 = arith.addf %669, %670 : vector<8x32xf32>
    %672 = math.tanh %671 : vector<8x32xf32>
    %673 = arith.mulf %668, %672 : vector<8x32xf32>
    %c0_368 = arith.constant 0 : index
    %c0_369 = arith.constant 0 : index
    %c0_370 = arith.constant 0 : index
    %674 = vector.load %arg9[%c0_368, %c0_369, %c0_370] : memref<2x8x32xf32, #tpu.memory_space<vmem>>, vector<1x8x32xf32>
    %675 = vector.shape_cast %674 : vector<1x8x32xf32> to vector<8x32xf32>
    %676 = vector.shape_cast %673 : vector<8x32xf32> to vector<1x8x32xf32>
    tpu.vector_store %arg9[%c0_368, %c0_369, %c0_370], %676 {strides = array<i32>} : memref<2x8x32xf32, #tpu.memory_space<vmem>>, vector<1x8x32xf32>,
    %c0_371 = arith.constant 0 : index
    %c0_372 = arith.constant 0 : index
    %c0_373 = arith.constant 0 : index
    %677 = vector.load %arg10[%c0_371, %c0_372, %c0_373] : memref<2x8x32xf32, #tpu.memory_space<vmem>>, vector<1x8x32xf32>
    %678 = vector.shape_cast %677 : vector<1x8x32xf32> to vector<8x32xf32>
    %679 = vector.shape_cast %671 : vector<8x32xf32> to vector<1x8x32xf32>
    tpu.vector_store %arg10[%c0_371, %c0_372, %c0_373], %679 {strides = array<i32>} : memref<2x8x32xf32, #tpu.memory_space<vmem>>, vector<1x8x32xf32>,
    %c0_374 = arith.constant 0 : index
    %c0_375 = arith.constant 0 : index
    %c0_376 = arith.constant 0 : index
    %680 = vector.load %arg4[%c0_374, %c0_375, %c0_376] : memref<1x64x128xbf16, #tpu.memory_space<vmem>>, vector<1x64x128xbf16>
    %681 = vector.shape_cast %680 : vector<1x64x128xbf16> to vector<64x128xbf16>
    %682 = arith.truncf %673 : vector<8x32xf32> to vector<8x32xbf16>
    %683 = vector.extract_strided_slice %681 {offsets = [0, 0], sizes = [32, 128], strides = [1, 1]} : vector<64x128xbf16> to vector<32x128xbf16>
    %cst_377 = arith.constant dense<0.000000e+00> : vector<8x128xf32>
    %684 = tpu.matmul %682, %683, %cst_377 {dimension_numbers = #tpu.dot_dimension_numbers<[1], [0], [0], [1], [0, 0, 1, 1], [], []>} : vector<8x32xbf16>, vector<32x128xbf16>, vector<8x128xf32> -> vector<8x128xf32>
    %c1_378 = arith.constant 1 : index
    %c0_379 = arith.constant 0 : index
    %c0_380 = arith.constant 0 : index
    %685 = vector.load %arg9[%c1_378, %c0_379, %c0_380] : memref<2x8x32xf32, #tpu.memory_space<vmem>>, vector<1x8x32xf32>
    %686 = vector.shape_cast %685 : vector<1x8x32xf32> to vector<8x32xf32>
    %687 = arith.truncf %686 : vector<8x32xf32> to vector<8x32xbf16>
    %688 = vector.extract_strided_slice %681 {offsets = [32, 0], sizes = [32, 128], strides = [1, 1]} : vector<64x128xbf16> to vector<32x128xbf16>
    %cst_381 = arith.constant dense<0.000000e+00> : vector<8x128xf32>
    %689 = tpu.matmul %687, %688, %cst_381 {dimension_numbers = #tpu.dot_dimension_numbers<[1], [0], [0], [1], [0, 0, 1, 1], [], []>} : vector<8x32xbf16>, vector<32x128xbf16>, vector<8x128xf32> -> vector<8x128xf32>
    %690 = arith.addf %684, %689 : vector<8x128xf32>
    %c0_382 = arith.constant 0 : index
    %c0_383 = arith.constant 0 : index
    %c0_384 = arith.constant 0 : index
    %691 = vector.load %arg5[%c0_382, %c0_383, %c0_384] : memref<1x1x128xf32, #tpu.memory_space<vmem>>, vector<1x1x128xf32>
    %692 = vector.shape_cast %691 : vector<1x1x128xf32> to vector<1x128xf32>
    %693 = vector.broadcast %692 : vector<1x128xf32> to vector<8x128xf32>
    %694 = arith.addf %690, %693 : vector<8x128xf32>
    %c1_385 = arith.constant 1 : index
    %c0_386 = arith.constant 0 : index
    %c0_387 = arith.constant 0 : index
    %695 = vector.load %arg10[%c1_385, %c0_386, %c0_387] : memref<2x8x32xf32, #tpu.memory_space<vmem>>, vector<1x8x32xf32>
    %696 = vector.shape_cast %695 : vector<1x8x32xf32> to vector<8x32xf32>
    %697 = vector.extract_strided_slice %694 {offsets = [0, 0], sizes = [8, 32], strides = [1, 1]} : vector<8x128xf32> to vector<8x32xf32>
    %cst_388 = arith.constant 0.000000e+00 : f32
    %698 = vector.broadcast %cst_388 : f32 to vector<8x32xf32>
    %699 = arith.subf %698, %697 : vector<8x32xf32>
    %700 = math.exp %699 : vector<8x32xf32>
    %cst_389 = arith.constant 1.000000e+00 : f32
    %701 = vector.broadcast %cst_389 : f32 to vector<8x32xf32>
    %702 = arith.addf %701, %700 : vector<8x32xf32>
    %cst_390 = arith.constant 1.000000e+00 : f32
    %703 = vector.broadcast %cst_390 : f32 to vector<8x32xf32>
    %704 = arith.divf %703, %702 : vector<8x32xf32>
    %705 = vector.extract_strided_slice %694 {offsets = [0, 32], sizes = [8, 32], strides = [1, 1]} : vector<8x128xf32> to vector<8x32xf32>
    %cst_391 = arith.constant 0.000000e+00 : f32
    %706 = vector.broadcast %cst_391 : f32 to vector<8x32xf32>
    %707 = arith.subf %706, %705 : vector<8x32xf32>
    %708 = math.exp %707 : vector<8x32xf32>
    %cst_392 = arith.constant 1.000000e+00 : f32
    %709 = vector.broadcast %cst_392 : f32 to vector<8x32xf32>
    %710 = arith.addf %709, %708 : vector<8x32xf32>
    %cst_393 = arith.constant 1.000000e+00 : f32
    %711 = vector.broadcast %cst_393 : f32 to vector<8x32xf32>
    %712 = arith.divf %711, %710 : vector<8x32xf32>
    %713 = vector.extract_strided_slice %694 {offsets = [0, 64], sizes = [8, 32], strides = [1, 1]} : vector<8x128xf32> to vector<8x32xf32>
    %714 = math.tanh %713 : vector<8x32xf32>
    %715 = vector.extract_strided_slice %694 {offsets = [0, 96], sizes = [8, 32], strides = [1, 1]} : vector<8x128xf32> to vector<8x32xf32>
    %cst_394 = arith.constant 0.000000e+00 : f32
    %716 = vector.broadcast %cst_394 : f32 to vector<8x32xf32>
    %717 = arith.subf %716, %715 : vector<8x32xf32>
    %718 = math.exp %717 : vector<8x32xf32>
    %cst_395 = arith.constant 1.000000e+00 : f32
    %719 = vector.broadcast %cst_395 : f32 to vector<8x32xf32>
    %720 = arith.addf %719, %718 : vector<8x32xf32>
    %cst_396 = arith.constant 1.000000e+00 : f32
    %721 = vector.broadcast %cst_396 : f32 to vector<8x32xf32>
    %722 = arith.divf %721, %720 : vector<8x32xf32>
    %723 = arith.mulf %712, %696 : vector<8x32xf32>
    %724 = arith.mulf %704, %714 : vector<8x32xf32>
    %725 = arith.addf %723, %724 : vector<8x32xf32>
    %726 = math.tanh %725 : vector<8x32xf32>
    %727 = arith.mulf %722, %726 : vector<8x32xf32>
    %c1_397 = arith.constant 1 : index
    %c0_398 = arith.constant 0 : index
    %c0_399 = arith.constant 0 : index
    %728 = vector.load %arg9[%c1_397, %c0_398, %c0_399] : memref<2x8x32xf32, #tpu.memory_space<vmem>>, vector<1x8x32xf32>
    %729 = vector.shape_cast %728 : vector<1x8x32xf32> to vector<8x32xf32>
    %730 = vector.shape_cast %727 : vector<8x32xf32> to vector<1x8x32xf32>
    tpu.vector_store %arg9[%c1_397, %c0_398, %c0_399], %730 {strides = array<i32>} : memref<2x8x32xf32, #tpu.memory_space<vmem>>, vector<1x8x32xf32>,
    %c1_400 = arith.constant 1 : index
    %c0_401 = arith.constant 0 : index
    %c0_402 = arith.constant 0 : index
    %731 = vector.load %arg10[%c1_400, %c0_401, %c0_402] : memref<2x8x32xf32, #tpu.memory_space<vmem>>, vector<1x8x32xf32>
    %732 = vector.shape_cast %731 : vector<1x8x32xf32> to vector<8x32xf32>
    %733 = vector.shape_cast %725 : vector<8x32xf32> to vector<1x8x32xf32>
    tpu.vector_store %arg10[%c1_400, %c0_401, %c0_402], %733 {strides = array<i32>} : memref<2x8x32xf32, #tpu.memory_space<vmem>>, vector<1x8x32xf32>,
    %734 = arith.truncf %727 : vector<8x32xf32> to vector<8x32xbf16>
    %c6_403 = arith.constant 6 : index
    %c0_404 = arith.constant 0 : index
    %c0_405 = arith.constant 0 : index
    %735 = vector.load %arg6[%c6_403, %c0_404, %c0_405] : memref<8x8x32xbf16, #tpu.memory_space<vmem>>, vector<1x8x32xbf16>
    %736 = vector.shape_cast %735 : vector<1x8x32xbf16> to vector<8x32xbf16>
    %737 = vector.shape_cast %734 : vector<8x32xbf16> to vector<1x8x32xbf16>
    tpu.vector_store %arg6[%c6_403, %c0_404, %c0_405], %737 {strides = array<i32>} : memref<8x8x32xbf16, #tpu.memory_space<vmem>>, vector<1x8x32xbf16>,
    %c7 = arith.constant 7 : index
    %c0_406 = arith.constant 0 : index
    %c0_407 = arith.constant 0 : index
    %738 = vector.load %arg2[%c7, %c0_406, %c0_407] : memref<8x8x128xf32, #tpu.memory_space<vmem>>, vector<1x8x128xf32>
    %739 = vector.shape_cast %738 : vector<1x8x128xf32> to vector<8x128xf32>
    %c0_408 = arith.constant 0 : index
    %c0_409 = arith.constant 0 : index
    %c0_410 = arith.constant 0 : index
    %740 = vector.load %arg9[%c0_408, %c0_409, %c0_410] : memref<2x8x32xf32, #tpu.memory_space<vmem>>, vector<1x8x32xf32>
    %741 = vector.shape_cast %740 : vector<1x8x32xf32> to vector<8x32xf32>
    %742 = arith.truncf %741 : vector<8x32xf32> to vector<8x32xbf16>
    %c0_411 = arith.constant 0 : index
    %c0_412 = arith.constant 0 : index
    %743 = vector.load %arg3[%c0_411, %c0_412] : memref<32x128xbf16, #tpu.memory_space<vmem>>, vector<32x128xbf16>
    %cst_413 = arith.constant dense<0.000000e+00> : vector<8x128xf32>
    %744 = tpu.matmul %742, %743, %cst_413 {dimension_numbers = #tpu.dot_dimension_numbers<[1], [0], [0], [1], [0, 0, 1, 1], [], []>} : vector<8x32xbf16>, vector<32x128xbf16>, vector<8x128xf32> -> vector<8x128xf32>
    %745 = arith.addf %739, %744 : vector<8x128xf32>
    %c0_414 = arith.constant 0 : index
    %c0_415 = arith.constant 0 : index
    %c0_416 = arith.constant 0 : index
    %746 = vector.load %arg10[%c0_414, %c0_415, %c0_416] : memref<2x8x32xf32, #tpu.memory_space<vmem>>, vector<1x8x32xf32>
    %747 = vector.shape_cast %746 : vector<1x8x32xf32> to vector<8x32xf32>
    %748 = vector.extract_strided_slice %745 {offsets = [0, 0], sizes = [8, 32], strides = [1, 1]} : vector<8x128xf32> to vector<8x32xf32>
    %cst_417 = arith.constant 0.000000e+00 : f32
    %749 = vector.broadcast %cst_417 : f32 to vector<8x32xf32>
    %750 = arith.subf %749, %748 : vector<8x32xf32>
    %751 = math.exp %750 : vector<8x32xf32>
    %cst_418 = arith.constant 1.000000e+00 : f32
    %752 = vector.broadcast %cst_418 : f32 to vector<8x32xf32>
    %753 = arith.addf %752, %751 : vector<8x32xf32>
    %cst_419 = arith.constant 1.000000e+00 : f32
    %754 = vector.broadcast %cst_419 : f32 to vector<8x32xf32>
    %755 = arith.divf %754, %753 : vector<8x32xf32>
    %756 = vector.extract_strided_slice %745 {offsets = [0, 32], sizes = [8, 32], strides = [1, 1]} : vector<8x128xf32> to vector<8x32xf32>
    %cst_420 = arith.constant 0.000000e+00 : f32
    %757 = vector.broadcast %cst_420 : f32 to vector<8x32xf32>
    %758 = arith.subf %757, %756 : vector<8x32xf32>
    %759 = math.exp %758 : vector<8x32xf32>
    %cst_421 = arith.constant 1.000000e+00 : f32
    %760 = vector.broadcast %cst_421 : f32 to vector<8x32xf32>
    %761 = arith.addf %760, %759 : vector<8x32xf32>
    %cst_422 = arith.constant 1.000000e+00 : f32
    %762 = vector.broadcast %cst_422 : f32 to vector<8x32xf32>
    %763 = arith.divf %762, %761 : vector<8x32xf32>
    %764 = vector.extract_strided_slice %745 {offsets = [0, 64], sizes = [8, 32], strides = [1, 1]} : vector<8x128xf32> to vector<8x32xf32>
    %765 = math.tanh %764 : vector<8x32xf32>
    %766 = vector.extract_strided_slice %745 {offsets = [0, 96], sizes = [8, 32], strides = [1, 1]} : vector<8x128xf32> to vector<8x32xf32>
    %cst_423 = arith.constant 0.000000e+00 : f32
    %767 = vector.broadcast %cst_423 : f32 to vector<8x32xf32>
    %768 = arith.subf %767, %766 : vector<8x32xf32>
    %769 = math.exp %768 : vector<8x32xf32>
    %cst_424 = arith.constant 1.000000e+00 : f32
    %770 = vector.broadcast %cst_424 : f32 to vector<8x32xf32>
    %771 = arith.addf %770, %769 : vector<8x32xf32>
    %cst_425 = arith.constant 1.000000e+00 : f32
    %772 = vector.broadcast %cst_425 : f32 to vector<8x32xf32>
    %773 = arith.divf %772, %771 : vector<8x32xf32>
    %774 = arith.mulf %763, %747 : vector<8x32xf32>
    %775 = arith.mulf %755, %765 : vector<8x32xf32>
    %776 = arith.addf %774, %775 : vector<8x32xf32>
    %777 = math.tanh %776 : vector<8x32xf32>
    %778 = arith.mulf %773, %777 : vector<8x32xf32>
    %c0_426 = arith.constant 0 : index
    %c0_427 = arith.constant 0 : index
    %c0_428 = arith.constant 0 : index
    %779 = vector.load %arg9[%c0_426, %c0_427, %c0_428] : memref<2x8x32xf32, #tpu.memory_space<vmem>>, vector<1x8x32xf32>
    %780 = vector.shape_cast %779 : vector<1x8x32xf32> to vector<8x32xf32>
    %781 = vector.shape_cast %778 : vector<8x32xf32> to vector<1x8x32xf32>
    tpu.vector_store %arg9[%c0_426, %c0_427, %c0_428], %781 {strides = array<i32>} : memref<2x8x32xf32, #tpu.memory_space<vmem>>, vector<1x8x32xf32>,
    %c0_429 = arith.constant 0 : index
    %c0_430 = arith.constant 0 : index
    %c0_431 = arith.constant 0 : index
    %782 = vector.load %arg10[%c0_429, %c0_430, %c0_431] : memref<2x8x32xf32, #tpu.memory_space<vmem>>, vector<1x8x32xf32>
    %783 = vector.shape_cast %782 : vector<1x8x32xf32> to vector<8x32xf32>
    %784 = vector.shape_cast %776 : vector<8x32xf32> to vector<1x8x32xf32>
    tpu.vector_store %arg10[%c0_429, %c0_430, %c0_431], %784 {strides = array<i32>} : memref<2x8x32xf32, #tpu.memory_space<vmem>>, vector<1x8x32xf32>,
    %c0_432 = arith.constant 0 : index
    %c0_433 = arith.constant 0 : index
    %c0_434 = arith.constant 0 : index
    %785 = vector.load %arg4[%c0_432, %c0_433, %c0_434] : memref<1x64x128xbf16, #tpu.memory_space<vmem>>, vector<1x64x128xbf16>
    %786 = vector.shape_cast %785 : vector<1x64x128xbf16> to vector<64x128xbf16>
    %787 = arith.truncf %778 : vector<8x32xf32> to vector<8x32xbf16>
    %788 = vector.extract_strided_slice %786 {offsets = [0, 0], sizes = [32, 128], strides = [1, 1]} : vector<64x128xbf16> to vector<32x128xbf16>
    %cst_435 = arith.constant dense<0.000000e+00> : vector<8x128xf32>
    %789 = tpu.matmul %787, %788, %cst_435 {dimension_numbers = #tpu.dot_dimension_numbers<[1], [0], [0], [1], [0, 0, 1, 1], [], []>} : vector<8x32xbf16>, vector<32x128xbf16>, vector<8x128xf32> -> vector<8x128xf32>
    %c1_436 = arith.constant 1 : index
    %c0_437 = arith.constant 0 : index
    %c0_438 = arith.constant 0 : index
    %790 = vector.load %arg9[%c1_436, %c0_437, %c0_438] : memref<2x8x32xf32, #tpu.memory_space<vmem>>, vector<1x8x32xf32>
    %791 = vector.shape_cast %790 : vector<1x8x32xf32> to vector<8x32xf32>
    %792 = arith.truncf %791 : vector<8x32xf32> to vector<8x32xbf16>
    %793 = vector.extract_strided_slice %786 {offsets = [32, 0], sizes = [32, 128], strides = [1, 1]} : vector<64x128xbf16> to vector<32x128xbf16>
    %cst_439 = arith.constant dense<0.000000e+00> : vector<8x128xf32>
    %794 = tpu.matmul %792, %793, %cst_439 {dimension_numbers = #tpu.dot_dimension_numbers<[1], [0], [0], [1], [0, 0, 1, 1], [], []>} : vector<8x32xbf16>, vector<32x128xbf16>, vector<8x128xf32> -> vector<8x128xf32>
    %795 = arith.addf %789, %794 : vector<8x128xf32>
    %c0_440 = arith.constant 0 : index
    %c0_441 = arith.constant 0 : index
    %c0_442 = arith.constant 0 : index
    %796 = vector.load %arg5[%c0_440, %c0_441, %c0_442] : memref<1x1x128xf32, #tpu.memory_space<vmem>>, vector<1x1x128xf32>
    %797 = vector.shape_cast %796 : vector<1x1x128xf32> to vector<1x128xf32>
    %798 = vector.broadcast %797 : vector<1x128xf32> to vector<8x128xf32>
    %799 = arith.addf %795, %798 : vector<8x128xf32>
    %c1_443 = arith.constant 1 : index
    %c0_444 = arith.constant 0 : index
    %c0_445 = arith.constant 0 : index
    %800 = vector.load %arg10[%c1_443, %c0_444, %c0_445] : memref<2x8x32xf32, #tpu.memory_space<vmem>>, vector<1x8x32xf32>
    %801 = vector.shape_cast %800 : vector<1x8x32xf32> to vector<8x32xf32>
    %802 = vector.extract_strided_slice %799 {offsets = [0, 0], sizes = [8, 32], strides = [1, 1]} : vector<8x128xf32> to vector<8x32xf32>
    %cst_446 = arith.constant 0.000000e+00 : f32
    %803 = vector.broadcast %cst_446 : f32 to vector<8x32xf32>
    %804 = arith.subf %803, %802 : vector<8x32xf32>
    %805 = math.exp %804 : vector<8x32xf32>
    %cst_447 = arith.constant 1.000000e+00 : f32
    %806 = vector.broadcast %cst_447 : f32 to vector<8x32xf32>
    %807 = arith.addf %806, %805 : vector<8x32xf32>
    %cst_448 = arith.constant 1.000000e+00 : f32
    %808 = vector.broadcast %cst_448 : f32 to vector<8x32xf32>
    %809 = arith.divf %808, %807 : vector<8x32xf32>
    %810 = vector.extract_strided_slice %799 {offsets = [0, 32], sizes = [8, 32], strides = [1, 1]} : vector<8x128xf32> to vector<8x32xf32>
    %cst_449 = arith.constant 0.000000e+00 : f32
    %811 = vector.broadcast %cst_449 : f32 to vector<8x32xf32>
    %812 = arith.subf %811, %810 : vector<8x32xf32>
    %813 = math.exp %812 : vector<8x32xf32>
    %cst_450 = arith.constant 1.000000e+00 : f32
    %814 = vector.broadcast %cst_450 : f32 to vector<8x32xf32>
    %815 = arith.addf %814, %813 : vector<8x32xf32>
    %cst_451 = arith.constant 1.000000e+00 : f32
    %816 = vector.broadcast %cst_451 : f32 to vector<8x32xf32>
    %817 = arith.divf %816, %815 : vector<8x32xf32>
    %818 = vector.extract_strided_slice %799 {offsets = [0, 64], sizes = [8, 32], strides = [1, 1]} : vector<8x128xf32> to vector<8x32xf32>
    %819 = math.tanh %818 : vector<8x32xf32>
    %820 = vector.extract_strided_slice %799 {offsets = [0, 96], sizes = [8, 32], strides = [1, 1]} : vector<8x128xf32> to vector<8x32xf32>
    %cst_452 = arith.constant 0.000000e+00 : f32
    %821 = vector.broadcast %cst_452 : f32 to vector<8x32xf32>
    %822 = arith.subf %821, %820 : vector<8x32xf32>
    %823 = math.exp %822 : vector<8x32xf32>
    %cst_453 = arith.constant 1.000000e+00 : f32
    %824 = vector.broadcast %cst_453 : f32 to vector<8x32xf32>
    %825 = arith.addf %824, %823 : vector<8x32xf32>
    %cst_454 = arith.constant 1.000000e+00 : f32
    %826 = vector.broadcast %cst_454 : f32 to vector<8x32xf32>
    %827 = arith.divf %826, %825 : vector<8x32xf32>
    %828 = arith.mulf %817, %801 : vector<8x32xf32>
    %829 = arith.mulf %809, %819 : vector<8x32xf32>
    %830 = arith.addf %828, %829 : vector<8x32xf32>
    %831 = math.tanh %830 : vector<8x32xf32>
    %832 = arith.mulf %827, %831 : vector<8x32xf32>
    %c1_455 = arith.constant 1 : index
    %c0_456 = arith.constant 0 : index
    %c0_457 = arith.constant 0 : index
    %833 = vector.load %arg9[%c1_455, %c0_456, %c0_457] : memref<2x8x32xf32, #tpu.memory_space<vmem>>, vector<1x8x32xf32>
    %834 = vector.shape_cast %833 : vector<1x8x32xf32> to vector<8x32xf32>
    %835 = vector.shape_cast %832 : vector<8x32xf32> to vector<1x8x32xf32>
    tpu.vector_store %arg9[%c1_455, %c0_456, %c0_457], %835 {strides = array<i32>} : memref<2x8x32xf32, #tpu.memory_space<vmem>>, vector<1x8x32xf32>,
    %c1_458 = arith.constant 1 : index
    %c0_459 = arith.constant 0 : index
    %c0_460 = arith.constant 0 : index
    %836 = vector.load %arg10[%c1_458, %c0_459, %c0_460] : memref<2x8x32xf32, #tpu.memory_space<vmem>>, vector<1x8x32xf32>
    %837 = vector.shape_cast %836 : vector<1x8x32xf32> to vector<8x32xf32>
    %838 = vector.shape_cast %830 : vector<8x32xf32> to vector<1x8x32xf32>
    tpu.vector_store %arg10[%c1_458, %c0_459, %c0_460], %838 {strides = array<i32>} : memref<2x8x32xf32, #tpu.memory_space<vmem>>, vector<1x8x32xf32>,
    %839 = arith.truncf %832 : vector<8x32xf32> to vector<8x32xbf16>
    %c7_461 = arith.constant 7 : index
    %c0_462 = arith.constant 0 : index
    %c0_463 = arith.constant 0 : index
    %840 = vector.load %arg6[%c7_461, %c0_462, %c0_463] : memref<8x8x32xbf16, #tpu.memory_space<vmem>>, vector<1x8x32xbf16>
    %841 = vector.shape_cast %840 : vector<1x8x32xbf16> to vector<8x32xbf16>
    %842 = vector.shape_cast %839 : vector<8x32xbf16> to vector<1x8x32xbf16>
    tpu.vector_store %arg6[%c7_461, %c0_462, %c0_463], %842 {strides = array<i32>} : memref<8x8x32xbf16, #tpu.memory_space<vmem>>, vector<1x8x32xbf16>,
    %c0_i32_464 = arith.constant 0 : i32
    %843 = arith.cmpi eq, %arg1, %c0_i32_464 : i32
    %844 = arith.extui %843 : i1 to i32
    %c0_i32_465 = arith.constant 0 : i32
    %845 = arith.cmpi ne, %844, %c0_i32_465 : i32
    scf.if %845 {
      %c0_466 = arith.constant 0 : index
      %c0_467 = arith.constant 0 : index
      %c0_468 = arith.constant 0 : index
      %846 = vector.load %arg9[%c0_466, %c0_467, %c0_468] : memref<2x8x32xf32, #tpu.memory_space<vmem>>, vector<2x8x32xf32>
      %c0_469 = arith.constant 0 : index
      %c0_470 = arith.constant 0 : index
      %c0_471 = arith.constant 0 : index
      %847 = vector.load %arg7[%c0_469, %c0_470, %c0_471] : memref<2x8x32xf32, #tpu.memory_space<vmem>>, vector<2x8x32xf32>
      tpu.vector_store %arg7[%c0_469, %c0_470, %c0_471], %846 {strides = array<i32>} : memref<2x8x32xf32, #tpu.memory_space<vmem>>, vector<2x8x32xf32>,
      %c0_472 = arith.constant 0 : index
      %c0_473 = arith.constant 0 : index
      %c0_474 = arith.constant 0 : index
      %848 = vector.load %arg10[%c0_472, %c0_473, %c0_474] : memref<2x8x32xf32, #tpu.memory_space<vmem>>, vector<2x8x32xf32>
      %c0_475 = arith.constant 0 : index
      %c0_476 = arith.constant 0 : index
      %c0_477 = arith.constant 0 : index
      %849 = vector.load %arg8[%c0_475, %c0_476, %c0_477] : memref<2x8x32xf32, #tpu.memory_space<vmem>>, vector<2x8x32xf32>
      tpu.vector_store %arg8[%c0_475, %c0_476, %c0_477], %848 {strides = array<i32>} : memref<2x8x32xf32, #tpu.memory_space<vmem>>, vector<2x8x32xf32>,
    } else {
    }
    return
  }
  func.func @transform_0(%arg0: i32, %arg1: i32) -> (i32, i32, i32) {
    %c0_i32 = arith.constant 0 : i32
    %c0_i32_0 = arith.constant 0 : i32
    return %arg1, %arg0, %c0_i32 : i32, i32, i32
  }
  func.func @transform_1(%arg0: i32, %arg1: i32) -> (i32, i32) {
    %c0_i32 = arith.constant 0 : i32
    %c0_i32_0 = arith.constant 0 : i32
    %c0_i32_1 = arith.constant 0 : i32
    return %c0_i32, %c0_i32_0 : i32, i32
  }
  func.func @transform_2(%arg0: i32, %arg1: i32) -> (i32, i32, i32) {
    %c0_i32 = arith.constant 0 : i32
    %c0_i32_0 = arith.constant 0 : i32
    %c0_i32_1 = arith.constant 0 : i32
    %c0_i32_2 = arith.constant 0 : i32
    return %c0_i32, %c0_i32_0, %c0_i32_1 : i32, i32, i32
  }
  func.func @transform_3(%arg0: i32, %arg1: i32) -> (i32, i32, i32) {
    %c0_i32 = arith.constant 0 : i32
    %c0_i32_0 = arith.constant 0 : i32
    %c0_i32_1 = arith.constant 0 : i32
    %c0_i32_2 = arith.constant 0 : i32
    return %c0_i32, %c0_i32_0, %c0_i32_1 : i32, i32, i32
  }
  func.func @transform_4(%arg0: i32, %arg1: i32) -> (i32, i32, i32) {
    %c0_i32 = arith.constant 0 : i32
    %c0_i32_0 = arith.constant 0 : i32
    return %arg1, %arg0, %c0_i32 : i32, i32, i32
  }
  func.func @transform_5(%arg0: i32, %arg1: i32) -> (i32, i32, i32) {
    %c0_i32 = arith.constant 0 : i32
    %c0_i32_0 = arith.constant 0 : i32
    %c0_i32_1 = arith.constant 0 : i32
    return %c0_i32, %arg0, %c0_i32_0 : i32, i32, i32
  }
  func.func @transform_6(%arg0: i32, %arg1: i32) -> (i32, i32, i32) {
    %c0_i32 = arith.constant 0 : i32
    %c0_i32_0 = arith.constant 0 : i32
    %c0_i32_1 = arith.constant 0 : i32
    return %c0_i32, %arg0, %c0_i32_0 : i32, i32, i32
  }
}

module attributes {stable_mosaic.version = 11 : i64} {
  func.func @kernel(%arg0: i32, %arg1: i32, %arg2: memref<8x8x128xf32, #tpu.memory_space<vmem>>, %arg3: memref<32x128xbf16, #tpu.memory_space<vmem>>, %arg4: memref<1x64x128xbf16, #tpu.memory_space<vmem>>, %arg5: memref<1x1x128xf32, #tpu.memory_space<vmem>>, %arg6: memref<8x8x32xbf16, #tpu.memory_space<vmem>>, %arg7: memref<2x8x32xf32, #tpu.memory_space<vmem>>, %arg8: memref<2x8x32xf32, #tpu.memory_space<vmem>>, %arg9: memref<2x8x32xf32, #tpu.memory_space<vmem>>, %arg10: memref<2x8x32xf32, #tpu.memory_space<vmem>>) attributes {dimension_semantics = [#tpu.dimension_semantics<parallel>, #tpu.dimension_semantics<arbitrary>], iteration_bounds = array<i64: 1, 1>, scalar_prefetch = 0 : i64, scratch_operands = 2 : i64, tpu.core_type = #tpu.core_type<tc>, window_params = [{transform_indices = @transform_0, window_bounds = array<i64: 8, 8, 128>}, {pipeline_mode = #tpu.pipeline_mode<synchronous>, transform_indices = @transform_1, window_bounds = array<i64: 32, 128>}, {pipeline_mode = #tpu.pipeline_mode<synchronous>, transform_indices = @transform_2, window_bounds = array<i64: 1, 64, 128>}, {pipeline_mode = #tpu.pipeline_mode<synchronous>, transform_indices = @transform_3, window_bounds = array<i64: 1, 1, 128>}, {transform_indices = @transform_4, window_bounds = array<i64: 8, 8, 32>}, {transform_indices = @transform_5, window_bounds = array<i64: 2, 8, 32>}, {transform_indices = @transform_6, window_bounds = array<i64: 2, 8, 32>}]} {
    %c0_i32 = arith.constant 0 : i32
    %0 = arith.cmpi eq, %arg1, %c0_i32 : i32
    %1 = arith.extui %0 : i1 to i32
    %c0_i32_0 = arith.constant 0 : i32
    %2 = arith.cmpi ne, %1, %c0_i32_0 : i32
    scf.if %2 {
      %cst_466 = arith.constant 0.000000e+00 : f32
      %846 = vector.broadcast %cst_466 : f32 to vector<2x8x32xf32>
      %c0_467 = arith.constant 0 : index
      %c0_468 = arith.constant 0 : index
      %c0_469 = arith.constant 0 : index
      %847 = vector.load %arg9[%c0_467, %c0_468, %c0_469] : memref<2x8x32xf32, #tpu.memory_space<vmem>>, vector<2x8x32xf32>
      tpu.vector_store %arg9[%c0_467, %c0_468, %c0_469], %846 {strides = array<i32>} : memref<2x8x32xf32, #tpu.memory_space<vmem>>, vector<2x8x32xf32>,
      %cst_470 = arith.constant 0.000000e+00 : f32
      %848 = vector.broadcast %cst_470 : f32 to vector<2x8x32xf32>
      %c0_471 = arith.constant 0 : index
      %c0_472 = arith.constant 0 : index
      %c0_473 = arith.constant 0 : index
      %849 = vector.load %arg10[%c0_471, %c0_472, %c0_473] : memref<2x8x32xf32, #tpu.memory_space<vmem>>, vector<2x8x32xf32>
      tpu.vector_store %arg10[%c0_471, %c0_472, %c0_473], %848 {strides = array<i32>} : memref<2x8x32xf32, #tpu.memory_space<vmem>>, vector<2x8x32xf32>,
    } else {
    }
    %c0 = arith.constant 0 : index
    %c0_1 = arith.constant 0 : index
    %c0_2 = arith.constant 0 : index
    %3 = vector.load %arg2[%c0, %c0_1, %c0_2] : memref<8x8x128xf32, #tpu.memory_space<vmem>>, vector<1x8x128xf32>
    %4 = vector.shape_cast %3 : vector<1x8x128xf32> to vector<8x128xf32>
    %c0_3 = arith.constant 0 : index
    %c0_4 = arith.constant 0 : index
    %c0_5 = arith.constant 0 : index
    %5 = vector.load %arg9[%c0_3, %c0_4, %c0_5] : memref<2x8x32xf32, #tpu.memory_space<vmem>>, vector<1x8x32xf32>
    %6 = vector.shape_cast %5 : vector<1x8x32xf32> to vector<8x32xf32>
    %7 = arith.truncf %6 : vector<8x32xf32> to vector<8x32xbf16>
    %c0_6 = arith.constant 0 : index
    %c0_7 = arith.constant 0 : index
    %8 = vector.load %arg3[%c0_6, %c0_7] : memref<32x128xbf16, #tpu.memory_space<vmem>>, vector<32x128xbf16>
    %cst = arith.constant dense<0.000000e+00> : vector<8x128xf32>
    %9 = tpu.matmul %7, %8, %cst {dimension_numbers = #tpu.dot_dimension_numbers<[1], [0], [0], [1], [0, 0, 1, 1], [], []>} : vector<8x32xbf16>, vector<32x128xbf16>, vector<8x128xf32> -> vector<8x128xf32>
    %10 = arith.addf %4, %9 : vector<8x128xf32>
    %c0_8 = arith.constant 0 : index
    %c0_9 = arith.constant 0 : index
    %c0_10 = arith.constant 0 : index
    %11 = vector.load %arg10[%c0_8, %c0_9, %c0_10] : memref<2x8x32xf32, #tpu.memory_space<vmem>>, vector<1x8x32xf32>
    %12 = vector.shape_cast %11 : vector<1x8x32xf32> to vector<8x32xf32>
    %13 = vector.extract_strided_slice %10 {offsets = [0, 0], sizes = [8, 32], strides = [1, 1]} : vector<8x128xf32> to vector<8x32xf32>
    %cst_11 = arith.constant 0.000000e+00 : f32
    %14 = vector.broadcast %cst_11 : f32 to vector<8x32xf32>
    %15 = arith.subf %14, %13 : vector<8x32xf32>
    %16 = math.exp %15 : vector<8x32xf32>
    %cst_12 = arith.constant 1.000000e+00 : f32
    %17 = vector.broadcast %cst_12 : f32 to vector<8x32xf32>
    %18 = arith.addf %17, %16 : vector<8x32xf32>
    %cst_13 = arith.constant 1.000000e+00 : f32
    %19 = vector.broadcast %cst_13 : f32 to vector<8x32xf32>
    %20 = arith.divf %19, %18 : vector<8x32xf32>
    %21 = vector.extract_strided_slice %10 {offsets = [0, 32], sizes = [8, 32], strides = [1, 1]} : vector<8x128xf32> to vector<8x32xf32>
    %cst_14 = arith.constant 0.000000e+00 : f32
    %22 = vector.broadcast %cst_14 : f32 to vector<8x32xf32>
    %23 = arith.subf %22, %21 : vector<8x32xf32>
    %24 = math.exp %23 : vector<8x32xf32>
    %cst_15 = arith.constant 1.000000e+00 : f32
    %25 = vector.broadcast %cst_15 : f32 to vector<8x32xf32>
    %26 = arith.addf %25, %24 : vector<8x32xf32>
    %cst_16 = arith.constant 1.000000e+00 : f32
    %27 = vector.broadcast %cst_16 : f32 to vector<8x32xf32>
    %28 = arith.divf %27, %26 : vector<8x32xf32>
    %29 = vector.extract_strided_slice %10 {offsets = [0, 64], sizes = [8, 32], strides = [1, 1]} : vector<8x128xf32> to vector<8x32xf32>
    %30 = math.tanh %29 : vector<8x32xf32>
    %31 = vector.extract_strided_slice %10 {offsets = [0, 96], sizes = [8, 32], strides = [1, 1]} : vector<8x128xf32> to vector<8x32xf32>
    %cst_17 = arith.constant 0.000000e+00 : f32
    %32 = vector.broadcast %cst_17 : f32 to vector<8x32xf32>
    %33 = arith.subf %32, %31 : vector<8x32xf32>
    %34 = math.exp %33 : vector<8x32xf32>
    %cst_18 = arith.constant 1.000000e+00 : f32
    %35 = vector.broadcast %cst_18 : f32 to vector<8x32xf32>
    %36 = arith.addf %35, %34 : vector<8x32xf32>
    %cst_19 = arith.constant 1.000000e+00 : f32
    %37 = vector.broadcast %cst_19 : f32 to vector<8x32xf32>
    %38 = arith.divf %37, %36 : vector<8x32xf32>
    %39 = arith.mulf %28, %12 : vector<8x32xf32>
    %40 = arith.mulf %20, %30 : vector<8x32xf32>
    %41 = arith.addf %39, %40 : vector<8x32xf32>
    %42 = math.tanh %41 : vector<8x32xf32>
    %43 = arith.mulf %38, %42 : vector<8x32xf32>
    %c0_20 = arith.constant 0 : index
    %c0_21 = arith.constant 0 : index
    %c0_22 = arith.constant 0 : index
    %44 = vector.load %arg9[%c0_20, %c0_21, %c0_22] : memref<2x8x32xf32, #tpu.memory_space<vmem>>, vector<1x8x32xf32>
    %45 = vector.shape_cast %44 : vector<1x8x32xf32> to vector<8x32xf32>
    %46 = vector.shape_cast %43 : vector<8x32xf32> to vector<1x8x32xf32>
    tpu.vector_store %arg9[%c0_20, %c0_21, %c0_22], %46 {strides = array<i32>} : memref<2x8x32xf32, #tpu.memory_space<vmem>>, vector<1x8x32xf32>,
    %c0_23 = arith.constant 0 : index
    %c0_24 = arith.constant 0 : index
    %c0_25 = arith.constant 0 : index
    %47 = vector.load %arg10[%c0_23, %c0_24, %c0_25] : memref<2x8x32xf32, #tpu.memory_space<vmem>>, vector<1x8x32xf32>
    %48 = vector.shape_cast %47 : vector<1x8x32xf32> to vector<8x32xf32>
    %49 = vector.shape_cast %41 : vector<8x32xf32> to vector<1x8x32xf32>
    tpu.vector_store %arg10[%c0_23, %c0_24, %c0_25], %49 {strides = array<i32>} : memref<2x8x32xf32, #tpu.memory_space<vmem>>, vector<1x8x32xf32>,
    %c0_26 = arith.constant 0 : index
    %c0_27 = arith.constant 0 : index
    %c0_28 = arith.constant 0 : index
    %50 = vector.load %arg4[%c0_26, %c0_27, %c0_28] : memref<1x64x128xbf16, #tpu.memory_space<vmem>>, vector<1x64x128xbf16>
    %51 = vector.shape_cast %50 : vector<1x64x128xbf16> to vector<64x128xbf16>
    %52 = arith.truncf %43 : vector<8x32xf32> to vector<8x32xbf16>
    %53 = vector.extract_strided_slice %51 {offsets = [0, 0], sizes = [32, 128], strides = [1, 1]} : vector<64x128xbf16> to vector<32x128xbf16>
    %cst_29 = arith.constant dense<0.000000e+00> : vector<8x128xf32>
    %54 = tpu.matmul %52, %53, %cst_29 {dimension_numbers = #tpu.dot_dimension_numbers<[1], [0], [0], [1], [0, 0, 1, 1], [], []>} : vector<8x32xbf16>, vector<32x128xbf16>, vector<8x128xf32> -> vector<8x128xf32>
    %c1 = arith.constant 1 : index
    %c0_30 = arith.constant 0 : index
    %c0_31 = arith.constant 0 : index
    %55 = vector.load %arg9[%c1, %c0_30, %c0_31] : memref<2x8x32xf32, #tpu.memory_space<vmem>>, vector<1x8x32xf32>
    %56 = vector.shape_cast %55 : vector<1x8x32xf32> to vector<8x32xf32>
    %57 = arith.truncf %56 : vector<8x32xf32> to vector<8x32xbf16>
    %58 = vector.extract_strided_slice %51 {offsets = [32, 0], sizes = [32, 128], strides = [1, 1]} : vector<64x128xbf16> to vector<32x128xbf16>
    %cst_32 = arith.constant dense<0.000000e+00> : vector<8x128xf32>
    %59 = tpu.matmul %57, %58, %cst_32 {dimension_numbers = #tpu.dot_dimension_numbers<[1], [0], [0], [1], [0, 0, 1, 1], [], []>} : vector<8x32xbf16>, vector<32x128xbf16>, vector<8x128xf32> -> vector<8x128xf32>
    %60 = arith.addf %54, %59 : vector<8x128xf32>
    %c0_33 = arith.constant 0 : index
    %c0_34 = arith.constant 0 : index
    %c0_35 = arith.constant 0 : index
    %61 = vector.load %arg5[%c0_33, %c0_34, %c0_35] : memref<1x1x128xf32, #tpu.memory_space<vmem>>, vector<1x1x128xf32>
    %62 = vector.shape_cast %61 : vector<1x1x128xf32> to vector<1x128xf32>
    %63 = vector.broadcast %62 : vector<1x128xf32> to vector<8x128xf32>
    %64 = arith.addf %60, %63 : vector<8x128xf32>
    %c1_36 = arith.constant 1 : index
    %c0_37 = arith.constant 0 : index
    %c0_38 = arith.constant 0 : index
    %65 = vector.load %arg10[%c1_36, %c0_37, %c0_38] : memref<2x8x32xf32, #tpu.memory_space<vmem>>, vector<1x8x32xf32>
    %66 = vector.shape_cast %65 : vector<1x8x32xf32> to vector<8x32xf32>
    %67 = vector.extract_strided_slice %64 {offsets = [0, 0], sizes = [8, 32], strides = [1, 1]} : vector<8x128xf32> to vector<8x32xf32>
    %cst_39 = arith.constant 0.000000e+00 : f32
    %68 = vector.broadcast %cst_39 : f32 to vector<8x32xf32>
    %69 = arith.subf %68, %67 : vector<8x32xf32>
    %70 = math.exp %69 : vector<8x32xf32>
    %cst_40 = arith.constant 1.000000e+00 : f32
    %71 = vector.broadcast %cst_40 : f32 to vector<8x32xf32>
    %72 = arith.addf %71, %70 : vector<8x32xf32>
    %cst_41 = arith.constant 1.000000e+00 : f32
    %73 = vector.broadcast %cst_41 : f32 to vector<8x32xf32>
    %74 = arith.divf %73, %72 : vector<8x32xf32>
    %75 = vector.extract_strided_slice %64 {offsets = [0, 32], sizes = [8, 32], strides = [1, 1]} : vector<8x128xf32> to vector<8x32xf32>
    %cst_42 = arith.constant 0.000000e+00 : f32
    %76 = vector.broadcast %cst_42 : f32 to vector<8x32xf32>
    %77 = arith.subf %76, %75 : vector<8x32xf32>
    %78 = math.exp %77 : vector<8x32xf32>
    %cst_43 = arith.constant 1.000000e+00 : f32
    %79 = vector.broadcast %cst_43 : f32 to vector<8x32xf32>
    %80 = arith.addf %79, %78 : vector<8x32xf32>
    %cst_44 = arith.constant 1.000000e+00 : f32
    %81 = vector.broadcast %cst_44 : f32 to vector<8x32xf32>
    %82 = arith.divf %81, %80 : vector<8x32xf32>
    %83 = vector.extract_strided_slice %64 {offsets = [0, 64], sizes = [8, 32], strides = [1, 1]} : vector<8x128xf32> to vector<8x32xf32>
    %84 = math.tanh %83 : vector<8x32xf32>
    %85 = vector.extract_strided_slice %64 {offsets = [0, 96], sizes = [8, 32], strides = [1, 1]} : vector<8x128xf32> to vector<8x32xf32>
    %cst_45 = arith.constant 0.000000e+00 : f32
    %86 = vector.broadcast %cst_45 : f32 to vector<8x32xf32>
    %87 = arith.subf %86, %85 : vector<8x32xf32>
    %88 = math.exp %87 : vector<8x32xf32>
    %cst_46 = arith.constant 1.000000e+00 : f32
    %89 = vector.broadcast %cst_46 : f32 to vector<8x32xf32>
    %90 = arith.addf %89, %88 : vector<8x32xf32>
    %cst_47 = arith.constant 1.000000e+00 : f32
    %91 = vector.broadcast %cst_47 : f32 to vector<8x32xf32>
    %92 = arith.divf %91, %90 : vector<8x32xf32>
    %93 = arith.mulf %82, %66 : vector<8x32xf32>
    %94 = arith.mulf %74, %84 : vector<8x32xf32>
    %95 = arith.addf %93, %94 : vector<8x32xf32>
    %96 = math.tanh %95 : vector<8x32xf32>
    %97 = arith.mulf %92, %96 : vector<8x32xf32>
    %c1_48 = arith.constant 1 : index
    %c0_49 = arith.constant 0 : index
    %c0_50 = arith.constant 0 : index
    %98 = vector.load %arg9[%c1_48, %c0_49, %c0_50] : memref<2x8x32xf32, #tpu.memory_space<vmem>>, vector<1x8x32xf32>
    %99 = vector.shape_cast %98 : vector<1x8x32xf32> to vector<8x32xf32>
    %100 = vector.shape_cast %97 : vector<8x32xf32> to vector<1x8x32xf32>
    tpu.vector_store %arg9[%c1_48, %c0_49, %c0_50], %100 {strides = array<i32>} : memref<2x8x32xf32, #tpu.memory_space<vmem>>, vector<1x8x32xf32>,
    %c1_51 = arith.constant 1 : index
    %c0_52 = arith.constant 0 : index
    %c0_53 = arith.constant 0 : index
    %101 = vector.load %arg10[%c1_51, %c0_52, %c0_53] : memref<2x8x32xf32, #tpu.memory_space<vmem>>, vector<1x8x32xf32>
    %102 = vector.shape_cast %101 : vector<1x8x32xf32> to vector<8x32xf32>
    %103 = vector.shape_cast %95 : vector<8x32xf32> to vector<1x8x32xf32>
    tpu.vector_store %arg10[%c1_51, %c0_52, %c0_53], %103 {strides = array<i32>} : memref<2x8x32xf32, #tpu.memory_space<vmem>>, vector<1x8x32xf32>,
    %104 = arith.truncf %97 : vector<8x32xf32> to vector<8x32xbf16>
    %c0_54 = arith.constant 0 : index
    %c0_55 = arith.constant 0 : index
    %c0_56 = arith.constant 0 : index
    %105 = vector.load %arg6[%c0_54, %c0_55, %c0_56] : memref<8x8x32xbf16, #tpu.memory_space<vmem>>, vector<1x8x32xbf16>
    %106 = vector.shape_cast %105 : vector<1x8x32xbf16> to vector<8x32xbf16>
    %107 = vector.shape_cast %104 : vector<8x32xbf16> to vector<1x8x32xbf16>
    tpu.vector_store %arg6[%c0_54, %c0_55, %c0_56], %107 {strides = array<i32>} : memref<8x8x32xbf16, #tpu.memory_space<vmem>>, vector<1x8x32xbf16>,
    %c1_57 = arith.constant 1 : index
    %c0_58 = arith.constant 0 : index
    %c0_59 = arith.constant 0 : index
    %108 = vector.load %arg2[%c1_57, %c0_58, %c0_59] : memref<8x8x128xf32, #tpu.memory_space<vmem>>, vector<1x8x128xf32>
    %109 = vector.shape_cast %108 : vector<1x8x128xf32> to vector<8x128xf32>
    %c0_60 = arith.constant 0 : index
    %c0_61 = arith.constant 0 : index
    %c0_62 = arith.constant 0 : index
    %110 = vector.load %arg9[%c0_60, %c0_61, %c0_62] : memref<2x8x32xf32, #tpu.memory_space<vmem>>, vector<1x8x32xf32>
    %111 = vector.shape_cast %110 : vector<1x8x32xf32> to vector<8x32xf32>
    %112 = arith.truncf %111 : vector<8x32xf32> to vector<8x32xbf16>
    %c0_63 = arith.constant 0 : index
    %c0_64 = arith.constant 0 : index
    %113 = vector.load %arg3[%c0_63, %c0_64] : memref<32x128xbf16, #tpu.memory_space<vmem>>, vector<32x128xbf16>
    %cst_65 = arith.constant dense<0.000000e+00> : vector<8x128xf32>
    %114 = tpu.matmul %112, %113, %cst_65 {dimension_numbers = #tpu.dot_dimension_numbers<[1], [0], [0], [1], [0, 0, 1, 1], [], []>} : vector<8x32xbf16>, vector<32x128xbf16>, vector<8x128xf32> -> vector<8x128xf32>
    %115 = arith.addf %109, %114 : vector<8x128xf32>
    %c0_66 = arith.constant 0 : index
    %c0_67 = arith.constant 0 : index
    %c0_68 = arith.constant 0 : index
    %116 = vector.load %arg10[%c0_66, %c0_67, %c0_68] : memref<2x8x32xf32, #tpu.memory_space<vmem>>, vector<1x8x32xf32>
    %117 = vector.shape_cast %116 : vector<1x8x32xf32> to vector<8x32xf32>
    %118 = vector.extract_strided_slice %115 {offsets = [0, 0], sizes = [8, 32], strides = [1, 1]} : vector<8x128xf32> to vector<8x32xf32>
    %cst_69 = arith.constant 0.000000e+00 : f32
    %119 = vector.broadcast %cst_69 : f32 to vector<8x32xf32>
    %120 = arith.subf %119, %118 : vector<8x32xf32>
    %121 = math.exp %120 : vector<8x32xf32>
    %cst_70 = arith.constant 1.000000e+00 : f32
    %122 = vector.broadcast %cst_70 : f32 to vector<8x32xf32>
    %123 = arith.addf %122, %121 : vector<8x32xf32>
    %cst_71 = arith.constant 1.000000e+00 : f32
    %124 = vector.broadcast %cst_71 : f32 to vector<8x32xf32>
    %125 = arith.divf %124, %123 : vector<8x32xf32>
    %126 = vector.extract_strided_slice %115 {offsets = [0, 32], sizes = [8, 32], strides = [1, 1]} : vector<8x128xf32> to vector<8x32xf32>
    %cst_72 = arith.constant 0.000000e+00 : f32
    %127 = vector.broadcast %cst_72 : f32 to vector<8x32xf32>
    %128 = arith.subf %127, %126 : vector<8x32xf32>
    %129 = math.exp %128 : vector<8x32xf32>
    %cst_73 = arith.constant 1.000000e+00 : f32
    %130 = vector.broadcast %cst_73 : f32 to vector<8x32xf32>
    %131 = arith.addf %130, %129 : vector<8x32xf32>
    %cst_74 = arith.constant 1.000000e+00 : f32
    %132 = vector.broadcast %cst_74 : f32 to vector<8x32xf32>
    %133 = arith.divf %132, %131 : vector<8x32xf32>
    %134 = vector.extract_strided_slice %115 {offsets = [0, 64], sizes = [8, 32], strides = [1, 1]} : vector<8x128xf32> to vector<8x32xf32>
    %135 = math.tanh %134 : vector<8x32xf32>
    %136 = vector.extract_strided_slice %115 {offsets = [0, 96], sizes = [8, 32], strides = [1, 1]} : vector<8x128xf32> to vector<8x32xf32>
    %cst_75 = arith.constant 0.000000e+00 : f32
    %137 = vector.broadcast %cst_75 : f32 to vector<8x32xf32>
    %138 = arith.subf %137, %136 : vector<8x32xf32>
    %139 = math.exp %138 : vector<8x32xf32>
    %cst_76 = arith.constant 1.000000e+00 : f32
    %140 = vector.broadcast %cst_76 : f32 to vector<8x32xf32>
    %141 = arith.addf %140, %139 : vector<8x32xf32>
    %cst_77 = arith.constant 1.000000e+00 : f32
    %142 = vector.broadcast %cst_77 : f32 to vector<8x32xf32>
    %143 = arith.divf %142, %141 : vector<8x32xf32>
    %144 = arith.mulf %133, %117 : vector<8x32xf32>
    %145 = arith.mulf %125, %135 : vector<8x32xf32>
    %146 = arith.addf %144, %145 : vector<8x32xf32>
    %147 = math.tanh %146 : vector<8x32xf32>
    %148 = arith.mulf %143, %147 : vector<8x32xf32>
    %c0_78 = arith.constant 0 : index
    %c0_79 = arith.constant 0 : index
    %c0_80 = arith.constant 0 : index
    %149 = vector.load %arg9[%c0_78, %c0_79, %c0_80] : memref<2x8x32xf32, #tpu.memory_space<vmem>>, vector<1x8x32xf32>
    %150 = vector.shape_cast %149 : vector<1x8x32xf32> to vector<8x32xf32>
    %151 = vector.shape_cast %148 : vector<8x32xf32> to vector<1x8x32xf32>
    tpu.vector_store %arg9[%c0_78, %c0_79, %c0_80], %151 {strides = array<i32>} : memref<2x8x32xf32, #tpu.memory_space<vmem>>, vector<1x8x32xf32>,
    %c0_81 = arith.constant 0 : index
    %c0_82 = arith.constant 0 : index
    %c0_83 = arith.constant 0 : index
    %152 = vector.load %arg10[%c0_81, %c0_82, %c0_83] : memref<2x8x32xf32, #tpu.memory_space<vmem>>, vector<1x8x32xf32>
    %153 = vector.shape_cast %152 : vector<1x8x32xf32> to vector<8x32xf32>
    %154 = vector.shape_cast %146 : vector<8x32xf32> to vector<1x8x32xf32>
    tpu.vector_store %arg10[%c0_81, %c0_82, %c0_83], %154 {strides = array<i32>} : memref<2x8x32xf32, #tpu.memory_space<vmem>>, vector<1x8x32xf32>,
    %c0_84 = arith.constant 0 : index
    %c0_85 = arith.constant 0 : index
    %c0_86 = arith.constant 0 : index
    %155 = vector.load %arg4[%c0_84, %c0_85, %c0_86] : memref<1x64x128xbf16, #tpu.memory_space<vmem>>, vector<1x64x128xbf16>
    %156 = vector.shape_cast %155 : vector<1x64x128xbf16> to vector<64x128xbf16>
    %157 = arith.truncf %148 : vector<8x32xf32> to vector<8x32xbf16>
    %158 = vector.extract_strided_slice %156 {offsets = [0, 0], sizes = [32, 128], strides = [1, 1]} : vector<64x128xbf16> to vector<32x128xbf16>
    %cst_87 = arith.constant dense<0.000000e+00> : vector<8x128xf32>
    %159 = tpu.matmul %157, %158, %cst_87 {dimension_numbers = #tpu.dot_dimension_numbers<[1], [0], [0], [1], [0, 0, 1, 1], [], []>} : vector<8x32xbf16>, vector<32x128xbf16>, vector<8x128xf32> -> vector<8x128xf32>
    %c1_88 = arith.constant 1 : index
    %c0_89 = arith.constant 0 : index
    %c0_90 = arith.constant 0 : index
    %160 = vector.load %arg9[%c1_88, %c0_89, %c0_90] : memref<2x8x32xf32, #tpu.memory_space<vmem>>, vector<1x8x32xf32>
    %161 = vector.shape_cast %160 : vector<1x8x32xf32> to vector<8x32xf32>
    %162 = arith.truncf %161 : vector<8x32xf32> to vector<8x32xbf16>
    %163 = vector.extract_strided_slice %156 {offsets = [32, 0], sizes = [32, 128], strides = [1, 1]} : vector<64x128xbf16> to vector<32x128xbf16>
    %cst_91 = arith.constant dense<0.000000e+00> : vector<8x128xf32>
    %164 = tpu.matmul %162, %163, %cst_91 {dimension_numbers = #tpu.dot_dimension_numbers<[1], [0], [0], [1], [0, 0, 1, 1], [], []>} : vector<8x32xbf16>, vector<32x128xbf16>, vector<8x128xf32> -> vector<8x128xf32>
    %165 = arith.addf %159, %164 : vector<8x128xf32>
    %c0_92 = arith.constant 0 : index
    %c0_93 = arith.constant 0 : index
    %c0_94 = arith.constant 0 : index
    %166 = vector.load %arg5[%c0_92, %c0_93, %c0_94] : memref<1x1x128xf32, #tpu.memory_space<vmem>>, vector<1x1x128xf32>
    %167 = vector.shape_cast %166 : vector<1x1x128xf32> to vector<1x128xf32>
    %168 = vector.broadcast %167 : vector<1x128xf32> to vector<8x128xf32>
    %169 = arith.addf %165, %168 : vector<8x128xf32>
    %c1_95 = arith.constant 1 : index
    %c0_96 = arith.constant 0 : index
    %c0_97 = arith.constant 0 : index
    %170 = vector.load %arg10[%c1_95, %c0_96, %c0_97] : memref<2x8x32xf32, #tpu.memory_space<vmem>>, vector<1x8x32xf32>
    %171 = vector.shape_cast %170 : vector<1x8x32xf32> to vector<8x32xf32>
    %172 = vector.extract_strided_slice %169 {offsets = [0, 0], sizes = [8, 32], strides = [1, 1]} : vector<8x128xf32> to vector<8x32xf32>
    %cst_98 = arith.constant 0.000000e+00 : f32
    %173 = vector.broadcast %cst_98 : f32 to vector<8x32xf32>
    %174 = arith.subf %173, %172 : vector<8x32xf32>
    %175 = math.exp %174 : vector<8x32xf32>
    %cst_99 = arith.constant 1.000000e+00 : f32
    %176 = vector.broadcast %cst_99 : f32 to vector<8x32xf32>
    %177 = arith.addf %176, %175 : vector<8x32xf32>
    %cst_100 = arith.constant 1.000000e+00 : f32
    %178 = vector.broadcast %cst_100 : f32 to vector<8x32xf32>
    %179 = arith.divf %178, %177 : vector<8x32xf32>
    %180 = vector.extract_strided_slice %169 {offsets = [0, 32], sizes = [8, 32], strides = [1, 1]} : vector<8x128xf32> to vector<8x32xf32>
    %cst_101 = arith.constant 0.000000e+00 : f32
    %181 = vector.broadcast %cst_101 : f32 to vector<8x32xf32>
    %182 = arith.subf %181, %180 : vector<8x32xf32>
    %183 = math.exp %182 : vector<8x32xf32>
    %cst_102 = arith.constant 1.000000e+00 : f32
    %184 = vector.broadcast %cst_102 : f32 to vector<8x32xf32>
    %185 = arith.addf %184, %183 : vector<8x32xf32>
    %cst_103 = arith.constant 1.000000e+00 : f32
    %186 = vector.broadcast %cst_103 : f32 to vector<8x32xf32>
    %187 = arith.divf %186, %185 : vector<8x32xf32>
    %188 = vector.extract_strided_slice %169 {offsets = [0, 64], sizes = [8, 32], strides = [1, 1]} : vector<8x128xf32> to vector<8x32xf32>
    %189 = math.tanh %188 : vector<8x32xf32>
    %190 = vector.extract_strided_slice %169 {offsets = [0, 96], sizes = [8, 32], strides = [1, 1]} : vector<8x128xf32> to vector<8x32xf32>
    %cst_104 = arith.constant 0.000000e+00 : f32
    %191 = vector.broadcast %cst_104 : f32 to vector<8x32xf32>
    %192 = arith.subf %191, %190 : vector<8x32xf32>
    %193 = math.exp %192 : vector<8x32xf32>
    %cst_105 = arith.constant 1.000000e+00 : f32
    %194 = vector.broadcast %cst_105 : f32 to vector<8x32xf32>
    %195 = arith.addf %194, %193 : vector<8x32xf32>
    %cst_106 = arith.constant 1.000000e+00 : f32
    %196 = vector.broadcast %cst_106 : f32 to vector<8x32xf32>
    %197 = arith.divf %196, %195 : vector<8x32xf32>
    %198 = arith.mulf %187, %171 : vector<8x32xf32>
    %199 = arith.mulf %179, %189 : vector<8x32xf32>
    %200 = arith.addf %198, %199 : vector<8x32xf32>
    %201 = math.tanh %200 : vector<8x32xf32>
    %202 = arith.mulf %197, %201 : vector<8x32xf32>
    %c1_107 = arith.constant 1 : index
    %c0_108 = arith.constant 0 : index
    %c0_109 = arith.constant 0 : index
    %203 = vector.load %arg9[%c1_107, %c0_108, %c0_109] : memref<2x8x32xf32, #tpu.memory_space<vmem>>, vector<1x8x32xf32>
    %204 = vector.shape_cast %203 : vector<1x8x32xf32> to vector<8x32xf32>
    %205 = vector.shape_cast %202 : vector<8x32xf32> to vector<1x8x32xf32>
    tpu.vector_store %arg9[%c1_107, %c0_108, %c0_109], %205 {strides = array<i32>} : memref<2x8x32xf32, #tpu.memory_space<vmem>>, vector<1x8x32xf32>,
    %c1_110 = arith.constant 1 : index
    %c0_111 = arith.constant 0 : index
    %c0_112 = arith.constant 0 : index
    %206 = vector.load %arg10[%c1_110, %c0_111, %c0_112] : memref<2x8x32xf32, #tpu.memory_space<vmem>>, vector<1x8x32xf32>
    %207 = vector.shape_cast %206 : vector<1x8x32xf32> to vector<8x32xf32>
    %208 = vector.shape_cast %200 : vector<8x32xf32> to vector<1x8x32xf32>
    tpu.vector_store %arg10[%c1_110, %c0_111, %c0_112], %208 {strides = array<i32>} : memref<2x8x32xf32, #tpu.memory_space<vmem>>, vector<1x8x32xf32>,
    %209 = arith.truncf %202 : vector<8x32xf32> to vector<8x32xbf16>
    %c1_113 = arith.constant 1 : index
    %c0_114 = arith.constant 0 : index
    %c0_115 = arith.constant 0 : index
    %210 = vector.load %arg6[%c1_113, %c0_114, %c0_115] : memref<8x8x32xbf16, #tpu.memory_space<vmem>>, vector<1x8x32xbf16>
    %211 = vector.shape_cast %210 : vector<1x8x32xbf16> to vector<8x32xbf16>
    %212 = vector.shape_cast %209 : vector<8x32xbf16> to vector<1x8x32xbf16>
    tpu.vector_store %arg6[%c1_113, %c0_114, %c0_115], %212 {strides = array<i32>} : memref<8x8x32xbf16, #tpu.memory_space<vmem>>, vector<1x8x32xbf16>,
    %c2 = arith.constant 2 : index
    %c0_116 = arith.constant 0 : index
    %c0_117 = arith.constant 0 : index
    %213 = vector.load %arg2[%c2, %c0_116, %c0_117] : memref<8x8x128xf32, #tpu.memory_space<vmem>>, vector<1x8x128xf32>
    %214 = vector.shape_cast %213 : vector<1x8x128xf32> to vector<8x128xf32>
    %c0_118 = arith.constant 0 : index
    %c0_119 = arith.constant 0 : index
    %c0_120 = arith.constant 0 : index
    %215 = vector.load %arg9[%c0_118, %c0_119, %c0_120] : memref<2x8x32xf32, #tpu.memory_space<vmem>>, vector<1x8x32xf32>
    %216 = vector.shape_cast %215 : vector<1x8x32xf32> to vector<8x32xf32>
    %217 = arith.truncf %216 : vector<8x32xf32> to vector<8x32xbf16>
    %c0_121 = arith.constant 0 : index
    %c0_122 = arith.constant 0 : index
    %218 = vector.load %arg3[%c0_121, %c0_122] : memref<32x128xbf16, #tpu.memory_space<vmem>>, vector<32x128xbf16>
    %cst_123 = arith.constant dense<0.000000e+00> : vector<8x128xf32>
    %219 = tpu.matmul %217, %218, %cst_123 {dimension_numbers = #tpu.dot_dimension_numbers<[1], [0], [0], [1], [0, 0, 1, 1], [], []>} : vector<8x32xbf16>, vector<32x128xbf16>, vector<8x128xf32> -> vector<8x128xf32>
    %220 = arith.addf %214, %219 : vector<8x128xf32>
    %c0_124 = arith.constant 0 : index
    %c0_125 = arith.constant 0 : index
    %c0_126 = arith.constant 0 : index
    %221 = vector.load %arg10[%c0_124, %c0_125, %c0_126] : memref<2x8x32xf32, #tpu.memory_space<vmem>>, vector<1x8x32xf32>
    %222 = vector.shape_cast %221 : vector<1x8x32xf32> to vector<8x32xf32>
    %223 = vector.extract_strided_slice %220 {offsets = [0, 0], sizes = [8, 32], strides = [1, 1]} : vector<8x128xf32> to vector<8x32xf32>
    %cst_127 = arith.constant 0.000000e+00 : f32
    %224 = vector.broadcast %cst_127 : f32 to vector<8x32xf32>
    %225 = arith.subf %224, %223 : vector<8x32xf32>
    %226 = math.exp %225 : vector<8x32xf32>
    %cst_128 = arith.constant 1.000000e+00 : f32
    %227 = vector.broadcast %cst_128 : f32 to vector<8x32xf32>
    %228 = arith.addf %227, %226 : vector<8x32xf32>
    %cst_129 = arith.constant 1.000000e+00 : f32
    %229 = vector.broadcast %cst_129 : f32 to vector<8x32xf32>
    %230 = arith.divf %229, %228 : vector<8x32xf32>
    %231 = vector.extract_strided_slice %220 {offsets = [0, 32], sizes = [8, 32], strides = [1, 1]} : vector<8x128xf32> to vector<8x32xf32>
    %cst_130 = arith.constant 0.000000e+00 : f32
    %232 = vector.broadcast %cst_130 : f32 to vector<8x32xf32>
    %233 = arith.subf %232, %231 : vector<8x32xf32>
    %234 = math.exp %233 : vector<8x32xf32>
    %cst_131 = arith.constant 1.000000e+00 : f32
    %235 = vector.broadcast %cst_131 : f32 to vector<8x32xf32>
    %236 = arith.addf %235, %234 : vector<8x32xf32>
    %cst_132 = arith.constant 1.000000e+00 : f32
    %237 = vector.broadcast %cst_132 : f32 to vector<8x32xf32>
    %238 = arith.divf %237, %236 : vector<8x32xf32>
    %239 = vector.extract_strided_slice %220 {offsets = [0, 64], sizes = [8, 32], strides = [1, 1]} : vector<8x128xf32> to vector<8x32xf32>
    %240 = math.tanh %239 : vector<8x32xf32>
    %241 = vector.extract_strided_slice %220 {offsets = [0, 96], sizes = [8, 32], strides = [1, 1]} : vector<8x128xf32> to vector<8x32xf32>
    %cst_133 = arith.constant 0.000000e+00 : f32
    %242 = vector.broadcast %cst_133 : f32 to vector<8x32xf32>
    %243 = arith.subf %242, %241 : vector<8x32xf32>
    %244 = math.exp %243 : vector<8x32xf32>
    %cst_134 = arith.constant 1.000000e+00 : f32
    %245 = vector.broadcast %cst_134 : f32 to vector<8x32xf32>
    %246 = arith.addf %245, %244 : vector<8x32xf32>
    %cst_135 = arith.constant 1.000000e+00 : f32
    %247 = vector.broadcast %cst_135 : f32 to vector<8x32xf32>
    %248 = arith.divf %247, %246 : vector<8x32xf32>
    %249 = arith.mulf %238, %222 : vector<8x32xf32>
    %250 = arith.mulf %230, %240 : vector<8x32xf32>
    %251 = arith.addf %249, %250 : vector<8x32xf32>
    %252 = math.tanh %251 : vector<8x32xf32>
    %253 = arith.mulf %248, %252 : vector<8x32xf32>
    %c0_136 = arith.constant 0 : index
    %c0_137 = arith.constant 0 : index
    %c0_138 = arith.constant 0 : index
    %254 = vector.load %arg9[%c0_136, %c0_137, %c0_138] : memref<2x8x32xf32, #tpu.memory_space<vmem>>, vector<1x8x32xf32>
    %255 = vector.shape_cast %254 : vector<1x8x32xf32> to vector<8x32xf32>
    %256 = vector.shape_cast %253 : vector<8x32xf32> to vector<1x8x32xf32>
    tpu.vector_store %arg9[%c0_136, %c0_137, %c0_138], %256 {strides = array<i32>} : memref<2x8x32xf32, #tpu.memory_space<vmem>>, vector<1x8x32xf32>,
    %c0_139 = arith.constant 0 : index
    %c0_140 = arith.constant 0 : index
    %c0_141 = arith.constant 0 : index
    %257 = vector.load %arg10[%c0_139, %c0_140, %c0_141] : memref<2x8x32xf32, #tpu.memory_space<vmem>>, vector<1x8x32xf32>
    %258 = vector.shape_cast %257 : vector<1x8x32xf32> to vector<8x32xf32>
    %259 = vector.shape_cast %251 : vector<8x32xf32> to vector<1x8x32xf32>
    tpu.vector_store %arg10[%c0_139, %c0_140, %c0_141], %259 {strides = array<i32>} : memref<2x8x32xf32, #tpu.memory_space<vmem>>, vector<1x8x32xf32>,
    %c0_142 = arith.constant 0 : index
    %c0_143 = arith.constant 0 : index
    %c0_144 = arith.constant 0 : index
    %260 = vector.load %arg4[%c0_142, %c0_143, %c0_144] : memref<1x64x128xbf16, #tpu.memory_space<vmem>>, vector<1x64x128xbf16>
    %261 = vector.shape_cast %260 : vector<1x64x128xbf16> to vector<64x128xbf16>
    %262 = arith.truncf %253 : vector<8x32xf32> to vector<8x32xbf16>
    %263 = vector.extract_strided_slice %261 {offsets = [0, 0], sizes = [32, 128], strides = [1, 1]} : vector<64x128xbf16> to vector<32x128xbf16>
    %cst_145 = arith.constant dense<0.000000e+00> : vector<8x128xf32>
    %264 = tpu.matmul %262, %263, %cst_145 {dimension_numbers = #tpu.dot_dimension_numbers<[1], [0], [0], [1], [0, 0, 1, 1], [], []>} : vector<8x32xbf16>, vector<32x128xbf16>, vector<8x128xf32> -> vector<8x128xf32>
    %c1_146 = arith.constant 1 : index
    %c0_147 = arith.constant 0 : index
    %c0_148 = arith.constant 0 : index
    %265 = vector.load %arg9[%c1_146, %c0_147, %c0_148] : memref<2x8x32xf32, #tpu.memory_space<vmem>>, vector<1x8x32xf32>
    %266 = vector.shape_cast %265 : vector<1x8x32xf32> to vector<8x32xf32>
    %267 = arith.truncf %266 : vector<8x32xf32> to vector<8x32xbf16>
    %268 = vector.extract_strided_slice %261 {offsets = [32, 0], sizes = [32, 128], strides = [1, 1]} : vector<64x128xbf16> to vector<32x128xbf16>
    %cst_149 = arith.constant dense<0.000000e+00> : vector<8x128xf32>
    %269 = tpu.matmul %267, %268, %cst_149 {dimension_numbers = #tpu.dot_dimension_numbers<[1], [0], [0], [1], [0, 0, 1, 1], [], []>} : vector<8x32xbf16>, vector<32x128xbf16>, vector<8x128xf32> -> vector<8x128xf32>
    %270 = arith.addf %264, %269 : vector<8x128xf32>
    %c0_150 = arith.constant 0 : index
    %c0_151 = arith.constant 0 : index
    %c0_152 = arith.constant 0 : index
    %271 = vector.load %arg5[%c0_150, %c0_151, %c0_152] : memref<1x1x128xf32, #tpu.memory_space<vmem>>, vector<1x1x128xf32>
    %272 = vector.shape_cast %271 : vector<1x1x128xf32> to vector<1x128xf32>
    %273 = vector.broadcast %272 : vector<1x128xf32> to vector<8x128xf32>
    %274 = arith.addf %270, %273 : vector<8x128xf32>
    %c1_153 = arith.constant 1 : index
    %c0_154 = arith.constant 0 : index
    %c0_155 = arith.constant 0 : index
    %275 = vector.load %arg10[%c1_153, %c0_154, %c0_155] : memref<2x8x32xf32, #tpu.memory_space<vmem>>, vector<1x8x32xf32>
    %276 = vector.shape_cast %275 : vector<1x8x32xf32> to vector<8x32xf32>
    %277 = vector.extract_strided_slice %274 {offsets = [0, 0], sizes = [8, 32], strides = [1, 1]} : vector<8x128xf32> to vector<8x32xf32>
    %cst_156 = arith.constant 0.000000e+00 : f32
    %278 = vector.broadcast %cst_156 : f32 to vector<8x32xf32>
    %279 = arith.subf %278, %277 : vector<8x32xf32>
    %280 = math.exp %279 : vector<8x32xf32>
    %cst_157 = arith.constant 1.000000e+00 : f32
    %281 = vector.broadcast %cst_157 : f32 to vector<8x32xf32>
    %282 = arith.addf %281, %280 : vector<8x32xf32>
    %cst_158 = arith.constant 1.000000e+00 : f32
    %283 = vector.broadcast %cst_158 : f32 to vector<8x32xf32>
    %284 = arith.divf %283, %282 : vector<8x32xf32>
    %285 = vector.extract_strided_slice %274 {offsets = [0, 32], sizes = [8, 32], strides = [1, 1]} : vector<8x128xf32> to vector<8x32xf32>
    %cst_159 = arith.constant 0.000000e+00 : f32
    %286 = vector.broadcast %cst_159 : f32 to vector<8x32xf32>
    %287 = arith.subf %286, %285 : vector<8x32xf32>
    %288 = math.exp %287 : vector<8x32xf32>
    %cst_160 = arith.constant 1.000000e+00 : f32
    %289 = vector.broadcast %cst_160 : f32 to vector<8x32xf32>
    %290 = arith.addf %289, %288 : vector<8x32xf32>
    %cst_161 = arith.constant 1.000000e+00 : f32
    %291 = vector.broadcast %cst_161 : f32 to vector<8x32xf32>
    %292 = arith.divf %291, %290 : vector<8x32xf32>
    %293 = vector.extract_strided_slice %274 {offsets = [0, 64], sizes = [8, 32], strides = [1, 1]} : vector<8x128xf32> to vector<8x32xf32>
    %294 = math.tanh %293 : vector<8x32xf32>
    %295 = vector.extract_strided_slice %274 {offsets = [0, 96], sizes = [8, 32], strides = [1, 1]} : vector<8x128xf32> to vector<8x32xf32>
    %cst_162 = arith.constant 0.000000e+00 : f32
    %296 = vector.broadcast %cst_162 : f32 to vector<8x32xf32>
    %297 = arith.subf %296, %295 : vector<8x32xf32>
    %298 = math.exp %297 : vector<8x32xf32>
    %cst_163 = arith.constant 1.000000e+00 : f32
    %299 = vector.broadcast %cst_163 : f32 to vector<8x32xf32>
    %300 = arith.addf %299, %298 : vector<8x32xf32>
    %cst_164 = arith.constant 1.000000e+00 : f32
    %301 = vector.broadcast %cst_164 : f32 to vector<8x32xf32>
    %302 = arith.divf %301, %300 : vector<8x32xf32>
    %303 = arith.mulf %292, %276 : vector<8x32xf32>
    %304 = arith.mulf %284, %294 : vector<8x32xf32>
    %305 = arith.addf %303, %304 : vector<8x32xf32>
    %306 = math.tanh %305 : vector<8x32xf32>
    %307 = arith.mulf %302, %306 : vector<8x32xf32>
    %c1_165 = arith.constant 1 : index
    %c0_166 = arith.constant 0 : index
    %c0_167 = arith.constant 0 : index
    %308 = vector.load %arg9[%c1_165, %c0_166, %c0_167] : memref<2x8x32xf32, #tpu.memory_space<vmem>>, vector<1x8x32xf32>
    %309 = vector.shape_cast %308 : vector<1x8x32xf32> to vector<8x32xf32>
    %310 = vector.shape_cast %307 : vector<8x32xf32> to vector<1x8x32xf32>
    tpu.vector_store %arg9[%c1_165, %c0_166, %c0_167], %310 {strides = array<i32>} : memref<2x8x32xf32, #tpu.memory_space<vmem>>, vector<1x8x32xf32>,
    %c1_168 = arith.constant 1 : index
    %c0_169 = arith.constant 0 : index
    %c0_170 = arith.constant 0 : index
    %311 = vector.load %arg10[%c1_168, %c0_169, %c0_170] : memref<2x8x32xf32, #tpu.memory_space<vmem>>, vector<1x8x32xf32>
    %312 = vector.shape_cast %311 : vector<1x8x32xf32> to vector<8x32xf32>
    %313 = vector.shape_cast %305 : vector<8x32xf32> to vector<1x8x32xf32>
    tpu.vector_store %arg10[%c1_168, %c0_169, %c0_170], %313 {strides = array<i32>} : memref<2x8x32xf32, #tpu.memory_space<vmem>>, vector<1x8x32xf32>,
    %314 = arith.truncf %307 : vector<8x32xf32> to vector<8x32xbf16>
    %c2_171 = arith.constant 2 : index
    %c0_172 = arith.constant 0 : index
    %c0_173 = arith.constant 0 : index
    %315 = vector.load %arg6[%c2_171, %c0_172, %c0_173] : memref<8x8x32xbf16, #tpu.memory_space<vmem>>, vector<1x8x32xbf16>
    %316 = vector.shape_cast %315 : vector<1x8x32xbf16> to vector<8x32xbf16>
    %317 = vector.shape_cast %314 : vector<8x32xbf16> to vector<1x8x32xbf16>
    tpu.vector_store %arg6[%c2_171, %c0_172, %c0_173], %317 {strides = array<i32>} : memref<8x8x32xbf16, #tpu.memory_space<vmem>>, vector<1x8x32xbf16>,
    %c3 = arith.constant 3 : index
    %c0_174 = arith.constant 0 : index
    %c0_175 = arith.constant 0 : index
    %318 = vector.load %arg2[%c3, %c0_174, %c0_175] : memref<8x8x128xf32, #tpu.memory_space<vmem>>, vector<1x8x128xf32>
    %319 = vector.shape_cast %318 : vector<1x8x128xf32> to vector<8x128xf32>
    %c0_176 = arith.constant 0 : index
    %c0_177 = arith.constant 0 : index
    %c0_178 = arith.constant 0 : index
    %320 = vector.load %arg9[%c0_176, %c0_177, %c0_178] : memref<2x8x32xf32, #tpu.memory_space<vmem>>, vector<1x8x32xf32>
    %321 = vector.shape_cast %320 : vector<1x8x32xf32> to vector<8x32xf32>
    %322 = arith.truncf %321 : vector<8x32xf32> to vector<8x32xbf16>
    %c0_179 = arith.constant 0 : index
    %c0_180 = arith.constant 0 : index
    %323 = vector.load %arg3[%c0_179, %c0_180] : memref<32x128xbf16, #tpu.memory_space<vmem>>, vector<32x128xbf16>
    %cst_181 = arith.constant dense<0.000000e+00> : vector<8x128xf32>
    %324 = tpu.matmul %322, %323, %cst_181 {dimension_numbers = #tpu.dot_dimension_numbers<[1], [0], [0], [1], [0, 0, 1, 1], [], []>} : vector<8x32xbf16>, vector<32x128xbf16>, vector<8x128xf32> -> vector<8x128xf32>
    %325 = arith.addf %319, %324 : vector<8x128xf32>
    %c0_182 = arith.constant 0 : index
    %c0_183 = arith.constant 0 : index
    %c0_184 = arith.constant 0 : index
    %326 = vector.load %arg10[%c0_182, %c0_183, %c0_184] : memref<2x8x32xf32, #tpu.memory_space<vmem>>, vector<1x8x32xf32>
    %327 = vector.shape_cast %326 : vector<1x8x32xf32> to vector<8x32xf32>
    %328 = vector.extract_strided_slice %325 {offsets = [0, 0], sizes = [8, 32], strides = [1, 1]} : vector<8x128xf32> to vector<8x32xf32>
    %cst_185 = arith.constant 0.000000e+00 : f32
    %329 = vector.broadcast %cst_185 : f32 to vector<8x32xf32>
    %330 = arith.subf %329, %328 : vector<8x32xf32>
    %331 = math.exp %330 : vector<8x32xf32>
    %cst_186 = arith.constant 1.000000e+00 : f32
    %332 = vector.broadcast %cst_186 : f32 to vector<8x32xf32>
    %333 = arith.addf %332, %331 : vector<8x32xf32>
    %cst_187 = arith.constant 1.000000e+00 : f32
    %334 = vector.broadcast %cst_187 : f32 to vector<8x32xf32>
    %335 = arith.divf %334, %333 : vector<8x32xf32>
    %336 = vector.extract_strided_slice %325 {offsets = [0, 32], sizes = [8, 32], strides = [1, 1]} : vector<8x128xf32> to vector<8x32xf32>
    %cst_188 = arith.constant 0.000000e+00 : f32
    %337 = vector.broadcast %cst_188 : f32 to vector<8x32xf32>
    %338 = arith.subf %337, %336 : vector<8x32xf32>
    %339 = math.exp %338 : vector<8x32xf32>
    %cst_189 = arith.constant 1.000000e+00 : f32
    %340 = vector.broadcast %cst_189 : f32 to vector<8x32xf32>
    %341 = arith.addf %340, %339 : vector<8x32xf32>
    %cst_190 = arith.constant 1.000000e+00 : f32
    %342 = vector.broadcast %cst_190 : f32 to vector<8x32xf32>
    %343 = arith.divf %342, %341 : vector<8x32xf32>
    %344 = vector.extract_strided_slice %325 {offsets = [0, 64], sizes = [8, 32], strides = [1, 1]} : vector<8x128xf32> to vector<8x32xf32>
    %345 = math.tanh %344 : vector<8x32xf32>
    %346 = vector.extract_strided_slice %325 {offsets = [0, 96], sizes = [8, 32], strides = [1, 1]} : vector<8x128xf32> to vector<8x32xf32>
    %cst_191 = arith.constant 0.000000e+00 : f32
    %347 = vector.broadcast %cst_191 : f32 to vector<8x32xf32>
    %348 = arith.subf %347, %346 : vector<8x32xf32>
    %349 = math.exp %348 : vector<8x32xf32>
    %cst_192 = arith.constant 1.000000e+00 : f32
    %350 = vector.broadcast %cst_192 : f32 to vector<8x32xf32>
    %351 = arith.addf %350, %349 : vector<8x32xf32>
    %cst_193 = arith.constant 1.000000e+00 : f32
    %352 = vector.broadcast %cst_193 : f32 to vector<8x32xf32>
    %353 = arith.divf %352, %351 : vector<8x32xf32>
    %354 = arith.mulf %343, %327 : vector<8x32xf32>
    %355 = arith.mulf %335, %345 : vector<8x32xf32>
    %356 = arith.addf %354, %355 : vector<8x32xf32>
    %357 = math.tanh %356 : vector<8x32xf32>
    %358 = arith.mulf %353, %357 : vector<8x32xf32>
    %c0_194 = arith.constant 0 : index
    %c0_195 = arith.constant 0 : index
    %c0_196 = arith.constant 0 : index
    %359 = vector.load %arg9[%c0_194, %c0_195, %c0_196] : memref<2x8x32xf32, #tpu.memory_space<vmem>>, vector<1x8x32xf32>
    %360 = vector.shape_cast %359 : vector<1x8x32xf32> to vector<8x32xf32>
    %361 = vector.shape_cast %358 : vector<8x32xf32> to vector<1x8x32xf32>
    tpu.vector_store %arg9[%c0_194, %c0_195, %c0_196], %361 {strides = array<i32>} : memref<2x8x32xf32, #tpu.memory_space<vmem>>, vector<1x8x32xf32>,
    %c0_197 = arith.constant 0 : index
    %c0_198 = arith.constant 0 : index
    %c0_199 = arith.constant 0 : index
    %362 = vector.load %arg10[%c0_197, %c0_198, %c0_199] : memref<2x8x32xf32, #tpu.memory_space<vmem>>, vector<1x8x32xf32>
    %363 = vector.shape_cast %362 : vector<1x8x32xf32> to vector<8x32xf32>
    %364 = vector.shape_cast %356 : vector<8x32xf32> to vector<1x8x32xf32>
    tpu.vector_store %arg10[%c0_197, %c0_198, %c0_199], %364 {strides = array<i32>} : memref<2x8x32xf32, #tpu.memory_space<vmem>>, vector<1x8x32xf32>,
    %c0_200 = arith.constant 0 : index
    %c0_201 = arith.constant 0 : index
    %c0_202 = arith.constant 0 : index
    %365 = vector.load %arg4[%c0_200, %c0_201, %c0_202] : memref<1x64x128xbf16, #tpu.memory_space<vmem>>, vector<1x64x128xbf16>
    %366 = vector.shape_cast %365 : vector<1x64x128xbf16> to vector<64x128xbf16>
    %367 = arith.truncf %358 : vector<8x32xf32> to vector<8x32xbf16>
    %368 = vector.extract_strided_slice %366 {offsets = [0, 0], sizes = [32, 128], strides = [1, 1]} : vector<64x128xbf16> to vector<32x128xbf16>
    %cst_203 = arith.constant dense<0.000000e+00> : vector<8x128xf32>
    %369 = tpu.matmul %367, %368, %cst_203 {dimension_numbers = #tpu.dot_dimension_numbers<[1], [0], [0], [1], [0, 0, 1, 1], [], []>} : vector<8x32xbf16>, vector<32x128xbf16>, vector<8x128xf32> -> vector<8x128xf32>
    %c1_204 = arith.constant 1 : index
    %c0_205 = arith.constant 0 : index
    %c0_206 = arith.constant 0 : index
    %370 = vector.load %arg9[%c1_204, %c0_205, %c0_206] : memref<2x8x32xf32, #tpu.memory_space<vmem>>, vector<1x8x32xf32>
    %371 = vector.shape_cast %370 : vector<1x8x32xf32> to vector<8x32xf32>
    %372 = arith.truncf %371 : vector<8x32xf32> to vector<8x32xbf16>
    %373 = vector.extract_strided_slice %366 {offsets = [32, 0], sizes = [32, 128], strides = [1, 1]} : vector<64x128xbf16> to vector<32x128xbf16>
    %cst_207 = arith.constant dense<0.000000e+00> : vector<8x128xf32>
    %374 = tpu.matmul %372, %373, %cst_207 {dimension_numbers = #tpu.dot_dimension_numbers<[1], [0], [0], [1], [0, 0, 1, 1], [], []>} : vector<8x32xbf16>, vector<32x128xbf16>, vector<8x128xf32> -> vector<8x128xf32>
    %375 = arith.addf %369, %374 : vector<8x128xf32>
    %c0_208 = arith.constant 0 : index
    %c0_209 = arith.constant 0 : index
    %c0_210 = arith.constant 0 : index
    %376 = vector.load %arg5[%c0_208, %c0_209, %c0_210] : memref<1x1x128xf32, #tpu.memory_space<vmem>>, vector<1x1x128xf32>
    %377 = vector.shape_cast %376 : vector<1x1x128xf32> to vector<1x128xf32>
    %378 = vector.broadcast %377 : vector<1x128xf32> to vector<8x128xf32>
    %379 = arith.addf %375, %378 : vector<8x128xf32>
    %c1_211 = arith.constant 1 : index
    %c0_212 = arith.constant 0 : index
    %c0_213 = arith.constant 0 : index
    %380 = vector.load %arg10[%c1_211, %c0_212, %c0_213] : memref<2x8x32xf32, #tpu.memory_space<vmem>>, vector<1x8x32xf32>
    %381 = vector.shape_cast %380 : vector<1x8x32xf32> to vector<8x32xf32>
    %382 = vector.extract_strided_slice %379 {offsets = [0, 0], sizes = [8, 32], strides = [1, 1]} : vector<8x128xf32> to vector<8x32xf32>
    %cst_214 = arith.constant 0.000000e+00 : f32
    %383 = vector.broadcast %cst_214 : f32 to vector<8x32xf32>
    %384 = arith.subf %383, %382 : vector<8x32xf32>
    %385 = math.exp %384 : vector<8x32xf32>
    %cst_215 = arith.constant 1.000000e+00 : f32
    %386 = vector.broadcast %cst_215 : f32 to vector<8x32xf32>
    %387 = arith.addf %386, %385 : vector<8x32xf32>
    %cst_216 = arith.constant 1.000000e+00 : f32
    %388 = vector.broadcast %cst_216 : f32 to vector<8x32xf32>
    %389 = arith.divf %388, %387 : vector<8x32xf32>
    %390 = vector.extract_strided_slice %379 {offsets = [0, 32], sizes = [8, 32], strides = [1, 1]} : vector<8x128xf32> to vector<8x32xf32>
    %cst_217 = arith.constant 0.000000e+00 : f32
    %391 = vector.broadcast %cst_217 : f32 to vector<8x32xf32>
    %392 = arith.subf %391, %390 : vector<8x32xf32>
    %393 = math.exp %392 : vector<8x32xf32>
    %cst_218 = arith.constant 1.000000e+00 : f32
    %394 = vector.broadcast %cst_218 : f32 to vector<8x32xf32>
    %395 = arith.addf %394, %393 : vector<8x32xf32>
    %cst_219 = arith.constant 1.000000e+00 : f32
    %396 = vector.broadcast %cst_219 : f32 to vector<8x32xf32>
    %397 = arith.divf %396, %395 : vector<8x32xf32>
    %398 = vector.extract_strided_slice %379 {offsets = [0, 64], sizes = [8, 32], strides = [1, 1]} : vector<8x128xf32> to vector<8x32xf32>
    %399 = math.tanh %398 : vector<8x32xf32>
    %400 = vector.extract_strided_slice %379 {offsets = [0, 96], sizes = [8, 32], strides = [1, 1]} : vector<8x128xf32> to vector<8x32xf32>
    %cst_220 = arith.constant 0.000000e+00 : f32
    %401 = vector.broadcast %cst_220 : f32 to vector<8x32xf32>
    %402 = arith.subf %401, %400 : vector<8x32xf32>
    %403 = math.exp %402 : vector<8x32xf32>
    %cst_221 = arith.constant 1.000000e+00 : f32
    %404 = vector.broadcast %cst_221 : f32 to vector<8x32xf32>
    %405 = arith.addf %404, %403 : vector<8x32xf32>
    %cst_222 = arith.constant 1.000000e+00 : f32
    %406 = vector.broadcast %cst_222 : f32 to vector<8x32xf32>
    %407 = arith.divf %406, %405 : vector<8x32xf32>
    %408 = arith.mulf %397, %381 : vector<8x32xf32>
    %409 = arith.mulf %389, %399 : vector<8x32xf32>
    %410 = arith.addf %408, %409 : vector<8x32xf32>
    %411 = math.tanh %410 : vector<8x32xf32>
    %412 = arith.mulf %407, %411 : vector<8x32xf32>
    %c1_223 = arith.constant 1 : index
    %c0_224 = arith.constant 0 : index
    %c0_225 = arith.constant 0 : index
    %413 = vector.load %arg9[%c1_223, %c0_224, %c0_225] : memref<2x8x32xf32, #tpu.memory_space<vmem>>, vector<1x8x32xf32>
    %414 = vector.shape_cast %413 : vector<1x8x32xf32> to vector<8x32xf32>
    %415 = vector.shape_cast %412 : vector<8x32xf32> to vector<1x8x32xf32>
    tpu.vector_store %arg9[%c1_223, %c0_224, %c0_225], %415 {strides = array<i32>} : memref<2x8x32xf32, #tpu.memory_space<vmem>>, vector<1x8x32xf32>,
    %c1_226 = arith.constant 1 : index
    %c0_227 = arith.constant 0 : index
    %c0_228 = arith.constant 0 : index
    %416 = vector.load %arg10[%c1_226, %c0_227, %c0_228] : memref<2x8x32xf32, #tpu.memory_space<vmem>>, vector<1x8x32xf32>
    %417 = vector.shape_cast %416 : vector<1x8x32xf32> to vector<8x32xf32>
    %418 = vector.shape_cast %410 : vector<8x32xf32> to vector<1x8x32xf32>
    tpu.vector_store %arg10[%c1_226, %c0_227, %c0_228], %418 {strides = array<i32>} : memref<2x8x32xf32, #tpu.memory_space<vmem>>, vector<1x8x32xf32>,
    %419 = arith.truncf %412 : vector<8x32xf32> to vector<8x32xbf16>
    %c3_229 = arith.constant 3 : index
    %c0_230 = arith.constant 0 : index
    %c0_231 = arith.constant 0 : index
    %420 = vector.load %arg6[%c3_229, %c0_230, %c0_231] : memref<8x8x32xbf16, #tpu.memory_space<vmem>>, vector<1x8x32xbf16>
    %421 = vector.shape_cast %420 : vector<1x8x32xbf16> to vector<8x32xbf16>
    %422 = vector.shape_cast %419 : vector<8x32xbf16> to vector<1x8x32xbf16>
    tpu.vector_store %arg6[%c3_229, %c0_230, %c0_231], %422 {strides = array<i32>} : memref<8x8x32xbf16, #tpu.memory_space<vmem>>, vector<1x8x32xbf16>,
    %c4 = arith.constant 4 : index
    %c0_232 = arith.constant 0 : index
    %c0_233 = arith.constant 0 : index
    %423 = vector.load %arg2[%c4, %c0_232, %c0_233] : memref<8x8x128xf32, #tpu.memory_space<vmem>>, vector<1x8x128xf32>
    %424 = vector.shape_cast %423 : vector<1x8x128xf32> to vector<8x128xf32>
    %c0_234 = arith.constant 0 : index
    %c0_235 = arith.constant 0 : index
    %c0_236 = arith.constant 0 : index
    %425 = vector.load %arg9[%c0_234, %c0_235, %c0_236] : memref<2x8x32xf32, #tpu.memory_space<vmem>>, vector<1x8x32xf32>
    %426 = vector.shape_cast %425 : vector<1x8x32xf32> to vector<8x32xf32>
    %427 = arith.truncf %426 : vector<8x32xf32> to vector<8x32xbf16>
    %c0_237 = arith.constant 0 : index
    %c0_238 = arith.constant 0 : index
    %428 = vector.load %arg3[%c0_237, %c0_238] : memref<32x128xbf16, #tpu.memory_space<vmem>>, vector<32x128xbf16>
    %cst_239 = arith.constant dense<0.000000e+00> : vector<8x128xf32>
    %429 = tpu.matmul %427, %428, %cst_239 {dimension_numbers = #tpu.dot_dimension_numbers<[1], [0], [0], [1], [0, 0, 1, 1], [], []>} : vector<8x32xbf16>, vector<32x128xbf16>, vector<8x128xf32> -> vector<8x128xf32>
    %430 = arith.addf %424, %429 : vector<8x128xf32>
    %c0_240 = arith.constant 0 : index
    %c0_241 = arith.constant 0 : index
    %c0_242 = arith.constant 0 : index
    %431 = vector.load %arg10[%c0_240, %c0_241, %c0_242] : memref<2x8x32xf32, #tpu.memory_space<vmem>>, vector<1x8x32xf32>
    %432 = vector.shape_cast %431 : vector<1x8x32xf32> to vector<8x32xf32>
    %433 = vector.extract_strided_slice %430 {offsets = [0, 0], sizes = [8, 32], strides = [1, 1]} : vector<8x128xf32> to vector<8x32xf32>
    %cst_243 = arith.constant 0.000000e+00 : f32
    %434 = vector.broadcast %cst_243 : f32 to vector<8x32xf32>
    %435 = arith.subf %434, %433 : vector<8x32xf32>
    %436 = math.exp %435 : vector<8x32xf32>
    %cst_244 = arith.constant 1.000000e+00 : f32
    %437 = vector.broadcast %cst_244 : f32 to vector<8x32xf32>
    %438 = arith.addf %437, %436 : vector<8x32xf32>
    %cst_245 = arith.constant 1.000000e+00 : f32
    %439 = vector.broadcast %cst_245 : f32 to vector<8x32xf32>
    %440 = arith.divf %439, %438 : vector<8x32xf32>
    %441 = vector.extract_strided_slice %430 {offsets = [0, 32], sizes = [8, 32], strides = [1, 1]} : vector<8x128xf32> to vector<8x32xf32>
    %cst_246 = arith.constant 0.000000e+00 : f32
    %442 = vector.broadcast %cst_246 : f32 to vector<8x32xf32>
    %443 = arith.subf %442, %441 : vector<8x32xf32>
    %444 = math.exp %443 : vector<8x32xf32>
    %cst_247 = arith.constant 1.000000e+00 : f32
    %445 = vector.broadcast %cst_247 : f32 to vector<8x32xf32>
    %446 = arith.addf %445, %444 : vector<8x32xf32>
    %cst_248 = arith.constant 1.000000e+00 : f32
    %447 = vector.broadcast %cst_248 : f32 to vector<8x32xf32>
    %448 = arith.divf %447, %446 : vector<8x32xf32>
    %449 = vector.extract_strided_slice %430 {offsets = [0, 64], sizes = [8, 32], strides = [1, 1]} : vector<8x128xf32> to vector<8x32xf32>
    %450 = math.tanh %449 : vector<8x32xf32>
    %451 = vector.extract_strided_slice %430 {offsets = [0, 96], sizes = [8, 32], strides = [1, 1]} : vector<8x128xf32> to vector<8x32xf32>
    %cst_249 = arith.constant 0.000000e+00 : f32
    %452 = vector.broadcast %cst_249 : f32 to vector<8x32xf32>
    %453 = arith.subf %452, %451 : vector<8x32xf32>
    %454 = math.exp %453 : vector<8x32xf32>
    %cst_250 = arith.constant 1.000000e+00 : f32
    %455 = vector.broadcast %cst_250 : f32 to vector<8x32xf32>
    %456 = arith.addf %455, %454 : vector<8x32xf32>
    %cst_251 = arith.constant 1.000000e+00 : f32
    %457 = vector.broadcast %cst_251 : f32 to vector<8x32xf32>
    %458 = arith.divf %457, %456 : vector<8x32xf32>
    %459 = arith.mulf %448, %432 : vector<8x32xf32>
    %460 = arith.mulf %440, %450 : vector<8x32xf32>
    %461 = arith.addf %459, %460 : vector<8x32xf32>
    %462 = math.tanh %461 : vector<8x32xf32>
    %463 = arith.mulf %458, %462 : vector<8x32xf32>
    %c0_252 = arith.constant 0 : index
    %c0_253 = arith.constant 0 : index
    %c0_254 = arith.constant 0 : index
    %464 = vector.load %arg9[%c0_252, %c0_253, %c0_254] : memref<2x8x32xf32, #tpu.memory_space<vmem>>, vector<1x8x32xf32>
    %465 = vector.shape_cast %464 : vector<1x8x32xf32> to vector<8x32xf32>
    %466 = vector.shape_cast %463 : vector<8x32xf32> to vector<1x8x32xf32>
    tpu.vector_store %arg9[%c0_252, %c0_253, %c0_254], %466 {strides = array<i32>} : memref<2x8x32xf32, #tpu.memory_space<vmem>>, vector<1x8x32xf32>,
    %c0_255 = arith.constant 0 : index
    %c0_256 = arith.constant 0 : index
    %c0_257 = arith.constant 0 : index
    %467 = vector.load %arg10[%c0_255, %c0_256, %c0_257] : memref<2x8x32xf32, #tpu.memory_space<vmem>>, vector<1x8x32xf32>
    %468 = vector.shape_cast %467 : vector<1x8x32xf32> to vector<8x32xf32>
    %469 = vector.shape_cast %461 : vector<8x32xf32> to vector<1x8x32xf32>
    tpu.vector_store %arg10[%c0_255, %c0_256, %c0_257], %469 {strides = array<i32>} : memref<2x8x32xf32, #tpu.memory_space<vmem>>, vector<1x8x32xf32>,
    %c0_258 = arith.constant 0 : index
    %c0_259 = arith.constant 0 : index
    %c0_260 = arith.constant 0 : index
    %470 = vector.load %arg4[%c0_258, %c0_259, %c0_260] : memref<1x64x128xbf16, #tpu.memory_space<vmem>>, vector<1x64x128xbf16>
    %471 = vector.shape_cast %470 : vector<1x64x128xbf16> to vector<64x128xbf16>
    %472 = arith.truncf %463 : vector<8x32xf32> to vector<8x32xbf16>
    %473 = vector.extract_strided_slice %471 {offsets = [0, 0], sizes = [32, 128], strides = [1, 1]} : vector<64x128xbf16> to vector<32x128xbf16>
    %cst_261 = arith.constant dense<0.000000e+00> : vector<8x128xf32>
    %474 = tpu.matmul %472, %473, %cst_261 {dimension_numbers = #tpu.dot_dimension_numbers<[1], [0], [0], [1], [0, 0, 1, 1], [], []>} : vector<8x32xbf16>, vector<32x128xbf16>, vector<8x128xf32> -> vector<8x128xf32>
    %c1_262 = arith.constant 1 : index
    %c0_263 = arith.constant 0 : index
    %c0_264 = arith.constant 0 : index
    %475 = vector.load %arg9[%c1_262, %c0_263, %c0_264] : memref<2x8x32xf32, #tpu.memory_space<vmem>>, vector<1x8x32xf32>
    %476 = vector.shape_cast %475 : vector<1x8x32xf32> to vector<8x32xf32>
    %477 = arith.truncf %476 : vector<8x32xf32> to vector<8x32xbf16>
    %478 = vector.extract_strided_slice %471 {offsets = [32, 0], sizes = [32, 128], strides = [1, 1]} : vector<64x128xbf16> to vector<32x128xbf16>
    %cst_265 = arith.constant dense<0.000000e+00> : vector<8x128xf32>
    %479 = tpu.matmul %477, %478, %cst_265 {dimension_numbers = #tpu.dot_dimension_numbers<[1], [0], [0], [1], [0, 0, 1, 1], [], []>} : vector<8x32xbf16>, vector<32x128xbf16>, vector<8x128xf32> -> vector<8x128xf32>
    %480 = arith.addf %474, %479 : vector<8x128xf32>
    %c0_266 = arith.constant 0 : index
    %c0_267 = arith.constant 0 : index
    %c0_268 = arith.constant 0 : index
    %481 = vector.load %arg5[%c0_266, %c0_267, %c0_268] : memref<1x1x128xf32, #tpu.memory_space<vmem>>, vector<1x1x128xf32>
    %482 = vector.shape_cast %481 : vector<1x1x128xf32> to vector<1x128xf32>
    %483 = vector.broadcast %482 : vector<1x128xf32> to vector<8x128xf32>
    %484 = arith.addf %480, %483 : vector<8x128xf32>
    %c1_269 = arith.constant 1 : index
    %c0_270 = arith.constant 0 : index
    %c0_271 = arith.constant 0 : index
    %485 = vector.load %arg10[%c1_269, %c0_270, %c0_271] : memref<2x8x32xf32, #tpu.memory_space<vmem>>, vector<1x8x32xf32>
    %486 = vector.shape_cast %485 : vector<1x8x32xf32> to vector<8x32xf32>
    %487 = vector.extract_strided_slice %484 {offsets = [0, 0], sizes = [8, 32], strides = [1, 1]} : vector<8x128xf32> to vector<8x32xf32>
    %cst_272 = arith.constant 0.000000e+00 : f32
    %488 = vector.broadcast %cst_272 : f32 to vector<8x32xf32>
    %489 = arith.subf %488, %487 : vector<8x32xf32>
    %490 = math.exp %489 : vector<8x32xf32>
    %cst_273 = arith.constant 1.000000e+00 : f32
    %491 = vector.broadcast %cst_273 : f32 to vector<8x32xf32>
    %492 = arith.addf %491, %490 : vector<8x32xf32>
    %cst_274 = arith.constant 1.000000e+00 : f32
    %493 = vector.broadcast %cst_274 : f32 to vector<8x32xf32>
    %494 = arith.divf %493, %492 : vector<8x32xf32>
    %495 = vector.extract_strided_slice %484 {offsets = [0, 32], sizes = [8, 32], strides = [1, 1]} : vector<8x128xf32> to vector<8x32xf32>
    %cst_275 = arith.constant 0.000000e+00 : f32
    %496 = vector.broadcast %cst_275 : f32 to vector<8x32xf32>
    %497 = arith.subf %496, %495 : vector<8x32xf32>
    %498 = math.exp %497 : vector<8x32xf32>
    %cst_276 = arith.constant 1.000000e+00 : f32
    %499 = vector.broadcast %cst_276 : f32 to vector<8x32xf32>
    %500 = arith.addf %499, %498 : vector<8x32xf32>
    %cst_277 = arith.constant 1.000000e+00 : f32
    %501 = vector.broadcast %cst_277 : f32 to vector<8x32xf32>
    %502 = arith.divf %501, %500 : vector<8x32xf32>
    %503 = vector.extract_strided_slice %484 {offsets = [0, 64], sizes = [8, 32], strides = [1, 1]} : vector<8x128xf32> to vector<8x32xf32>
    %504 = math.tanh %503 : vector<8x32xf32>
    %505 = vector.extract_strided_slice %484 {offsets = [0, 96], sizes = [8, 32], strides = [1, 1]} : vector<8x128xf32> to vector<8x32xf32>
    %cst_278 = arith.constant 0.000000e+00 : f32
    %506 = vector.broadcast %cst_278 : f32 to vector<8x32xf32>
    %507 = arith.subf %506, %505 : vector<8x32xf32>
    %508 = math.exp %507 : vector<8x32xf32>
    %cst_279 = arith.constant 1.000000e+00 : f32
    %509 = vector.broadcast %cst_279 : f32 to vector<8x32xf32>
    %510 = arith.addf %509, %508 : vector<8x32xf32>
    %cst_280 = arith.constant 1.000000e+00 : f32
    %511 = vector.broadcast %cst_280 : f32 to vector<8x32xf32>
    %512 = arith.divf %511, %510 : vector<8x32xf32>
    %513 = arith.mulf %502, %486 : vector<8x32xf32>
    %514 = arith.mulf %494, %504 : vector<8x32xf32>
    %515 = arith.addf %513, %514 : vector<8x32xf32>
    %516 = math.tanh %515 : vector<8x32xf32>
    %517 = arith.mulf %512, %516 : vector<8x32xf32>
    %c1_281 = arith.constant 1 : index
    %c0_282 = arith.constant 0 : index
    %c0_283 = arith.constant 0 : index
    %518 = vector.load %arg9[%c1_281, %c0_282, %c0_283] : memref<2x8x32xf32, #tpu.memory_space<vmem>>, vector<1x8x32xf32>
    %519 = vector.shape_cast %518 : vector<1x8x32xf32> to vector<8x32xf32>
    %520 = vector.shape_cast %517 : vector<8x32xf32> to vector<1x8x32xf32>
    tpu.vector_store %arg9[%c1_281, %c0_282, %c0_283], %520 {strides = array<i32>} : memref<2x8x32xf32, #tpu.memory_space<vmem>>, vector<1x8x32xf32>,
    %c1_284 = arith.constant 1 : index
    %c0_285 = arith.constant 0 : index
    %c0_286 = arith.constant 0 : index
    %521 = vector.load %arg10[%c1_284, %c0_285, %c0_286] : memref<2x8x32xf32, #tpu.memory_space<vmem>>, vector<1x8x32xf32>
    %522 = vector.shape_cast %521 : vector<1x8x32xf32> to vector<8x32xf32>
    %523 = vector.shape_cast %515 : vector<8x32xf32> to vector<1x8x32xf32>
    tpu.vector_store %arg10[%c1_284, %c0_285, %c0_286], %523 {strides = array<i32>} : memref<2x8x32xf32, #tpu.memory_space<vmem>>, vector<1x8x32xf32>,
    %524 = arith.truncf %517 : vector<8x32xf32> to vector<8x32xbf16>
    %c4_287 = arith.constant 4 : index
    %c0_288 = arith.constant 0 : index
    %c0_289 = arith.constant 0 : index
    %525 = vector.load %arg6[%c4_287, %c0_288, %c0_289] : memref<8x8x32xbf16, #tpu.memory_space<vmem>>, vector<1x8x32xbf16>
    %526 = vector.shape_cast %525 : vector<1x8x32xbf16> to vector<8x32xbf16>
    %527 = vector.shape_cast %524 : vector<8x32xbf16> to vector<1x8x32xbf16>
    tpu.vector_store %arg6[%c4_287, %c0_288, %c0_289], %527 {strides = array<i32>} : memref<8x8x32xbf16, #tpu.memory_space<vmem>>, vector<1x8x32xbf16>,
    %c5 = arith.constant 5 : index
    %c0_290 = arith.constant 0 : index
    %c0_291 = arith.constant 0 : index
    %528 = vector.load %arg2[%c5, %c0_290, %c0_291] : memref<8x8x128xf32, #tpu.memory_space<vmem>>, vector<1x8x128xf32>
    %529 = vector.shape_cast %528 : vector<1x8x128xf32> to vector<8x128xf32>
    %c0_292 = arith.constant 0 : index
    %c0_293 = arith.constant 0 : index
    %c0_294 = arith.constant 0 : index
    %530 = vector.load %arg9[%c0_292, %c0_293, %c0_294] : memref<2x8x32xf32, #tpu.memory_space<vmem>>, vector<1x8x32xf32>
    %531 = vector.shape_cast %530 : vector<1x8x32xf32> to vector<8x32xf32>
    %532 = arith.truncf %531 : vector<8x32xf32> to vector<8x32xbf16>
    %c0_295 = arith.constant 0 : index
    %c0_296 = arith.constant 0 : index
    %533 = vector.load %arg3[%c0_295, %c0_296] : memref<32x128xbf16, #tpu.memory_space<vmem>>, vector<32x128xbf16>
    %cst_297 = arith.constant dense<0.000000e+00> : vector<8x128xf32>
    %534 = tpu.matmul %532, %533, %cst_297 {dimension_numbers = #tpu.dot_dimension_numbers<[1], [0], [0], [1], [0, 0, 1, 1], [], []>} : vector<8x32xbf16>, vector<32x128xbf16>, vector<8x128xf32> -> vector<8x128xf32>
    %535 = arith.addf %529, %534 : vector<8x128xf32>
    %c0_298 = arith.constant 0 : index
    %c0_299 = arith.constant 0 : index
    %c0_300 = arith.constant 0 : index
    %536 = vector.load %arg10[%c0_298, %c0_299, %c0_300] : memref<2x8x32xf32, #tpu.memory_space<vmem>>, vector<1x8x32xf32>
    %537 = vector.shape_cast %536 : vector<1x8x32xf32> to vector<8x32xf32>
    %538 = vector.extract_strided_slice %535 {offsets = [0, 0], sizes = [8, 32], strides = [1, 1]} : vector<8x128xf32> to vector<8x32xf32>
    %cst_301 = arith.constant 0.000000e+00 : f32
    %539 = vector.broadcast %cst_301 : f32 to vector<8x32xf32>
    %540 = arith.subf %539, %538 : vector<8x32xf32>
    %541 = math.exp %540 : vector<8x32xf32>
    %cst_302 = arith.constant 1.000000e+00 : f32
    %542 = vector.broadcast %cst_302 : f32 to vector<8x32xf32>
    %543 = arith.addf %542, %541 : vector<8x32xf32>
    %cst_303 = arith.constant 1.000000e+00 : f32
    %544 = vector.broadcast %cst_303 : f32 to vector<8x32xf32>
    %545 = arith.divf %544, %543 : vector<8x32xf32>
    %546 = vector.extract_strided_slice %535 {offsets = [0, 32], sizes = [8, 32], strides = [1, 1]} : vector<8x128xf32> to vector<8x32xf32>
    %cst_304 = arith.constant 0.000000e+00 : f32
    %547 = vector.broadcast %cst_304 : f32 to vector<8x32xf32>
    %548 = arith.subf %547, %546 : vector<8x32xf32>
    %549 = math.exp %548 : vector<8x32xf32>
    %cst_305 = arith.constant 1.000000e+00 : f32
    %550 = vector.broadcast %cst_305 : f32 to vector<8x32xf32>
    %551 = arith.addf %550, %549 : vector<8x32xf32>
    %cst_306 = arith.constant 1.000000e+00 : f32
    %552 = vector.broadcast %cst_306 : f32 to vector<8x32xf32>
    %553 = arith.divf %552, %551 : vector<8x32xf32>
    %554 = vector.extract_strided_slice %535 {offsets = [0, 64], sizes = [8, 32], strides = [1, 1]} : vector<8x128xf32> to vector<8x32xf32>
    %555 = math.tanh %554 : vector<8x32xf32>
    %556 = vector.extract_strided_slice %535 {offsets = [0, 96], sizes = [8, 32], strides = [1, 1]} : vector<8x128xf32> to vector<8x32xf32>
    %cst_307 = arith.constant 0.000000e+00 : f32
    %557 = vector.broadcast %cst_307 : f32 to vector<8x32xf32>
    %558 = arith.subf %557, %556 : vector<8x32xf32>
    %559 = math.exp %558 : vector<8x32xf32>
    %cst_308 = arith.constant 1.000000e+00 : f32
    %560 = vector.broadcast %cst_308 : f32 to vector<8x32xf32>
    %561 = arith.addf %560, %559 : vector<8x32xf32>
    %cst_309 = arith.constant 1.000000e+00 : f32
    %562 = vector.broadcast %cst_309 : f32 to vector<8x32xf32>
    %563 = arith.divf %562, %561 : vector<8x32xf32>
    %564 = arith.mulf %553, %537 : vector<8x32xf32>
    %565 = arith.mulf %545, %555 : vector<8x32xf32>
    %566 = arith.addf %564, %565 : vector<8x32xf32>
    %567 = math.tanh %566 : vector<8x32xf32>
    %568 = arith.mulf %563, %567 : vector<8x32xf32>
    %c0_310 = arith.constant 0 : index
    %c0_311 = arith.constant 0 : index
    %c0_312 = arith.constant 0 : index
    %569 = vector.load %arg9[%c0_310, %c0_311, %c0_312] : memref<2x8x32xf32, #tpu.memory_space<vmem>>, vector<1x8x32xf32>
    %570 = vector.shape_cast %569 : vector<1x8x32xf32> to vector<8x32xf32>
    %571 = vector.shape_cast %568 : vector<8x32xf32> to vector<1x8x32xf32>
    tpu.vector_store %arg9[%c0_310, %c0_311, %c0_312], %571 {strides = array<i32>} : memref<2x8x32xf32, #tpu.memory_space<vmem>>, vector<1x8x32xf32>,
    %c0_313 = arith.constant 0 : index
    %c0_314 = arith.constant 0 : index
    %c0_315 = arith.constant 0 : index
    %572 = vector.load %arg10[%c0_313, %c0_314, %c0_315] : memref<2x8x32xf32, #tpu.memory_space<vmem>>, vector<1x8x32xf32>
    %573 = vector.shape_cast %572 : vector<1x8x32xf32> to vector<8x32xf32>
    %574 = vector.shape_cast %566 : vector<8x32xf32> to vector<1x8x32xf32>
    tpu.vector_store %arg10[%c0_313, %c0_314, %c0_315], %574 {strides = array<i32>} : memref<2x8x32xf32, #tpu.memory_space<vmem>>, vector<1x8x32xf32>,
    %c0_316 = arith.constant 0 : index
    %c0_317 = arith.constant 0 : index
    %c0_318 = arith.constant 0 : index
    %575 = vector.load %arg4[%c0_316, %c0_317, %c0_318] : memref<1x64x128xbf16, #tpu.memory_space<vmem>>, vector<1x64x128xbf16>
    %576 = vector.shape_cast %575 : vector<1x64x128xbf16> to vector<64x128xbf16>
    %577 = arith.truncf %568 : vector<8x32xf32> to vector<8x32xbf16>
    %578 = vector.extract_strided_slice %576 {offsets = [0, 0], sizes = [32, 128], strides = [1, 1]} : vector<64x128xbf16> to vector<32x128xbf16>
    %cst_319 = arith.constant dense<0.000000e+00> : vector<8x128xf32>
    %579 = tpu.matmul %577, %578, %cst_319 {dimension_numbers = #tpu.dot_dimension_numbers<[1], [0], [0], [1], [0, 0, 1, 1], [], []>} : vector<8x32xbf16>, vector<32x128xbf16>, vector<8x128xf32> -> vector<8x128xf32>
    %c1_320 = arith.constant 1 : index
    %c0_321 = arith.constant 0 : index
    %c0_322 = arith.constant 0 : index
    %580 = vector.load %arg9[%c1_320, %c0_321, %c0_322] : memref<2x8x32xf32, #tpu.memory_space<vmem>>, vector<1x8x32xf32>
    %581 = vector.shape_cast %580 : vector<1x8x32xf32> to vector<8x32xf32>
    %582 = arith.truncf %581 : vector<8x32xf32> to vector<8x32xbf16>
    %583 = vector.extract_strided_slice %576 {offsets = [32, 0], sizes = [32, 128], strides = [1, 1]} : vector<64x128xbf16> to vector<32x128xbf16>
    %cst_323 = arith.constant dense<0.000000e+00> : vector<8x128xf32>
    %584 = tpu.matmul %582, %583, %cst_323 {dimension_numbers = #tpu.dot_dimension_numbers<[1], [0], [0], [1], [0, 0, 1, 1], [], []>} : vector<8x32xbf16>, vector<32x128xbf16>, vector<8x128xf32> -> vector<8x128xf32>
    %585 = arith.addf %579, %584 : vector<8x128xf32>
    %c0_324 = arith.constant 0 : index
    %c0_325 = arith.constant 0 : index
    %c0_326 = arith.constant 0 : index
    %586 = vector.load %arg5[%c0_324, %c0_325, %c0_326] : memref<1x1x128xf32, #tpu.memory_space<vmem>>, vector<1x1x128xf32>
    %587 = vector.shape_cast %586 : vector<1x1x128xf32> to vector<1x128xf32>
    %588 = vector.broadcast %587 : vector<1x128xf32> to vector<8x128xf32>
    %589 = arith.addf %585, %588 : vector<8x128xf32>
    %c1_327 = arith.constant 1 : index
    %c0_328 = arith.constant 0 : index
    %c0_329 = arith.constant 0 : index
    %590 = vector.load %arg10[%c1_327, %c0_328, %c0_329] : memref<2x8x32xf32, #tpu.memory_space<vmem>>, vector<1x8x32xf32>
    %591 = vector.shape_cast %590 : vector<1x8x32xf32> to vector<8x32xf32>
    %592 = vector.extract_strided_slice %589 {offsets = [0, 0], sizes = [8, 32], strides = [1, 1]} : vector<8x128xf32> to vector<8x32xf32>
    %cst_330 = arith.constant 0.000000e+00 : f32
    %593 = vector.broadcast %cst_330 : f32 to vector<8x32xf32>
    %594 = arith.subf %593, %592 : vector<8x32xf32>
    %595 = math.exp %594 : vector<8x32xf32>
    %cst_331 = arith.constant 1.000000e+00 : f32
    %596 = vector.broadcast %cst_331 : f32 to vector<8x32xf32>
    %597 = arith.addf %596, %595 : vector<8x32xf32>
    %cst_332 = arith.constant 1.000000e+00 : f32
    %598 = vector.broadcast %cst_332 : f32 to vector<8x32xf32>
    %599 = arith.divf %598, %597 : vector<8x32xf32>
    %600 = vector.extract_strided_slice %589 {offsets = [0, 32], sizes = [8, 32], strides = [1, 1]} : vector<8x128xf32> to vector<8x32xf32>
    %cst_333 = arith.constant 0.000000e+00 : f32
    %601 = vector.broadcast %cst_333 : f32 to vector<8x32xf32>
    %602 = arith.subf %601, %600 : vector<8x32xf32>
    %603 = math.exp %602 : vector<8x32xf32>
    %cst_334 = arith.constant 1.000000e+00 : f32
    %604 = vector.broadcast %cst_334 : f32 to vector<8x32xf32>
    %605 = arith.addf %604, %603 : vector<8x32xf32>
    %cst_335 = arith.constant 1.000000e+00 : f32
    %606 = vector.broadcast %cst_335 : f32 to vector<8x32xf32>
    %607 = arith.divf %606, %605 : vector<8x32xf32>
    %608 = vector.extract_strided_slice %589 {offsets = [0, 64], sizes = [8, 32], strides = [1, 1]} : vector<8x128xf32> to vector<8x32xf32>
    %609 = math.tanh %608 : vector<8x32xf32>
    %610 = vector.extract_strided_slice %589 {offsets = [0, 96], sizes = [8, 32], strides = [1, 1]} : vector<8x128xf32> to vector<8x32xf32>
    %cst_336 = arith.constant 0.000000e+00 : f32
    %611 = vector.broadcast %cst_336 : f32 to vector<8x32xf32>
    %612 = arith.subf %611, %610 : vector<8x32xf32>
    %613 = math.exp %612 : vector<8x32xf32>
    %cst_337 = arith.constant 1.000000e+00 : f32
    %614 = vector.broadcast %cst_337 : f32 to vector<8x32xf32>
    %615 = arith.addf %614, %613 : vector<8x32xf32>
    %cst_338 = arith.constant 1.000000e+00 : f32
    %616 = vector.broadcast %cst_338 : f32 to vector<8x32xf32>
    %617 = arith.divf %616, %615 : vector<8x32xf32>
    %618 = arith.mulf %607, %591 : vector<8x32xf32>
    %619 = arith.mulf %599, %609 : vector<8x32xf32>
    %620 = arith.addf %618, %619 : vector<8x32xf32>
    %621 = math.tanh %620 : vector<8x32xf32>
    %622 = arith.mulf %617, %621 : vector<8x32xf32>
    %c1_339 = arith.constant 1 : index
    %c0_340 = arith.constant 0 : index
    %c0_341 = arith.constant 0 : index
    %623 = vector.load %arg9[%c1_339, %c0_340, %c0_341] : memref<2x8x32xf32, #tpu.memory_space<vmem>>, vector<1x8x32xf32>
    %624 = vector.shape_cast %623 : vector<1x8x32xf32> to vector<8x32xf32>
    %625 = vector.shape_cast %622 : vector<8x32xf32> to vector<1x8x32xf32>
    tpu.vector_store %arg9[%c1_339, %c0_340, %c0_341], %625 {strides = array<i32>} : memref<2x8x32xf32, #tpu.memory_space<vmem>>, vector<1x8x32xf32>,
    %c1_342 = arith.constant 1 : index
    %c0_343 = arith.constant 0 : index
    %c0_344 = arith.constant 0 : index
    %626 = vector.load %arg10[%c1_342, %c0_343, %c0_344] : memref<2x8x32xf32, #tpu.memory_space<vmem>>, vector<1x8x32xf32>
    %627 = vector.shape_cast %626 : vector<1x8x32xf32> to vector<8x32xf32>
    %628 = vector.shape_cast %620 : vector<8x32xf32> to vector<1x8x32xf32>
    tpu.vector_store %arg10[%c1_342, %c0_343, %c0_344], %628 {strides = array<i32>} : memref<2x8x32xf32, #tpu.memory_space<vmem>>, vector<1x8x32xf32>,
    %629 = arith.truncf %622 : vector<8x32xf32> to vector<8x32xbf16>
    %c5_345 = arith.constant 5 : index
    %c0_346 = arith.constant 0 : index
    %c0_347 = arith.constant 0 : index
    %630 = vector.load %arg6[%c5_345, %c0_346, %c0_347] : memref<8x8x32xbf16, #tpu.memory_space<vmem>>, vector<1x8x32xbf16>
    %631 = vector.shape_cast %630 : vector<1x8x32xbf16> to vector<8x32xbf16>
    %632 = vector.shape_cast %629 : vector<8x32xbf16> to vector<1x8x32xbf16>
    tpu.vector_store %arg6[%c5_345, %c0_346, %c0_347], %632 {strides = array<i32>} : memref<8x8x32xbf16, #tpu.memory_space<vmem>>, vector<1x8x32xbf16>,
    %c6 = arith.constant 6 : index
    %c0_348 = arith.constant 0 : index
    %c0_349 = arith.constant 0 : index
    %633 = vector.load %arg2[%c6, %c0_348, %c0_349] : memref<8x8x128xf32, #tpu.memory_space<vmem>>, vector<1x8x128xf32>
    %634 = vector.shape_cast %633 : vector<1x8x128xf32> to vector<8x128xf32>
    %c0_350 = arith.constant 0 : index
    %c0_351 = arith.constant 0 : index
    %c0_352 = arith.constant 0 : index
    %635 = vector.load %arg9[%c0_350, %c0_351, %c0_352] : memref<2x8x32xf32, #tpu.memory_space<vmem>>, vector<1x8x32xf32>
    %636 = vector.shape_cast %635 : vector<1x8x32xf32> to vector<8x32xf32>
    %637 = arith.truncf %636 : vector<8x32xf32> to vector<8x32xbf16>
    %c0_353 = arith.constant 0 : index
    %c0_354 = arith.constant 0 : index
    %638 = vector.load %arg3[%c0_353, %c0_354] : memref<32x128xbf16, #tpu.memory_space<vmem>>, vector<32x128xbf16>
    %cst_355 = arith.constant dense<0.000000e+00> : vector<8x128xf32>
    %639 = tpu.matmul %637, %638, %cst_355 {dimension_numbers = #tpu.dot_dimension_numbers<[1], [0], [0], [1], [0, 0, 1, 1], [], []>} : vector<8x32xbf16>, vector<32x128xbf16>, vector<8x128xf32> -> vector<8x128xf32>
    %640 = arith.addf %634, %639 : vector<8x128xf32>
    %c0_356 = arith.constant 0 : index
    %c0_357 = arith.constant 0 : index
    %c0_358 = arith.constant 0 : index
    %641 = vector.load %arg10[%c0_356, %c0_357, %c0_358] : memref<2x8x32xf32, #tpu.memory_space<vmem>>, vector<1x8x32xf32>
    %642 = vector.shape_cast %641 : vector<1x8x32xf32> to vector<8x32xf32>
    %643 = vector.extract_strided_slice %640 {offsets = [0, 0], sizes = [8, 32], strides = [1, 1]} : vector<8x128xf32> to vector<8x32xf32>
    %cst_359 = arith.constant 0.000000e+00 : f32
    %644 = vector.broadcast %cst_359 : f32 to vector<8x32xf32>
    %645 = arith.subf %644, %643 : vector<8x32xf32>
    %646 = math.exp %645 : vector<8x32xf32>
    %cst_360 = arith.constant 1.000000e+00 : f32
    %647 = vector.broadcast %cst_360 : f32 to vector<8x32xf32>
    %648 = arith.addf %647, %646 : vector<8x32xf32>
    %cst_361 = arith.constant 1.000000e+00 : f32
    %649 = vector.broadcast %cst_361 : f32 to vector<8x32xf32>
    %650 = arith.divf %649, %648 : vector<8x32xf32>
    %651 = vector.extract_strided_slice %640 {offsets = [0, 32], sizes = [8, 32], strides = [1, 1]} : vector<8x128xf32> to vector<8x32xf32>
    %cst_362 = arith.constant 0.000000e+00 : f32
    %652 = vector.broadcast %cst_362 : f32 to vector<8x32xf32>
    %653 = arith.subf %652, %651 : vector<8x32xf32>
    %654 = math.exp %653 : vector<8x32xf32>
    %cst_363 = arith.constant 1.000000e+00 : f32
    %655 = vector.broadcast %cst_363 : f32 to vector<8x32xf32>
    %656 = arith.addf %655, %654 : vector<8x32xf32>
    %cst_364 = arith.constant 1.000000e+00 : f32
    %657 = vector.broadcast %cst_364 : f32 to vector<8x32xf32>
    %658 = arith.divf %657, %656 : vector<8x32xf32>
    %659 = vector.extract_strided_slice %640 {offsets = [0, 64], sizes = [8, 32], strides = [1, 1]} : vector<8x128xf32> to vector<8x32xf32>
    %660 = math.tanh %659 : vector<8x32xf32>
    %661 = vector.extract_strided_slice %640 {offsets = [0, 96], sizes = [8, 32], strides = [1, 1]} : vector<8x128xf32> to vector<8x32xf32>
    %cst_365 = arith.constant 0.000000e+00 : f32
    %662 = vector.broadcast %cst_365 : f32 to vector<8x32xf32>
    %663 = arith.subf %662, %661 : vector<8x32xf32>
    %664 = math.exp %663 : vector<8x32xf32>
    %cst_366 = arith.constant 1.000000e+00 : f32
    %665 = vector.broadcast %cst_366 : f32 to vector<8x32xf32>
    %666 = arith.addf %665, %664 : vector<8x32xf32>
    %cst_367 = arith.constant 1.000000e+00 : f32
    %667 = vector.broadcast %cst_367 : f32 to vector<8x32xf32>
    %668 = arith.divf %667, %666 : vector<8x32xf32>
    %669 = arith.mulf %658, %642 : vector<8x32xf32>
    %670 = arith.mulf %650, %660 : vector<8x32xf32>
    %671 = arith.addf %669, %670 : vector<8x32xf32>
    %672 = math.tanh %671 : vector<8x32xf32>
    %673 = arith.mulf %668, %672 : vector<8x32xf32>
    %c0_368 = arith.constant 0 : index
    %c0_369 = arith.constant 0 : index
    %c0_370 = arith.constant 0 : index
    %674 = vector.load %arg9[%c0_368, %c0_369, %c0_370] : memref<2x8x32xf32, #tpu.memory_space<vmem>>, vector<1x8x32xf32>
    %675 = vector.shape_cast %674 : vector<1x8x32xf32> to vector<8x32xf32>
    %676 = vector.shape_cast %673 : vector<8x32xf32> to vector<1x8x32xf32>
    tpu.vector_store %arg9[%c0_368, %c0_369, %c0_370], %676 {strides = array<i32>} : memref<2x8x32xf32, #tpu.memory_space<vmem>>, vector<1x8x32xf32>,
    %c0_371 = arith.constant 0 : index
    %c0_372 = arith.constant 0 : index
    %c0_373 = arith.constant 0 : index
    %677 = vector.load %arg10[%c0_371, %c0_372, %c0_373] : memref<2x8x32xf32, #tpu.memory_space<vmem>>, vector<1x8x32xf32>
    %678 = vector.shape_cast %677 : vector<1x8x32xf32> to vector<8x32xf32>
    %679 = vector.shape_cast %671 : vector<8x32xf32> to vector<1x8x32xf32>
    tpu.vector_store %arg10[%c0_371, %c0_372, %c0_373], %679 {strides = array<i32>} : memref<2x8x32xf32, #tpu.memory_space<vmem>>, vector<1x8x32xf32>,
    %c0_374 = arith.constant 0 : index
    %c0_375 = arith.constant 0 : index
    %c0_376 = arith.constant 0 : index
    %680 = vector.load %arg4[%c0_374, %c0_375, %c0_376] : memref<1x64x128xbf16, #tpu.memory_space<vmem>>, vector<1x64x128xbf16>
    %681 = vector.shape_cast %680 : vector<1x64x128xbf16> to vector<64x128xbf16>
    %682 = arith.truncf %673 : vector<8x32xf32> to vector<8x32xbf16>
    %683 = vector.extract_strided_slice %681 {offsets = [0, 0], sizes = [32, 128], strides = [1, 1]} : vector<64x128xbf16> to vector<32x128xbf16>
    %cst_377 = arith.constant dense<0.000000e+00> : vector<8x128xf32>
    %684 = tpu.matmul %682, %683, %cst_377 {dimension_numbers = #tpu.dot_dimension_numbers<[1], [0], [0], [1], [0, 0, 1, 1], [], []>} : vector<8x32xbf16>, vector<32x128xbf16>, vector<8x128xf32> -> vector<8x128xf32>
    %c1_378 = arith.constant 1 : index
    %c0_379 = arith.constant 0 : index
    %c0_380 = arith.constant 0 : index
    %685 = vector.load %arg9[%c1_378, %c0_379, %c0_380] : memref<2x8x32xf32, #tpu.memory_space<vmem>>, vector<1x8x32xf32>
    %686 = vector.shape_cast %685 : vector<1x8x32xf32> to vector<8x32xf32>
    %687 = arith.truncf %686 : vector<8x32xf32> to vector<8x32xbf16>
    %688 = vector.extract_strided_slice %681 {offsets = [32, 0], sizes = [32, 128], strides = [1, 1]} : vector<64x128xbf16> to vector<32x128xbf16>
    %cst_381 = arith.constant dense<0.000000e+00> : vector<8x128xf32>
    %689 = tpu.matmul %687, %688, %cst_381 {dimension_numbers = #tpu.dot_dimension_numbers<[1], [0], [0], [1], [0, 0, 1, 1], [], []>} : vector<8x32xbf16>, vector<32x128xbf16>, vector<8x128xf32> -> vector<8x128xf32>
    %690 = arith.addf %684, %689 : vector<8x128xf32>
    %c0_382 = arith.constant 0 : index
    %c0_383 = arith.constant 0 : index
    %c0_384 = arith.constant 0 : index
    %691 = vector.load %arg5[%c0_382, %c0_383, %c0_384] : memref<1x1x128xf32, #tpu.memory_space<vmem>>, vector<1x1x128xf32>
    %692 = vector.shape_cast %691 : vector<1x1x128xf32> to vector<1x128xf32>
    %693 = vector.broadcast %692 : vector<1x128xf32> to vector<8x128xf32>
    %694 = arith.addf %690, %693 : vector<8x128xf32>
    %c1_385 = arith.constant 1 : index
    %c0_386 = arith.constant 0 : index
    %c0_387 = arith.constant 0 : index
    %695 = vector.load %arg10[%c1_385, %c0_386, %c0_387] : memref<2x8x32xf32, #tpu.memory_space<vmem>>, vector<1x8x32xf32>
    %696 = vector.shape_cast %695 : vector<1x8x32xf32> to vector<8x32xf32>
    %697 = vector.extract_strided_slice %694 {offsets = [0, 0], sizes = [8, 32], strides = [1, 1]} : vector<8x128xf32> to vector<8x32xf32>
    %cst_388 = arith.constant 0.000000e+00 : f32
    %698 = vector.broadcast %cst_388 : f32 to vector<8x32xf32>
    %699 = arith.subf %698, %697 : vector<8x32xf32>
    %700 = math.exp %699 : vector<8x32xf32>
    %cst_389 = arith.constant 1.000000e+00 : f32
    %701 = vector.broadcast %cst_389 : f32 to vector<8x32xf32>
    %702 = arith.addf %701, %700 : vector<8x32xf32>
    %cst_390 = arith.constant 1.000000e+00 : f32
    %703 = vector.broadcast %cst_390 : f32 to vector<8x32xf32>
    %704 = arith.divf %703, %702 : vector<8x32xf32>
    %705 = vector.extract_strided_slice %694 {offsets = [0, 32], sizes = [8, 32], strides = [1, 1]} : vector<8x128xf32> to vector<8x32xf32>
    %cst_391 = arith.constant 0.000000e+00 : f32
    %706 = vector.broadcast %cst_391 : f32 to vector<8x32xf32>
    %707 = arith.subf %706, %705 : vector<8x32xf32>
    %708 = math.exp %707 : vector<8x32xf32>
    %cst_392 = arith.constant 1.000000e+00 : f32
    %709 = vector.broadcast %cst_392 : f32 to vector<8x32xf32>
    %710 = arith.addf %709, %708 : vector<8x32xf32>
    %cst_393 = arith.constant 1.000000e+00 : f32
    %711 = vector.broadcast %cst_393 : f32 to vector<8x32xf32>
    %712 = arith.divf %711, %710 : vector<8x32xf32>
    %713 = vector.extract_strided_slice %694 {offsets = [0, 64], sizes = [8, 32], strides = [1, 1]} : vector<8x128xf32> to vector<8x32xf32>
    %714 = math.tanh %713 : vector<8x32xf32>
    %715 = vector.extract_strided_slice %694 {offsets = [0, 96], sizes = [8, 32], strides = [1, 1]} : vector<8x128xf32> to vector<8x32xf32>
    %cst_394 = arith.constant 0.000000e+00 : f32
    %716 = vector.broadcast %cst_394 : f32 to vector<8x32xf32>
    %717 = arith.subf %716, %715 : vector<8x32xf32>
    %718 = math.exp %717 : vector<8x32xf32>
    %cst_395 = arith.constant 1.000000e+00 : f32
    %719 = vector.broadcast %cst_395 : f32 to vector<8x32xf32>
    %720 = arith.addf %719, %718 : vector<8x32xf32>
    %cst_396 = arith.constant 1.000000e+00 : f32
    %721 = vector.broadcast %cst_396 : f32 to vector<8x32xf32>
    %722 = arith.divf %721, %720 : vector<8x32xf32>
    %723 = arith.mulf %712, %696 : vector<8x32xf32>
    %724 = arith.mulf %704, %714 : vector<8x32xf32>
    %725 = arith.addf %723, %724 : vector<8x32xf32>
    %726 = math.tanh %725 : vector<8x32xf32>
    %727 = arith.mulf %722, %726 : vector<8x32xf32>
    %c1_397 = arith.constant 1 : index
    %c0_398 = arith.constant 0 : index
    %c0_399 = arith.constant 0 : index
    %728 = vector.load %arg9[%c1_397, %c0_398, %c0_399] : memref<2x8x32xf32, #tpu.memory_space<vmem>>, vector<1x8x32xf32>
    %729 = vector.shape_cast %728 : vector<1x8x32xf32> to vector<8x32xf32>
    %730 = vector.shape_cast %727 : vector<8x32xf32> to vector<1x8x32xf32>
    tpu.vector_store %arg9[%c1_397, %c0_398, %c0_399], %730 {strides = array<i32>} : memref<2x8x32xf32, #tpu.memory_space<vmem>>, vector<1x8x32xf32>,
    %c1_400 = arith.constant 1 : index
    %c0_401 = arith.constant 0 : index
    %c0_402 = arith.constant 0 : index
    %731 = vector.load %arg10[%c1_400, %c0_401, %c0_402] : memref<2x8x32xf32, #tpu.memory_space<vmem>>, vector<1x8x32xf32>
    %732 = vector.shape_cast %731 : vector<1x8x32xf32> to vector<8x32xf32>
    %733 = vector.shape_cast %725 : vector<8x32xf32> to vector<1x8x32xf32>
    tpu.vector_store %arg10[%c1_400, %c0_401, %c0_402], %733 {strides = array<i32>} : memref<2x8x32xf32, #tpu.memory_space<vmem>>, vector<1x8x32xf32>,
    %734 = arith.truncf %727 : vector<8x32xf32> to vector<8x32xbf16>
    %c6_403 = arith.constant 6 : index
    %c0_404 = arith.constant 0 : index
    %c0_405 = arith.constant 0 : index
    %735 = vector.load %arg6[%c6_403, %c0_404, %c0_405] : memref<8x8x32xbf16, #tpu.memory_space<vmem>>, vector<1x8x32xbf16>
    %736 = vector.shape_cast %735 : vector<1x8x32xbf16> to vector<8x32xbf16>
    %737 = vector.shape_cast %734 : vector<8x32xbf16> to vector<1x8x32xbf16>
    tpu.vector_store %arg6[%c6_403, %c0_404, %c0_405], %737 {strides = array<i32>} : memref<8x8x32xbf16, #tpu.memory_space<vmem>>, vector<1x8x32xbf16>,
    %c7 = arith.constant 7 : index
    %c0_406 = arith.constant 0 : index
    %c0_407 = arith.constant 0 : index
    %738 = vector.load %arg2[%c7, %c0_406, %c0_407] : memref<8x8x128xf32, #tpu.memory_space<vmem>>, vector<1x8x128xf32>
    %739 = vector.shape_cast %738 : vector<1x8x128xf32> to vector<8x128xf32>
    %c0_408 = arith.constant 0 : index
    %c0_409 = arith.constant 0 : index
    %c0_410 = arith.constant 0 : index
    %740 = vector.load %arg9[%c0_408, %c0_409, %c0_410] : memref<2x8x32xf32, #tpu.memory_space<vmem>>, vector<1x8x32xf32>
    %741 = vector.shape_cast %740 : vector<1x8x32xf32> to vector<8x32xf32>
    %742 = arith.truncf %741 : vector<8x32xf32> to vector<8x32xbf16>
    %c0_411 = arith.constant 0 : index
    %c0_412 = arith.constant 0 : index
    %743 = vector.load %arg3[%c0_411, %c0_412] : memref<32x128xbf16, #tpu.memory_space<vmem>>, vector<32x128xbf16>
    %cst_413 = arith.constant dense<0.000000e+00> : vector<8x128xf32>
    %744 = tpu.matmul %742, %743, %cst_413 {dimension_numbers = #tpu.dot_dimension_numbers<[1], [0], [0], [1], [0, 0, 1, 1], [], []>} : vector<8x32xbf16>, vector<32x128xbf16>, vector<8x128xf32> -> vector<8x128xf32>
    %745 = arith.addf %739, %744 : vector<8x128xf32>
    %c0_414 = arith.constant 0 : index
    %c0_415 = arith.constant 0 : index
    %c0_416 = arith.constant 0 : index
    %746 = vector.load %arg10[%c0_414, %c0_415, %c0_416] : memref<2x8x32xf32, #tpu.memory_space<vmem>>, vector<1x8x32xf32>
    %747 = vector.shape_cast %746 : vector<1x8x32xf32> to vector<8x32xf32>
    %748 = vector.extract_strided_slice %745 {offsets = [0, 0], sizes = [8, 32], strides = [1, 1]} : vector<8x128xf32> to vector<8x32xf32>
    %cst_417 = arith.constant 0.000000e+00 : f32
    %749 = vector.broadcast %cst_417 : f32 to vector<8x32xf32>
    %750 = arith.subf %749, %748 : vector<8x32xf32>
    %751 = math.exp %750 : vector<8x32xf32>
    %cst_418 = arith.constant 1.000000e+00 : f32
    %752 = vector.broadcast %cst_418 : f32 to vector<8x32xf32>
    %753 = arith.addf %752, %751 : vector<8x32xf32>
    %cst_419 = arith.constant 1.000000e+00 : f32
    %754 = vector.broadcast %cst_419 : f32 to vector<8x32xf32>
    %755 = arith.divf %754, %753 : vector<8x32xf32>
    %756 = vector.extract_strided_slice %745 {offsets = [0, 32], sizes = [8, 32], strides = [1, 1]} : vector<8x128xf32> to vector<8x32xf32>
    %cst_420 = arith.constant 0.000000e+00 : f32
    %757 = vector.broadcast %cst_420 : f32 to vector<8x32xf32>
    %758 = arith.subf %757, %756 : vector<8x32xf32>
    %759 = math.exp %758 : vector<8x32xf32>
    %cst_421 = arith.constant 1.000000e+00 : f32
    %760 = vector.broadcast %cst_421 : f32 to vector<8x32xf32>
    %761 = arith.addf %760, %759 : vector<8x32xf32>
    %cst_422 = arith.constant 1.000000e+00 : f32
    %762 = vector.broadcast %cst_422 : f32 to vector<8x32xf32>
    %763 = arith.divf %762, %761 : vector<8x32xf32>
    %764 = vector.extract_strided_slice %745 {offsets = [0, 64], sizes = [8, 32], strides = [1, 1]} : vector<8x128xf32> to vector<8x32xf32>
    %765 = math.tanh %764 : vector<8x32xf32>
    %766 = vector.extract_strided_slice %745 {offsets = [0, 96], sizes = [8, 32], strides = [1, 1]} : vector<8x128xf32> to vector<8x32xf32>
    %cst_423 = arith.constant 0.000000e+00 : f32
    %767 = vector.broadcast %cst_423 : f32 to vector<8x32xf32>
    %768 = arith.subf %767, %766 : vector<8x32xf32>
    %769 = math.exp %768 : vector<8x32xf32>
    %cst_424 = arith.constant 1.000000e+00 : f32
    %770 = vector.broadcast %cst_424 : f32 to vector<8x32xf32>
    %771 = arith.addf %770, %769 : vector<8x32xf32>
    %cst_425 = arith.constant 1.000000e+00 : f32
    %772 = vector.broadcast %cst_425 : f32 to vector<8x32xf32>
    %773 = arith.divf %772, %771 : vector<8x32xf32>
    %774 = arith.mulf %763, %747 : vector<8x32xf32>
    %775 = arith.mulf %755, %765 : vector<8x32xf32>
    %776 = arith.addf %774, %775 : vector<8x32xf32>
    %777 = math.tanh %776 : vector<8x32xf32>
    %778 = arith.mulf %773, %777 : vector<8x32xf32>
    %c0_426 = arith.constant 0 : index
    %c0_427 = arith.constant 0 : index
    %c0_428 = arith.constant 0 : index
    %779 = vector.load %arg9[%c0_426, %c0_427, %c0_428] : memref<2x8x32xf32, #tpu.memory_space<vmem>>, vector<1x8x32xf32>
    %780 = vector.shape_cast %779 : vector<1x8x32xf32> to vector<8x32xf32>
    %781 = vector.shape_cast %778 : vector<8x32xf32> to vector<1x8x32xf32>
    tpu.vector_store %arg9[%c0_426, %c0_427, %c0_428], %781 {strides = array<i32>} : memref<2x8x32xf32, #tpu.memory_space<vmem>>, vector<1x8x32xf32>,
    %c0_429 = arith.constant 0 : index
    %c0_430 = arith.constant 0 : index
    %c0_431 = arith.constant 0 : index
    %782 = vector.load %arg10[%c0_429, %c0_430, %c0_431] : memref<2x8x32xf32, #tpu.memory_space<vmem>>, vector<1x8x32xf32>
    %783 = vector.shape_cast %782 : vector<1x8x32xf32> to vector<8x32xf32>
    %784 = vector.shape_cast %776 : vector<8x32xf32> to vector<1x8x32xf32>
    tpu.vector_store %arg10[%c0_429, %c0_430, %c0_431], %784 {strides = array<i32>} : memref<2x8x32xf32, #tpu.memory_space<vmem>>, vector<1x8x32xf32>,
    %c0_432 = arith.constant 0 : index
    %c0_433 = arith.constant 0 : index
    %c0_434 = arith.constant 0 : index
    %785 = vector.load %arg4[%c0_432, %c0_433, %c0_434] : memref<1x64x128xbf16, #tpu.memory_space<vmem>>, vector<1x64x128xbf16>
    %786 = vector.shape_cast %785 : vector<1x64x128xbf16> to vector<64x128xbf16>
    %787 = arith.truncf %778 : vector<8x32xf32> to vector<8x32xbf16>
    %788 = vector.extract_strided_slice %786 {offsets = [0, 0], sizes = [32, 128], strides = [1, 1]} : vector<64x128xbf16> to vector<32x128xbf16>
    %cst_435 = arith.constant dense<0.000000e+00> : vector<8x128xf32>
    %789 = tpu.matmul %787, %788, %cst_435 {dimension_numbers = #tpu.dot_dimension_numbers<[1], [0], [0], [1], [0, 0, 1, 1], [], []>} : vector<8x32xbf16>, vector<32x128xbf16>, vector<8x128xf32> -> vector<8x128xf32>
    %c1_436 = arith.constant 1 : index
    %c0_437 = arith.constant 0 : index
    %c0_438 = arith.constant 0 : index
    %790 = vector.load %arg9[%c1_436, %c0_437, %c0_438] : memref<2x8x32xf32, #tpu.memory_space<vmem>>, vector<1x8x32xf32>
    %791 = vector.shape_cast %790 : vector<1x8x32xf32> to vector<8x32xf32>
    %792 = arith.truncf %791 : vector<8x32xf32> to vector<8x32xbf16>
    %793 = vector.extract_strided_slice %786 {offsets = [32, 0], sizes = [32, 128], strides = [1, 1]} : vector<64x128xbf16> to vector<32x128xbf16>
    %cst_439 = arith.constant dense<0.000000e+00> : vector<8x128xf32>
    %794 = tpu.matmul %792, %793, %cst_439 {dimension_numbers = #tpu.dot_dimension_numbers<[1], [0], [0], [1], [0, 0, 1, 1], [], []>} : vector<8x32xbf16>, vector<32x128xbf16>, vector<8x128xf32> -> vector<8x128xf32>
    %795 = arith.addf %789, %794 : vector<8x128xf32>
    %c0_440 = arith.constant 0 : index
    %c0_441 = arith.constant 0 : index
    %c0_442 = arith.constant 0 : index
    %796 = vector.load %arg5[%c0_440, %c0_441, %c0_442] : memref<1x1x128xf32, #tpu.memory_space<vmem>>, vector<1x1x128xf32>
    %797 = vector.shape_cast %796 : vector<1x1x128xf32> to vector<1x128xf32>
    %798 = vector.broadcast %797 : vector<1x128xf32> to vector<8x128xf32>
    %799 = arith.addf %795, %798 : vector<8x128xf32>
    %c1_443 = arith.constant 1 : index
    %c0_444 = arith.constant 0 : index
    %c0_445 = arith.constant 0 : index
    %800 = vector.load %arg10[%c1_443, %c0_444, %c0_445] : memref<2x8x32xf32, #tpu.memory_space<vmem>>, vector<1x8x32xf32>
    %801 = vector.shape_cast %800 : vector<1x8x32xf32> to vector<8x32xf32>
    %802 = vector.extract_strided_slice %799 {offsets = [0, 0], sizes = [8, 32], strides = [1, 1]} : vector<8x128xf32> to vector<8x32xf32>
    %cst_446 = arith.constant 0.000000e+00 : f32
    %803 = vector.broadcast %cst_446 : f32 to vector<8x32xf32>
    %804 = arith.subf %803, %802 : vector<8x32xf32>
    %805 = math.exp %804 : vector<8x32xf32>
    %cst_447 = arith.constant 1.000000e+00 : f32
    %806 = vector.broadcast %cst_447 : f32 to vector<8x32xf32>
    %807 = arith.addf %806, %805 : vector<8x32xf32>
    %cst_448 = arith.constant 1.000000e+00 : f32
    %808 = vector.broadcast %cst_448 : f32 to vector<8x32xf32>
    %809 = arith.divf %808, %807 : vector<8x32xf32>
    %810 = vector.extract_strided_slice %799 {offsets = [0, 32], sizes = [8, 32], strides = [1, 1]} : vector<8x128xf32> to vector<8x32xf32>
    %cst_449 = arith.constant 0.000000e+00 : f32
    %811 = vector.broadcast %cst_449 : f32 to vector<8x32xf32>
    %812 = arith.subf %811, %810 : vector<8x32xf32>
    %813 = math.exp %812 : vector<8x32xf32>
    %cst_450 = arith.constant 1.000000e+00 : f32
    %814 = vector.broadcast %cst_450 : f32 to vector<8x32xf32>
    %815 = arith.addf %814, %813 : vector<8x32xf32>
    %cst_451 = arith.constant 1.000000e+00 : f32
    %816 = vector.broadcast %cst_451 : f32 to vector<8x32xf32>
    %817 = arith.divf %816, %815 : vector<8x32xf32>
    %818 = vector.extract_strided_slice %799 {offsets = [0, 64], sizes = [8, 32], strides = [1, 1]} : vector<8x128xf32> to vector<8x32xf32>
    %819 = math.tanh %818 : vector<8x32xf32>
    %820 = vector.extract_strided_slice %799 {offsets = [0, 96], sizes = [8, 32], strides = [1, 1]} : vector<8x128xf32> to vector<8x32xf32>
    %cst_452 = arith.constant 0.000000e+00 : f32
    %821 = vector.broadcast %cst_452 : f32 to vector<8x32xf32>
    %822 = arith.subf %821, %820 : vector<8x32xf32>
    %823 = math.exp %822 : vector<8x32xf32>
    %cst_453 = arith.constant 1.000000e+00 : f32
    %824 = vector.broadcast %cst_453 : f32 to vector<8x32xf32>
    %825 = arith.addf %824, %823 : vector<8x32xf32>
    %cst_454 = arith.constant 1.000000e+00 : f32
    %826 = vector.broadcast %cst_454 : f32 to vector<8x32xf32>
    %827 = arith.divf %826, %825 : vector<8x32xf32>
    %828 = arith.mulf %817, %801 : vector<8x32xf32>
    %829 = arith.mulf %809, %819 : vector<8x32xf32>
    %830 = arith.addf %828, %829 : vector<8x32xf32>
    %831 = math.tanh %830 : vector<8x32xf32>
    %832 = arith.mulf %827, %831 : vector<8x32xf32>
    %c1_455 = arith.constant 1 : index
    %c0_456 = arith.constant 0 : index
    %c0_457 = arith.constant 0 : index
    %833 = vector.load %arg9[%c1_455, %c0_456, %c0_457] : memref<2x8x32xf32, #tpu.memory_space<vmem>>, vector<1x8x32xf32>
    %834 = vector.shape_cast %833 : vector<1x8x32xf32> to vector<8x32xf32>
    %835 = vector.shape_cast %832 : vector<8x32xf32> to vector<1x8x32xf32>
    tpu.vector_store %arg9[%c1_455, %c0_456, %c0_457], %835 {strides = array<i32>} : memref<2x8x32xf32, #tpu.memory_space<vmem>>, vector<1x8x32xf32>,
    %c1_458 = arith.constant 1 : index
    %c0_459 = arith.constant 0 : index
    %c0_460 = arith.constant 0 : index
    %836 = vector.load %arg10[%c1_458, %c0_459, %c0_460] : memref<2x8x32xf32, #tpu.memory_space<vmem>>, vector<1x8x32xf32>
    %837 = vector.shape_cast %836 : vector<1x8x32xf32> to vector<8x32xf32>
    %838 = vector.shape_cast %830 : vector<8x32xf32> to vector<1x8x32xf32>
    tpu.vector_store %arg10[%c1_458, %c0_459, %c0_460], %838 {strides = array<i32>} : memref<2x8x32xf32, #tpu.memory_space<vmem>>, vector<1x8x32xf32>,
    %839 = arith.truncf %832 : vector<8x32xf32> to vector<8x32xbf16>
    %c7_461 = arith.constant 7 : index
    %c0_462 = arith.constant 0 : index
    %c0_463 = arith.constant 0 : index
    %840 = vector.load %arg6[%c7_461, %c0_462, %c0_463] : memref<8x8x32xbf16, #tpu.memory_space<vmem>>, vector<1x8x32xbf16>
    %841 = vector.shape_cast %840 : vector<1x8x32xbf16> to vector<8x32xbf16>
    %842 = vector.shape_cast %839 : vector<8x32xbf16> to vector<1x8x32xbf16>
    tpu.vector_store %arg6[%c7_461, %c0_462, %c0_463], %842 {strides = array<i32>} : memref<8x8x32xbf16, #tpu.memory_space<vmem>>, vector<1x8x32xbf16>,
    %c0_i32_464 = arith.constant 0 : i32
    %843 = arith.cmpi eq, %arg1, %c0_i32_464 : i32
    %844 = arith.extui %843 : i1 to i32
    %c0_i32_465 = arith.constant 0 : i32
    %845 = arith.cmpi ne, %844, %c0_i32_465 : i32
    scf.if %845 {
      %c0_466 = arith.constant 0 : index
      %c0_467 = arith.constant 0 : index
      %c0_468 = arith.constant 0 : index
      %846 = vector.load %arg9[%c0_466, %c0_467, %c0_468] : memref<2x8x32xf32, #tpu.memory_space<vmem>>, vector<2x8x32xf32>
      %c0_469 = arith.constant 0 : index
      %c0_470 = arith.constant 0 : index
      %c0_471 = arith.constant 0 : index
      %847 = vector.load %arg7[%c0_469, %c0_470, %c0_471] : memref<2x8x32xf32, #tpu.memory_space<vmem>>, vector<2x8x32xf32>
      tpu.vector_store %arg7[%c0_469, %c0_470, %c0_471], %846 {strides = array<i32>} : memref<2x8x32xf32, #tpu.memory_space<vmem>>, vector<2x8x32xf32>,
      %c0_472 = arith.constant 0 : index
      %c0_473 = arith.constant 0 : index
      %c0_474 = arith.constant 0 : index
      %848 = vector.load %arg10[%c0_472, %c0_473, %c0_474] : memref<2x8x32xf32, #tpu.memory_space<vmem>>, vector<2x8x32xf32>
      %c0_475 = arith.constant 0 : index
      %c0_476 = arith.constant 0 : index
      %c0_477 = arith.constant 0 : index
      %849 = vector.load %arg8[%c0_475, %c0_476, %c0_477] : memref<2x8x32xf32, #tpu.memory_space<vmem>>, vector<2x8x32xf32>
      tpu.vector_store %arg8[%c0_475, %c0_476, %c0_477], %848 {strides = array<i32>} : memref<2x8x32xf32, #tpu.memory_space<vmem>>, vector<2x8x32xf32>,
    } else {
    }
    return
  }
  func.func @transform_0(%arg0: i32, %arg1: i32) -> (i32, i32, i32) {
    %c0_i32 = arith.constant 0 : i32
    %c0_i32_0 = arith.constant 0 : i32
    return %arg1, %arg0, %c0_i32 : i32, i32, i32
  }
  func.func @transform_1(%arg0: i32, %arg1: i32) -> (i32, i32) {
    %c0_i32 = arith.constant 0 : i32
    %c0_i32_0 = arith.constant 0 : i32
    %c0_i32_1 = arith.constant 0 : i32
    return %c0_i32, %c0_i32_0 : i32, i32
  }
  func.func @transform_2(%arg0: i32, %arg1: i32) -> (i32, i32, i32) {
    %c0_i32 = arith.constant 0 : i32
    %c0_i32_0 = arith.constant 0 : i32
    %c0_i32_1 = arith.constant 0 : i32
    %c0_i32_2 = arith.constant 0 : i32
    return %c0_i32, %c0_i32_0, %c0_i32_1 : i32, i32, i32
  }
  func.func @transform_3(%arg0: i32, %arg1: i32) -> (i32, i32, i32) {
    %c0_i32 = arith.constant 0 : i32
    %c0_i32_0 = arith.constant 0 : i32
    %c0_i32_1 = arith.constant 0 : i32
    %c0_i32_2 = arith.constant 0 : i32
    return %c0_i32, %c0_i32_0, %c0_i32_1 : i32, i32, i32
  }
  func.func @transform_4(%arg0: i32, %arg1: i32) -> (i32, i32, i32) {
    %c0_i32 = arith.constant 0 : i32
    %c0_i32_0 = arith.constant 0 : i32
    return %arg1, %arg0, %c0_i32 : i32, i32, i32
  }
  func.func @transform_5(%arg0: i32, %arg1: i32) -> (i32, i32, i32) {
    %c0_i32 = arith.constant 0 : i32
    %c0_i32_0 = arith.constant 0 : i32
    %c0_i32_1 = arith.constant 0 : i32
    return %c0_i32, %arg0, %c0_i32_0 : i32, i32, i32
  }
  func.func @transform_6(%arg0: i32, %arg1: i32) -> (i32, i32, i32) {
    %c0_i32 = arith.constant 0 : i32
    %c0_i32_0 = arith.constant 0 : i32
    %c0_i32_1 = arith.constant 0 : i32
    return %c0_i32, %arg0, %c0_i32_0 : i32, i32, i32
  }
}

module attributes {stable_mosaic.version = 11 : i64} {
  func.func @_matmul_bias_kernel(%arg0: i32, %arg1: i32, %arg2: memref<64x32xbf16, #tpu.memory_space<vmem>>, %arg3: memref<32x128xbf16, #tpu.memory_space<vmem>>, %arg4: memref<1x128xf32, #tpu.memory_space<vmem>>, %arg5: memref<64x128xf32, #tpu.memory_space<vmem>>) attributes {dimension_semantics = [#tpu.dimension_semantics<parallel>, #tpu.dimension_semantics<parallel>], iteration_bounds = array<i64: 1, 1>, scalar_prefetch = 0 : i64, scratch_operands = 0 : i64, tpu.core_type = #tpu.core_type<tc>, window_params = [{transform_indices = @transform_0, window_bounds = array<i64: 64, 32>}, {transform_indices = @transform_1, window_bounds = array<i64: 32, 128>}, {transform_indices = @transform_2, window_bounds = array<i64: 1, 128>}, {transform_indices = @transform_3, window_bounds = array<i64: 64, 128>}]} {
    %c0 = arith.constant 0 : index
    %c0_0 = arith.constant 0 : index
    %0 = vector.load %arg2[%c0, %c0_0] : memref<64x32xbf16, #tpu.memory_space<vmem>>, vector<64x32xbf16>
    %c0_1 = arith.constant 0 : index
    %c0_2 = arith.constant 0 : index
    %1 = vector.load %arg3[%c0_1, %c0_2] : memref<32x128xbf16, #tpu.memory_space<vmem>>, vector<32x128xbf16>
    %cst = arith.constant dense<0.000000e+00> : vector<64x128xf32>
    %2 = tpu.matmul %0, %1, %cst {dimension_numbers = #tpu.dot_dimension_numbers<[1], [0], [0], [1], [0, 0, 1, 1], [], []>} : vector<64x32xbf16>, vector<32x128xbf16>, vector<64x128xf32> -> vector<64x128xf32>
    %c0_3 = arith.constant 0 : index
    %c0_4 = arith.constant 0 : index
    %3 = vector.load %arg4[%c0_3, %c0_4] : memref<1x128xf32, #tpu.memory_space<vmem>>, vector<1x128xf32>
    %4 = vector.broadcast %3 : vector<1x128xf32> to vector<64x128xf32>
    %5 = arith.addf %2, %4 : vector<64x128xf32>
    %c0_5 = arith.constant 0 : index
    %c0_6 = arith.constant 0 : index
    %6 = vector.load %arg5[%c0_5, %c0_6] : memref<64x128xf32, #tpu.memory_space<vmem>>, vector<64x128xf32>
    tpu.vector_store %arg5[%c0_5, %c0_6], %5 {strides = array<i32>} : memref<64x128xf32, #tpu.memory_space<vmem>>, vector<64x128xf32>,
    return
  }
  func.func @transform_0(%arg0: i32, %arg1: i32) -> (i32, i32) {
    %c0_i32 = arith.constant 0 : i32
    %c0_i32_0 = arith.constant 0 : i32
    return %arg0, %c0_i32 : i32, i32
  }
  func.func @transform_1(%arg0: i32, %arg1: i32) -> (i32, i32) {
    %c0_i32 = arith.constant 0 : i32
    %c0_i32_0 = arith.constant 0 : i32
    return %c0_i32, %arg1 : i32, i32
  }
  func.func @transform_2(%arg0: i32, %arg1: i32) -> (i32, i32) {
    %c0_i32 = arith.constant 0 : i32
    %c0_i32_0 = arith.constant 0 : i32
    return %c0_i32, %arg1 : i32, i32
  }
  func.func @transform_3(%arg0: i32, %arg1: i32) -> (i32, i32) {
    %c0_i32 = arith.constant 0 : i32
    return %arg0, %arg1 : i32, i32
  }
}

</mosaic_0001>

<llo_original>
// kernel: lstm_att_forward.9
$region0: #{lstm_att_forward.9}
  #allocation0 [shape = 'u32[]', space=smem, size = 0x4, offset = 0x4, fixed_abs, tag = 'smem constant byte address 0x4 - core index']
  #allocation1 [shape = 'u32[144,128]{1,0:T(1,128)}', space=vmem, size = 0x12000, scoped, tag = 'internal scratch']
  %s0 = inlined_call_operand.vmem [shape: bf16[8,32], index: 0, kind: input, shape index: {}]
  %s1 = inlined_call_operand.vmem [shape: bf16[32,128], index: 1, kind: input, shape index: {}]
  %s2 = inlined_call_operand.vmem [shape: f32[1,128], index: 2, kind: input, shape index: {}]
  %s3 = inlined_call_operand.vmem [shape: f32[8,128], index: 3, kind: output, shape index: {}]
  %s4 = sld [smem:[#allocation0]]
  $region22: #{lstm_att_forward.9} parent=0
    _
  %s6 = ssub.s32 1, %s4
  %s7 = scalar_select 0, %s6, %s4
  // Predicated region
  $region2: #{lstm_att_forward.9} parent=0 // pred_check
    _
  $region3: #{lstm_att_forward.9} parent=0 // pred_check_branch
    %9 = sbr.rel (0) target = $region5
  $region4: #{lstm_att_forward.9} parent=0 // pred_region
    _
  $region5: #{lstm_att_forward.9} parent=0 // pred_fallthru
    _
  // Predicated region
  $region6: #{lstm_att_forward.9} parent=0 // pred_check
    _
  $region7: #{lstm_att_forward.9} parent=0 // pred_check_branch
    %11 = sbr.rel (0) target = $region9
  $region8: #{lstm_att_forward.9} parent=0 // pred_region
    _
  $region9: #{lstm_att_forward.9} parent=0 // pred_fallthru
    _
  // Predicated region
  $region10: #{lstm_att_forward.9} parent=0 // pred_check
    _
  $region11: #{lstm_att_forward.9} parent=0 // pred_check_branch
    %13 = sbr.rel (0) target = $region13
  $region12: #{lstm_att_forward.9} parent=0 // pred_region
    _
  $region13: #{lstm_att_forward.9} parent=0 // pred_fallthru
    _
  %v15 = vld [vmem:[%s0] sm:$0xf]
  %v16 = vld [vmem:[%s1] sm:$0xf]
  %v17 = vld [vmem:[%s1 + $0x4] sm:$0xf]
  %v18 = vld [vmem:[%s1 + $0x8] sm:$0xf]
  %v19 = vld [vmem:[%s1 + $0xc] sm:$0xf]
  %v20 = vld [vmem:[%s2] sm:$0x1]
  %v22 = vlaneseq
  %v23 = vshrl.u32 %v22, 7
  %v24 = vsub.s32 0, %v23
  %v25 = vrot.slane %v20, %v24
  %v31 = vunpack.c.l.b16 %v16
  %v32 = vunpack.c.l.b16 %v17
  %v33 = vunpack.c.l.b16 %v18
  %v34 = vunpack.c.l.b16 %v19
  %v35 = vpack.c.b16 %v32, %v31
  %v36 = vpack.c.b16 %v34, %v33
  %vm39 = vcmask 261120
  %v41 = vsel %vm39, %v15, 0
  %43 = vmatprep.subr.bf16.mxu0 0
  %44 = vmatpush1.bf16.msra.mxu0 %v35
  %45 = vmatprep.subr.bf16.mxu0 0
  %46 = vmatpush1.bf16.msra.mxu0 %v36
  %47 = vmatprep.subr.bf16.mxu0 0
  %48 = vmatpush1.bf16.msra.mxu0 0
  %49 = vmatprep.subr.bf16.mxu0 0
  %50 = vmatpush1.bf16.msra.mxu0 0
  %51 = vmatprep.subr.bf16.mxu0 0
  %52 = vmatpush1.bf16.msra.mxu0 0
  %53 = vmatprep.subr.bf16.mxu0 0
  %54 = vmatpush1.bf16.msra.mxu0 0
  %55 = vmatprep.subr.bf16.mxu0 0
  %56 = vmatpush1.bf16.msra.mxu0 0
  %57 = vmatprep.subr.bf16.mxu0 0
  %58 = vmatpush1.bf16.msra.mxu0 0
  %59 = vmatprep.subr.bf16.mxu0 0
  %60 = vmatpush1.bf16.msra.mxu0 0
  %61 = vmatprep.subr.bf16.mxu0 0
  %62 = vmatpush1.bf16.msra.mxu0 0
  %63 = vmatprep.subr.bf16.mxu0 0
  %64 = vmatpush1.bf16.msra.mxu0 0
  %65 = vmatprep.subr.bf16.mxu0 0
  %66 = vmatpush1.bf16.msra.mxu0 0
  %67 = vmatprep.subr.bf16.mxu0 0
  %68 = vmatpush1.bf16.msra.mxu0 0
  %69 = vmatprep.subr.bf16.mxu0 0
  %70 = vmatpush1.bf16.msra.mxu0 0
  %71 = vmatprep.subr.bf16.mxu0 0
  %72 = vmatpush1.bf16.msra.mxu0 0
  %73 = vmatprep.subr.bf16.mxu0 0
  %74 = vmatpush1.bf16.msra.mxu0 0
  %75 = vmatprep.mubr.bf16.mxu0 0
  %76 = vmatmul.mubr.bf16.gmra.mrb[0].mxu0 %v41
  %v77 = vpop.f32.mrb[0].mxu0
  %v78 = vadd.f32 %v25, %v77
  %v79 = vpop.f32.mrb[0].mxu0
  %v80 = vpop.f32.mrb[0].mxu0
  %v81 = vpop.f32.mrb[0].mxu0
  %82 = vdwg.mxu0
  %83 = vst [vmem:[%s3] sm:$0xff] %v78
  // Predicated region
  $region14: #{lstm_att_forward.9} parent=0 // pred_check
    _
  $region15: #{lstm_att_forward.9} parent=0 // pred_check_branch
    %85 = sbr.rel (0) target = $region17
  $region16: #{lstm_att_forward.9} parent=0 // pred_region
    _
  $region17: #{lstm_att_forward.9} parent=0 // pred_fallthru
    _
  // Predicated region
  $region18: #{lstm_att_forward.9} parent=0 // pred_check
    _
  $region19: #{lstm_att_forward.9} parent=0 // pred_check_branch
    %87 = sbr.rel (0) target = $region21
  $region20: #{lstm_att_forward.9} parent=0 // pred_region
    _
  $region21: #{lstm_att_forward.9} parent=0 // pred_fallthru
    _

// kernel: lstm_att_forward.6
$region0: #{lstm_att_forward.6}
  #allocation0 [shape = 'u32[]', space=smem, size = 0x4, offset = 0x4, fixed_abs, tag = 'smem constant byte address 0x4 - core index']
  #allocation1 [shape = 'u32[144,128]{1,0:T(1,128)}', space=vmem, size = 0x12000, scoped, tag = 'internal scratch']
  %s0 = inlined_call_operand.vmem [shape: bf16[64,16], index: 0, kind: input, shape index: {}]
  %s1 = inlined_call_operand.vmem [shape: bf16[16,128], index: 1, kind: input, shape index: {}]
  %s2 = inlined_call_operand.vmem [shape: f32[1,128], index: 2, kind: input, shape index: {}]
  %s3 = inlined_call_operand.vmem [shape: f32[64,128], index: 3, kind: output, shape index: {}]
  %s4 = sld [smem:[#allocation0]]
  $region22: #{lstm_att_forward.6} parent=0
    _
  %s6 = ssub.s32 1, %s4
  %s7 = scalar_select 0, %s6, %s4
  // Predicated region
  $region2: #{lstm_att_forward.6} parent=0 // pred_check
    _
  $region3: #{lstm_att_forward.6} parent=0 // pred_check_branch
    %9 = sbr.rel (0) target = $region5
  $region4: #{lstm_att_forward.6} parent=0 // pred_region
    _
  $region5: #{lstm_att_forward.6} parent=0 // pred_fallthru
    _
  // Predicated region
  $region6: #{lstm_att_forward.6} parent=0 // pred_check
    _
  $region7: #{lstm_att_forward.6} parent=0 // pred_check_branch
    %11 = sbr.rel (0) target = $region9
  $region8: #{lstm_att_forward.6} parent=0 // pred_region
    _
  $region9: #{lstm_att_forward.6} parent=0 // pred_fallthru
    _
  // Predicated region
  $region10: #{lstm_att_forward.6} parent=0 // pred_check
    _
  $region11: #{lstm_att_forward.6} parent=0 // pred_check_branch
    %13 = sbr.rel (0) target = $region13
  $region12: #{lstm_att_forward.6} parent=0 // pred_region
    _
  $region13: #{lstm_att_forward.6} parent=0 // pred_fallthru
    _
  %v15 = vld [vmem:[%s0] sm:$0xf]
  %v16 = vld [vmem:[%s0 + $0x4] sm:$0xf]
  %v17 = vld [vmem:[%s0 + $0x8] sm:$0xf]
  %v18 = vld [vmem:[%s0 + $0xc] sm:$0xf]
  %v19 = vld [vmem:[%s0 + $0x10] sm:$0xf]
  %v20 = vld [vmem:[%s0 + $0x14] sm:$0xf]
  %v21 = vld [vmem:[%s0 + $0x18] sm:$0xf]
  %v22 = vld [vmem:[%s0 + $0x1c] sm:$0xf]
  %v23 = vld [vmem:[%s1] sm:$0xf]
  %v24 = vld [vmem:[%s1 + $0x4] sm:$0xf]
  %v25 = vld [vmem:[%s2] sm:$0x1]
  %v27 = vlaneseq
  %v28 = vshrl.u32 %v27, 7
  %v29 = vsub.s32 0, %v28
  %v30 = vrot.slane %v25, %v29
  %v40 = vunpack.c.l.b16 %v15
  %v41 = vunpack.c.l.b16 %v16
  %v42 = vunpack.c.l.b16 %v17
  %v43 = vunpack.c.l.b16 %v18
  %v44 = vunpack.c.l.b16 %v19
  %v45 = vunpack.c.l.b16 %v20
  %v46 = vunpack.c.l.b16 %v21
  %v47 = vunpack.c.l.b16 %v22
  %v48 = vpack.c.b16 %v41, %v40
  %v49 = vpack.c.b16 %v43, %v42
  %v50 = vpack.c.b16 %v45, %v44
  %v51 = vpack.c.b16 %v47, %v46
  %v54 = vunpack.c.l.b16 %v23
  %v55 = vunpack.c.l.b16 %v24
  %v56 = vpack.c.b16 %v55, %v54
  %vm58 = vcmask 130048
  %v60 = vsel %vm58, %v48, 0
  %v63 = vsel %vm58, %v49, 0
  %v66 = vsel %vm58, %v50, 0
  %v69 = vsel %vm58, %v51, 0
  %71 = vmatprep.subr.bf16.mxu0 0
  %72 = vmatpush1.bf16.msra.mxu0 %v56
  %73 = vmatprep.subr.bf16.mxu0 0
  %74 = vmatpush1.bf16.msra.mxu0 0
  %75 = vmatprep.subr.bf16.mxu0 0
  %76 = vmatpush1.bf16.msra.mxu0 0
  %77 = vmatprep.subr.bf16.mxu0 0
  %78 = vmatpush1.bf16.msra.mxu0 0
  %79 = vmatprep.subr.bf16.mxu0 0
  %80 = vmatpush1.bf16.msra.mxu0 0
  %81 = vmatprep.subr.bf16.mxu0 0
  %82 = vmatpush1.bf16.msra.mxu0 0
  %83 = vmatprep.subr.bf16.mxu0 0
  %84 = vmatpush1.bf16.msra.mxu0 0
  %85 = vmatprep.subr.bf16.mxu0 0
  %86 = vmatpush1.bf16.msra.mxu0 0
  %87 = vmatprep.subr.bf16.mxu0 0
  %88 = vmatpush1.bf16.msra.mxu0 0
  %89 = vmatprep.subr.bf16.mxu0 0
  %90 = vmatpush1.bf16.msra.mxu0 0
  %91 = vmatprep.subr.bf16.mxu0 0
  %92 = vmatpush1.bf16.msra.mxu0 0
  %93 = vmatprep.subr.bf16.mxu0 0
  %94 = vmatpush1.bf16.msra.mxu0 0
  %95 = vmatprep.subr.bf16.mxu0 0
  %96 = vmatpush1.bf16.msra.mxu0 0
  %97 = vmatprep.subr.bf16.mxu0 0
  %98 = vmatpush1.bf16.msra.mxu0 0
  %99 = vmatprep.subr.bf16.mxu0 0
  %100 = vmatpush1.bf16.msra.mxu0 0
  %101 = vmatprep.subr.bf16.mxu0 0
  %102 = vmatpush1.bf16.msra.mxu0 0
  %103 = vmatprep.mubr.bf16.mxu0 0
  %104 = vmatmul.mubr.bf16.gmra.mrb[0].mxu0 %v60
  %v105 = vpop.f32.mrb[0].mxu0
  %v106 = vadd.f32 %v30, %v105
  %v107 = vpop.f32.mrb[0].mxu0
  %v108 = vpop.f32.mrb[0].mxu0
  %v109 = vadd.f32 %v30, %v108
  %v110 = vpop.f32.mrb[0].mxu0
  %111 = vmatprep.mubr.bf16.mxu0 0
  %112 = vmatmul.mubr.bf16.gmra.mrb[0].mxu0 %v63
  %v113 = vpop.f32.mrb[0].mxu0
  %v114 = vadd.f32 %v30, %v113
  %v115 = vpop.f32.mrb[0].mxu0
  %v116 = vpop.f32.mrb[0].mxu0
  %v117 = vadd.f32 %v30, %v116
  %v118 = vpop.f32.mrb[0].mxu0
  %119 = vmatprep.mubr.bf16.mxu0 0
  %120 = vmatmul.mubr.bf16.gmra.mrb[0].mxu0 %v66
  %v121 = vpop.f32.mrb[0].mxu0
  %v122 = vadd.f32 %v30, %v121
  %v123 = vpop.f32.mrb[0].mxu0
  %v124 = vpop.f32.mrb[0].mxu0
  %v125 = vadd.f32 %v30, %v124
  %v126 = vpop.f32.mrb[0].mxu0
  %127 = vmatprep.mubr.bf16.mxu0 0
  %128 = vmatmul.mubr.bf16.gmra.mrb[0].mxu0 %v69
  %v129 = vpop.f32.mrb[0].mxu0
  %v130 = vadd.f32 %v30, %v129
  %v131 = vpop.f32.mrb[0].mxu0
  %v132 = vpop.f32.mrb[0].mxu0
  %v133 = vadd.f32 %v30, %v132
  %v134 = vpop.f32.mrb[0].mxu0
  %135 = vdwg.mxu0
  %136 = vst [vmem:[%s3] sm:$0xff] %v106
  %137 = vst [vmem:[%s3 + $0x8] sm:$0xff] %v109
  %138 = vst [vmem:[%s3 + $0x10] sm:$0xff] %v114
  %139 = vst [vmem:[%s3 + $0x18] sm:$0xff] %v117
  %140 = vst [vmem:[%s3 + $0x20] sm:$0xff] %v122
  %141 = vst [vmem:[%s3 + $0x28] sm:$0xff] %v125
  %142 = vst [vmem:[%s3 + $0x30] sm:$0xff] %v130
  %143 = vst [vmem:[%s3 + $0x38] sm:$0xff] %v133
  // Predicated region
  $region14: #{lstm_att_forward.6} parent=0 // pred_check
    _
  $region15: #{lstm_att_forward.6} parent=0 // pred_check_branch
    %145 = sbr.rel (0) target = $region17
  $region16: #{lstm_att_forward.6} parent=0 // pred_region
    _
  $region17: #{lstm_att_forward.6} parent=0 // pred_fallthru
    _
  // Predicated region
  $region18: #{lstm_att_forward.6} parent=0 // pred_check
    _
  $region19: #{lstm_att_forward.6} parent=0 // pred_check_branch
    %147 = sbr.rel (0) target = $region21
  $region20: #{lstm_att_forward.6} parent=0 // pred_region
    _
  $region21: #{lstm_att_forward.6} parent=0 // pred_fallthru
    _

// kernel: lstm_att_forward.11
$region0: #{lstm_att_forward.11}
  #allocation0 [shape = 'u32[]', space=smem, size = 0x4, offset = 0x4, fixed_abs, tag = 'smem constant byte address 0x4 - core index']
  #allocation1 [shape = 'u32[144,128]{1,0:T(1,128)}', space=vmem, size = 0x12000, scoped, tag = 'internal scratch']
  %s0 = inlined_call_operand.vmem [shape: bf16[64,32], index: 0, kind: input, shape index: {}]
  %s1 = inlined_call_operand.vmem [shape: bf16[32,128], index: 1, kind: input, shape index: {}]
  %s2 = inlined_call_operand.vmem [shape: f32[1,128], index: 2, kind: input, shape index: {}]
  %s3 = inlined_call_operand.vmem [shape: f32[64,128], index: 3, kind: output, shape index: {}]
  %s4 = sld [smem:[#allocation0]]
  $region22: #{lstm_att_forward.11} parent=0
    _
  %s6 = ssub.s32 1, %s4
  %s7 = scalar_select 0, %s6, %s4
  // Predicated region
  $region2: #{lstm_att_forward.11} parent=0 // pred_check
    _
  $region3: #{lstm_att_forward.11} parent=0 // pred_check_branch
    %9 = sbr.rel (0) target = $region5
  $region4: #{lstm_att_forward.11} parent=0 // pred_region
    _
  $region5: #{lstm_att_forward.11} parent=0 // pred_fallthru
    _
  // Predicated region
  $region6: #{lstm_att_forward.11} parent=0 // pred_check
    _
  $region7: #{lstm_att_forward.11} parent=0 // pred_check_branch
    %11 = sbr.rel (0) target = $region9
  $region8: #{lstm_att_forward.11} parent=0 // pred_region
    _
  $region9: #{lstm_att_forward.11} parent=0 // pred_fallthru
    _
  // Predicated region
  $region10: #{lstm_att_forward.11} parent=0 // pred_check
    _
  $region11: #{lstm_att_forward.11} parent=0 // pred_check_branch
    %13 = sbr.rel (0) target = $region13
  $region12: #{lstm_att_forward.11} parent=0 // pred_region
    _
  $region13: #{lstm_att_forward.11} parent=0 // pred_fallthru
    _
  %v15 = vld [vmem:[%s0] sm:$0xf]
  %v16 = vld [vmem:[%s0 + $0x4] sm:$0xf]
  %v17 = vld [vmem:[%s0 + $0x8] sm:$0xf]
  %v18 = vld [vmem:[%s0 + $0xc] sm:$0xf]
  %v19 = vld [vmem:[%s0 + $0x10] sm:$0xf]
  %v20 = vld [vmem:[%s0 + $0x14] sm:$0xf]
  %v21 = vld [vmem:[%s0 + $0x18] sm:$0xf]
  %v22 = vld [vmem:[%s0 + $0x1c] sm:$0xf]
  %v23 = vld [vmem:[%s1] sm:$0xf]
  %v24 = vld [vmem:[%s1 + $0x4] sm:$0xf]
  %v25 = vld [vmem:[%s1 + $0x8] sm:$0xf]
  %v26 = vld [vmem:[%s1 + $0xc] sm:$0xf]
  %v27 = vld [vmem:[%s2] sm:$0x1]
  %v29 = vlaneseq
  %v30 = vshrl.u32 %v29, 7
  %v31 = vsub.s32 0, %v30
  %v32 = vrot.slane %v27, %v31
  %v42 = vunpack.c.l.b16 %v15
  %v43 = vunpack.c.l.b16 %v16
  %v44 = vunpack.c.l.b16 %v17
  %v45 = vunpack.c.l.b16 %v18
  %v46 = vunpack.c.l.b16 %v19
  %v47 = vunpack.c.l.b16 %v20
  %v48 = vunpack.c.l.b16 %v21
  %v49 = vunpack.c.l.b16 %v22
  %v50 = vpack.c.b16 %v43, %v42
  %v51 = vpack.c.b16 %v45, %v44
  %v52 = vpack.c.b16 %v47, %v46
  %v53 = vpack.c.b16 %v49, %v48
  %v58 = vunpack.c.l.b16 %v23
  %v59 = vunpack.c.l.b16 %v24
  %v60 = vunpack.c.l.b16 %v25
  %v61 = vunpack.c.l.b16 %v26
  %v62 = vpack.c.b16 %v59, %v58
  %v63 = vpack.c.b16 %v61, %v60
  %vm66 = vcmask 261120
  %v68 = vsel %vm66, %v50, 0
  %v71 = vsel %vm66, %v51, 0
  %v74 = vsel %vm66, %v52, 0
  %v77 = vsel %vm66, %v53, 0
  %79 = vmatprep.subr.bf16.mxu0 0
  %80 = vmatpush1.bf16.msra.mxu0 %v62
  %81 = vmatprep.subr.bf16.mxu0 0
  %82 = vmatpush1.bf16.msra.mxu0 %v63
  %83 = vmatprep.subr.bf16.mxu0 0
  %84 = vmatpush1.bf16.msra.mxu0 0
  %85 = vmatprep.subr.bf16.mxu0 0
  %86 = vmatpush1.bf16.msra.mxu0 0
  %87 = vmatprep.subr.bf16.mxu0 0
  %88 = vmatpush1.bf16.msra.mxu0 0
  %89 = vmatprep.subr.bf16.mxu0 0
  %90 = vmatpush1.bf16.msra.mxu0 0
  %91 = vmatprep.subr.bf16.mxu0 0
  %92 = vmatpush1.bf16.msra.mxu0 0
  %93 = vmatprep.subr.bf16.mxu0 0
  %94 = vmatpush1.bf16.msra.mxu0 0
  %95 = vmatprep.subr.bf16.mxu0 0
  %96 = vmatpush1.bf16.msra.mxu0 0
  %97 = vmatprep.subr.bf16.mxu0 0
  %98 = vmatpush1.bf16.msra.mxu0 0
  %99 = vmatprep.subr.bf16.mxu0 0
  %100 = vmatpush1.bf16.msra.mxu0 0
  %101 = vmatprep.subr.bf16.mxu0 0
  %102 = vmatpush1.bf16.msra.mxu0 0
  %103 = vmatprep.subr.bf16.mxu0 0
  %104 = vmatpush1.bf16.msra.mxu0 0
  %105 = vmatprep.subr.bf16.mxu0 0
  %106 = vmatpush1.bf16.msra.mxu0 0
  %107 = vmatprep.subr.bf16.mxu0 0
  %108 = vmatpush1.bf16.msra.mxu0 0
  %109 = vmatprep.subr.bf16.mxu0 0
  %110 = vmatpush1.bf16.msra.mxu0 0
  %111 = vmatprep.mubr.bf16.mxu0 0
  %112 = vmatmul.mubr.bf16.gmra.mrb[0].mxu0 %v68
  %v113 = vpop.f32.mrb[0].mxu0
  %v114 = vadd.f32 %v32, %v113
  %v115 = vpop.f32.mrb[0].mxu0
  %v116 = vpop.f32.mrb[0].mxu0
  %v117 = vadd.f32 %v32, %v116
  %v118 = vpop.f32.mrb[0].mxu0
  %119 = vmatprep.mubr.bf16.mxu0 0
  %120 = vmatmul.mubr.bf16.gmra.mrb[0].mxu0 %v71
  %v121 = vpop.f32.mrb[0].mxu0
  %v122 = vadd.f32 %v32, %v121
  %v123 = vpop.f32.mrb[0].mxu0
  %v124 = vpop.f32.mrb[0].mxu0
  %v125 = vadd.f32 %v32, %v124
  %v126 = vpop.f32.mrb[0].mxu0
  %127 = vmatprep.mubr.bf16.mxu0 0
  %128 = vmatmul.mubr.bf16.gmra.mrb[0].mxu0 %v74
  %v129 = vpop.f32.mrb[0].mxu0
  %v130 = vadd.f32 %v32, %v129
  %v131 = vpop.f32.mrb[0].mxu0
  %v132 = vpop.f32.mrb[0].mxu0
  %v133 = vadd.f32 %v32, %v132
  %v134 = vpop.f32.mrb[0].mxu0
  %135 = vmatprep.mubr.bf16.mxu0 0
  %136 = vmatmul.mubr.bf16.gmra.mrb[0].mxu0 %v77
  %v137 = vpop.f32.mrb[0].mxu0
  %v138 = vadd.f32 %v32, %v137
  %v139 = vpop.f32.mrb[0].mxu0
  %v140 = vpop.f32.mrb[0].mxu0
  %v141 = vadd.f32 %v32, %v140
  %v142 = vpop.f32.mrb[0].mxu0
  %143 = vdwg.mxu0
  %144 = vst [vmem:[%s3] sm:$0xff] %v114
  %145 = vst [vmem:[%s3 + $0x8] sm:$0xff] %v117
  %146 = vst [vmem:[%s3 + $0x10] sm:$0xff] %v122
  %147 = vst [vmem:[%s3 + $0x18] sm:$0xff] %v125
  %148 = vst [vmem:[%s3 + $0x20] sm:$0xff] %v130
  %149 = vst [vmem:[%s3 + $0x28] sm:$0xff] %v133
  %150 = vst [vmem:[%s3 + $0x30] sm:$0xff] %v138
  %151 = vst [vmem:[%s3 + $0x38] sm:$0xff] %v141
  // Predicated region
  $region14: #{lstm_att_forward.11} parent=0 // pred_check
    _
  $region15: #{lstm_att_forward.11} parent=0 // pred_check_branch
    %153 = sbr.rel (0) target = $region17
  $region16: #{lstm_att_forward.11} parent=0 // pred_region
    _
  $region17: #{lstm_att_forward.11} parent=0 // pred_fallthru
    _
  // Predicated region
  $region18: #{lstm_att_forward.11} parent=0 // pred_check
    _
  $region19: #{lstm_att_forward.11} parent=0 // pred_check_branch
    %155 = sbr.rel (0) target = $region21
  $region20: #{lstm_att_forward.11} parent=0 // pred_region
    _
  $region21: #{lstm_att_forward.11} parent=0 // pred_fallthru
    _

// kernel: lstm_att_forward.8
$region0: #{lstm_att_forward.8}
  #allocation0 [shape = 'u32[]', space=smem, size = 0x4, offset = 0x4, fixed_abs, tag = 'smem constant byte address 0x4 - core index']
  #allocation1 [shape = 'u32[144,128]{1,0:T(1,128)}', space=vmem, size = 0x12000, scoped, tag = 'internal scratch']
  #allocation2 [shape = 'f32[2,8,32]{2,1,0:T(8,128)}', space=vmem, size = 0x2000, scoped, tag = 'scratch operand']
  #allocation3 [shape = 'f32[2,8,32]{2,1,0:T(8,128)}', space=vmem, size = 0x2000, scoped, tag = 'scratch operand']
  %s0 = inlined_call_operand.vmem [shape: f32[8,8,128], index: 0, kind: input, shape index: {}]
  %s1 = inlined_call_operand.vmem [shape: bf16[32,128], index: 1, kind: input, shape index: {}]
  %s2 = inlined_call_operand.vmem [shape: bf16[1,64,128], index: 2, kind: input, shape index: {}]
  %s3 = inlined_call_operand.vmem [shape: f32[1,1,128], index: 3, kind: input, shape index: {}]
  %s4 = inlined_call_operand.hbm [shape: bf16[8,8,32], index: 4, kind: output, shape index: {0}]
  %s5 = inlined_call_operand.vmem [shape: f32[2,8,32], index: 5, kind: output, shape index: {1}]
  %s6 = inlined_call_operand.vmem [shape: f32[2,8,32], index: 6, kind: output, shape index: {2}]
  %7 = xla_tuple %s4, %s5, %s6
  %s8 = sld [smem:[#allocation0]]
  $region50: #{lstm_att_forward.8} parent=0
    _
  %s10 = ssub.s32 1, %s8
  %s11 = scalar_select 0, %s10, %s8
  $region1: #{lstm_att_forward.8} parent=0
    #allocation4 [shape = 'u8[16384]{0}', space=vmem, size = 0x4000, scoped, tag = 'output window, operand 0, single buffered']
    #allocation5 [shape = 's32[1]{0}', space=sflag, size = 0x4, scoped, tag = 'scoped memory for lstm_att_forward.8']
    %12 = vsyncpa [#allocation5], 0
    // Predicated region
    $region2: #{lstm_att_forward.8} parent=1 // pred_check
      _
    $region3: #{lstm_att_forward.8} parent=1 // pred_check_branch
      %14 = sbr.rel (0) target = $region5
    $region4: #{lstm_att_forward.8} parent=1 // pred_region
      _
    $region5: #{lstm_att_forward.8} parent=1 // pred_fallthru
      _
    // Predicated region
    $region6: #{lstm_att_forward.8} parent=1 // pred_check
      _
    $region7: #{lstm_att_forward.8} parent=1 // pred_check_branch
      %16 = sbr.rel (0) target = $region9
    $region8: #{lstm_att_forward.8} parent=1 // pred_region
      _
    $region9: #{lstm_att_forward.8} parent=1 // pred_fallthru
      _
    // Predicated region
    $region10: #{lstm_att_forward.8} parent=1 // pred_check
      _
    $region11: #{lstm_att_forward.8} parent=1 // pred_check_branch
      %18 = sbr.rel (0) target = $region13
    $region12: #{lstm_att_forward.8} parent=1 // pred_region
      _
    $region13: #{lstm_att_forward.8} parent=1 // pred_fallthru
      _
    // Predicated region
    $region14: #{lstm_att_forward.8} parent=1 // pred_check
      _
    $region15: #{lstm_att_forward.8} parent=1 // pred_check_branch
      %20 = sbr.rel (0) target = $region17
    $region16: #{lstm_att_forward.8} parent=1 // pred_region
      _
    $region17: #{lstm_att_forward.8} parent=1 // pred_fallthru
      _
    %p22 = scmp.eq.s32.totalorder 0, 0
    // Predicated region
    $region18: #{lstm_att_forward.8} parent=1 // pred_check
      %p23 = pneg %p22
    $region19: #{lstm_att_forward.8} parent=1 // pred_check_branch
      %25 = sbr.rel (%p23) target = $region21
    $region20: #{lstm_att_forward.8} parent=1 // pred_region
      %vm26 = vcmask 261120
      %27 = vst.msk [vmem:[#allocation2] sm:$0xff] %vm26, 0.0
      %28 = vst.msk [vmem:[#allocation2 + $0x8] sm:$0xff] %vm26, 0.0
      %29 = vst.msk [vmem:[#allocation3] sm:$0xff] %vm26, 0.0
      %30 = vst.msk [vmem:[#allocation3 + $0x8] sm:$0xff] %vm26, 0.0
    $region21: #{lstm_att_forward.8} parent=1 // pred_fallthru
      _
    %v31 = vld [vmem:[%s0] sm:$0xff]
    %v32 = vld [vmem:[#allocation2] sm:$0xff]
    %v33 = vpack.c.bf16 %v32, %v32
    %v34 = vld [vmem:[%s1] sm:$0xf]
    %v35 = vld [vmem:[%s1 + $0x4] sm:$0xf]
    %v36 = vld [vmem:[%s1 + $0x8] sm:$0xf]
    %v37 = vld [vmem:[%s1 + $0xc] sm:$0xf]
    %v42 = vunpack.c.l.b16 %v34
    %v43 = vunpack.c.l.b16 %v35
    %v44 = vunpack.c.l.b16 %v36
    %v45 = vunpack.c.l.b16 %v37
    %v46 = vpack.c.b16 %v43, %v42
    %v47 = vpack.c.b16 %v45, %v44
    %vm50 = vcmask 261120
    %v52 = vsel %vm50, %v33, 0
    %54 = vmatprep.subr.bf16.mxu0 0
    %55 = vmatpush1.bf16.msra.mxu0 %v46
    %56 = vmatprep.subr.bf16.mxu0 0
    %57 = vmatpush1.bf16.msra.mxu0 %v47
    %58 = vmatprep.subr.bf16.mxu0 0
    %59 = vmatpush1.bf16.msra.mxu0 0
    %60 = vmatprep.subr.bf16.mxu0 0
    %61 = vmatpush1.bf16.msra.mxu0 0
    %62 = vmatprep.subr.bf16.mxu0 0
    %63 = vmatpush1.bf16.msra.mxu0 0
    %64 = vmatprep.subr.bf16.mxu0 0
    %65 = vmatpush1.bf16.msra.mxu0 0
    %66 = vmatprep.subr.bf16.mxu0 0
    %67 = vmatpush1.bf16.msra.mxu0 0
    %68 = vmatprep.subr.bf16.mxu0 0
    %69 = vmatpush1.bf16.msra.mxu0 0
    %70 = vmatprep.subr.bf16.mxu0 0
    %71 = vmatpush1.bf16.msra.mxu0 0
    %72 = vmatprep.subr.bf16.mxu0 0
    %73 = vmatpush1.bf16.msra.mxu0 0
    %74 = vmatprep.subr.bf16.mxu0 0
    %75 = vmatpush1.bf16.msra.mxu0 0
    %76 = vmatprep.subr.bf16.mxu0 0
    %77 = vmatpush1.bf16.msra.mxu0 0
    %78 = vmatprep.subr.bf16.mxu0 0
    %79 = vmatpush1.bf16.msra.mxu0 0
    %80 = vmatprep.subr.bf16.mxu0 0
    %81 = vmatpush1.bf16.msra.mxu0 0
    %82 = vmatprep.subr.bf16.mxu0 0
    %83 = vmatpush1.bf16.msra.mxu0 0
    %84 = vmatprep.subr.bf16.mxu0 0
    %85 = vmatpush1.bf16.msra.mxu0 0
    %86 = vmatprep.mubr.bf16.mxu0 0
    %87 = vmatmul.mubr.bf16.gmra.mrb[0].mxu0 %v52
    %v88 = vpop.f32.mrb[0].mxu0
    %v89 = vadd.f32 0.0, %v88
    %v90 = vpop.f32.mrb[0].mxu0
    %v91 = vpop.f32.mrb[0].mxu0
    %v92 = vpop.f32.mrb[0].mxu0
    %93 = vdwg.mxu0
    %v94 = vadd.f32 %v31, %v89
    %v95 = vld [vmem:[#allocation3] sm:$0xff]
    %v96 = vsub.f32 0.0, %v94
    %v97 = vmul.f32 %v96, 1.442695
    %v98 = vpow.pop %v97
    %v99 = vadd.f32 %v98, 1.0
    %v100 = vrcp.pop %v99
    %v101 = vmul.f32 1.0, %v100
    %v102 = vtanh.pop %v94
    %104 = vrot.lane.b32.xlu0 %v95, 32
    %v105 = vpop.permute.xlu0 %104
    %v107 = vmul.f32 %v101, %v105
    %109 = vrot.lane.b32.xlu0 %v102, 64
    %v110 = vpop.permute.xlu0 %109
    %v112 = vmul.f32 %v101, %v110
    %114 = vrot.lane.b32.xlu0 %v112, 32
    %v115 = vpop.permute.xlu0 %114
    %v117 = vadd.f32 %v107, %v115
    %v118 = vtanh.pop %v117
    %120 = vrot.lane.b32.xlu0 %v118, 64
    %v121 = vpop.permute.xlu0 %120
    %v123 = vmul.f32 %v101, %v121
    %125 = vrot.lane.b32.xlu0 %v123, 32
    %v126 = vpop.permute.xlu0 %125
    %128 = vst.msk [vmem:[#allocation2] sm:$0xff] %vm50, %v126
    %130 = vrot.lane.b32.xlu0 %v117, 96
    %v131 = vpop.permute.xlu0 %130
    %133 = vst.msk [vmem:[#allocation3] sm:$0xff] %vm50, %v131
    %v134 = vld [vmem:[%s2] sm:$0xf]
    %v135 = vld [vmem:[%s2 + $0x4] sm:$0xf]
    %v136 = vld [vmem:[%s2 + $0x8] sm:$0xf]
    %v137 = vld [vmem:[%s2 + $0xc] sm:$0xf]
    %v138 = vld [vmem:[%s2 + $0x10] sm:$0xf]
    %v139 = vld [vmem:[%s2 + $0x14] sm:$0xf]
    %v140 = vld [vmem:[%s2 + $0x18] sm:$0xf]
    %v141 = vld [vmem:[%s2 + $0x1c] sm:$0xf]
    %v142 = vpack.c.bf16 %v123, %v123
    %s143 = scalar_lea.vmem [#allocation2], 8
    %v144 = vld [vmem:[%s143] sm:$0xff]
    %v145 = vpack.c.bf16 %v144, %v144
    %v150 = vunpack.c.l.b16 %v138
    %v151 = vunpack.c.l.b16 %v139
    %v152 = vunpack.c.l.b16 %v140
    %v153 = vunpack.c.l.b16 %v141
    %v154 = vpack.c.b16 %v151, %v150
    %v155 = vpack.c.b16 %v153, %v152
    %v159 = vsel %vm50, %v145, 0
    %161 = vmatprep.subr.bf16.mxu0 0
    %162 = vmatpush1.bf16.msra.mxu0 %v154
    %163 = vmatprep.subr.bf16.mxu0 0
    %164 = vmatpush1.bf16.msra.mxu0 %v155
    %165 = vmatprep.subr.bf16.mxu0 0
    %166 = vmatpush1.bf16.msra.mxu0 0
    %167 = vmatprep.subr.bf16.mxu0 0
    %168 = vmatpush1.bf16.msra.mxu0 0
    %169 = vmatprep.subr.bf16.mxu0 0
    %170 = vmatpush1.bf16.msra.mxu0 0
    %171 = vmatprep.subr.bf16.mxu0 0
    %172 = vmatpush1.bf16.msra.mxu0 0
    %173 = vmatprep.subr.bf16.mxu0 0
    %174 = vmatpush1.bf16.msra.mxu0 0
    %175 = vmatprep.subr.bf16.mxu0 0
    %176 = vmatpush1.bf16.msra.mxu0 0
    %177 = vmatprep.subr.bf16.mxu0 0
    %178 = vmatpush1.bf16.msra.mxu0 0
    %179 = vmatprep.subr.bf16.mxu0 0
    %180 = vmatpush1.bf16.msra.mxu0 0
    %181 = vmatprep.subr.bf16.mxu0 0
    %182 = vmatpush1.bf16.msra.mxu0 0
    %183 = vmatprep.subr.bf16.mxu0 0
    %184 = vmatpush1.bf16.msra.mxu0 0
    %185 = vmatprep.subr.bf16.mxu0 0
    %186 = vmatpush1.bf16.msra.mxu0 0
    %187 = vmatprep.subr.bf16.mxu0 0
    %188 = vmatpush1.bf16.msra.mxu0 0
    %189 = vmatprep.subr.bf16.mxu0 0
    %190 = vmatpush1.bf16.msra.mxu0 0
    %191 = vmatprep.subr.bf16.mxu0 0
    %192 = vmatpush1.bf16.msra.mxu0 0
    %193 = vmatprep.mubr.bf16.mxu0 0
    %194 = vmatmul.mubr.bf16.gmra.mrb[0].mxu0 %v159
    %v195 = vpop.f32.mrb[0].mxu0
    %v196 = vadd.f32 0.0, %v195
    %v197 = vpop.f32.mrb[0].mxu0
    %v198 = vpop.f32.mrb[0].mxu0
    %v199 = vpop.f32.mrb[0].mxu0
    %200 = vdwg.mxu0
    %202 = vrot.lane.b32.xlu0 %v142, 32
    %v203 = vpop.permute.xlu0 %202
    %v208 = vunpack.c.l.b16 %v134
    %v209 = vunpack.c.l.b16 %v135
    %v210 = vunpack.c.l.b16 %v136
    %v211 = vunpack.c.l.b16 %v137
    %v212 = vpack.c.b16 %v209, %v208
    %v213 = vpack.c.b16 %v211, %v210
    %v217 = vsel %vm50, %v203, 0
    %219 = vmatprep.subr.bf16.mxu0 0
    %220 = vmatpush1.bf16.msra.mxu0 %v212
    %221 = vmatprep.subr.bf16.mxu0 0
    %222 = vmatpush1.bf16.msra.mxu0 %v213
    %223 = vmatprep.subr.bf16.mxu0 0
    %224 = vmatpush1.bf16.msra.mxu0 0
    %225 = vmatprep.subr.bf16.mxu0 0
    %226 = vmatpush1.bf16.msra.mxu0 0
    %227 = vmatprep.subr.bf16.mxu0 0
    %228 = vmatpush1.bf16.msra.mxu0 0
    %229 = vmatprep.subr.bf16.mxu0 0
    %230 = vmatpush1.bf16.msra.mxu0 0
    %231 = vmatprep.subr.bf16.mxu0 0
    %232 = vmatpush1.bf16.msra.mxu0 0
    %233 = vmatprep.subr.bf16.mxu0 0
    %234 = vmatpush1.bf16.msra.mxu0 0
    %235 = vmatprep.subr.bf16.mxu0 0
    %236 = vmatpush1.bf16.msra.mxu0 0
    %237 = vmatprep.subr.bf16.mxu0 0
    %238 = vmatpush1.bf16.msra.mxu0 0
    %239 = vmatprep.subr.bf16.mxu0 0
    %240 = vmatpush1.bf16.msra.mxu0 0
    %241 = vmatprep.subr.bf16.mxu0 0
    %242 = vmatpush1.bf16.msra.mxu0 0
    %243 = vmatprep.subr.bf16.mxu0 0
    %244 = vmatpush1.bf16.msra.mxu0 0
    %245 = vmatprep.subr.bf16.mxu0 0
    %246 = vmatpush1.bf16.msra.mxu0 0
    %247 = vmatprep.subr.bf16.mxu0 0
    %248 = vmatpush1.bf16.msra.mxu0 0
    %249 = vmatprep.subr.bf16.mxu0 0
    %250 = vmatpush1.bf16.msra.mxu0 0
    %251 = vmatprep.mubr.bf16.mxu0 0
    %252 = vmatmul.mubr.bf16.gmra.mrb[0].mxu0 %v217
    %v253 = vpop.f32.mrb[0].mxu0
    %v254 = vadd.f32 %v196, %v253
    %v255 = vpop.f32.mrb[0].mxu0
    %v256 = vpop.f32.mrb[0].mxu0
    %v257 = vpop.f32.mrb[0].mxu0
    %258 = vdwg.mxu0
    %v259 = vld [vmem:[%s3] sm:$0x1]
    %v261 = vlaneseq
    %v262 = vshrl.u32 %v261, 7
    %v263 = vsub.s32 0, %v262
    %v264 = vrot.slane %v259, %v263
    %v266 = vadd.f32 %v254, %v264
    %s267 = scalar_lea.vmem [#allocation3], 8
    %v268 = vld [vmem:[%s267] sm:$0xff]
    %v269 = vsub.f32 0.0, %v266
    %v270 = vmul.f32 %v269, 1.442695
    %v271 = vpow.pop %v270
    %v272 = vadd.f32 %v271, 1.0
    %v273 = vrcp.pop %v272
    %v274 = vmul.f32 1.0, %v273
    %v275 = vtanh.pop %v266
    %277 = vrot.lane.b32.xlu0 %v268, 32
    %v278 = vpop.permute.xlu0 %277
    %v280 = vmul.f32 %v274, %v278
    %282 = vrot.lane.b32.xlu0 %v275, 64
    %v283 = vpop.permute.xlu0 %282
    %v285 = vmul.f32 %v274, %v283
    %287 = vrot.lane.b32.xlu0 %v285, 32
    %v288 = vpop.permute.xlu0 %287
    %v290 = vadd.f32 %v280, %v288
    %v291 = vtanh.pop %v290
    %293 = vrot.lane.b32.xlu0 %v291, 64
    %v294 = vpop.permute.xlu0 %293
    %v296 = vmul.f32 %v274, %v294
    %298 = vrot.lane.b32.xlu0 %v296, 32
    %v299 = vpop.permute.xlu0 %298
    %301 = vst.msk [vmem:[%s143] sm:$0xff] %vm50, %v299
    %303 = vrot.lane.b32.xlu0 %v290, 96
    %v304 = vpop.permute.xlu0 %303
    %306 = vst.msk [vmem:[%s267] sm:$0xff] %vm50, %v304
    %v307 = vpack.c.bf16 %v296, %v296
    %v309 = vunpack.c.l.b16 %v307
    %v310 = vpack.c.b16 %v309, %v309
    %311 = vrot.lane.b32.xlu0 %v310, 32
    %v312 = vpop.permute.xlu0 %311
    %vm314 = vcmask 257024
    %315 = vst.msk [vmem:[#allocation4] sm:$0xf] %vm314, %v312
    %s316 = scalar_lea.vmem %s0, 8
    %v317 = vld [vmem:[%s316] sm:$0xff]
    %v318 = vld [vmem:[#allocation2] sm:$0xff]
    %v319 = vpack.c.bf16 %v318, %v318
    %v320 = vld [vmem:[%s1] sm:$0xf]
    %v321 = vld [vmem:[%s1 + $0x4] sm:$0xf]
    %v322 = vld [vmem:[%s1 + $0x8] sm:$0xf]
    %v323 = vld [vmem:[%s1 + $0xc] sm:$0xf]
    %v328 = vunpack.c.l.b16 %v320
    %v329 = vunpack.c.l.b16 %v321
    %v330 = vunpack.c.l.b16 %v322
    %v331 = vunpack.c.l.b16 %v323
    %v332 = vpack.c.b16 %v329, %v328
    %v333 = vpack.c.b16 %v331, %v330
    %v337 = vsel %vm50, %v319, 0
    %339 = vmatprep.subr.bf16.mxu0 0
    %340 = vmatpush1.bf16.msra.mxu0 %v332
    %341 = vmatprep.subr.bf16.mxu0 0
    %342 = vmatpush1.bf16.msra.mxu0 %v333
    %343 = vmatprep.subr.bf16.mxu0 0
    %344 = vmatpush1.bf16.msra.mxu0 0
    %345 = vmatprep.subr.bf16.mxu0 0
    %346 = vmatpush1.bf16.msra.mxu0 0
    %347 = vmatprep.subr.bf16.mxu0 0
    %348 = vmatpush1.bf16.msra.mxu0 0
    %349 = vmatprep.subr.bf16.mxu0 0
    %350 = vmatpush1.bf16.msra.mxu0 0
    %351 = vmatprep.subr.bf16.mxu0 0
    %352 = vmatpush1.bf16.msra.mxu0 0
    %353 = vmatprep.subr.bf16.mxu0 0
    %354 = vmatpush1.bf16.msra.mxu0 0
    %355 = vmatprep.subr.bf16.mxu0 0
    %356 = vmatpush1.bf16.msra.mxu0 0
    %357 = vmatprep.subr.bf16.mxu0 0
    %358 = vmatpush1.bf16.msra.mxu0 0
    %359 = vmatprep.subr.bf16.mxu0 0
    %360 = vmatpush1.bf16.msra.mxu0 0
    %361 = vmatprep.subr.bf16.mxu0 0
    %362 = vmatpush1.bf16.msra.mxu0 0
    %363 = vmatprep.subr.bf16.mxu0 0
    %364 = vmatpush1.bf16.msra.mxu0 0
    %365 = vmatprep.subr.bf16.mxu0 0
    %366 = vmatpush1.bf16.msra.mxu0 0
    %367 = vmatprep.subr.bf16.mxu0 0
    %368 = vmatpush1.bf16.msra.mxu0 0
    %369 = vmatprep.subr.bf16.mxu0 0
    %370 = vmatpush1.bf16.msra.mxu0 0
    %371 = vmatprep.mubr.bf16.mxu0 0
    %372 = vmatmul.mubr.bf16.gmra.mrb[0].mxu0 %v337
    %v373 = vpop.f32.mrb[0].mxu0
    %v374 = vadd.f32 0.0, %v373
    %v375 = vpop.f32.mrb[0].mxu0
    %v376 = vpop.f32.mrb[0].mxu0
    %v377 = vpop.f32.mrb[0].mxu0
    %378 = vdwg.mxu0
    %v379 = vadd.f32 %v317, %v374
    %v380 = vld [vmem:[#allocation3] sm:$0xff]
    %v381 = vsub.f32 0.0, %v379
    %v382 = vmul.f32 %v381, 1.442695
    %v383 = vpow.pop %v382
    %v384 = vadd.f32 %v383, 1.0
    %v385 = vrcp.pop %v384
    %v386 = vmul.f32 1.0, %v385
    %v387 = vtanh.pop %v379
    %389 = vrot.lane.b32.xlu0 %v380, 32
    %v390 = vpop.permute.xlu0 %389
    %v392 = vmul.f32 %v386, %v390
    %394 = vrot.lane.b32.xlu0 %v387, 64
    %v395 = vpop.permute.xlu0 %394
    %v397 = vmul.f32 %v386, %v395
    %399 = vrot.lane.b32.xlu0 %v397, 32
    %v400 = vpop.permute.xlu0 %399
    %v402 = vadd.f32 %v392, %v400
    %v403 = vtanh.pop %v402
    %405 = vrot.lane.b32.xlu0 %v403, 64
    %v406 = vpop.permute.xlu0 %405
    %v408 = vmul.f32 %v386, %v406
    %410 = vrot.lane.b32.xlu0 %v408, 32
    %v411 = vpop.permute.xlu0 %410
    %413 = vst.msk [vmem:[#allocation2] sm:$0xff] %vm50, %v411
    %415 = vrot.lane.b32.xlu0 %v402, 96
    %v416 = vpop.permute.xlu0 %415
    %418 = vst.msk [vmem:[#allocation3] sm:$0xff] %vm50, %v416
    %v419 = vld [vmem:[%s2] sm:$0xf]
    %v420 = vld [vmem:[%s2 + $0x4] sm:$0xf]
    %v421 = vld [vmem:[%s2 + $0x8] sm:$0xf]
    %v422 = vld [vmem:[%s2 + $0xc] sm:$0xf]
    %v423 = vld [vmem:[%s2 + $0x10] sm:$0xf]
    %v424 = vld [vmem:[%s2 + $0x14] sm:$0xf]
    %v425 = vld [vmem:[%s2 + $0x18] sm:$0xf]
    %v426 = vld [vmem:[%s2 + $0x1c] sm:$0xf]
    %v427 = vpack.c.bf16 %v408, %v408
    %v428 = vld [vmem:[%s143] sm:$0xff]
    %v429 = vpack.c.bf16 %v428, %v428
    %v434 = vunpack.c.l.b16 %v423
    %v435 = vunpack.c.l.b16 %v424
    %v436 = vunpack.c.l.b16 %v425
    %v437 = vunpack.c.l.b16 %v426
    %v438 = vpack.c.b16 %v435, %v434
    %v439 = vpack.c.b16 %v437, %v436
    %v443 = vsel %vm50, %v429, 0
    %445 = vmatprep.subr.bf16.mxu0 0
    %446 = vmatpush1.bf16.msra.mxu0 %v438
    %447 = vmatprep.subr.bf16.mxu0 0
    %448 = vmatpush1.bf16.msra.mxu0 %v439
    %449 = vmatprep.subr.bf16.mxu0 0
    %450 = vmatpush1.bf16.msra.mxu0 0
    %451 = vmatprep.subr.bf16.mxu0 0
    %452 = vmatpush1.bf16.msra.mxu0 0
    %453 = vmatprep.subr.bf16.mxu0 0
    %454 = vmatpush1.bf16.msra.mxu0 0
    %455 = vmatprep.subr.bf16.mxu0 0
    %456 = vmatpush1.bf16.msra.mxu0 0
    %457 = vmatprep.subr.bf16.mxu0 0
    %458 = vmatpush1.bf16.msra.mxu0 0
    %459 = vmatprep.subr.bf16.mxu0 0
    %460 = vmatpush1.bf16.msra.mxu0 0
    %461 = vmatprep.subr.bf16.mxu0 0
    %462 = vmatpush1.bf16.msra.mxu0 0
    %463 = vmatprep.subr.bf16.mxu0 0
    %464 = vmatpush1.bf16.msra.mxu0 0
    %465 = vmatprep.subr.bf16.mxu0 0
    %466 = vmatpush1.bf16.msra.mxu0 0
    %467 = vmatprep.subr.bf16.mxu0 0
    %468 = vmatpush1.bf16.msra.mxu0 0
    %469 = vmatprep.subr.bf16.mxu0 0
    %470 = vmatpush1.bf16.msra.mxu0 0
    %471 = vmatprep.subr.bf16.mxu0 0
    %472 = vmatpush1.bf16.msra.mxu0 0
    %473 = vmatprep.subr.bf16.mxu0 0
    %474 = vmatpush1.bf16.msra.mxu0 0
    %475 = vmatprep.subr.bf16.mxu0 0
    %476 = vmatpush1.bf16.msra.mxu0 0
    %477 = vmatprep.mubr.bf16.mxu0 0
    %478 = vmatmul.mubr.bf16.gmra.mrb[0].mxu0 %v443
    %v479 = vpop.f32.mrb[0].mxu0
    %v480 = vadd.f32 0.0, %v479
    %v481 = vpop.f32.mrb[0].mxu0
    %v482 = vpop.f32.mrb[0].mxu0
    %v483 = vpop.f32.mrb[0].mxu0
    %484 = vdwg.mxu0
    %486 = vrot.lane.b32.xlu0 %v427, 32
    %v487 = vpop.permute.xlu0 %486
    %v492 = vunpack.c.l.b16 %v419
    %v493 = vunpack.c.l.b16 %v420
    %v494 = vunpack.c.l.b16 %v421
    %v495 = vunpack.c.l.b16 %v422
    %v496 = vpack.c.b16 %v493, %v492
    %v497 = vpack.c.b16 %v495, %v494
    %v501 = vsel %vm50, %v487, 0
    %503 = vmatprep.subr.bf16.mxu0 0
    %504 = vmatpush1.bf16.msra.mxu0 %v496
    %505 = vmatprep.subr.bf16.mxu0 0
    %506 = vmatpush1.bf16.msra.mxu0 %v497
    %507 = vmatprep.subr.bf16.mxu0 0
    %508 = vmatpush1.bf16.msra.mxu0 0
    %509 = vmatprep.subr.bf16.mxu0 0
    %510 = vmatpush1.bf16.msra.mxu0 0
    %511 = vmatprep.subr.bf16.mxu0 0
    %512 = vmatpush1.bf16.msra.mxu0 0
    %513 = vmatprep.subr.bf16.mxu0 0
    %514 = vmatpush1.bf16.msra.mxu0 0
    %515 = vmatprep.subr.bf16.mxu0 0
    %516 = vmatpush1.bf16.msra.mxu0 0
    %517 = vmatprep.subr.bf16.mxu0 0
    %518 = vmatpush1.bf16.msra.mxu0 0
    %519 = vmatprep.subr.bf16.mxu0 0
    %520 = vmatpush1.bf16.msra.mxu0 0
    %521 = vmatprep.subr.bf16.mxu0 0
    %522 = vmatpush1.bf16.msra.mxu0 0
    %523 = vmatprep.subr.bf16.mxu0 0
    %524 = vmatpush1.bf16.msra.mxu0 0
    %525 = vmatprep.subr.bf16.mxu0 0
    %526 = vmatpush1.bf16.msra.mxu0 0
    %527 = vmatprep.subr.bf16.mxu0 0
    %528 = vmatpush1.bf16.msra.mxu0 0
    %529 = vmatprep.subr.bf16.mxu0 0
    %530 = vmatpush1.bf16.msra.mxu0 0
    %531 = vmatprep.subr.bf16.mxu0 0
    %532 = vmatpush1.bf16.msra.mxu0 0
    %533 = vmatprep.subr.bf16.mxu0 0
    %534 = vmatpush1.bf16.msra.mxu0 0
    %535 = vmatprep.mubr.bf16.mxu0 0
    %536 = vmatmul.mubr.bf16.gmra.mrb[0].mxu0 %v501
    %v537 = vpop.f32.mrb[0].mxu0
    %v538 = vadd.f32 %v480, %v537
    %v539 = vpop.f32.mrb[0].mxu0
    %v540 = vpop.f32.mrb[0].mxu0
    %v541 = vpop.f32.mrb[0].mxu0
    %542 = vdwg.mxu0
    %v543 = vld [vmem:[%s3] sm:$0x1]
    %v545 = vlaneseq
    %v546 = vshrl.u32 %v545, 7
    %v547 = vsub.s32 0, %v546
    %v548 = vrot.slane %v543, %v547
    %v550 = vadd.f32 %v538, %v548
    %v551 = vld [vmem:[%s267] sm:$0xff]
    %v552 = vsub.f32 0.0, %v550
    %v553 = vmul.f32 %v552, 1.442695
    %v554 = vpow.pop %v553
    %v555 = vadd.f32 %v554, 1.0
    %v556 = vrcp.pop %v555
    %v557 = vmul.f32 1.0, %v556
    %v558 = vtanh.pop %v550
    %560 = vrot.lane.b32.xlu0 %v551, 32
    %v561 = vpop.permute.xlu0 %560
    %v563 = vmul.f32 %v557, %v561
    %565 = vrot.lane.b32.xlu0 %v558, 64
    %v566 = vpop.permute.xlu0 %565
    %v568 = vmul.f32 %v557, %v566
    %570 = vrot.lane.b32.xlu0 %v568, 32
    %v571 = vpop.permute.xlu0 %570
    %v573 = vadd.f32 %v563, %v571
    %v574 = vtanh.pop %v573
    %576 = vrot.lane.b32.xlu0 %v574, 64
    %v577 = vpop.permute.xlu0 %576
    %v579 = vmul.f32 %v557, %v577
    %581 = vrot.lane.b32.xlu0 %v579, 32
    %v582 = vpop.permute.xlu0 %581
    %584 = vst.msk [vmem:[%s143] sm:$0xff] %vm50, %v582
    %586 = vrot.lane.b32.xlu0 %v573, 96
    %v587 = vpop.permute.xlu0 %586
    %589 = vst.msk [vmem:[%s267] sm:$0xff] %vm50, %v587
    %v590 = vpack.c.bf16 %v579, %v579
    %v592 = vunpack.c.l.b16 %v590
    %v593 = vpack.c.b16 %v592, %v592
    %594 = vrot.lane.b32.xlu0 %v593, 32
    %v595 = vpop.permute.xlu0 %594
    %s597 = scalar_lea.vmem [#allocation4], 4
    %598 = vst.msk [vmem:[%s597] sm:$0xf] %vm314, %v595
    %s599 = scalar_lea.vmem %s0, 16
    %v600 = vld [vmem:[%s599] sm:$0xff]
    %v601 = vld [vmem:[#allocation2] sm:$0xff]
    %v602 = vpack.c.bf16 %v601, %v601
    %v603 = vld [vmem:[%s1] sm:$0xf]
    %v604 = vld [vmem:[%s1 + $0x4] sm:$0xf]
    %v605 = vld [vmem:[%s1 + $0x8] sm:$0xf]
    %v606 = vld [vmem:[%s1 + $0xc] sm:$0xf]
    %v611 = vunpack.c.l.b16 %v603
    %v612 = vunpack.c.l.b16 %v604
    %v613 = vunpack.c.l.b16 %v605
    %v614 = vunpack.c.l.b16 %v606
    %v615 = vpack.c.b16 %v612, %v611
    %v616 = vpack.c.b16 %v614, %v613
    %v620 = vsel %vm50, %v602, 0
    %622 = vmatprep.subr.bf16.mxu0 0
    %623 = vmatpush1.bf16.msra.mxu0 %v615
    %624 = vmatprep.subr.bf16.mxu0 0
    %625 = vmatpush1.bf16.msra.mxu0 %v616
    %626 = vmatprep.subr.bf16.mxu0 0
    %627 = vmatpush1.bf16.msra.mxu0 0
    %628 = vmatprep.subr.bf16.mxu0 0
    %629 = vmatpush1.bf16.msra.mxu0 0
    %630 = vmatprep.subr.bf16.mxu0 0
    %631 = vmatpush1.bf16.msra.mxu0 0
    %632 = vmatprep.subr.bf16.mxu0 0
    %633 = vmatpush1.bf16.msra.mxu0 0
    %634 = vmatprep.subr.bf16.mxu0 0
    %635 = vmatpush1.bf16.msra.mxu0 0
    %636 = vmatprep.subr.bf16.mxu0 0
    %637 = vmatpush1.bf16.msra.mxu0 0
    %638 = vmatprep.subr.bf16.mxu0 0
    %639 = vmatpush1.bf16.msra.mxu0 0
    %640 = vmatprep.subr.bf16.mxu0 0
    %641 = vmatpush1.bf16.msra.mxu0 0
    %642 = vmatprep.subr.bf16.mxu0 0
    %643 = vmatpush1.bf16.msra.mxu0 0
    %644 = vmatprep.subr.bf16.mxu0 0
    %645 = vmatpush1.bf16.msra.mxu0 0
    %646 = vmatprep.subr.bf16.mxu0 0
    %647 = vmatpush1.bf16.msra.mxu0 0
    %648 = vmatprep.subr.bf16.mxu0 0
    %649 = vmatpush1.bf16.msra.mxu0 0
    %650 = vmatprep.subr.bf16.mxu0 0
    %651 = vmatpush1.bf16.msra.mxu0 0
    %652 = vmatprep.subr.bf16.mxu0 0
    %653 = vmatpush1.bf16.msra.mxu0 0
    %654 = vmatprep.mubr.bf16.mxu0 0
    %655 = vmatmul.mubr.bf16.gmra.mrb[0].mxu0 %v620
    %v656 = vpop.f32.mrb[0].mxu0
    %v657 = vadd.f32 0.0, %v656
    %v658 = vpop.f32.mrb[0].mxu0
    %v659 = vpop.f32.mrb[0].mxu0
    %v660 = vpop.f32.mrb[0].mxu0
    %661 = vdwg.mxu0
    %v662 = vadd.f32 %v600, %v657
    %v663 = vld [vmem:[#allocation3] sm:$0xff]
    %v664 = vsub.f32 0.0, %v662
    %v665 = vmul.f32 %v664, 1.442695
    %v666 = vpow.pop %v665
    %v667 = vadd.f32 %v666, 1.0
    %v668 = vrcp.pop %v667
    %v669 = vmul.f32 1.0, %v668
    %v670 = vtanh.pop %v662
    %672 = vrot.lane.b32.xlu0 %v663, 32
    %v673 = vpop.permute.xlu0 %672
    %v675 = vmul.f32 %v669, %v673
    %677 = vrot.lane.b32.xlu0 %v670, 64
    %v678 = vpop.permute.xlu0 %677
    %v680 = vmul.f32 %v669, %v678
    %682 = vrot.lane.b32.xlu0 %v680, 32
    %v683 = vpop.permute.xlu0 %682
    %v685 = vadd.f32 %v675, %v683
    %v686 = vtanh.pop %v685
    %688 = vrot.lane.b32.xlu0 %v686, 64
    %v689 = vpop.permute.xlu0 %688
    %v691 = vmul.f32 %v669, %v689
    %693 = vrot.lane.b32.xlu0 %v691, 32
    %v694 = vpop.permute.xlu0 %693
    %696 = vst.msk [vmem:[#allocation2] sm:$0xff] %vm50, %v694
    %698 = vrot.lane.b32.xlu0 %v685, 96
    %v699 = vpop.permute.xlu0 %698
    %701 = vst.msk [vmem:[#allocation3] sm:$0xff] %vm50, %v699
    %v702 = vld [vmem:[%s2] sm:$0xf]
    %v703 = vld [vmem:[%s2 + $0x4] sm:$0xf]
    %v704 = vld [vmem:[%s2 + $0x8] sm:$0xf]
    %v705 = vld [vmem:[%s2 + $0xc] sm:$0xf]
    %v706 = vld [vmem:[%s2 + $0x10] sm:$0xf]
    %v707 = vld [vmem:[%s2 + $0x14] sm:$0xf]
    %v708 = vld [vmem:[%s2 + $0x18] sm:$0xf]
    %v709 = vld [vmem:[%s2 + $0x1c] sm:$0xf]
    %v710 = vpack.c.bf16 %v691, %v691
    %v711 = vld [vmem:[%s143] sm:$0xff]
    %v712 = vpack.c.bf16 %v711, %v711
    %v717 = vunpack.c.l.b16 %v706
    %v718 = vunpack.c.l.b16 %v707
    %v719 = vunpack.c.l.b16 %v708
    %v720 = vunpack.c.l.b16 %v709
    %v721 = vpack.c.b16 %v718, %v717
    %v722 = vpack.c.b16 %v720, %v719
    %v726 = vsel %vm50, %v712, 0
    %728 = vmatprep.subr.bf16.mxu0 0
    %729 = vmatpush1.bf16.msra.mxu0 %v721
    %730 = vmatprep.subr.bf16.mxu0 0
    %731 = vmatpush1.bf16.msra.mxu0 %v722
    %732 = vmatprep.subr.bf16.mxu0 0
    %733 = vmatpush1.bf16.msra.mxu0 0
    %734 = vmatprep.subr.bf16.mxu0 0
    %735 = vmatpush1.bf16.msra.mxu0 0
    %736 = vmatprep.subr.bf16.mxu0 0
    %737 = vmatpush1.bf16.msra.mxu0 0
    %738 = vmatprep.subr.bf16.mxu0 0
    %739 = vmatpush1.bf16.msra.mxu0 0
    %740 = vmatprep.subr.bf16.mxu0 0
    %741 = vmatpush1.bf16.msra.mxu0 0
    %742 = vmatprep.subr.bf16.mxu0 0
    %743 = vmatpush1.bf16.msra.mxu0 0
    %744 = vmatprep.subr.bf16.mxu0 0
    %745 = vmatpush1.bf16.msra.mxu0 0
    %746 = vmatprep.subr.bf16.mxu0 0
    %747 = vmatpush1.bf16.msra.mxu0 0
    %748 = vmatprep.subr.bf16.mxu0 0
    %749 = vmatpush1.bf16.msra.mxu0 0
    %750 = vmatprep.subr.bf16.mxu0 0
    %751 = vmatpush1.bf16.msra.mxu0 0
    %752 = vmatprep.subr.bf16.mxu0 0
    %753 = vmatpush1.bf16.msra.mxu0 0
    %754 = vmatprep.subr.bf16.mxu0 0
    %755 = vmatpush1.bf16.msra.mxu0 0
    %756 = vmatprep.subr.bf16.mxu0 0
    %757 = vmatpush1.bf16.msra.mxu0 0
    %758 = vmatprep.subr.bf16.mxu0 0
    %759 = vmatpush1.bf16.msra.mxu0 0
    %760 = vmatprep.mubr.bf16.mxu0 0
    %761 = vmatmul.mubr.bf16.gmra.mrb[0].mxu0 %v726
    %v762 = vpop.f32.mrb[0].mxu0
    %v763 = vadd.f32 0.0, %v762
    %v764 = vpop.f32.mrb[0].mxu0
    %v765 = vpop.f32.mrb[0].mxu0
    %v766 = vpop.f32.mrb[0].mxu0
    %767 = vdwg.mxu0
    %769 = vrot.lane.b32.xlu0 %v710, 32
    %v770 = vpop.permute.xlu0 %769
    %v775 = vunpack.c.l.b16 %v702
    %v776 = vunpack.c.l.b16 %v703
    %v777 = vunpack.c.l.b16 %v704
    %v778 = vunpack.c.l.b16 %v705
    %v779 = vpack.c.b16 %v776, %v775
    %v780 = vpack.c.b16 %v778, %v777
    %v784 = vsel %vm50, %v770, 0
    %786 = vmatprep.subr.bf16.mxu0 0
    %787 = vmatpush1.bf16.msra.mxu0 %v779
    %788 = vmatprep.subr.bf16.mxu0 0
    %789 = vmatpush1.bf16.msra.mxu0 %v780
    %790 = vmatprep.subr.bf16.mxu0 0
    %791 = vmatpush1.bf16.msra.mxu0 0
    %792 = vmatprep.subr.bf16.mxu0 0
    %793 = vmatpush1.bf16.msra.mxu0 0
    %794 = vmatprep.subr.bf16.mxu0 0
    %795 = vmatpush1.bf16.msra.mxu0 0
    %796 = vmatprep.subr.bf16.mxu0 0
    %797 = vmatpush1.bf16.msra.mxu0 0
    %798 = vmatprep.subr.bf16.mxu0 0
    %799 = vmatpush1.bf16.msra.mxu0 0
    %800 = vmatprep.subr.bf16.mxu0 0
    %801 = vmatpush1.bf16.msra.mxu0 0
    %802 = vmatprep.subr.bf16.mxu0 0
    %803 = vmatpush1.bf16.msra.mxu0 0
    %804 = vmatprep.subr.bf16.mxu0 0
    %805 = vmatpush1.bf16.msra.mxu0 0
    %806 = vmatprep.subr.bf16.mxu0 0
    %807 = vmatpush1.bf16.msra.mxu0 0
    %808 = vmatprep.subr.bf16.mxu0 0
    %809 = vmatpush1.bf16.msra.mxu0 0
    %810 = vmatprep.subr.bf16.mxu0 0
    %811 = vmatpush1.bf16.msra.mxu0 0
    %812 = vmatprep.subr.bf16.mxu0 0
    %813 = vmatpush1.bf16.msra.mxu0 0
    %814 = vmatprep.subr.bf16.mxu0 0
    %815 = vmatpush1.bf16.msra.mxu0 0
    %816 = vmatprep.subr.bf16.mxu0 0
    %817 = vmatpush1.bf16.msra.mxu0 0
    %818 = vmatprep.mubr.bf16.mxu0 0
    %819 = vmatmul.mubr.bf16.gmra.mrb[0].mxu0 %v784
    %v820 = vpop.f32.mrb[0].mxu0
    %v821 = vadd.f32 %v763, %v820
    %v822 = vpop.f32.mrb[0].mxu0
    %v823 = vpop.f32.mrb[0].mxu0
    %v824 = vpop.f32.mrb[0].mxu0
    %825 = vdwg.mxu0
    %v826 = vld [vmem:[%s3] sm:$0x1]
    %v828 = vlaneseq
    %v829 = vshrl.u32 %v828, 7
    %v830 = vsub.s32 0, %v829
    %v831 = vrot.slane %v826, %v830
    %v833 = vadd.f32 %v821, %v831
    %v834 = vld [vmem:[%s267] sm:$0xff]
    %v835 = vsub.f32 0.0, %v833
    %v836 = vmul.f32 %v835, 1.442695
    %v837 = vpow.pop %v836
    %v838 = vadd.f32 %v837, 1.0
    %v839 = vrcp.pop %v838
    %v840 = vmul.f32 1.0, %v839
    %v841 = vtanh.pop %v833
    %843 = vrot.lane.b32.xlu0 %v834, 32
    %v844 = vpop.permute.xlu0 %843
    %v846 = vmul.f32 %v840, %v844
    %848 = vrot.lane.b32.xlu0 %v841, 64
    %v849 = vpop.permute.xlu0 %848
    %v851 = vmul.f32 %v840, %v849
    %853 = vrot.lane.b32.xlu0 %v851, 32
    %v854 = vpop.permute.xlu0 %853
    %v856 = vadd.f32 %v846, %v854
    %v857 = vtanh.pop %v856
    %859 = vrot.lane.b32.xlu0 %v857, 64
    %v860 = vpop.permute.xlu0 %859
    %v862 = vmul.f32 %v840, %v860
    %864 = vrot.lane.b32.xlu0 %v862, 32
    %v865 = vpop.permute.xlu0 %864
    %867 = vst.msk [vmem:[%s143] sm:$0xff] %vm50, %v865
    %869 = vrot.lane.b32.xlu0 %v856, 96
    %v870 = vpop.permute.xlu0 %869
    %872 = vst.msk [vmem:[%s267] sm:$0xff] %vm50, %v870
    %v873 = vpack.c.bf16 %v862, %v862
    %v875 = vunpack.c.l.b16 %v873
    %v876 = vpack.c.b16 %v875, %v875
    %877 = vrot.lane.b32.xlu0 %v876, 32
    %v878 = vpop.permute.xlu0 %877
    %s880 = scalar_lea.vmem [#allocation4], 8
    %881 = vst.msk [vmem:[%s880] sm:$0xf] %vm314, %v878
    %s882 = scalar_lea.vmem %s0, 24
    %v883 = vld [vmem:[%s882] sm:$0xff]
    %v884 = vld [vmem:[#allocation2] sm:$0xff]
    %v885 = vpack.c.bf16 %v884, %v884
    %v886 = vld [vmem:[%s1] sm:$0xf]
    %v887 = vld [vmem:[%s1 + $0x4] sm:$0xf]
    %v888 = vld [vmem:[%s1 + $0x8] sm:$0xf]
    %v889 = vld [vmem:[%s1 + $0xc] sm:$0xf]
    %v894 = vunpack.c.l.b16 %v886
    %v895 = vunpack.c.l.b16 %v887
    %v896 = vunpack.c.l.b16 %v888
    %v897 = vunpack.c.l.b16 %v889
    %v898 = vpack.c.b16 %v895, %v894
    %v899 = vpack.c.b16 %v897, %v896
    %v903 = vsel %vm50, %v885, 0
    %905 = vmatprep.subr.bf16.mxu0 0
    %906 = vmatpush1.bf16.msra.mxu0 %v898
    %907 = vmatprep.subr.bf16.mxu0 0
    %908 = vmatpush1.bf16.msra.mxu0 %v899
    %909 = vmatprep.subr.bf16.mxu0 0
    %910 = vmatpush1.bf16.msra.mxu0 0
    %911 = vmatprep.subr.bf16.mxu0 0
    %912 = vmatpush1.bf16.msra.mxu0 0
    %913 = vmatprep.subr.bf16.mxu0 0
    %914 = vmatpush1.bf16.msra.mxu0 0
    %915 = vmatprep.subr.bf16.mxu0 0
    %916 = vmatpush1.bf16.msra.mxu0 0
    %917 = vmatprep.subr.bf16.mxu0 0
    %918 = vmatpush1.bf16.msra.mxu0 0
    %919 = vmatprep.subr.bf16.mxu0 0
    %920 = vmatpush1.bf16.msra.mxu0 0
    %921 = vmatprep.subr.bf16.mxu0 0
    %922 = vmatpush1.bf16.msra.mxu0 0
    %923 = vmatprep.subr.bf16.mxu0 0
    %924 = vmatpush1.bf16.msra.mxu0 0
    %925 = vmatprep.subr.bf16.mxu0 0
    %926 = vmatpush1.bf16.msra.mxu0 0
    %927 = vmatprep.subr.bf16.mxu0 0
    %928 = vmatpush1.bf16.msra.mxu0 0
    %929 = vmatprep.subr.bf16.mxu0 0
    %930 = vmatpush1.bf16.msra.mxu0 0
    %931 = vmatprep.subr.bf16.mxu0 0
    %932 = vmatpush1.bf16.msra.mxu0 0
    %933 = vmatprep.subr.bf16.mxu0 0
    %934 = vmatpush1.bf16.msra.mxu0 0
    %935 = vmatprep.subr.bf16.mxu0 0
    %936 = vmatpush1.bf16.msra.mxu0 0
    %937 = vmatprep.mubr.bf16.mxu0 0
    %938 = vmatmul.mubr.bf16.gmra.mrb[0].mxu0 %v903
    %v939 = vpop.f32.mrb[0].mxu0
    %v940 = vadd.f32 0.0, %v939
    %v941 = vpop.f32.mrb[0].mxu0
    %v942 = vpop.f32.mrb[0].mxu0
    %v943 = vpop.f32.mrb[0].mxu0
    %944 = vdwg.mxu0
    %v945 = vadd.f32 %v883, %v940
    %v946 = vld [vmem:[#allocation3] sm:$0xff]
    %v947 = vsub.f32 0.0, %v945
    %v948 = vmul.f32 %v947, 1.442695
    %v949 = vpow.pop %v948
    %v950 = vadd.f32 %v949, 1.0
    %v951 = vrcp.pop %v950
    %v952 = vmul.f32 1.0, %v951
    %v953 = vtanh.pop %v945
    %955 = vrot.lane.b32.xlu0 %v946, 32
    %v956 = vpop.permute.xlu0 %955
    %v958 = vmul.f32 %v952, %v956
    %960 = vrot.lane.b32.xlu0 %v953, 64
    %v961 = vpop.permute.xlu0 %960
    %v963 = vmul.f32 %v952, %v961
    %965 = vrot.lane.b32.xlu0 %v963, 32
    %v966 = vpop.permute.xlu0 %965
    %v968 = vadd.f32 %v958, %v966
    %v969 = vtanh.pop %v968
    %971 = vrot.lane.b32.xlu0 %v969, 64
    %v972 = vpop.permute.xlu0 %971
    %v974 = vmul.f32 %v952, %v972
    %976 = vrot.lane.b32.xlu0 %v974, 32
    %v977 = vpop.permute.xlu0 %976
    %979 = vst.msk [vmem:[#allocation2] sm:$0xff] %vm50, %v977
    %981 = vrot.lane.b32.xlu0 %v968, 96
    %v982 = vpop.permute.xlu0 %981
    %984 = vst.msk [vmem:[#allocation3] sm:$0xff] %vm50, %v982
    %v985 = vld [vmem:[%s2] sm:$0xf]
    %v986 = vld [vmem:[%s2 + $0x4] sm:$0xf]
    %v987 = vld [vmem:[%s2 + $0x8] sm:$0xf]
    %v988 = vld [vmem:[%s2 + $0xc] sm:$0xf]
    %v989 = vld [vmem:[%s2 + $0x10] sm:$0xf]
    %v990 = vld [vmem:[%s2 + $0x14] sm:$0xf]
    %v991 = vld [vmem:[%s2 + $0x18] sm:$0xf]
    %v992 = vld [vmem:[%s2 + $0x1c] sm:$0xf]
    %v993 = vpack.c.bf16 %v974, %v974
    %v994 = vld [vmem:[%s143] sm:$0xff]
    %v995 = vpack.c.bf16 %v994, %v994
    %v1000 = vunpack.c.l.b16 %v989
    %v1001 = vunpack.c.l.b16 %v990
    %v1002 = vunpack.c.l.b16 %v991
    %v1003 = vunpack.c.l.b16 %v992
    %v1004 = vpack.c.b16 %v1001, %v1000
    %v1005 = vpack.c.b16 %v1003, %v1002
    %v1009 = vsel %vm50, %v995, 0
    %1011 = vmatprep.subr.bf16.mxu0 0
    %1012 = vmatpush1.bf16.msra.mxu0 %v1004
    %1013 = vmatprep.subr.bf16.mxu0 0
    %1014 = vmatpush1.bf16.msra.mxu0 %v1005
    %1015 = vmatprep.subr.bf16.mxu0 0
    %1016 = vmatpush1.bf16.msra.mxu0 0
    %1017 = vmatprep.subr.bf16.mxu0 0
    %1018 = vmatpush1.bf16.msra.mxu0 0
    %1019 = vmatprep.subr.bf16.mxu0 0
    %1020 = vmatpush1.bf16.msra.mxu0 0
    %1021 = vmatprep.subr.bf16.mxu0 0
    %1022 = vmatpush1.bf16.msra.mxu0 0
    %1023 = vmatprep.subr.bf16.mxu0 0
    %1024 = vmatpush1.bf16.msra.mxu0 0
    %1025 = vmatprep.subr.bf16.mxu0 0
    %1026 = vmatpush1.bf16.msra.mxu0 0
    %1027 = vmatprep.subr.bf16.mxu0 0
    %1028 = vmatpush1.bf16.msra.mxu0 0
    %1029 = vmatprep.subr.bf16.mxu0 0
    %1030 = vmatpush1.bf16.msra.mxu0 0
    %1031 = vmatprep.subr.bf16.mxu0 0
    %1032 = vmatpush1.bf16.msra.mxu0 0
    %1033 = vmatprep.subr.bf16.mxu0 0
    %1034 = vmatpush1.bf16.msra.mxu0 0
    %1035 = vmatprep.subr.bf16.mxu0 0
    %1036 = vmatpush1.bf16.msra.mxu0 0
    %1037 = vmatprep.subr.bf16.mxu0 0
    %1038 = vmatpush1.bf16.msra.mxu0 0
    %1039 = vmatprep.subr.bf16.mxu0 0
    %1040 = vmatpush1.bf16.msra.mxu0 0
    %1041 = vmatprep.subr.bf16.mxu0 0
    %1042 = vmatpush1.bf16.msra.mxu0 0
    %1043 = vmatprep.mubr.bf16.mxu0 0
    %1044 = vmatmul.mubr.bf16.gmra.mrb[0].mxu0 %v1009
    %v1045 = vpop.f32.mrb[0].mxu0
    %v1046 = vadd.f32 0.0, %v1045
    %v1047 = vpop.f32.mrb[0].mxu0
    %v1048 = vpop.f32.mrb[0].mxu0
    %v1049 = vpop.f32.mrb[0].mxu0
    %1050 = vdwg.mxu0
    %1052 = vrot.lane.b32.xlu0 %v993, 32
    %v1053 = vpop.permute.xlu0 %1052
    %v1058 = vunpack.c.l.b16 %v985
    %v1059 = vunpack.c.l.b16 %v986
    %v1060 = vunpack.c.l.b16 %v987
    %v1061 = vunpack.c.l.b16 %v988
    %v1062 = vpack.c.b16 %v1059, %v1058
    %v1063 = vpack.c.b16 %v1061, %v1060
    %v1067 = vsel %vm50, %v1053, 0
    %1069 = vmatprep.subr.bf16.mxu0 0
    %1070 = vmatpush1.bf16.msra.mxu0 %v1062
    %1071 = vmatprep.subr.bf16.mxu0 0
    %1072 = vmatpush1.bf16.msra.mxu0 %v1063
    %1073 = vmatprep.subr.bf16.mxu0 0
    %1074 = vmatpush1.bf16.msra.mxu0 0
    %1075 = vmatprep.subr.bf16.mxu0 0
    %1076 = vmatpush1.bf16.msra.mxu0 0
    %1077 = vmatprep.subr.bf16.mxu0 0
    %1078 = vmatpush1.bf16.msra.mxu0 0
    %1079 = vmatprep.subr.bf16.mxu0 0
    %1080 = vmatpush1.bf16.msra.mxu0 0
    %1081 = vmatprep.subr.bf16.mxu0 0
    %1082 = vmatpush1.bf16.msra.mxu0 0
    %1083 = vmatprep.subr.bf16.mxu0 0
    %1084 = vmatpush1.bf16.msra.mxu0 0
    %1085 = vmatprep.subr.bf16.mxu0 0
    %1086 = vmatpush1.bf16.msra.mxu0 0
    %1087 = vmatprep.subr.bf16.mxu0 0
    %1088 = vmatpush1.bf16.msra.mxu0 0
    %1089 = vmatprep.subr.bf16.mxu0 0
    %1090 = vmatpush1.bf16.msra.mxu0 0
    %1091 = vmatprep.subr.bf16.mxu0 0
    %1092 = vmatpush1.bf16.msra.mxu0 0
    %1093 = vmatprep.subr.bf16.mxu0 0
    %1094 = vmatpush1.bf16.msra.mxu0 0
    %1095 = vmatprep.subr.bf16.mxu0 0
    %1096 = vmatpush1.bf16.msra.mxu0 0
    %1097 = vmatprep.subr.bf16.mxu0 0
    %1098 = vmatpush1.bf16.msra.mxu0 0
    %1099 = vmatprep.subr.bf16.mxu0 0
    %1100 = vmatpush1.bf16.msra.mxu0 0
    %1101 = vmatprep.mubr.bf16.mxu0 0
    %1102 = vmatmul.mubr.bf16.gmra.mrb[0].mxu0 %v1067
    %v1103 = vpop.f32.mrb[0].mxu0
    %v1104 = vadd.f32 %v1046, %v1103
    %v1105 = vpop.f32.mrb[0].mxu0
    %v1106 = vpop.f32.mrb[0].mxu0
    %v1107 = vpop.f32.mrb[0].mxu0
    %1108 = vdwg.mxu0
    %v1109 = vld [vmem:[%s3] sm:$0x1]
    %v1111 = vlaneseq
    %v1112 = vshrl.u32 %v1111, 7
    %v1113 = vsub.s32 0, %v1112
    %v1114 = vrot.slane %v1109, %v1113
    %v1116 = vadd.f32 %v1104, %v1114
    %v1117 = vld [vmem:[%s267] sm:$0xff]
    %v1118 = vsub.f32 0.0, %v1116
    %v1119 = vmul.f32 %v1118, 1.442695
    %v1120 = vpow.pop %v1119
    %v1121 = vadd.f32 %v1120, 1.0
    %v1122 = vrcp.pop %v1121
    %v1123 = vmul.f32 1.0, %v1122
    %v1124 = vtanh.pop %v1116
    %1126 = vrot.lane.b32.xlu0 %v1117, 32
    %v1127 = vpop.permute.xlu0 %1126
    %v1129 = vmul.f32 %v1123, %v1127
    %1131 = vrot.lane.b32.xlu0 %v1124, 64
    %v1132 = vpop.permute.xlu0 %1131
    %v1134 = vmul.f32 %v1123, %v1132
    %1136 = vrot.lane.b32.xlu0 %v1134, 32
    %v1137 = vpop.permute.xlu0 %1136
    %v1139 = vadd.f32 %v1129, %v1137
    %v1140 = vtanh.pop %v1139
    %1142 = vrot.lane.b32.xlu0 %v1140, 64
    %v1143 = vpop.permute.xlu0 %1142
    %v1145 = vmul.f32 %v1123, %v1143
    %1147 = vrot.lane.b32.xlu0 %v1145, 32
    %v1148 = vpop.permute.xlu0 %1147
    %1150 = vst.msk [vmem:[%s143] sm:$0xff] %vm50, %v1148
    %1152 = vrot.lane.b32.xlu0 %v1139, 96
    %v1153 = vpop.permute.xlu0 %1152
    %1155 = vst.msk [vmem:[%s267] sm:$0xff] %vm50, %v1153
    %v1156 = vpack.c.bf16 %v1145, %v1145
    %v1158 = vunpack.c.l.b16 %v1156
    %v1159 = vpack.c.b16 %v1158, %v1158
    %1160 = vrot.lane.b32.xlu0 %v1159, 32
    %v1161 = vpop.permute.xlu0 %1160
    %s1163 = scalar_lea.vmem [#allocation4], 12
    %1164 = vst.msk [vmem:[%s1163] sm:$0xf] %vm314, %v1161
    %s1165 = scalar_lea.vmem %s0, 32
    %v1166 = vld [vmem:[%s1165] sm:$0xff]
    %v1167 = vld [vmem:[#allocation2] sm:$0xff]
    %v1168 = vpack.c.bf16 %v1167, %v1167
    %v1169 = vld [vmem:[%s1] sm:$0xf]
    %v1170 = vld [vmem:[%s1 + $0x4] sm:$0xf]
    %v1171 = vld [vmem:[%s1 + $0x8] sm:$0xf]
    %v1172 = vld [vmem:[%s1 + $0xc] sm:$0xf]
    %v1177 = vunpack.c.l.b16 %v1169
    %v1178 = vunpack.c.l.b16 %v1170
    %v1179 = vunpack.c.l.b16 %v1171
    %v1180 = vunpack.c.l.b16 %v1172
    %v1181 = vpack.c.b16 %v1178, %v1177
    %v1182 = vpack.c.b16 %v1180, %v1179
    %v1186 = vsel %vm50, %v1168, 0
    %1188 = vmatprep.subr.bf16.mxu0 0
    %1189 = vmatpush1.bf16.msra.mxu0 %v1181
    %1190 = vmatprep.subr.bf16.mxu0 0
    %1191 = vmatpush1.bf16.msra.mxu0 %v1182
    %1192 = vmatprep.subr.bf16.mxu0 0
    %1193 = vmatpush1.bf16.msra.mxu0 0
    %1194 = vmatprep.subr.bf16.mxu0 0
    %1195 = vmatpush1.bf16.msra.mxu0 0
    %1196 = vmatprep.subr.bf16.mxu0 0
    %1197 = vmatpush1.bf16.msra.mxu0 0
    %1198 = vmatprep.subr.bf16.mxu0 0
    %1199 = vmatpush1.bf16.msra.mxu0 0
    %1200 = vmatprep.subr.bf16.mxu0 0
    %1201 = vmatpush1.bf16.msra.mxu0 0
    %1202 = vmatprep.subr.bf16.mxu0 0
    %1203 = vmatpush1.bf16.msra.mxu0 0
    %1204 = vmatprep.subr.bf16.mxu0 0
    %1205 = vmatpush1.bf16.msra.mxu0 0
    %1206 = vmatprep.subr.bf16.mxu0 0
    %1207 = vmatpush1.bf16.msra.mxu0 0
    %1208 = vmatprep.subr.bf16.mxu0 0
    %1209 = vmatpush1.bf16.msra.mxu0 0
    %1210 = vmatprep.subr.bf16.mxu0 0
    %1211 = vmatpush1.bf16.msra.mxu0 0
    %1212 = vmatprep.subr.bf16.mxu0 0
    %1213 = vmatpush1.bf16.msra.mxu0 0
    %1214 = vmatprep.subr.bf16.mxu0 0
    %1215 = vmatpush1.bf16.msra.mxu0 0
    %1216 = vmatprep.subr.bf16.mxu0 0
    %1217 = vmatpush1.bf16.msra.mxu0 0
    %1218 = vmatprep.subr.bf16.mxu0 0
    %1219 = vmatpush1.bf16.msra.mxu0 0
    %1220 = vmatprep.mubr.bf16.mxu0 0
    %1221 = vmatmul.mubr.bf16.gmra.mrb[0].mxu0 %v1186
    %v1222 = vpop.f32.mrb[0].mxu0
    %v1223 = vadd.f32 0.0, %v1222
    %v1224 = vpop.f32.mrb[0].mxu0
    %v1225 = vpop.f32.mrb[0].mxu0
    %v1226 = vpop.f32.mrb[0].mxu0
    %1227 = vdwg.mxu0
    %v1228 = vadd.f32 %v1166, %v1223
    %v1229 = vld [vmem:[#allocation3] sm:$0xff]
    %v1230 = vsub.f32 0.0, %v1228
    %v1231 = vmul.f32 %v1230, 1.442695
    %v1232 = vpow.pop %v1231
    %v1233 = vadd.f32 %v1232, 1.0
    %v1234 = vrcp.pop %v1233
    %v1235 = vmul.f32 1.0, %v1234
    %v1236 = vtanh.pop %v1228
    %1238 = vrot.lane.b32.xlu0 %v1229, 32
    %v1239 = vpop.permute.xlu0 %1238
    %v1241 = vmul.f32 %v1235, %v1239
    %1243 = vrot.lane.b32.xlu0 %v1236, 64
    %v1244 = vpop.permute.xlu0 %1243
    %v1246 = vmul.f32 %v1235, %v1244
    %1248 = vrot.lane.b32.xlu0 %v1246, 32
    %v1249 = vpop.permute.xlu0 %1248
    %v1251 = vadd.f32 %v1241, %v1249
    %v1252 = vtanh.pop %v1251
    %1254 = vrot.lane.b32.xlu0 %v1252, 64
    %v1255 = vpop.permute.xlu0 %1254
    %v1257 = vmul.f32 %v1235, %v1255
    %1259 = vrot.lane.b32.xlu0 %v1257, 32
    %v1260 = vpop.permute.xlu0 %1259
    %1262 = vst.msk [vmem:[#allocation2] sm:$0xff] %vm50, %v1260
    %1264 = vrot.lane.b32.xlu0 %v1251, 96
    %v1265 = vpop.permute.xlu0 %1264
    %1267 = vst.msk [vmem:[#allocation3] sm:$0xff] %vm50, %v1265
    %v1268 = vld [vmem:[%s2] sm:$0xf]
    %v1269 = vld [vmem:[%s2 + $0x4] sm:$0xf]
    %v1270 = vld [vmem:[%s2 + $0x8] sm:$0xf]
    %v1271 = vld [vmem:[%s2 + $0xc] sm:$0xf]
    %v1272 = vld [vmem:[%s2 + $0x10] sm:$0xf]
    %v1273 = vld [vmem:[%s2 + $0x14] sm:$0xf]
    %v1274 = vld [vmem:[%s2 + $0x18] sm:$0xf]
    %v1275 = vld [vmem:[%s2 + $0x1c] sm:$0xf]
    %v1276 = vpack.c.bf16 %v1257, %v1257
    %v1277 = vld [vmem:[%s143] sm:$0xff]
    %v1278 = vpack.c.bf16 %v1277, %v1277
    %v1283 = vunpack.c.l.b16 %v1272
    %v1284 = vunpack.c.l.b16 %v1273
    %v1285 = vunpack.c.l.b16 %v1274
    %v1286 = vunpack.c.l.b16 %v1275
    %v1287 = vpack.c.b16 %v1284, %v1283
    %v1288 = vpack.c.b16 %v1286, %v1285
    %v1292 = vsel %vm50, %v1278, 0
    %1294 = vmatprep.subr.bf16.mxu0 0
    %1295 = vmatpush1.bf16.msra.mxu0 %v1287
    %1296 = vmatprep.subr.bf16.mxu0 0
    %1297 = vmatpush1.bf16.msra.mxu0 %v1288
    %1298 = vmatprep.subr.bf16.mxu0 0
    %1299 = vmatpush1.bf16.msra.mxu0 0
    %1300 = vmatprep.subr.bf16.mxu0 0
    %1301 = vmatpush1.bf16.msra.mxu0 0
    %1302 = vmatprep.subr.bf16.mxu0 0
    %1303 = vmatpush1.bf16.msra.mxu0 0
    %1304 = vmatprep.subr.bf16.mxu0 0
    %1305 = vmatpush1.bf16.msra.mxu0 0
    %1306 = vmatprep.subr.bf16.mxu0 0
    %1307 = vmatpush1.bf16.msra.mxu0 0
    %1308 = vmatprep.subr.bf16.mxu0 0
    %1309 = vmatpush1.bf16.msra.mxu0 0
    %1310 = vmatprep.subr.bf16.mxu0 0
    %1311 = vmatpush1.bf16.msra.mxu0 0
    %1312 = vmatprep.subr.bf16.mxu0 0
    %1313 = vmatpush1.bf16.msra.mxu0 0
    %1314 = vmatprep.subr.bf16.mxu0 0
    %1315 = vmatpush1.bf16.msra.mxu0 0
    %1316 = vmatprep.subr.bf16.mxu0 0
    %1317 = vmatpush1.bf16.msra.mxu0 0
    %1318 = vmatprep.subr.bf16.mxu0 0
    %1319 = vmatpush1.bf16.msra.mxu0 0
    %1320 = vmatprep.subr.bf16.mxu0 0
    %1321 = vmatpush1.bf16.msra.mxu0 0
    %1322 = vmatprep.subr.bf16.mxu0 0
    %1323 = vmatpush1.bf16.msra.mxu0 0
    %1324 = vmatprep.subr.bf16.mxu0 0
    %1325 = vmatpush1.bf16.msra.mxu0 0
    %1326 = vmatprep.mubr.bf16.mxu0 0
    %1327 = vmatmul.mubr.bf16.gmra.mrb[0].mxu0 %v1292
    %v1328 = vpop.f32.mrb[0].mxu0
    %v1329 = vadd.f32 0.0, %v1328
    %v1330 = vpop.f32.mrb[0].mxu0
    %v1331 = vpop.f32.mrb[0].mxu0
    %v1332 = vpop.f32.mrb[0].mxu0
    %1333 = vdwg.mxu0
    %1335 = vrot.lane.b32.xlu0 %v1276, 32
    %v1336 = vpop.permute.xlu0 %1335
    %v1341 = vunpack.c.l.b16 %v1268
    %v1342 = vunpack.c.l.b16 %v1269
    %v1343 = vunpack.c.l.b16 %v1270
    %v1344 = vunpack.c.l.b16 %v1271
    %v1345 = vpack.c.b16 %v1342, %v1341
    %v1346 = vpack.c.b16 %v1344, %v1343
    %v1350 = vsel %vm50, %v1336, 0
    %1352 = vmatprep.subr.bf16.mxu0 0
    %1353 = vmatpush1.bf16.msra.mxu0 %v1345
    %1354 = vmatprep.subr.bf16.mxu0 0
    %1355 = vmatpush1.bf16.msra.mxu0 %v1346
    %1356 = vmatprep.subr.bf16.mxu0 0
    %1357 = vmatpush1.bf16.msra.mxu0 0
    %1358 = vmatprep.subr.bf16.mxu0 0
    %1359 = vmatpush1.bf16.msra.mxu0 0
    %1360 = vmatprep.subr.bf16.mxu0 0
    %1361 = vmatpush1.bf16.msra.mxu0 0
    %1362 = vmatprep.subr.bf16.mxu0 0
    %1363 = vmatpush1.bf16.msra.mxu0 0
    %1364 = vmatprep.subr.bf16.mxu0 0
    %1365 = vmatpush1.bf16.msra.mxu0 0
    %1366 = vmatprep.subr.bf16.mxu0 0
    %1367 = vmatpush1.bf16.msra.mxu0 0
    %1368 = vmatprep.subr.bf16.mxu0 0
    %1369 = vmatpush1.bf16.msra.mxu0 0
    %1370 = vmatprep.subr.bf16.mxu0 0
    %1371 = vmatpush1.bf16.msra.mxu0 0
    %1372 = vmatprep.subr.bf16.mxu0 0
    %1373 = vmatpush1.bf16.msra.mxu0 0
    %1374 = vmatprep.subr.bf16.mxu0 0
    %1375 = vmatpush1.bf16.msra.mxu0 0
    %1376 = vmatprep.subr.bf16.mxu0 0
    %1377 = vmatpush1.bf16.msra.mxu0 0
    %1378 = vmatprep.subr.bf16.mxu0 0
    %1379 = vmatpush1.bf16.msra.mxu0 0
    %1380 = vmatprep.subr.bf16.mxu0 0
    %1381 = vmatpush1.bf16.msra.mxu0 0
    %1382 = vmatprep.subr.bf16.mxu0 0
    %1383 = vmatpush1.bf16.msra.mxu0 0
    %1384 = vmatprep.mubr.bf16.mxu0 0
    %1385 = vmatmul.mubr.bf16.gmra.mrb[0].mxu0 %v1350
    %v1386 = vpop.f32.mrb[0].mxu0
    %v1387 = vadd.f32 %v1329, %v1386
    %v1388 = vpop.f32.mrb[0].mxu0
    %v1389 = vpop.f32.mrb[0].mxu0
    %v1390 = vpop.f32.mrb[0].mxu0
    %1391 = vdwg.mxu0
    %v1392 = vld [vmem:[%s3] sm:$0x1]
    %v1394 = vlaneseq
    %v1395 = vshrl.u32 %v1394, 7
    %v1396 = vsub.s32 0, %v1395
    %v1397 = vrot.slane %v1392, %v1396
    %v1399 = vadd.f32 %v1387, %v1397
    %v1400 = vld [vmem:[%s267] sm:$0xff]
    %v1401 = vsub.f32 0.0, %v1399
    %v1402 = vmul.f32 %v1401, 1.442695
    %v1403 = vpow.pop %v1402
    %v1404 = vadd.f32 %v1403, 1.0
    %v1405 = vrcp.pop %v1404
    %v1406 = vmul.f32 1.0, %v1405
    %v1407 = vtanh.pop %v1399
    %1409 = vrot.lane.b32.xlu0 %v1400, 32
    %v1410 = vpop.permute.xlu0 %1409
    %v1412 = vmul.f32 %v1406, %v1410
    %1414 = vrot.lane.b32.xlu0 %v1407, 64
    %v1415 = vpop.permute.xlu0 %1414
    %v1417 = vmul.f32 %v1406, %v1415
    %1419 = vrot.lane.b32.xlu0 %v1417, 32
    %v1420 = vpop.permute.xlu0 %1419
    %v1422 = vadd.f32 %v1412, %v1420
    %v1423 = vtanh.pop %v1422
    %1425 = vrot.lane.b32.xlu0 %v1423, 64
    %v1426 = vpop.permute.xlu0 %1425
    %v1428 = vmul.f32 %v1406, %v1426
    %1430 = vrot.lane.b32.xlu0 %v1428, 32
    %v1431 = vpop.permute.xlu0 %1430
    %1433 = vst.msk [vmem:[%s143] sm:$0xff] %vm50, %v1431
    %1435 = vrot.lane.b32.xlu0 %v1422, 96
    %v1436 = vpop.permute.xlu0 %1435
    %1438 = vst.msk [vmem:[%s267] sm:$0xff] %vm50, %v1436
    %v1439 = vpack.c.bf16 %v1428, %v1428
    %v1441 = vunpack.c.l.b16 %v1439
    %v1442 = vpack.c.b16 %v1441, %v1441
    %1443 = vrot.lane.b32.xlu0 %v1442, 32
    %v1444 = vpop.permute.xlu0 %1443
    %s1446 = scalar_lea.vmem [#allocation4], 16
    %1447 = vst.msk [vmem:[%s1446] sm:$0xf] %vm314, %v1444
    %s1448 = scalar_lea.vmem %s0, 40
    %v1449 = vld [vmem:[%s1448] sm:$0xff]
    %v1450 = vld [vmem:[#allocation2] sm:$0xff]
    %v1451 = vpack.c.bf16 %v1450, %v1450
    %v1452 = vld [vmem:[%s1] sm:$0xf]
    %v1453 = vld [vmem:[%s1 + $0x4] sm:$0xf]
    %v1454 = vld [vmem:[%s1 + $0x8] sm:$0xf]
    %v1455 = vld [vmem:[%s1 + $0xc] sm:$0xf]
    %v1460 = vunpack.c.l.b16 %v1452
    %v1461 = vunpack.c.l.b16 %v1453
    %v1462 = vunpack.c.l.b16 %v1454
    %v1463 = vunpack.c.l.b16 %v1455
    %v1464 = vpack.c.b16 %v1461, %v1460
    %v1465 = vpack.c.b16 %v1463, %v1462
    %v1469 = vsel %vm50, %v1451, 0
    %1471 = vmatprep.subr.bf16.mxu0 0
    %1472 = vmatpush1.bf16.msra.mxu0 %v1464
    %1473 = vmatprep.subr.bf16.mxu0 0
    %1474 = vmatpush1.bf16.msra.mxu0 %v1465
    %1475 = vmatprep.subr.bf16.mxu0 0
    %1476 = vmatpush1.bf16.msra.mxu0 0
    %1477 = vmatprep.subr.bf16.mxu0 0
    %1478 = vmatpush1.bf16.msra.mxu0 0
    %1479 = vmatprep.subr.bf16.mxu0 0
    %1480 = vmatpush1.bf16.msra.mxu0 0
    %1481 = vmatprep.subr.bf16.mxu0 0
    %1482 = vmatpush1.bf16.msra.mxu0 0
    %1483 = vmatprep.subr.bf16.mxu0 0
    %1484 = vmatpush1.bf16.msra.mxu0 0
    %1485 = vmatprep.subr.bf16.mxu0 0
    %1486 = vmatpush1.bf16.msra.mxu0 0
    %1487 = vmatprep.subr.bf16.mxu0 0
    %1488 = vmatpush1.bf16.msra.mxu0 0
    %1489 = vmatprep.subr.bf16.mxu0 0
    %1490 = vmatpush1.bf16.msra.mxu0 0
    %1491 = vmatprep.subr.bf16.mxu0 0
    %1492 = vmatpush1.bf16.msra.mxu0 0
    %1493 = vmatprep.subr.bf16.mxu0 0
    %1494 = vmatpush1.bf16.msra.mxu0 0
    %1495 = vmatprep.subr.bf16.mxu0 0
    %1496 = vmatpush1.bf16.msra.mxu0 0
    %1497 = vmatprep.subr.bf16.mxu0 0
    %1498 = vmatpush1.bf16.msra.mxu0 0
    %1499 = vmatprep.subr.bf16.mxu0 0
    %1500 = vmatpush1.bf16.msra.mxu0 0
    %1501 = vmatprep.subr.bf16.mxu0 0
    %1502 = vmatpush1.bf16.msra.mxu0 0
    %1503 = vmatprep.mubr.bf16.mxu0 0
    %1504 = vmatmul.mubr.bf16.gmra.mrb[0].mxu0 %v1469
    %v1505 = vpop.f32.mrb[0].mxu0
    %v1506 = vadd.f32 0.0, %v1505
    %v1507 = vpop.f32.mrb[0].mxu0
    %v1508 = vpop.f32.mrb[0].mxu0
    %v1509 = vpop.f32.mrb[0].mxu0
    %1510 = vdwg.mxu0
    %v1511 = vadd.f32 %v1449, %v1506
    %v1512 = vld [vmem:[#allocation3] sm:$0xff]
    %v1513 = vsub.f32 0.0, %v1511
    %v1514 = vmul.f32 %v1513, 1.442695
    %v1515 = vpow.pop %v1514
    %v1516 = vadd.f32 %v1515, 1.0
    %v1517 = vrcp.pop %v1516
    %v1518 = vmul.f32 1.0, %v1517
    %v1519 = vtanh.pop %v1511
    %1521 = vrot.lane.b32.xlu0 %v1512, 32
    %v1522 = vpop.permute.xlu0 %1521
    %v1524 = vmul.f32 %v1518, %v1522
    %1526 = vrot.lane.b32.xlu0 %v1519, 64
    %v1527 = vpop.permute.xlu0 %1526
    %v1529 = vmul.f32 %v1518, %v1527
    %1531 = vrot.lane.b32.xlu0 %v1529, 32
    %v1532 = vpop.permute.xlu0 %1531
    %v1534 = vadd.f32 %v1524, %v1532
    %v1535 = vtanh.pop %v1534
    %1537 = vrot.lane.b32.xlu0 %v1535, 64
    %v1538 = vpop.permute.xlu0 %1537
    %v1540 = vmul.f32 %v1518, %v1538
    %1542 = vrot.lane.b32.xlu0 %v1540, 32
    %v1543 = vpop.permute.xlu0 %1542
    %1545 = vst.msk [vmem:[#allocation2] sm:$0xff] %vm50, %v1543
    %1547 = vrot.lane.b32.xlu0 %v1534, 96
    %v1548 = vpop.permute.xlu0 %1547
    %1550 = vst.msk [vmem:[#allocation3] sm:$0xff] %vm50, %v1548
    %v1551 = vld [vmem:[%s2] sm:$0xf]
    %v1552 = vld [vmem:[%s2 + $0x4] sm:$0xf]
    %v1553 = vld [vmem:[%s2 + $0x8] sm:$0xf]
    %v1554 = vld [vmem:[%s2 + $0xc] sm:$0xf]
    %v1555 = vld [vmem:[%s2 + $0x10] sm:$0xf]
    %v1556 = vld [vmem:[%s2 + $0x14] sm:$0xf]
    %v1557 = vld [vmem:[%s2 + $0x18] sm:$0xf]
    %v1558 = vld [vmem:[%s2 + $0x1c] sm:$0xf]
    %v1559 = vpack.c.bf16 %v1540, %v1540
    %v1560 = vld [vmem:[%s143] sm:$0xff]
    %v1561 = vpack.c.bf16 %v1560, %v1560
    %v1566 = vunpack.c.l.b16 %v1555
    %v1567 = vunpack.c.l.b16 %v1556
    %v1568 = vunpack.c.l.b16 %v1557
    %v1569 = vunpack.c.l.b16 %v1558
    %v1570 = vpack.c.b16 %v1567, %v1566
    %v1571 = vpack.c.b16 %v1569, %v1568
    %v1575 = vsel %vm50, %v1561, 0
    %1577 = vmatprep.subr.bf16.mxu0 0
    %1578 = vmatpush1.bf16.msra.mxu0 %v1570
    %1579 = vmatprep.subr.bf16.mxu0 0
    %1580 = vmatpush1.bf16.msra.mxu0 %v1571
    %1581 = vmatprep.subr.bf16.mxu0 0
    %1582 = vmatpush1.bf16.msra.mxu0 0
    %1583 = vmatprep.subr.bf16.mxu0 0
    %1584 = vmatpush1.bf16.msra.mxu0 0
    %1585 = vmatprep.subr.bf16.mxu0 0
    %1586 = vmatpush1.bf16.msra.mxu0 0
    %1587 = vmatprep.subr.bf16.mxu0 0
    %1588 = vmatpush1.bf16.msra.mxu0 0
    %1589 = vmatprep.subr.bf16.mxu0 0
    %1590 = vmatpush1.bf16.msra.mxu0 0
    %1591 = vmatprep.subr.bf16.mxu0 0
    %1592 = vmatpush1.bf16.msra.mxu0 0
    %1593 = vmatprep.subr.bf16.mxu0 0
    %1594 = vmatpush1.bf16.msra.mxu0 0
    %1595 = vmatprep.subr.bf16.mxu0 0
    %1596 = vmatpush1.bf16.msra.mxu0 0
    %1597 = vmatprep.subr.bf16.mxu0 0
    %1598 = vmatpush1.bf16.msra.mxu0 0
    %1599 = vmatprep.subr.bf16.mxu0 0
    %1600 = vmatpush1.bf16.msra.mxu0 0
    %1601 = vmatprep.subr.bf16.mxu0 0
    %1602 = vmatpush1.bf16.msra.mxu0 0
    %1603 = vmatprep.subr.bf16.mxu0 0
    %1604 = vmatpush1.bf16.msra.mxu0 0
    %1605 = vmatprep.subr.bf16.mxu0 0
    %1606 = vmatpush1.bf16.msra.mxu0 0
    %1607 = vmatprep.subr.bf16.mxu0 0
    %1608 = vmatpush1.bf16.msra.mxu0 0
    %1609 = vmatprep.mubr.bf16.mxu0 0
    %1610 = vmatmul.mubr.bf16.gmra.mrb[0].mxu0 %v1575
    %v1611 = vpop.f32.mrb[0].mxu0
    %v1612 = vadd.f32 0.0, %v1611
    %v1613 = vpop.f32.mrb[0].mxu0
    %v1614 = vpop.f32.mrb[0].mxu0
    %v1615 = vpop.f32.mrb[0].mxu0
    %1616 = vdwg.mxu0
    %1618 = vrot.lane.b32.xlu0 %v1559, 32
    %v1619 = vpop.permute.xlu0 %1618
    %v1624 = vunpack.c.l.b16 %v1551
    %v1625 = vunpack.c.l.b16 %v1552
    %v1626 = vunpack.c.l.b16 %v1553
    %v1627 = vunpack.c.l.b16 %v1554
    %v1628 = vpack.c.b16 %v1625, %v1624
    %v1629 = vpack.c.b16 %v1627, %v1626
    %v1633 = vsel %vm50, %v1619, 0
    %1635 = vmatprep.subr.bf16.mxu0 0
    %1636 = vmatpush1.bf16.msra.mxu0 %v1628
    %1637 = vmatprep.subr.bf16.mxu0 0
    %1638 = vmatpush1.bf16.msra.mxu0 %v1629
    %1639 = vmatprep.subr.bf16.mxu0 0
    %1640 = vmatpush1.bf16.msra.mxu0 0
    %1641 = vmatprep.subr.bf16.mxu0 0
    %1642 = vmatpush1.bf16.msra.mxu0 0
    %1643 = vmatprep.subr.bf16.mxu0 0
    %1644 = vmatpush1.bf16.msra.mxu0 0
    %1645 = vmatprep.subr.bf16.mxu0 0
    %1646 = vmatpush1.bf16.msra.mxu0 0
    %1647 = vmatprep.subr.bf16.mxu0 0
    %1648 = vmatpush1.bf16.msra.mxu0 0
    %1649 = vmatprep.subr.bf16.mxu0 0
    %1650 = vmatpush1.bf16.msra.mxu0 0
    %1651 = vmatprep.subr.bf16.mxu0 0
    %1652 = vmatpush1.bf16.msra.mxu0 0
    %1653 = vmatprep.subr.bf16.mxu0 0
    %1654 = vmatpush1.bf16.msra.mxu0 0
    %1655 = vmatprep.subr.bf16.mxu0 0
    %1656 = vmatpush1.bf16.msra.mxu0 0
    %1657 = vmatprep.subr.bf16.mxu0 0
    %1658 = vmatpush1.bf16.msra.mxu0 0
    %1659 = vmatprep.subr.bf16.mxu0 0
    %1660 = vmatpush1.bf16.msra.mxu0 0
    %1661 = vmatprep.subr.bf16.mxu0 0
    %1662 = vmatpush1.bf16.msra.mxu0 0
    %1663 = vmatprep.subr.bf16.mxu0 0
    %1664 = vmatpush1.bf16.msra.mxu0 0
    %1665 = vmatprep.subr.bf16.mxu0 0
    %1666 = vmatpush1.bf16.msra.mxu0 0
    %1667 = vmatprep.mubr.bf16.mxu0 0
    %1668 = vmatmul.mubr.bf16.gmra.mrb[0].mxu0 %v1633
    %v1669 = vpop.f32.mrb[0].mxu0
    %v1670 = vadd.f32 %v1612, %v1669
    %v1671 = vpop.f32.mrb[0].mxu0
    %v1672 = vpop.f32.mrb[0].mxu0
    %v1673 = vpop.f32.mrb[0].mxu0
    %1674 = vdwg.mxu0
    %v1675 = vld [vmem:[%s3] sm:$0x1]
    %v1677 = vlaneseq
    %v1678 = vshrl.u32 %v1677, 7
    %v1679 = vsub.s32 0, %v1678
    %v1680 = vrot.slane %v1675, %v1679
    %v1682 = vadd.f32 %v1670, %v1680
    %v1683 = vld [vmem:[%s267] sm:$0xff]
    %v1684 = vsub.f32 0.0, %v1682
    %v1685 = vmul.f32 %v1684, 1.442695
    %v1686 = vpow.pop %v1685
    %v1687 = vadd.f32 %v1686, 1.0
    %v1688 = vrcp.pop %v1687
    %v1689 = vmul.f32 1.0, %v1688
    %v1690 = vtanh.pop %v1682
    %1692 = vrot.lane.b32.xlu0 %v1683, 32
    %v1693 = vpop.permute.xlu0 %1692
    %v1695 = vmul.f32 %v1689, %v1693
    %1697 = vrot.lane.b32.xlu0 %v1690, 64
    %v1698 = vpop.permute.xlu0 %1697
    %v1700 = vmul.f32 %v1689, %v1698
    %1702 = vrot.lane.b32.xlu0 %v1700, 32
    %v1703 = vpop.permute.xlu0 %1702
    %v1705 = vadd.f32 %v1695, %v1703
    %v1706 = vtanh.pop %v1705
    %1708 = vrot.lane.b32.xlu0 %v1706, 64
    %v1709 = vpop.permute.xlu0 %1708
    %v1711 = vmul.f32 %v1689, %v1709
    %1713 = vrot.lane.b32.xlu0 %v1711, 32
    %v1714 = vpop.permute.xlu0 %1713
    %1716 = vst.msk [vmem:[%s143] sm:$0xff] %vm50, %v1714
    %1718 = vrot.lane.b32.xlu0 %v1705, 96
    %v1719 = vpop.permute.xlu0 %1718
    %1721 = vst.msk [vmem:[%s267] sm:$0xff] %vm50, %v1719
    %v1722 = vpack.c.bf16 %v1711, %v1711
    %v1724 = vunpack.c.l.b16 %v1722
    %v1725 = vpack.c.b16 %v1724, %v1724
    %1726 = vrot.lane.b32.xlu0 %v1725, 32
    %v1727 = vpop.permute.xlu0 %1726
    %s1729 = scalar_lea.vmem [#allocation4], 20
    %1730 = vst.msk [vmem:[%s1729] sm:$0xf] %vm314, %v1727
    %s1731 = scalar_lea.vmem %s0, 48
    %v1732 = vld [vmem:[%s1731] sm:$0xff]
    %v1733 = vld [vmem:[#allocation2] sm:$0xff]
    %v1734 = vpack.c.bf16 %v1733, %v1733
    %v1735 = vld [vmem:[%s1] sm:$0xf]
    %v1736 = vld [vmem:[%s1 + $0x4] sm:$0xf]
    %v1737 = vld [vmem:[%s1 + $0x8] sm:$0xf]
    %v1738 = vld [vmem:[%s1 + $0xc] sm:$0xf]
    %v1743 = vunpack.c.l.b16 %v1735
    %v1744 = vunpack.c.l.b16 %v1736
    %v1745 = vunpack.c.l.b16 %v1737
    %v1746 = vunpack.c.l.b16 %v1738
    %v1747 = vpack.c.b16 %v1744, %v1743
    %v1748 = vpack.c.b16 %v1746, %v1745
    %v1752 = vsel %vm50, %v1734, 0
    %1754 = vmatprep.subr.bf16.mxu0 0
    %1755 = vmatpush1.bf16.msra.mxu0 %v1747
    %1756 = vmatprep.subr.bf16.mxu0 0
    %1757 = vmatpush1.bf16.msra.mxu0 %v1748
    %1758 = vmatprep.subr.bf16.mxu0 0
    %1759 = vmatpush1.bf16.msra.mxu0 0
    %1760 = vmatprep.subr.bf16.mxu0 0
    %1761 = vmatpush1.bf16.msra.mxu0 0
    %1762 = vmatprep.subr.bf16.mxu0 0
    %1763 = vmatpush1.bf16.msra.mxu0 0
    %1764 = vmatprep.subr.bf16.mxu0 0
    %1765 = vmatpush1.bf16.msra.mxu0 0
    %1766 = vmatprep.subr.bf16.mxu0 0
    %1767 = vmatpush1.bf16.msra.mxu0 0
    %1768 = vmatprep.subr.bf16.mxu0 0
    %1769 = vmatpush1.bf16.msra.mxu0 0
    %1770 = vmatprep.subr.bf16.mxu0 0
    %1771 = vmatpush1.bf16.msra.mxu0 0
    %1772 = vmatprep.subr.bf16.mxu0 0
    %1773 = vmatpush1.bf16.msra.mxu0 0
    %1774 = vmatprep.subr.bf16.mxu0 0
    %1775 = vmatpush1.bf16.msra.mxu0 0
    %1776 = vmatprep.subr.bf16.mxu0 0
    %1777 = vmatpush1.bf16.msra.mxu0 0
    %1778 = vmatprep.subr.bf16.mxu0 0
    %1779 = vmatpush1.bf16.msra.mxu0 0
    %1780 = vmatprep.subr.bf16.mxu0 0
    %1781 = vmatpush1.bf16.msra.mxu0 0
    %1782 = vmatprep.subr.bf16.mxu0 0
    %1783 = vmatpush1.bf16.msra.mxu0 0
    %1784 = vmatprep.subr.bf16.mxu0 0
    %1785 = vmatpush1.bf16.msra.mxu0 0
    %1786 = vmatprep.mubr.bf16.mxu0 0
    %1787 = vmatmul.mubr.bf16.gmra.mrb[0].mxu0 %v1752
    %v1788 = vpop.f32.mrb[0].mxu0
    %v1789 = vadd.f32 0.0, %v1788
    %v1790 = vpop.f32.mrb[0].mxu0
    %v1791 = vpop.f32.mrb[0].mxu0
    %v1792 = vpop.f32.mrb[0].mxu0
    %1793 = vdwg.mxu0
    %v1794 = vadd.f32 %v1732, %v1789
    %v1795 = vld [vmem:[#allocation3] sm:$0xff]
    %v1796 = vsub.f32 0.0, %v1794
    %v1797 = vmul.f32 %v1796, 1.442695
    %v1798 = vpow.pop %v1797
    %v1799 = vadd.f32 %v1798, 1.0
    %v1800 = vrcp.pop %v1799
    %v1801 = vmul.f32 1.0, %v1800
    %v1802 = vtanh.pop %v1794
    %1804 = vrot.lane.b32.xlu0 %v1795, 32
    %v1805 = vpop.permute.xlu0 %1804
    %v1807 = vmul.f32 %v1801, %v1805
    %1809 = vrot.lane.b32.xlu0 %v1802, 64
    %v1810 = vpop.permute.xlu0 %1809
    %v1812 = vmul.f32 %v1801, %v1810
    %1814 = vrot.lane.b32.xlu0 %v1812, 32
    %v1815 = vpop.permute.xlu0 %1814
    %v1817 = vadd.f32 %v1807, %v1815
    %v1818 = vtanh.pop %v1817
    %1820 = vrot.lane.b32.xlu0 %v1818, 64
    %v1821 = vpop.permute.xlu0 %1820
    %v1823 = vmul.f32 %v1801, %v1821
    %1825 = vrot.lane.b32.xlu0 %v1823, 32
    %v1826 = vpop.permute.xlu0 %1825
    %1828 = vst.msk [vmem:[#allocation2] sm:$0xff] %vm50, %v1826
    %1830 = vrot.lane.b32.xlu0 %v1817, 96
    %v1831 = vpop.permute.xlu0 %1830
    %1833 = vst.msk [vmem:[#allocation3] sm:$0xff] %vm50, %v1831
    %v1834 = vld [vmem:[%s2] sm:$0xf]
    %v1835 = vld [vmem:[%s2 + $0x4] sm:$0xf]
    %v1836 = vld [vmem:[%s2 + $0x8] sm:$0xf]
    %v1837 = vld [vmem:[%s2 + $0xc] sm:$0xf]
    %v1838 = vld [vmem:[%s2 + $0x10] sm:$0xf]
    %v1839 = vld [vmem:[%s2 + $0x14] sm:$0xf]
    %v1840 = vld [vmem:[%s2 + $0x18] sm:$0xf]
    %v1841 = vld [vmem:[%s2 + $0x1c] sm:$0xf]
    %v1842 = vpack.c.bf16 %v1823, %v1823
    %v1843 = vld [vmem:[%s143] sm:$0xff]
    %v1844 = vpack.c.bf16 %v1843, %v1843
    %v1849 = vunpack.c.l.b16 %v1838
    %v1850 = vunpack.c.l.b16 %v1839
    %v1851 = vunpack.c.l.b16 %v1840
    %v1852 = vunpack.c.l.b16 %v1841
    %v1853 = vpack.c.b16 %v1850, %v1849
    %v1854 = vpack.c.b16 %v1852, %v1851
    %v1858 = vsel %vm50, %v1844, 0
    %1860 = vmatprep.subr.bf16.mxu0 0
    %1861 = vmatpush1.bf16.msra.mxu0 %v1853
    %1862 = vmatprep.subr.bf16.mxu0 0
    %1863 = vmatpush1.bf16.msra.mxu0 %v1854
    %1864 = vmatprep.subr.bf16.mxu0 0
    %1865 = vmatpush1.bf16.msra.mxu0 0
    %1866 = vmatprep.subr.bf16.mxu0 0
    %1867 = vmatpush1.bf16.msra.mxu0 0
    %1868 = vmatprep.subr.bf16.mxu0 0
    %1869 = vmatpush1.bf16.msra.mxu0 0
    %1870 = vmatprep.subr.bf16.mxu0 0
    %1871 = vmatpush1.bf16.msra.mxu0 0
    %1872 = vmatprep.subr.bf16.mxu0 0
    %1873 = vmatpush1.bf16.msra.mxu0 0
    %1874 = vmatprep.subr.bf16.mxu0 0
    %1875 = vmatpush1.bf16.msra.mxu0 0
    %1876 = vmatprep.subr.bf16.mxu0 0
    %1877 = vmatpush1.bf16.msra.mxu0 0
    %1878 = vmatprep.subr.bf16.mxu0 0
    %1879 = vmatpush1.bf16.msra.mxu0 0
    %1880 = vmatprep.subr.bf16.mxu0 0
    %1881 = vmatpush1.bf16.msra.mxu0 0
    %1882 = vmatprep.subr.bf16.mxu0 0
    %1883 = vmatpush1.bf16.msra.mxu0 0
    %1884 = vmatprep.subr.bf16.mxu0 0
    %1885 = vmatpush1.bf16.msra.mxu0 0
    %1886 = vmatprep.subr.bf16.mxu0 0
    %1887 = vmatpush1.bf16.msra.mxu0 0
    %1888 = vmatprep.subr.bf16.mxu0 0
    %1889 = vmatpush1.bf16.msra.mxu0 0
    %1890 = vmatprep.subr.bf16.mxu0 0
    %1891 = vmatpush1.bf16.msra.mxu0 0
    %1892 = vmatprep.mubr.bf16.mxu0 0
    %1893 = vmatmul.mubr.bf16.gmra.mrb[0].mxu0 %v1858
    %v1894 = vpop.f32.mrb[0].mxu0
    %v1895 = vadd.f32 0.0, %v1894
    %v1896 = vpop.f32.mrb[0].mxu0
    %v1897 = vpop.f32.mrb[0].mxu0
    %v1898 = vpop.f32.mrb[0].mxu0
    %1899 = vdwg.mxu0
    %1901 = vrot.lane.b32.xlu0 %v1842, 32
    %v1902 = vpop.permute.xlu0 %1901
    %v1907 = vunpack.c.l.b16 %v1834
    %v1908 = vunpack.c.l.b16 %v1835
    %v1909 = vunpack.c.l.b16 %v1836
    %v1910 = vunpack.c.l.b16 %v1837
    %v1911 = vpack.c.b16 %v1908, %v1907
    %v1912 = vpack.c.b16 %v1910, %v1909
    %v1916 = vsel %vm50, %v1902, 0
    %1918 = vmatprep.subr.bf16.mxu0 0
    %1919 = vmatpush1.bf16.msra.mxu0 %v1911
    %1920 = vmatprep.subr.bf16.mxu0 0
    %1921 = vmatpush1.bf16.msra.mxu0 %v1912
    %1922 = vmatprep.subr.bf16.mxu0 0
    %1923 = vmatpush1.bf16.msra.mxu0 0
    %1924 = vmatprep.subr.bf16.mxu0 0
    %1925 = vmatpush1.bf16.msra.mxu0 0
    %1926 = vmatprep.subr.bf16.mxu0 0
    %1927 = vmatpush1.bf16.msra.mxu0 0
    %1928 = vmatprep.subr.bf16.mxu0 0
    %1929 = vmatpush1.bf16.msra.mxu0 0
    %1930 = vmatprep.subr.bf16.mxu0 0
    %1931 = vmatpush1.bf16.msra.mxu0 0
    %1932 = vmatprep.subr.bf16.mxu0 0
    %1933 = vmatpush1.bf16.msra.mxu0 0
    %1934 = vmatprep.subr.bf16.mxu0 0
    %1935 = vmatpush1.bf16.msra.mxu0 0
    %1936 = vmatprep.subr.bf16.mxu0 0
    %1937 = vmatpush1.bf16.msra.mxu0 0
    %1938 = vmatprep.subr.bf16.mxu0 0
    %1939 = vmatpush1.bf16.msra.mxu0 0
    %1940 = vmatprep.subr.bf16.mxu0 0
    %1941 = vmatpush1.bf16.msra.mxu0 0
    %1942 = vmatprep.subr.bf16.mxu0 0
    %1943 = vmatpush1.bf16.msra.mxu0 0
    %1944 = vmatprep.subr.bf16.mxu0 0
    %1945 = vmatpush1.bf16.msra.mxu0 0
    %1946 = vmatprep.subr.bf16.mxu0 0
    %1947 = vmatpush1.bf16.msra.mxu0 0
    %1948 = vmatprep.subr.bf16.mxu0 0
    %1949 = vmatpush1.bf16.msra.mxu0 0
    %1950 = vmatprep.mubr.bf16.mxu0 0
    %1951 = vmatmul.mubr.bf16.gmra.mrb[0].mxu0 %v1916
    %v1952 = vpop.f32.mrb[0].mxu0
    %v1953 = vadd.f32 %v1895, %v1952
    %v1954 = vpop.f32.mrb[0].mxu0
    %v1955 = vpop.f32.mrb[0].mxu0
    %v1956 = vpop.f32.mrb[0].mxu0
    %1957 = vdwg.mxu0
    %v1958 = vld [vmem:[%s3] sm:$0x1]
    %v1960 = vlaneseq
    %v1961 = vshrl.u32 %v1960, 7
    %v1962 = vsub.s32 0, %v1961
    %v1963 = vrot.slane %v1958, %v1962
    %v1965 = vadd.f32 %v1953, %v1963
    %v1966 = vld [vmem:[%s267] sm:$0xff]
    %v1967 = vsub.f32 0.0, %v1965
    %v1968 = vmul.f32 %v1967, 1.442695
    %v1969 = vpow.pop %v1968
    %v1970 = vadd.f32 %v1969, 1.0
    %v1971 = vrcp.pop %v1970
    %v1972 = vmul.f32 1.0, %v1971
    %v1973 = vtanh.pop %v1965
    %1975 = vrot.lane.b32.xlu0 %v1966, 32
    %v1976 = vpop.permute.xlu0 %1975
    %v1978 = vmul.f32 %v1972, %v1976
    %1980 = vrot.lane.b32.xlu0 %v1973, 64
    %v1981 = vpop.permute.xlu0 %1980
    %v1983 = vmul.f32 %v1972, %v1981
    %1985 = vrot.lane.b32.xlu0 %v1983, 32
    %v1986 = vpop.permute.xlu0 %1985
    %v1988 = vadd.f32 %v1978, %v1986
    %v1989 = vtanh.pop %v1988
    %1991 = vrot.lane.b32.xlu0 %v1989, 64
    %v1992 = vpop.permute.xlu0 %1991
    %v1994 = vmul.f32 %v1972, %v1992
    %1996 = vrot.lane.b32.xlu0 %v1994, 32
    %v1997 = vpop.permute.xlu0 %1996
    %1999 = vst.msk [vmem:[%s143] sm:$0xff] %vm50, %v1997
    %2001 = vrot.lane.b32.xlu0 %v1988, 96
    %v2002 = vpop.permute.xlu0 %2001
    %2004 = vst.msk [vmem:[%s267] sm:$0xff] %vm50, %v2002
    %v2005 = vpack.c.bf16 %v1994, %v1994
    %v2007 = vunpack.c.l.b16 %v2005
    %v2008 = vpack.c.b16 %v2007, %v2007
    %2009 = vrot.lane.b32.xlu0 %v2008, 32
    %v2010 = vpop.permute.xlu0 %2009
    %s2012 = scalar_lea.vmem [#allocation4], 24
    %2013 = vst.msk [vmem:[%s2012] sm:$0xf] %vm314, %v2010
    %s2014 = scalar_lea.vmem %s0, 56
    %v2015 = vld [vmem:[%s2014] sm:$0xff]
    %v2016 = vld [vmem:[#allocation2] sm:$0xff]
    %v2017 = vpack.c.bf16 %v2016, %v2016
    %v2018 = vld [vmem:[%s1] sm:$0xf]
    %v2019 = vld [vmem:[%s1 + $0x4] sm:$0xf]
    %v2020 = vld [vmem:[%s1 + $0x8] sm:$0xf]
    %v2021 = vld [vmem:[%s1 + $0xc] sm:$0xf]
    %v2026 = vunpack.c.l.b16 %v2018
    %v2027 = vunpack.c.l.b16 %v2019
    %v2028 = vunpack.c.l.b16 %v2020
    %v2029 = vunpack.c.l.b16 %v2021
    %v2030 = vpack.c.b16 %v2027, %v2026
    %v2031 = vpack.c.b16 %v2029, %v2028
    %v2035 = vsel %vm50, %v2017, 0
    %2037 = vmatprep.subr.bf16.mxu0 0
    %2038 = vmatpush1.bf16.msra.mxu0 %v2030
    %2039 = vmatprep.subr.bf16.mxu0 0
    %2040 = vmatpush1.bf16.msra.mxu0 %v2031
    %2041 = vmatprep.subr.bf16.mxu0 0
    %2042 = vmatpush1.bf16.msra.mxu0 0
    %2043 = vmatprep.subr.bf16.mxu0 0
    %2044 = vmatpush1.bf16.msra.mxu0 0
    %2045 = vmatprep.subr.bf16.mxu0 0
    %2046 = vmatpush1.bf16.msra.mxu0 0
    %2047 = vmatprep.subr.bf16.mxu0 0
    %2048 = vmatpush1.bf16.msra.mxu0 0
    %2049 = vmatprep.subr.bf16.mxu0 0
    %2050 = vmatpush1.bf16.msra.mxu0 0
    %2051 = vmatprep.subr.bf16.mxu0 0
    %2052 = vmatpush1.bf16.msra.mxu0 0
    %2053 = vmatprep.subr.bf16.mxu0 0
    %2054 = vmatpush1.bf16.msra.mxu0 0
    %2055 = vmatprep.subr.bf16.mxu0 0
    %2056 = vmatpush1.bf16.msra.mxu0 0
    %2057 = vmatprep.subr.bf16.mxu0 0
    %2058 = vmatpush1.bf16.msra.mxu0 0
    %2059 = vmatprep.subr.bf16.mxu0 0
    %2060 = vmatpush1.bf16.msra.mxu0 0
    %2061 = vmatprep.subr.bf16.mxu0 0
    %2062 = vmatpush1.bf16.msra.mxu0 0
    %2063 = vmatprep.subr.bf16.mxu0 0
    %2064 = vmatpush1.bf16.msra.mxu0 0
    %2065 = vmatprep.subr.bf16.mxu0 0
    %2066 = vmatpush1.bf16.msra.mxu0 0
    %2067 = vmatprep.subr.bf16.mxu0 0
    %2068 = vmatpush1.bf16.msra.mxu0 0
    %2069 = vmatprep.mubr.bf16.mxu0 0
    %2070 = vmatmul.mubr.bf16.gmra.mrb[0].mxu0 %v2035
    %v2071 = vpop.f32.mrb[0].mxu0
    %v2072 = vadd.f32 0.0, %v2071
    %v2073 = vpop.f32.mrb[0].mxu0
    %v2074 = vpop.f32.mrb[0].mxu0
    %v2075 = vpop.f32.mrb[0].mxu0
    %2076 = vdwg.mxu0
    %v2077 = vadd.f32 %v2015, %v2072
    %v2078 = vld [vmem:[#allocation3] sm:$0xff]
    %v2079 = vsub.f32 0.0, %v2077
    %v2080 = vmul.f32 %v2079, 1.442695
    %v2081 = vpow.pop %v2080
    %v2082 = vadd.f32 %v2081, 1.0
    %v2083 = vrcp.pop %v2082
    %v2084 = vmul.f32 1.0, %v2083
    %v2085 = vtanh.pop %v2077
    %2087 = vrot.lane.b32.xlu0 %v2078, 32
    %v2088 = vpop.permute.xlu0 %2087
    %v2090 = vmul.f32 %v2084, %v2088
    %2092 = vrot.lane.b32.xlu0 %v2085, 64
    %v2093 = vpop.permute.xlu0 %2092
    %v2095 = vmul.f32 %v2084, %v2093
    %2097 = vrot.lane.b32.xlu0 %v2095, 32
    %v2098 = vpop.permute.xlu0 %2097
    %v2100 = vadd.f32 %v2090, %v2098
    %v2101 = vtanh.pop %v2100
    %2103 = vrot.lane.b32.xlu0 %v2101, 64
    %v2104 = vpop.permute.xlu0 %2103
    %v2106 = vmul.f32 %v2084, %v2104
    %2108 = vrot.lane.b32.xlu0 %v2106, 32
    %v2109 = vpop.permute.xlu0 %2108
    %2111 = vst.msk [vmem:[#allocation2] sm:$0xff] %vm50, %v2109
    %2113 = vrot.lane.b32.xlu0 %v2100, 96
    %v2114 = vpop.permute.xlu0 %2113
    %2116 = vst.msk [vmem:[#allocation3] sm:$0xff] %vm50, %v2114
    %v2117 = vld [vmem:[%s2] sm:$0xf]
    %v2118 = vld [vmem:[%s2 + $0x4] sm:$0xf]
    %v2119 = vld [vmem:[%s2 + $0x8] sm:$0xf]
    %v2120 = vld [vmem:[%s2 + $0xc] sm:$0xf]
    %v2121 = vld [vmem:[%s2 + $0x10] sm:$0xf]
    %v2122 = vld [vmem:[%s2 + $0x14] sm:$0xf]
    %v2123 = vld [vmem:[%s2 + $0x18] sm:$0xf]
    %v2124 = vld [vmem:[%s2 + $0x1c] sm:$0xf]
    %v2125 = vpack.c.bf16 %v2106, %v2106
    %v2126 = vld [vmem:[%s143] sm:$0xff]
    %v2127 = vpack.c.bf16 %v2126, %v2126
    %v2132 = vunpack.c.l.b16 %v2121
    %v2133 = vunpack.c.l.b16 %v2122
    %v2134 = vunpack.c.l.b16 %v2123
    %v2135 = vunpack.c.l.b16 %v2124
    %v2136 = vpack.c.b16 %v2133, %v2132
    %v2137 = vpack.c.b16 %v2135, %v2134
    %v2141 = vsel %vm50, %v2127, 0
    %2143 = vmatprep.subr.bf16.mxu0 0
    %2144 = vmatpush1.bf16.msra.mxu0 %v2136
    %2145 = vmatprep.subr.bf16.mxu0 0
    %2146 = vmatpush1.bf16.msra.mxu0 %v2137
    %2147 = vmatprep.subr.bf16.mxu0 0
    %2148 = vmatpush1.bf16.msra.mxu0 0
    %2149 = vmatprep.subr.bf16.mxu0 0
    %2150 = vmatpush1.bf16.msra.mxu0 0
    %2151 = vmatprep.subr.bf16.mxu0 0
    %2152 = vmatpush1.bf16.msra.mxu0 0
    %2153 = vmatprep.subr.bf16.mxu0 0
    %2154 = vmatpush1.bf16.msra.mxu0 0
    %2155 = vmatprep.subr.bf16.mxu0 0
    %2156 = vmatpush1.bf16.msra.mxu0 0
    %2157 = vmatprep.subr.bf16.mxu0 0
    %2158 = vmatpush1.bf16.msra.mxu0 0
    %2159 = vmatprep.subr.bf16.mxu0 0
    %2160 = vmatpush1.bf16.msra.mxu0 0
    %2161 = vmatprep.subr.bf16.mxu0 0
    %2162 = vmatpush1.bf16.msra.mxu0 0
    %2163 = vmatprep.subr.bf16.mxu0 0
    %2164 = vmatpush1.bf16.msra.mxu0 0
    %2165 = vmatprep.subr.bf16.mxu0 0
    %2166 = vmatpush1.bf16.msra.mxu0 0
    %2167 = vmatprep.subr.bf16.mxu0 0
    %2168 = vmatpush1.bf16.msra.mxu0 0
    %2169 = vmatprep.subr.bf16.mxu0 0
    %2170 = vmatpush1.bf16.msra.mxu0 0
    %2171 = vmatprep.subr.bf16.mxu0 0
    %2172 = vmatpush1.bf16.msra.mxu0 0
    %2173 = vmatprep.subr.bf16.mxu0 0
    %2174 = vmatpush1.bf16.msra.mxu0 0
    %2175 = vmatprep.mubr.bf16.mxu0 0
    %2176 = vmatmul.mubr.bf16.gmra.mrb[0].mxu0 %v2141
    %v2177 = vpop.f32.mrb[0].mxu0
    %v2178 = vadd.f32 0.0, %v2177
    %v2179 = vpop.f32.mrb[0].mxu0
    %v2180 = vpop.f32.mrb[0].mxu0
    %v2181 = vpop.f32.mrb[0].mxu0
    %2182 = vdwg.mxu0
    %2184 = vrot.lane.b32.xlu0 %v2125, 32
    %v2185 = vpop.permute.xlu0 %2184
    %v2190 = vunpack.c.l.b16 %v2117
    %v2191 = vunpack.c.l.b16 %v2118
    %v2192 = vunpack.c.l.b16 %v2119
    %v2193 = vunpack.c.l.b16 %v2120
    %v2194 = vpack.c.b16 %v2191, %v2190
    %v2195 = vpack.c.b16 %v2193, %v2192
    %v2199 = vsel %vm50, %v2185, 0
    %2201 = vmatprep.subr.bf16.mxu0 0
    %2202 = vmatpush1.bf16.msra.mxu0 %v2194
    %2203 = vmatprep.subr.bf16.mxu0 0
    %2204 = vmatpush1.bf16.msra.mxu0 %v2195
    %2205 = vmatprep.subr.bf16.mxu0 0
    %2206 = vmatpush1.bf16.msra.mxu0 0
    %2207 = vmatprep.subr.bf16.mxu0 0
    %2208 = vmatpush1.bf16.msra.mxu0 0
    %2209 = vmatprep.subr.bf16.mxu0 0
    %2210 = vmatpush1.bf16.msra.mxu0 0
    %2211 = vmatprep.subr.bf16.mxu0 0
    %2212 = vmatpush1.bf16.msra.mxu0 0
    %2213 = vmatprep.subr.bf16.mxu0 0
    %2214 = vmatpush1.bf16.msra.mxu0 0
    %2215 = vmatprep.subr.bf16.mxu0 0
    %2216 = vmatpush1.bf16.msra.mxu0 0
    %2217 = vmatprep.subr.bf16.mxu0 0
    %2218 = vmatpush1.bf16.msra.mxu0 0
    %2219 = vmatprep.subr.bf16.mxu0 0
    %2220 = vmatpush1.bf16.msra.mxu0 0
    %2221 = vmatprep.subr.bf16.mxu0 0
    %2222 = vmatpush1.bf16.msra.mxu0 0
    %2223 = vmatprep.subr.bf16.mxu0 0
    %2224 = vmatpush1.bf16.msra.mxu0 0
    %2225 = vmatprep.subr.bf16.mxu0 0
    %2226 = vmatpush1.bf16.msra.mxu0 0
    %2227 = vmatprep.subr.bf16.mxu0 0
    %2228 = vmatpush1.bf16.msra.mxu0 0
    %2229 = vmatprep.subr.bf16.mxu0 0
    %2230 = vmatpush1.bf16.msra.mxu0 0
    %2231 = vmatprep.subr.bf16.mxu0 0
    %2232 = vmatpush1.bf16.msra.mxu0 0
    %2233 = vmatprep.mubr.bf16.mxu0 0
    %2234 = vmatmul.mubr.bf16.gmra.mrb[0].mxu0 %v2199
    %v2235 = vpop.f32.mrb[0].mxu0
    %v2236 = vadd.f32 %v2178, %v2235
    %v2237 = vpop.f32.mrb[0].mxu0
    %v2238 = vpop.f32.mrb[0].mxu0
    %v2239 = vpop.f32.mrb[0].mxu0
    %2240 = vdwg.mxu0
    %v2241 = vld [vmem:[%s3] sm:$0x1]
    %v2243 = vlaneseq
    %v2244 = vshrl.u32 %v2243, 7
    %v2245 = vsub.s32 0, %v2244
    %v2246 = vrot.slane %v2241, %v2245
    %v2248 = vadd.f32 %v2236, %v2246
    %v2249 = vld [vmem:[%s267] sm:$0xff]
    %v2250 = vsub.f32 0.0, %v2248
    %v2251 = vmul.f32 %v2250, 1.442695
    %v2252 = vpow.pop %v2251
    %v2253 = vadd.f32 %v2252, 1.0
    %v2254 = vrcp.pop %v2253
    %v2255 = vmul.f32 1.0, %v2254
    %v2256 = vtanh.pop %v2248
    %2258 = vrot.lane.b32.xlu0 %v2249, 32
    %v2259 = vpop.permute.xlu0 %2258
    %v2261 = vmul.f32 %v2255, %v2259
    %2263 = vrot.lane.b32.xlu0 %v2256, 64
    %v2264 = vpop.permute.xlu0 %2263
    %v2266 = vmul.f32 %v2255, %v2264
    %2268 = vrot.lane.b32.xlu0 %v2266, 32
    %v2269 = vpop.permute.xlu0 %2268
    %v2271 = vadd.f32 %v2261, %v2269
    %v2272 = vtanh.pop %v2271
    %2274 = vrot.lane.b32.xlu0 %v2272, 64
    %v2275 = vpop.permute.xlu0 %2274
    %v2277 = vmul.f32 %v2255, %v2275
    %2279 = vrot.lane.b32.xlu0 %v2277, 32
    %v2280 = vpop.permute.xlu0 %2279
    %2282 = vst.msk [vmem:[%s143] sm:$0xff] %vm50, %v2280
    %2284 = vrot.lane.b32.xlu0 %v2271, 96
    %v2285 = vpop.permute.xlu0 %2284
    %2287 = vst.msk [vmem:[%s267] sm:$0xff] %vm50, %v2285
    %v2288 = vpack.c.bf16 %v2277, %v2277
    %v2290 = vunpack.c.l.b16 %v2288
    %v2291 = vpack.c.b16 %v2290, %v2290
    %2292 = vrot.lane.b32.xlu0 %v2291, 32
    %v2293 = vpop.permute.xlu0 %2292
    %s2295 = scalar_lea.vmem [#allocation4], 28
    %2296 = vst.msk [vmem:[%s2295] sm:$0xf] %vm314, %v2293
    // Predicated region
    $region22: #{lstm_att_forward.8} parent=1 // pred_check
      %p2297 = pneg %p22
    $region23: #{lstm_att_forward.8} parent=1 // pred_check_branch
      %2299 = sbr.rel (%p2297) target = $region25
    $region24: #{lstm_att_forward.8} parent=1 // pred_region
      %v2300 = vld [vmem:[#allocation2] sm:$0xff]
      %v2301 = vld [vmem:[#allocation2 + $0x8] sm:$0xff]
      %2302 = vst.msk [vmem:[%s5] sm:$0xff] %vm50, %v2300
      %2303 = vst.msk [vmem:[%s5 + $0x8] sm:$0xff] %vm50, %v2301
      %v2304 = vld [vmem:[#allocation3] sm:$0xff]
      %v2305 = vld [vmem:[#allocation3 + $0x8] sm:$0xff]
      %2306 = vst.msk [vmem:[%s6] sm:$0xff] %vm50, %v2304
      %2307 = vst.msk [vmem:[%s6 + $0x8] sm:$0xff] %vm50, %v2305
    $region25: #{lstm_att_forward.8} parent=1 // pred_fallthru
      _
    // Predicated region
    $region26: #{lstm_att_forward.8} parent=1 // pred_check
      _
    $region27: #{lstm_att_forward.8} parent=1 // pred_check_branch
      %2309 = sbr.rel (0) target = $region29
    $region28: #{lstm_att_forward.8} parent=1 // pred_region
      %s2311 = ssub.s32 512, 512
      %2312 = vsyncadd [#allocation5], %s2311
      %s2313 = sshll.u32 [#allocation4], 4
      %s2314 = int_to_ptr.vmem [resolvable:$true] %s2313
      %2319 = dma.vmem_to_hbm [thread:$0]  %s2314, 512, %s4, [#allocation5], 64, 64, 4
    $region29: #{lstm_att_forward.8} parent=1 // pred_fallthru
      _
    // Predicated region
    $region30: #{lstm_att_forward.8} parent=1 // pred_check
      _
    $region31: #{lstm_att_forward.8} parent=1 // pred_check_branch
      %2321 = sbr.rel (0) target = $region33
    $region32: #{lstm_att_forward.8} parent=1 // pred_region
      _
    $region33: #{lstm_att_forward.8} parent=1 // pred_fallthru
      _
    // Predicated region
    $region34: #{lstm_att_forward.8} parent=1 // pred_check
      _
    $region35: #{lstm_att_forward.8} parent=1 // pred_check_branch
      %2323 = sbr.rel (0) target = $region37
    $region36: #{lstm_att_forward.8} parent=1 // pred_region
      _
    $region37: #{lstm_att_forward.8} parent=1 // pred_fallthru
      _
    // Predicated region
    $region38: #{lstm_att_forward.8} parent=1 // pred_check
      _
    $region39: #{lstm_att_forward.8} parent=1 // pred_check_branch
      %2325 = sbr.rel (0) target = $region41
    $region40: #{lstm_att_forward.8} parent=1 // pred_region
      %2326 = dma.done [#allocation5], 512
    $region41: #{lstm_att_forward.8} parent=1 // pred_fallthru
      _
    // Predicated region
    $region42: #{lstm_att_forward.8} parent=1 // pred_check
      _
    $region43: #{lstm_att_forward.8} parent=1 // pred_check_branch
      %2328 = sbr.rel (0) target = $region45
    $region44: #{lstm_att_forward.8} parent=1 // pred_region
      _
    $region45: #{lstm_att_forward.8} parent=1 // pred_fallthru
      _
    // Predicated region
    $region46: #{lstm_att_forward.8} parent=1 // pred_check
      _
    $region47: #{lstm_att_forward.8} parent=1 // pred_check_branch
      %2330 = sbr.rel (0) target = $region49
    $region48: #{lstm_att_forward.8} parent=1 // pred_region
      _
    $region49: #{lstm_att_forward.8} parent=1 // pred_fallthru
      _
    %2331 = vsyncpa [#allocation5], 1

// kernel: lstm_att_forward.10
$region0: #{lstm_att_forward.10}
  #allocation0 [shape = 'u32[]', space=smem, size = 0x4, offset = 0x4, fixed_abs, tag = 'smem constant byte address 0x4 - core index']
  #allocation1 [shape = 'u32[144,128]{1,0:T(1,128)}', space=vmem, size = 0x12000, scoped, tag = 'internal scratch']
  #allocation2 [shape = 'f32[2,8,32]{2,1,0:T(8,128)}', space=vmem, size = 0x2000, scoped, tag = 'scratch operand']
  #allocation3 [shape = 'f32[2,8,32]{2,1,0:T(8,128)}', space=vmem, size = 0x2000, scoped, tag = 'scratch operand']
  %s0 = inlined_call_operand.vmem [shape: f32[8,8,128], index: 0, kind: input, shape index: {}]
  %s1 = inlined_call_operand.vmem [shape: bf16[32,128], index: 1, kind: input, shape index: {}]
  %s2 = inlined_call_operand.vmem [shape: bf16[1,64,128], index: 2, kind: input, shape index: {}]
  %s3 = inlined_call_operand.vmem [shape: f32[1,1,128], index: 3, kind: input, shape index: {}]
  %s4 = inlined_call_operand.vmem [shape: bf16[8,8,32], index: 4, kind: output, shape index: {0}]
  %s5 = inlined_call_operand.vmem [shape: f32[2,8,32], index: 5, kind: output, shape index: {1}]
  %s6 = inlined_call_operand.vmem [shape: f32[2,8,32], index: 6, kind: output, shape index: {2}]
  %7 = xla_tuple %s4, %s5, %s6
  %s8 = sld [smem:[#allocation0]]
  $region50: #{lstm_att_forward.10} parent=0
    _
  %s10 = ssub.s32 1, %s8
  %s11 = scalar_select 0, %s10, %s8
  // Predicated region
  $region2: #{lstm_att_forward.10} parent=0 // pred_check
    _
  $region3: #{lstm_att_forward.10} parent=0 // pred_check_branch
    %13 = sbr.rel (0) target = $region5
  $region4: #{lstm_att_forward.10} parent=0 // pred_region
    _
  $region5: #{lstm_att_forward.10} parent=0 // pred_fallthru
    _
  // Predicated region
  $region6: #{lstm_att_forward.10} parent=0 // pred_check
    _
  $region7: #{lstm_att_forward.10} parent=0 // pred_check_branch
    %15 = sbr.rel (0) target = $region9
  $region8: #{lstm_att_forward.10} parent=0 // pred_region
    _
  $region9: #{lstm_att_forward.10} parent=0 // pred_fallthru
    _
  // Predicated region
  $region10: #{lstm_att_forward.10} parent=0 // pred_check
    _
  $region11: #{lstm_att_forward.10} parent=0 // pred_check_branch
    %17 = sbr.rel (0) target = $region13
  $region12: #{lstm_att_forward.10} parent=0 // pred_region
    _
  $region13: #{lstm_att_forward.10} parent=0 // pred_fallthru
    _
  // Predicated region
  $region14: #{lstm_att_forward.10} parent=0 // pred_check
    _
  $region15: #{lstm_att_forward.10} parent=0 // pred_check_branch
    %19 = sbr.rel (0) target = $region17
  $region16: #{lstm_att_forward.10} parent=0 // pred_region
    _
  $region17: #{lstm_att_forward.10} parent=0 // pred_fallthru
    _
  %p21 = scmp.eq.s32.totalorder 0, 0
  // Predicated region
  $region18: #{lstm_att_forward.10} parent=0 // pred_check
    %p22 = pneg %p21
  $region19: #{lstm_att_forward.10} parent=0 // pred_check_branch
    %24 = sbr.rel (%p22) target = $region21
  $region20: #{lstm_att_forward.10} parent=0 // pred_region
    %vm25 = vcmask 261120
    %26 = vst.msk [vmem:[#allocation2] sm:$0xff] %vm25, 0.0
    %27 = vst.msk [vmem:[#allocation2 + $0x8] sm:$0xff] %vm25, 0.0
    %28 = vst.msk [vmem:[#allocation3] sm:$0xff] %vm25, 0.0
    %29 = vst.msk [vmem:[#allocation3 + $0x8] sm:$0xff] %vm25, 0.0
  $region21: #{lstm_att_forward.10} parent=0 // pred_fallthru
    _
  %v30 = vld [vmem:[%s0] sm:$0xff]
  %v31 = vld [vmem:[#allocation2] sm:$0xff]
  %v32 = vpack.c.bf16 %v31, %v31
  %v33 = vld [vmem:[%s1] sm:$0xf]
  %v34 = vld [vmem:[%s1 + $0x4] sm:$0xf]
  %v35 = vld [vmem:[%s1 + $0x8] sm:$0xf]
  %v36 = vld [vmem:[%s1 + $0xc] sm:$0xf]
  %v41 = vunpack.c.l.b16 %v33
  %v42 = vunpack.c.l.b16 %v34
  %v43 = vunpack.c.l.b16 %v35
  %v44 = vunpack.c.l.b16 %v36
  %v45 = vpack.c.b16 %v42, %v41
  %v46 = vpack.c.b16 %v44, %v43
  %vm49 = vcmask 261120
  %v51 = vsel %vm49, %v32, 0
  %53 = vmatprep.subr.bf16.mxu0 0
  %54 = vmatpush1.bf16.msra.mxu0 %v45
  %55 = vmatprep.subr.bf16.mxu0 0
  %56 = vmatpush1.bf16.msra.mxu0 %v46
  %57 = vmatprep.subr.bf16.mxu0 0
  %58 = vmatpush1.bf16.msra.mxu0 0
  %59 = vmatprep.subr.bf16.mxu0 0
  %60 = vmatpush1.bf16.msra.mxu0 0
  %61 = vmatprep.subr.bf16.mxu0 0
  %62 = vmatpush1.bf16.msra.mxu0 0
  %63 = vmatprep.subr.bf16.mxu0 0
  %64 = vmatpush1.bf16.msra.mxu0 0
  %65 = vmatprep.subr.bf16.mxu0 0
  %66 = vmatpush1.bf16.msra.mxu0 0
  %67 = vmatprep.subr.bf16.mxu0 0
  %68 = vmatpush1.bf16.msra.mxu0 0
  %69 = vmatprep.subr.bf16.mxu0 0
  %70 = vmatpush1.bf16.msra.mxu0 0
  %71 = vmatprep.subr.bf16.mxu0 0
  %72 = vmatpush1.bf16.msra.mxu0 0
  %73 = vmatprep.subr.bf16.mxu0 0
  %74 = vmatpush1.bf16.msra.mxu0 0
  %75 = vmatprep.subr.bf16.mxu0 0
  %76 = vmatpush1.bf16.msra.mxu0 0
  %77 = vmatprep.subr.bf16.mxu0 0
  %78 = vmatpush1.bf16.msra.mxu0 0
  %79 = vmatprep.subr.bf16.mxu0 0
  %80 = vmatpush1.bf16.msra.mxu0 0
  %81 = vmatprep.subr.bf16.mxu0 0
  %82 = vmatpush1.bf16.msra.mxu0 0
  %83 = vmatprep.subr.bf16.mxu0 0
  %84 = vmatpush1.bf16.msra.mxu0 0
  %85 = vmatprep.mubr.bf16.mxu0 0
  %86 = vmatmul.mubr.bf16.gmra.mrb[0].mxu0 %v51
  %v87 = vpop.f32.mrb[0].mxu0
  %v88 = vadd.f32 0.0, %v87
  %v89 = vpop.f32.mrb[0].mxu0
  %v90 = vpop.f32.mrb[0].mxu0
  %v91 = vpop.f32.mrb[0].mxu0
  %92 = vdwg.mxu0
  %v93 = vadd.f32 %v30, %v88
  %v94 = vld [vmem:[#allocation3] sm:$0xff]
  %v95 = vsub.f32 0.0, %v93
  %v96 = vmul.f32 %v95, 1.442695
  %v97 = vpow.pop %v96
  %v98 = vadd.f32 %v97, 1.0
  %v99 = vrcp.pop %v98
  %v100 = vmul.f32 1.0, %v99
  %v101 = vtanh.pop %v93
  %103 = vrot.lane.b32.xlu0 %v94, 32
  %v104 = vpop.permute.xlu0 %103
  %v106 = vmul.f32 %v100, %v104
  %108 = vrot.lane.b32.xlu0 %v101, 64
  %v109 = vpop.permute.xlu0 %108
  %v111 = vmul.f32 %v100, %v109
  %113 = vrot.lane.b32.xlu0 %v111, 32
  %v114 = vpop.permute.xlu0 %113
  %v116 = vadd.f32 %v106, %v114
  %v117 = vtanh.pop %v116
  %119 = vrot.lane.b32.xlu0 %v117, 64
  %v120 = vpop.permute.xlu0 %119
  %v122 = vmul.f32 %v100, %v120
  %124 = vrot.lane.b32.xlu0 %v122, 32
  %v125 = vpop.permute.xlu0 %124
  %127 = vst.msk [vmem:[#allocation2] sm:$0xff] %vm49, %v125
  %129 = vrot.lane.b32.xlu0 %v116, 96
  %v130 = vpop.permute.xlu0 %129
  %132 = vst.msk [vmem:[#allocation3] sm:$0xff] %vm49, %v130
  %v133 = vld [vmem:[%s2] sm:$0xf]
  %v134 = vld [vmem:[%s2 + $0x4] sm:$0xf]
  %v135 = vld [vmem:[%s2 + $0x8] sm:$0xf]
  %v136 = vld [vmem:[%s2 + $0xc] sm:$0xf]
  %v137 = vld [vmem:[%s2 + $0x10] sm:$0xf]
  %v138 = vld [vmem:[%s2 + $0x14] sm:$0xf]
  %v139 = vld [vmem:[%s2 + $0x18] sm:$0xf]
  %v140 = vld [vmem:[%s2 + $0x1c] sm:$0xf]
  %v141 = vpack.c.bf16 %v122, %v122
  %s142 = scalar_lea.vmem [#allocation2], 8
  %v143 = vld [vmem:[%s142] sm:$0xff]
  %v144 = vpack.c.bf16 %v143, %v143
  %v149 = vunpack.c.l.b16 %v137
  %v150 = vunpack.c.l.b16 %v138
  %v151 = vunpack.c.l.b16 %v139
  %v152 = vunpack.c.l.b16 %v140
  %v153 = vpack.c.b16 %v150, %v149
  %v154 = vpack.c.b16 %v152, %v151
  %v158 = vsel %vm49, %v144, 0
  %160 = vmatprep.subr.bf16.mxu0 0
  %161 = vmatpush1.bf16.msra.mxu0 %v153
  %162 = vmatprep.subr.bf16.mxu0 0
  %163 = vmatpush1.bf16.msra.mxu0 %v154
  %164 = vmatprep.subr.bf16.mxu0 0
  %165 = vmatpush1.bf16.msra.mxu0 0
  %166 = vmatprep.subr.bf16.mxu0 0
  %167 = vmatpush1.bf16.msra.mxu0 0
  %168 = vmatprep.subr.bf16.mxu0 0
  %169 = vmatpush1.bf16.msra.mxu0 0
  %170 = vmatprep.subr.bf16.mxu0 0
  %171 = vmatpush1.bf16.msra.mxu0 0
  %172 = vmatprep.subr.bf16.mxu0 0
  %173 = vmatpush1.bf16.msra.mxu0 0
  %174 = vmatprep.subr.bf16.mxu0 0
  %175 = vmatpush1.bf16.msra.mxu0 0
  %176 = vmatprep.subr.bf16.mxu0 0
  %177 = vmatpush1.bf16.msra.mxu0 0
  %178 = vmatprep.subr.bf16.mxu0 0
  %179 = vmatpush1.bf16.msra.mxu0 0
  %180 = vmatprep.subr.bf16.mxu0 0
  %181 = vmatpush1.bf16.msra.mxu0 0
  %182 = vmatprep.subr.bf16.mxu0 0
  %183 = vmatpush1.bf16.msra.mxu0 0
  %184 = vmatprep.subr.bf16.mxu0 0
  %185 = vmatpush1.bf16.msra.mxu0 0
  %186 = vmatprep.subr.bf16.mxu0 0
  %187 = vmatpush1.bf16.msra.mxu0 0
  %188 = vmatprep.subr.bf16.mxu0 0
  %189 = vmatpush1.bf16.msra.mxu0 0
  %190 = vmatprep.subr.bf16.mxu0 0
  %191 = vmatpush1.bf16.msra.mxu0 0
  %192 = vmatprep.mubr.bf16.mxu0 0
  %193 = vmatmul.mubr.bf16.gmra.mrb[0].mxu0 %v158
  %v194 = vpop.f32.mrb[0].mxu0
  %v195 = vadd.f32 0.0, %v194
  %v196 = vpop.f32.mrb[0].mxu0
  %v197 = vpop.f32.mrb[0].mxu0
  %v198 = vpop.f32.mrb[0].mxu0
  %199 = vdwg.mxu0
  %201 = vrot.lane.b32.xlu0 %v141, 32
  %v202 = vpop.permute.xlu0 %201
  %v207 = vunpack.c.l.b16 %v133
  %v208 = vunpack.c.l.b16 %v134
  %v209 = vunpack.c.l.b16 %v135
  %v210 = vunpack.c.l.b16 %v136
  %v211 = vpack.c.b16 %v208, %v207
  %v212 = vpack.c.b16 %v210, %v209
  %v216 = vsel %vm49, %v202, 0
  %218 = vmatprep.subr.bf16.mxu0 0
  %219 = vmatpush1.bf16.msra.mxu0 %v211
  %220 = vmatprep.subr.bf16.mxu0 0
  %221 = vmatpush1.bf16.msra.mxu0 %v212
  %222 = vmatprep.subr.bf16.mxu0 0
  %223 = vmatpush1.bf16.msra.mxu0 0
  %224 = vmatprep.subr.bf16.mxu0 0
  %225 = vmatpush1.bf16.msra.mxu0 0
  %226 = vmatprep.subr.bf16.mxu0 0
  %227 = vmatpush1.bf16.msra.mxu0 0
  %228 = vmatprep.subr.bf16.mxu0 0
  %229 = vmatpush1.bf16.msra.mxu0 0
  %230 = vmatprep.subr.bf16.mxu0 0
  %231 = vmatpush1.bf16.msra.mxu0 0
  %232 = vmatprep.subr.bf16.mxu0 0
  %233 = vmatpush1.bf16.msra.mxu0 0
  %234 = vmatprep.subr.bf16.mxu0 0
  %235 = vmatpush1.bf16.msra.mxu0 0
  %236 = vmatprep.subr.bf16.mxu0 0
  %237 = vmatpush1.bf16.msra.mxu0 0
  %238 = vmatprep.subr.bf16.mxu0 0
  %239 = vmatpush1.bf16.msra.mxu0 0
  %240 = vmatprep.subr.bf16.mxu0 0
  %241 = vmatpush1.bf16.msra.mxu0 0
  %242 = vmatprep.subr.bf16.mxu0 0
  %243 = vmatpush1.bf16.msra.mxu0 0
  %244 = vmatprep.subr.bf16.mxu0 0
  %245 = vmatpush1.bf16.msra.mxu0 0
  %246 = vmatprep.subr.bf16.mxu0 0
  %247 = vmatpush1.bf16.msra.mxu0 0
  %248 = vmatprep.subr.bf16.mxu0 0
  %249 = vmatpush1.bf16.msra.mxu0 0
  %250 = vmatprep.mubr.bf16.mxu0 0
  %251 = vmatmul.mubr.bf16.gmra.mrb[0].mxu0 %v216
  %v252 = vpop.f32.mrb[0].mxu0
  %v253 = vadd.f32 %v195, %v252
  %v254 = vpop.f32.mrb[0].mxu0
  %v255 = vpop.f32.mrb[0].mxu0
  %v256 = vpop.f32.mrb[0].mxu0
  %257 = vdwg.mxu0
  %v258 = vld [vmem:[%s3] sm:$0x1]
  %v260 = vlaneseq
  %v261 = vshrl.u32 %v260, 7
  %v262 = vsub.s32 0, %v261
  %v263 = vrot.slane %v258, %v262
  %v265 = vadd.f32 %v253, %v263
  %s266 = scalar_lea.vmem [#allocation3], 8
  %v267 = vld [vmem:[%s266] sm:$0xff]
  %v268 = vsub.f32 0.0, %v265
  %v269 = vmul.f32 %v268, 1.442695
  %v270 = vpow.pop %v269
  %v271 = vadd.f32 %v270, 1.0
  %v272 = vrcp.pop %v271
  %v273 = vmul.f32 1.0, %v272
  %v274 = vtanh.pop %v265
  %276 = vrot.lane.b32.xlu0 %v267, 32
  %v277 = vpop.permute.xlu0 %276
  %v279 = vmul.f32 %v273, %v277
  %281 = vrot.lane.b32.xlu0 %v274, 64
  %v282 = vpop.permute.xlu0 %281
  %v284 = vmul.f32 %v273, %v282
  %286 = vrot.lane.b32.xlu0 %v284, 32
  %v287 = vpop.permute.xlu0 %286
  %v289 = vadd.f32 %v279, %v287
  %v290 = vtanh.pop %v289
  %292 = vrot.lane.b32.xlu0 %v290, 64
  %v293 = vpop.permute.xlu0 %292
  %v295 = vmul.f32 %v273, %v293
  %297 = vrot.lane.b32.xlu0 %v295, 32
  %v298 = vpop.permute.xlu0 %297
  %300 = vst.msk [vmem:[%s142] sm:$0xff] %vm49, %v298
  %302 = vrot.lane.b32.xlu0 %v289, 96
  %v303 = vpop.permute.xlu0 %302
  %305 = vst.msk [vmem:[%s266] sm:$0xff] %vm49, %v303
  %v306 = vpack.c.bf16 %v295, %v295
  %v308 = vunpack.c.l.b16 %v306
  %v309 = vpack.c.b16 %v308, %v308
  %310 = vrot.lane.b32.xlu0 %v309, 32
  %v311 = vpop.permute.xlu0 %310
  %vm313 = vcmask 257024
  %314 = vst.msk [vmem:[%s4] sm:$0xf] %vm313, %v311
  %s315 = scalar_lea.vmem %s0, 8
  %v316 = vld [vmem:[%s315] sm:$0xff]
  %v317 = vld [vmem:[#allocation2] sm:$0xff]
  %v318 = vpack.c.bf16 %v317, %v317
  %v319 = vld [vmem:[%s1] sm:$0xf]
  %v320 = vld [vmem:[%s1 + $0x4] sm:$0xf]
  %v321 = vld [vmem:[%s1 + $0x8] sm:$0xf]
  %v322 = vld [vmem:[%s1 + $0xc] sm:$0xf]
  %v327 = vunpack.c.l.b16 %v319
  %v328 = vunpack.c.l.b16 %v320
  %v329 = vunpack.c.l.b16 %v321
  %v330 = vunpack.c.l.b16 %v322
  %v331 = vpack.c.b16 %v328, %v327
  %v332 = vpack.c.b16 %v330, %v329
  %v336 = vsel %vm49, %v318, 0
  %338 = vmatprep.subr.bf16.mxu0 0
  %339 = vmatpush1.bf16.msra.mxu0 %v331
  %340 = vmatprep.subr.bf16.mxu0 0
  %341 = vmatpush1.bf16.msra.mxu0 %v332
  %342 = vmatprep.subr.bf16.mxu0 0
  %343 = vmatpush1.bf16.msra.mxu0 0
  %344 = vmatprep.subr.bf16.mxu0 0
  %345 = vmatpush1.bf16.msra.mxu0 0
  %346 = vmatprep.subr.bf16.mxu0 0
  %347 = vmatpush1.bf16.msra.mxu0 0
  %348 = vmatprep.subr.bf16.mxu0 0
  %349 = vmatpush1.bf16.msra.mxu0 0
  %350 = vmatprep.subr.bf16.mxu0 0
  %351 = vmatpush1.bf16.msra.mxu0 0
  %352 = vmatprep.subr.bf16.mxu0 0
  %353 = vmatpush1.bf16.msra.mxu0 0
  %354 = vmatprep.subr.bf16.mxu0 0
  %355 = vmatpush1.bf16.msra.mxu0 0
  %356 = vmatprep.subr.bf16.mxu0 0
  %357 = vmatpush1.bf16.msra.mxu0 0
  %358 = vmatprep.subr.bf16.mxu0 0
  %359 = vmatpush1.bf16.msra.mxu0 0
  %360 = vmatprep.subr.bf16.mxu0 0
  %361 = vmatpush1.bf16.msra.mxu0 0
  %362 = vmatprep.subr.bf16.mxu0 0
  %363 = vmatpush1.bf16.msra.mxu0 0
  %364 = vmatprep.subr.bf16.mxu0 0
  %365 = vmatpush1.bf16.msra.mxu0 0
  %366 = vmatprep.subr.bf16.mxu0 0
  %367 = vmatpush1.bf16.msra.mxu0 0
  %368 = vmatprep.subr.bf16.mxu0 0
  %369 = vmatpush1.bf16.msra.mxu0 0
  %370 = vmatprep.mubr.bf16.mxu0 0
  %371 = vmatmul.mubr.bf16.gmra.mrb[0].mxu0 %v336
  %v372 = vpop.f32.mrb[0].mxu0
  %v373 = vadd.f32 0.0, %v372
  %v374 = vpop.f32.mrb[0].mxu0
  %v375 = vpop.f32.mrb[0].mxu0
  %v376 = vpop.f32.mrb[0].mxu0
  %377 = vdwg.mxu0
  %v378 = vadd.f32 %v316, %v373
  %v379 = vld [vmem:[#allocation3] sm:$0xff]
  %v380 = vsub.f32 0.0, %v378
  %v381 = vmul.f32 %v380, 1.442695
  %v382 = vpow.pop %v381
  %v383 = vadd.f32 %v382, 1.0
  %v384 = vrcp.pop %v383
  %v385 = vmul.f32 1.0, %v384
  %v386 = vtanh.pop %v378
  %388 = vrot.lane.b32.xlu0 %v379, 32
  %v389 = vpop.permute.xlu0 %388
  %v391 = vmul.f32 %v385, %v389
  %393 = vrot.lane.b32.xlu0 %v386, 64
  %v394 = vpop.permute.xlu0 %393
  %v396 = vmul.f32 %v385, %v394
  %398 = vrot.lane.b32.xlu0 %v396, 32
  %v399 = vpop.permute.xlu0 %398
  %v401 = vadd.f32 %v391, %v399
  %v402 = vtanh.pop %v401
  %404 = vrot.lane.b32.xlu0 %v402, 64
  %v405 = vpop.permute.xlu0 %404
  %v407 = vmul.f32 %v385, %v405
  %409 = vrot.lane.b32.xlu0 %v407, 32
  %v410 = vpop.permute.xlu0 %409
  %412 = vst.msk [vmem:[#allocation2] sm:$0xff] %vm49, %v410
  %414 = vrot.lane.b32.xlu0 %v401, 96
  %v415 = vpop.permute.xlu0 %414
  %417 = vst.msk [vmem:[#allocation3] sm:$0xff] %vm49, %v415
  %v418 = vld [vmem:[%s2] sm:$0xf]
  %v419 = vld [vmem:[%s2 + $0x4] sm:$0xf]
  %v420 = vld [vmem:[%s2 + $0x8] sm:$0xf]
  %v421 = vld [vmem:[%s2 + $0xc] sm:$0xf]
  %v422 = vld [vmem:[%s2 + $0x10] sm:$0xf]
  %v423 = vld [vmem:[%s2 + $0x14] sm:$0xf]
  %v424 = vld [vmem:[%s2 + $0x18] sm:$0xf]
  %v425 = vld [vmem:[%s2 + $0x1c] sm:$0xf]
  %v426 = vpack.c.bf16 %v407, %v407
  %v427 = vld [vmem:[%s142] sm:$0xff]
  %v428 = vpack.c.bf16 %v427, %v427
  %v433 = vunpack.c.l.b16 %v422
  %v434 = vunpack.c.l.b16 %v423
  %v435 = vunpack.c.l.b16 %v424
  %v436 = vunpack.c.l.b16 %v425
  %v437 = vpack.c.b16 %v434, %v433
  %v438 = vpack.c.b16 %v436, %v435
  %v442 = vsel %vm49, %v428, 0
  %444 = vmatprep.subr.bf16.mxu0 0
  %445 = vmatpush1.bf16.msra.mxu0 %v437
  %446 = vmatprep.subr.bf16.mxu0 0
  %447 = vmatpush1.bf16.msra.mxu0 %v438
  %448 = vmatprep.subr.bf16.mxu0 0
  %449 = vmatpush1.bf16.msra.mxu0 0
  %450 = vmatprep.subr.bf16.mxu0 0
  %451 = vmatpush1.bf16.msra.mxu0 0
  %452 = vmatprep.subr.bf16.mxu0 0
  %453 = vmatpush1.bf16.msra.mxu0 0
  %454 = vmatprep.subr.bf16.mxu0 0
  %455 = vmatpush1.bf16.msra.mxu0 0
  %456 = vmatprep.subr.bf16.mxu0 0
  %457 = vmatpush1.bf16.msra.mxu0 0
  %458 = vmatprep.subr.bf16.mxu0 0
  %459 = vmatpush1.bf16.msra.mxu0 0
  %460 = vmatprep.subr.bf16.mxu0 0
  %461 = vmatpush1.bf16.msra.mxu0 0
  %462 = vmatprep.subr.bf16.mxu0 0
  %463 = vmatpush1.bf16.msra.mxu0 0
  %464 = vmatprep.subr.bf16.mxu0 0
  %465 = vmatpush1.bf16.msra.mxu0 0
  %466 = vmatprep.subr.bf16.mxu0 0
  %467 = vmatpush1.bf16.msra.mxu0 0
  %468 = vmatprep.subr.bf16.mxu0 0
  %469 = vmatpush1.bf16.msra.mxu0 0
  %470 = vmatprep.subr.bf16.mxu0 0
  %471 = vmatpush1.bf16.msra.mxu0 0
  %472 = vmatprep.subr.bf16.mxu0 0
  %473 = vmatpush1.bf16.msra.mxu0 0
  %474 = vmatprep.subr.bf16.mxu0 0
  %475 = vmatpush1.bf16.msra.mxu0 0
  %476 = vmatprep.mubr.bf16.mxu0 0
  %477 = vmatmul.mubr.bf16.gmra.mrb[0].mxu0 %v442
  %v478 = vpop.f32.mrb[0].mxu0
  %v479 = vadd.f32 0.0, %v478
  %v480 = vpop.f32.mrb[0].mxu0
  %v481 = vpop.f32.mrb[0].mxu0
  %v482 = vpop.f32.mrb[0].mxu0
  %483 = vdwg.mxu0
  %485 = vrot.lane.b32.xlu0 %v426, 32
  %v486 = vpop.permute.xlu0 %485
  %v491 = vunpack.c.l.b16 %v418
  %v492 = vunpack.c.l.b16 %v419
  %v493 = vunpack.c.l.b16 %v420
  %v494 = vunpack.c.l.b16 %v421
  %v495 = vpack.c.b16 %v492, %v491
  %v496 = vpack.c.b16 %v494, %v493
  %v500 = vsel %vm49, %v486, 0
  %502 = vmatprep.subr.bf16.mxu0 0
  %503 = vmatpush1.bf16.msra.mxu0 %v495
  %504 = vmatprep.subr.bf16.mxu0 0
  %505 = vmatpush1.bf16.msra.mxu0 %v496
  %506 = vmatprep.subr.bf16.mxu0 0
  %507 = vmatpush1.bf16.msra.mxu0 0
  %508 = vmatprep.subr.bf16.mxu0 0
  %509 = vmatpush1.bf16.msra.mxu0 0
  %510 = vmatprep.subr.bf16.mxu0 0
  %511 = vmatpush1.bf16.msra.mxu0 0
  %512 = vmatprep.subr.bf16.mxu0 0
  %513 = vmatpush1.bf16.msra.mxu0 0
  %514 = vmatprep.subr.bf16.mxu0 0
  %515 = vmatpush1.bf16.msra.mxu0 0
  %516 = vmatprep.subr.bf16.mxu0 0
  %517 = vmatpush1.bf16.msra.mxu0 0
  %518 = vmatprep.subr.bf16.mxu0 0
  %519 = vmatpush1.bf16.msra.mxu0 0
  %520 = vmatprep.subr.bf16.mxu0 0
  %521 = vmatpush1.bf16.msra.mxu0 0
  %522 = vmatprep.subr.bf16.mxu0 0
  %523 = vmatpush1.bf16.msra.mxu0 0
  %524 = vmatprep.subr.bf16.mxu0 0
  %525 = vmatpush1.bf16.msra.mxu0 0
  %526 = vmatprep.subr.bf16.mxu0 0
  %527 = vmatpush1.bf16.msra.mxu0 0
  %528 = vmatprep.subr.bf16.mxu0 0
  %529 = vmatpush1.bf16.msra.mxu0 0
  %530 = vmatprep.subr.bf16.mxu0 0
  %531 = vmatpush1.bf16.msra.mxu0 0
  %532 = vmatprep.subr.bf16.mxu0 0
  %533 = vmatpush1.bf16.msra.mxu0 0
  %534 = vmatprep.mubr.bf16.mxu0 0
  %535 = vmatmul.mubr.bf16.gmra.mrb[0].mxu0 %v500
  %v536 = vpop.f32.mrb[0].mxu0
  %v537 = vadd.f32 %v479, %v536
  %v538 = vpop.f32.mrb[0].mxu0
  %v539 = vpop.f32.mrb[0].mxu0
  %v540 = vpop.f32.mrb[0].mxu0
  %541 = vdwg.mxu0
  %v542 = vld [vmem:[%s3] sm:$0x1]
  %v544 = vlaneseq
  %v545 = vshrl.u32 %v544, 7
  %v546 = vsub.s32 0, %v545
  %v547 = vrot.slane %v542, %v546
  %v549 = vadd.f32 %v537, %v547
  %v550 = vld [vmem:[%s266] sm:$0xff]
  %v551 = vsub.f32 0.0, %v549
  %v552 = vmul.f32 %v551, 1.442695
  %v553 = vpow.pop %v552
  %v554 = vadd.f32 %v553, 1.0
  %v555 = vrcp.pop %v554
  %v556 = vmul.f32 1.0, %v555
  %v557 = vtanh.pop %v549
  %559 = vrot.lane.b32.xlu0 %v550, 32
  %v560 = vpop.permute.xlu0 %559
  %v562 = vmul.f32 %v556, %v560
  %564 = vrot.lane.b32.xlu0 %v557, 64
  %v565 = vpop.permute.xlu0 %564
  %v567 = vmul.f32 %v556, %v565
  %569 = vrot.lane.b32.xlu0 %v567, 32
  %v570 = vpop.permute.xlu0 %569
  %v572 = vadd.f32 %v562, %v570
  %v573 = vtanh.pop %v572
  %575 = vrot.lane.b32.xlu0 %v573, 64
  %v576 = vpop.permute.xlu0 %575
  %v578 = vmul.f32 %v556, %v576
  %580 = vrot.lane.b32.xlu0 %v578, 32
  %v581 = vpop.permute.xlu0 %580
  %583 = vst.msk [vmem:[%s142] sm:$0xff] %vm49, %v581
  %585 = vrot.lane.b32.xlu0 %v572, 96
  %v586 = vpop.permute.xlu0 %585
  %588 = vst.msk [vmem:[%s266] sm:$0xff] %vm49, %v586
  %v589 = vpack.c.bf16 %v578, %v578
  %v591 = vunpack.c.l.b16 %v589
  %v592 = vpack.c.b16 %v591, %v591
  %593 = vrot.lane.b32.xlu0 %v592, 32
  %v594 = vpop.permute.xlu0 %593
  %s596 = scalar_lea.vmem %s4, 4
  %597 = vst.msk [vmem:[%s596] sm:$0xf] %vm313, %v594
  %s598 = scalar_lea.vmem %s0, 16
  %v599 = vld [vmem:[%s598] sm:$0xff]
  %v600 = vld [vmem:[#allocation2] sm:$0xff]
  %v601 = vpack.c.bf16 %v600, %v600
  %v602 = vld [vmem:[%s1] sm:$0xf]
  %v603 = vld [vmem:[%s1 + $0x4] sm:$0xf]
  %v604 = vld [vmem:[%s1 + $0x8] sm:$0xf]
  %v605 = vld [vmem:[%s1 + $0xc] sm:$0xf]
  %v610 = vunpack.c.l.b16 %v602
  %v611 = vunpack.c.l.b16 %v603
  %v612 = vunpack.c.l.b16 %v604
  %v613 = vunpack.c.l.b16 %v605
  %v614 = vpack.c.b16 %v611, %v610
  %v615 = vpack.c.b16 %v613, %v612
  %v619 = vsel %vm49, %v601, 0
  %621 = vmatprep.subr.bf16.mxu0 0
  %622 = vmatpush1.bf16.msra.mxu0 %v614
  %623 = vmatprep.subr.bf16.mxu0 0
  %624 = vmatpush1.bf16.msra.mxu0 %v615
  %625 = vmatprep.subr.bf16.mxu0 0
  %626 = vmatpush1.bf16.msra.mxu0 0
  %627 = vmatprep.subr.bf16.mxu0 0
  %628 = vmatpush1.bf16.msra.mxu0 0
  %629 = vmatprep.subr.bf16.mxu0 0
  %630 = vmatpush1.bf16.msra.mxu0 0
  %631 = vmatprep.subr.bf16.mxu0 0
  %632 = vmatpush1.bf16.msra.mxu0 0
  %633 = vmatprep.subr.bf16.mxu0 0
  %634 = vmatpush1.bf16.msra.mxu0 0
  %635 = vmatprep.subr.bf16.mxu0 0
  %636 = vmatpush1.bf16.msra.mxu0 0
  %637 = vmatprep.subr.bf16.mxu0 0
  %638 = vmatpush1.bf16.msra.mxu0 0
  %639 = vmatprep.subr.bf16.mxu0 0
  %640 = vmatpush1.bf16.msra.mxu0 0
  %641 = vmatprep.subr.bf16.mxu0 0
  %642 = vmatpush1.bf16.msra.mxu0 0
  %643 = vmatprep.subr.bf16.mxu0 0
  %644 = vmatpush1.bf16.msra.mxu0 0
  %645 = vmatprep.subr.bf16.mxu0 0
  %646 = vmatpush1.bf16.msra.mxu0 0
  %647 = vmatprep.subr.bf16.mxu0 0
  %648 = vmatpush1.bf16.msra.mxu0 0
  %649 = vmatprep.subr.bf16.mxu0 0
  %650 = vmatpush1.bf16.msra.mxu0 0
  %651 = vmatprep.subr.bf16.mxu0 0
  %652 = vmatpush1.bf16.msra.mxu0 0
  %653 = vmatprep.mubr.bf16.mxu0 0
  %654 = vmatmul.mubr.bf16.gmra.mrb[0].mxu0 %v619
  %v655 = vpop.f32.mrb[0].mxu0
  %v656 = vadd.f32 0.0, %v655
  %v657 = vpop.f32.mrb[0].mxu0
  %v658 = vpop.f32.mrb[0].mxu0
  %v659 = vpop.f32.mrb[0].mxu0
  %660 = vdwg.mxu0
  %v661 = vadd.f32 %v599, %v656
  %v662 = vld [vmem:[#allocation3] sm:$0xff]
  %v663 = vsub.f32 0.0, %v661
  %v664 = vmul.f32 %v663, 1.442695
  %v665 = vpow.pop %v664
  %v666 = vadd.f32 %v665, 1.0
  %v667 = vrcp.pop %v666
  %v668 = vmul.f32 1.0, %v667
  %v669 = vtanh.pop %v661
  %671 = vrot.lane.b32.xlu0 %v662, 32
  %v672 = vpop.permute.xlu0 %671
  %v674 = vmul.f32 %v668, %v672
  %676 = vrot.lane.b32.xlu0 %v669, 64
  %v677 = vpop.permute.xlu0 %676
  %v679 = vmul.f32 %v668, %v677
  %681 = vrot.lane.b32.xlu0 %v679, 32
  %v682 = vpop.permute.xlu0 %681
  %v684 = vadd.f32 %v674, %v682
  %v685 = vtanh.pop %v684
  %687 = vrot.lane.b32.xlu0 %v685, 64
  %v688 = vpop.permute.xlu0 %687
  %v690 = vmul.f32 %v668, %v688
  %692 = vrot.lane.b32.xlu0 %v690, 32
  %v693 = vpop.permute.xlu0 %692
  %695 = vst.msk [vmem:[#allocation2] sm:$0xff] %vm49, %v693
  %697 = vrot.lane.b32.xlu0 %v684, 96
  %v698 = vpop.permute.xlu0 %697
  %700 = vst.msk [vmem:[#allocation3] sm:$0xff] %vm49, %v698
  %v701 = vld [vmem:[%s2] sm:$0xf]
  %v702 = vld [vmem:[%s2 + $0x4] sm:$0xf]
  %v703 = vld [vmem:[%s2 + $0x8] sm:$0xf]
  %v704 = vld [vmem:[%s2 + $0xc] sm:$0xf]
  %v705 = vld [vmem:[%s2 + $0x10] sm:$0xf]
  %v706 = vld [vmem:[%s2 + $0x14] sm:$0xf]
  %v707 = vld [vmem:[%s2 + $0x18] sm:$0xf]
  %v708 = vld [vmem:[%s2 + $0x1c] sm:$0xf]
  %v709 = vpack.c.bf16 %v690, %v690
  %v710 = vld [vmem:[%s142] sm:$0xff]
  %v711 = vpack.c.bf16 %v710, %v710
  %v716 = vunpack.c.l.b16 %v705
  %v717 = vunpack.c.l.b16 %v706
  %v718 = vunpack.c.l.b16 %v707
  %v719 = vunpack.c.l.b16 %v708
  %v720 = vpack.c.b16 %v717, %v716
  %v721 = vpack.c.b16 %v719, %v718
  %v725 = vsel %vm49, %v711, 0
  %727 = vmatprep.subr.bf16.mxu0 0
  %728 = vmatpush1.bf16.msra.mxu0 %v720
  %729 = vmatprep.subr.bf16.mxu0 0
  %730 = vmatpush1.bf16.msra.mxu0 %v721
  %731 = vmatprep.subr.bf16.mxu0 0
  %732 = vmatpush1.bf16.msra.mxu0 0
  %733 = vmatprep.subr.bf16.mxu0 0
  %734 = vmatpush1.bf16.msra.mxu0 0
  %735 = vmatprep.subr.bf16.mxu0 0
  %736 = vmatpush1.bf16.msra.mxu0 0
  %737 = vmatprep.subr.bf16.mxu0 0
  %738 = vmatpush1.bf16.msra.mxu0 0
  %739 = vmatprep.subr.bf16.mxu0 0
  %740 = vmatpush1.bf16.msra.mxu0 0
  %741 = vmatprep.subr.bf16.mxu0 0
  %742 = vmatpush1.bf16.msra.mxu0 0
  %743 = vmatprep.subr.bf16.mxu0 0
  %744 = vmatpush1.bf16.msra.mxu0 0
  %745 = vmatprep.subr.bf16.mxu0 0
  %746 = vmatpush1.bf16.msra.mxu0 0
  %747 = vmatprep.subr.bf16.mxu0 0
  %748 = vmatpush1.bf16.msra.mxu0 0
  %749 = vmatprep.subr.bf16.mxu0 0
  %750 = vmatpush1.bf16.msra.mxu0 0
  %751 = vmatprep.subr.bf16.mxu0 0
  %752 = vmatpush1.bf16.msra.mxu0 0
  %753 = vmatprep.subr.bf16.mxu0 0
  %754 = vmatpush1.bf16.msra.mxu0 0
  %755 = vmatprep.subr.bf16.mxu0 0
  %756 = vmatpush1.bf16.msra.mxu0 0
  %757 = vmatprep.subr.bf16.mxu0 0
  %758 = vmatpush1.bf16.msra.mxu0 0
  %759 = vmatprep.mubr.bf16.mxu0 0
  %760 = vmatmul.mubr.bf16.gmra.mrb[0].mxu0 %v725
  %v761 = vpop.f32.mrb[0].mxu0
  %v762 = vadd.f32 0.0, %v761
  %v763 = vpop.f32.mrb[0].mxu0
  %v764 = vpop.f32.mrb[0].mxu0
  %v765 = vpop.f32.mrb[0].mxu0
  %766 = vdwg.mxu0
  %768 = vrot.lane.b32.xlu0 %v709, 32
  %v769 = vpop.permute.xlu0 %768
  %v774 = vunpack.c.l.b16 %v701
  %v775 = vunpack.c.l.b16 %v702
  %v776 = vunpack.c.l.b16 %v703
  %v777 = vunpack.c.l.b16 %v704
  %v778 = vpack.c.b16 %v775, %v774
  %v779 = vpack.c.b16 %v777, %v776
  %v783 = vsel %vm49, %v769, 0
  %785 = vmatprep.subr.bf16.mxu0 0
  %786 = vmatpush1.bf16.msra.mxu0 %v778
  %787 = vmatprep.subr.bf16.mxu0 0
  %788 = vmatpush1.bf16.msra.mxu0 %v779
  %789 = vmatprep.subr.bf16.mxu0 0
  %790 = vmatpush1.bf16.msra.mxu0 0
  %791 = vmatprep.subr.bf16.mxu0 0
  %792 = vmatpush1.bf16.msra.mxu0 0
  %793 = vmatprep.subr.bf16.mxu0 0
  %794 = vmatpush1.bf16.msra.mxu0 0
  %795 = vmatprep.subr.bf16.mxu0 0
  %796 = vmatpush1.bf16.msra.mxu0 0
  %797 = vmatprep.subr.bf16.mxu0 0
  %798 = vmatpush1.bf16.msra.mxu0 0
  %799 = vmatprep.subr.bf16.mxu0 0
  %800 = vmatpush1.bf16.msra.mxu0 0
  %801 = vmatprep.subr.bf16.mxu0 0
  %802 = vmatpush1.bf16.msra.mxu0 0
  %803 = vmatprep.subr.bf16.mxu0 0
  %804 = vmatpush1.bf16.msra.mxu0 0
  %805 = vmatprep.subr.bf16.mxu0 0
  %806 = vmatpush1.bf16.msra.mxu0 0
  %807 = vmatprep.subr.bf16.mxu0 0
  %808 = vmatpush1.bf16.msra.mxu0 0
  %809 = vmatprep.subr.bf16.mxu0 0
  %810 = vmatpush1.bf16.msra.mxu0 0
  %811 = vmatprep.subr.bf16.mxu0 0
  %812 = vmatpush1.bf16.msra.mxu0 0
  %813 = vmatprep.subr.bf16.mxu0 0
  %814 = vmatpush1.bf16.msra.mxu0 0
  %815 = vmatprep.subr.bf16.mxu0 0
  %816 = vmatpush1.bf16.msra.mxu0 0
  %817 = vmatprep.mubr.bf16.mxu0 0
  %818 = vmatmul.mubr.bf16.gmra.mrb[0].mxu0 %v783
  %v819 = vpop.f32.mrb[0].mxu0
  %v820 = vadd.f32 %v762, %v819
  %v821 = vpop.f32.mrb[0].mxu0
  %v822 = vpop.f32.mrb[0].mxu0
  %v823 = vpop.f32.mrb[0].mxu0
  %824 = vdwg.mxu0
  %v825 = vld [vmem:[%s3] sm:$0x1]
  %v827 = vlaneseq
  %v828 = vshrl.u32 %v827, 7
  %v829 = vsub.s32 0, %v828
  %v830 = vrot.slane %v825, %v829
  %v832 = vadd.f32 %v820, %v830
  %v833 = vld [vmem:[%s266] sm:$0xff]
  %v834 = vsub.f32 0.0, %v832
  %v835 = vmul.f32 %v834, 1.442695
  %v836 = vpow.pop %v835
  %v837 = vadd.f32 %v836, 1.0
  %v838 = vrcp.pop %v837
  %v839 = vmul.f32 1.0, %v838
  %v840 = vtanh.pop %v832
  %842 = vrot.lane.b32.xlu0 %v833, 32
  %v843 = vpop.permute.xlu0 %842
  %v845 = vmul.f32 %v839, %v843
  %847 = vrot.lane.b32.xlu0 %v840, 64
  %v848 = vpop.permute.xlu0 %847
  %v850 = vmul.f32 %v839, %v848
  %852 = vrot.lane.b32.xlu0 %v850, 32
  %v853 = vpop.permute.xlu0 %852
  %v855 = vadd.f32 %v845, %v853
  %v856 = vtanh.pop %v855
  %858 = vrot.lane.b32.xlu0 %v856, 64
  %v859 = vpop.permute.xlu0 %858
  %v861 = vmul.f32 %v839, %v859
  %863 = vrot.lane.b32.xlu0 %v861, 32
  %v864 = vpop.permute.xlu0 %863
  %866 = vst.msk [vmem:[%s142] sm:$0xff] %vm49, %v864
  %868 = vrot.lane.b32.xlu0 %v855, 96
  %v869 = vpop.permute.xlu0 %868
  %871 = vst.msk [vmem:[%s266] sm:$0xff] %vm49, %v869
  %v872 = vpack.c.bf16 %v861, %v861
  %v874 = vunpack.c.l.b16 %v872
  %v875 = vpack.c.b16 %v874, %v874
  %876 = vrot.lane.b32.xlu0 %v875, 32
  %v877 = vpop.permute.xlu0 %876
  %s879 = scalar_lea.vmem %s4, 8
  %880 = vst.msk [vmem:[%s879] sm:$0xf] %vm313, %v877
  %s881 = scalar_lea.vmem %s0, 24
  %v882 = vld [vmem:[%s881] sm:$0xff]
  %v883 = vld [vmem:[#allocation2] sm:$0xff]
  %v884 = vpack.c.bf16 %v883, %v883
  %v885 = vld [vmem:[%s1] sm:$0xf]
  %v886 = vld [vmem:[%s1 + $0x4] sm:$0xf]
  %v887 = vld [vmem:[%s1 + $0x8] sm:$0xf]
  %v888 = vld [vmem:[%s1 + $0xc] sm:$0xf]
  %v893 = vunpack.c.l.b16 %v885
  %v894 = vunpack.c.l.b16 %v886
  %v895 = vunpack.c.l.b16 %v887
  %v896 = vunpack.c.l.b16 %v888
  %v897 = vpack.c.b16 %v894, %v893
  %v898 = vpack.c.b16 %v896, %v895
  %v902 = vsel %vm49, %v884, 0
  %904 = vmatprep.subr.bf16.mxu0 0
  %905 = vmatpush1.bf16.msra.mxu0 %v897
  %906 = vmatprep.subr.bf16.mxu0 0
  %907 = vmatpush1.bf16.msra.mxu0 %v898
  %908 = vmatprep.subr.bf16.mxu0 0
  %909 = vmatpush1.bf16.msra.mxu0 0
  %910 = vmatprep.subr.bf16.mxu0 0
  %911 = vmatpush1.bf16.msra.mxu0 0
  %912 = vmatprep.subr.bf16.mxu0 0
  %913 = vmatpush1.bf16.msra.mxu0 0
  %914 = vmatprep.subr.bf16.mxu0 0
  %915 = vmatpush1.bf16.msra.mxu0 0
  %916 = vmatprep.subr.bf16.mxu0 0
  %917 = vmatpush1.bf16.msra.mxu0 0
  %918 = vmatprep.subr.bf16.mxu0 0
  %919 = vmatpush1.bf16.msra.mxu0 0
  %920 = vmatprep.subr.bf16.mxu0 0
  %921 = vmatpush1.bf16.msra.mxu0 0
  %922 = vmatprep.subr.bf16.mxu0 0
  %923 = vmatpush1.bf16.msra.mxu0 0
  %924 = vmatprep.subr.bf16.mxu0 0
  %925 = vmatpush1.bf16.msra.mxu0 0
  %926 = vmatprep.subr.bf16.mxu0 0
  %927 = vmatpush1.bf16.msra.mxu0 0
  %928 = vmatprep.subr.bf16.mxu0 0
  %929 = vmatpush1.bf16.msra.mxu0 0
  %930 = vmatprep.subr.bf16.mxu0 0
  %931 = vmatpush1.bf16.msra.mxu0 0
  %932 = vmatprep.subr.bf16.mxu0 0
  %933 = vmatpush1.bf16.msra.mxu0 0
  %934 = vmatprep.subr.bf16.mxu0 0
  %935 = vmatpush1.bf16.msra.mxu0 0
  %936 = vmatprep.mubr.bf16.mxu0 0
  %937 = vmatmul.mubr.bf16.gmra.mrb[0].mxu0 %v902
  %v938 = vpop.f32.mrb[0].mxu0
  %v939 = vadd.f32 0.0, %v938
  %v940 = vpop.f32.mrb[0].mxu0
  %v941 = vpop.f32.mrb[0].mxu0
  %v942 = vpop.f32.mrb[0].mxu0
  %943 = vdwg.mxu0
  %v944 = vadd.f32 %v882, %v939
  %v945 = vld [vmem:[#allocation3] sm:$0xff]
  %v946 = vsub.f32 0.0, %v944
  %v947 = vmul.f32 %v946, 1.442695
  %v948 = vpow.pop %v947
  %v949 = vadd.f32 %v948, 1.0
  %v950 = vrcp.pop %v949
  %v951 = vmul.f32 1.0, %v950
  %v952 = vtanh.pop %v944
  %954 = vrot.lane.b32.xlu0 %v945, 32
  %v955 = vpop.permute.xlu0 %954
  %v957 = vmul.f32 %v951, %v955
  %959 = vrot.lane.b32.xlu0 %v952, 64
  %v960 = vpop.permute.xlu0 %959
  %v962 = vmul.f32 %v951, %v960
  %964 = vrot.lane.b32.xlu0 %v962, 32
  %v965 = vpop.permute.xlu0 %964
  %v967 = vadd.f32 %v957, %v965
  %v968 = vtanh.pop %v967
  %970 = vrot.lane.b32.xlu0 %v968, 64
  %v971 = vpop.permute.xlu0 %970
  %v973 = vmul.f32 %v951, %v971
  %975 = vrot.lane.b32.xlu0 %v973, 32
  %v976 = vpop.permute.xlu0 %975
  %978 = vst.msk [vmem:[#allocation2] sm:$0xff] %vm49, %v976
  %980 = vrot.lane.b32.xlu0 %v967, 96
  %v981 = vpop.permute.xlu0 %980
  %983 = vst.msk [vmem:[#allocation3] sm:$0xff] %vm49, %v981
  %v984 = vld [vmem:[%s2] sm:$0xf]
  %v985 = vld [vmem:[%s2 + $0x4] sm:$0xf]
  %v986 = vld [vmem:[%s2 + $0x8] sm:$0xf]
  %v987 = vld [vmem:[%s2 + $0xc] sm:$0xf]
  %v988 = vld [vmem:[%s2 + $0x10] sm:$0xf]
  %v989 = vld [vmem:[%s2 + $0x14] sm:$0xf]
  %v990 = vld [vmem:[%s2 + $0x18] sm:$0xf]
  %v991 = vld [vmem:[%s2 + $0x1c] sm:$0xf]
  %v992 = vpack.c.bf16 %v973, %v973
  %v993 = vld [vmem:[%s142] sm:$0xff]
  %v994 = vpack.c.bf16 %v993, %v993
  %v999 = vunpack.c.l.b16 %v988
  %v1000 = vunpack.c.l.b16 %v989
  %v1001 = vunpack.c.l.b16 %v990
  %v1002 = vunpack.c.l.b16 %v991
  %v1003 = vpack.c.b16 %v1000, %v999
  %v1004 = vpack.c.b16 %v1002, %v1001
  %v1008 = vsel %vm49, %v994, 0
  %1010 = vmatprep.subr.bf16.mxu0 0
  %1011 = vmatpush1.bf16.msra.mxu0 %v1003
  %1012 = vmatprep.subr.bf16.mxu0 0
  %1013 = vmatpush1.bf16.msra.mxu0 %v1004
  %1014 = vmatprep.subr.bf16.mxu0 0
  %1015 = vmatpush1.bf16.msra.mxu0 0
  %1016 = vmatprep.subr.bf16.mxu0 0
  %1017 = vmatpush1.bf16.msra.mxu0 0
  %1018 = vmatprep.subr.bf16.mxu0 0
  %1019 = vmatpush1.bf16.msra.mxu0 0
  %1020 = vmatprep.subr.bf16.mxu0 0
  %1021 = vmatpush1.bf16.msra.mxu0 0
  %1022 = vmatprep.subr.bf16.mxu0 0
  %1023 = vmatpush1.bf16.msra.mxu0 0
  %1024 = vmatprep.subr.bf16.mxu0 0
  %1025 = vmatpush1.bf16.msra.mxu0 0
  %1026 = vmatprep.subr.bf16.mxu0 0
  %1027 = vmatpush1.bf16.msra.mxu0 0
  %1028 = vmatprep.subr.bf16.mxu0 0
  %1029 = vmatpush1.bf16.msra.mxu0 0
  %1030 = vmatprep.subr.bf16.mxu0 0
  %1031 = vmatpush1.bf16.msra.mxu0 0
  %1032 = vmatprep.subr.bf16.mxu0 0
  %1033 = vmatpush1.bf16.msra.mxu0 0
  %1034 = vmatprep.subr.bf16.mxu0 0
  %1035 = vmatpush1.bf16.msra.mxu0 0
  %1036 = vmatprep.subr.bf16.mxu0 0
  %1037 = vmatpush1.bf16.msra.mxu0 0
  %1038 = vmatprep.subr.bf16.mxu0 0
  %1039 = vmatpush1.bf16.msra.mxu0 0
  %1040 = vmatprep.subr.bf16.mxu0 0
  %1041 = vmatpush1.bf16.msra.mxu0 0
  %1042 = vmatprep.mubr.bf16.mxu0 0
  %1043 = vmatmul.mubr.bf16.gmra.mrb[0].mxu0 %v1008
  %v1044 = vpop.f32.mrb[0].mxu0
  %v1045 = vadd.f32 0.0, %v1044
  %v1046 = vpop.f32.mrb[0].mxu0
  %v1047 = vpop.f32.mrb[0].mxu0
  %v1048 = vpop.f32.mrb[0].mxu0
  %1049 = vdwg.mxu0
  %1051 = vrot.lane.b32.xlu0 %v992, 32
  %v1052 = vpop.permute.xlu0 %1051
  %v1057 = vunpack.c.l.b16 %v984
  %v1058 = vunpack.c.l.b16 %v985
  %v1059 = vunpack.c.l.b16 %v986
  %v1060 = vunpack.c.l.b16 %v987
  %v1061 = vpack.c.b16 %v1058, %v1057
  %v1062 = vpack.c.b16 %v1060, %v1059
  %v1066 = vsel %vm49, %v1052, 0
  %1068 = vmatprep.subr.bf16.mxu0 0
  %1069 = vmatpush1.bf16.msra.mxu0 %v1061
  %1070 = vmatprep.subr.bf16.mxu0 0
  %1071 = vmatpush1.bf16.msra.mxu0 %v1062
  %1072 = vmatprep.subr.bf16.mxu0 0
  %1073 = vmatpush1.bf16.msra.mxu0 0
  %1074 = vmatprep.subr.bf16.mxu0 0
  %1075 = vmatpush1.bf16.msra.mxu0 0
  %1076 = vmatprep.subr.bf16.mxu0 0
  %1077 = vmatpush1.bf16.msra.mxu0 0
  %1078 = vmatprep.subr.bf16.mxu0 0
  %1079 = vmatpush1.bf16.msra.mxu0 0
  %1080 = vmatprep.subr.bf16.mxu0 0
  %1081 = vmatpush1.bf16.msra.mxu0 0
  %1082 = vmatprep.subr.bf16.mxu0 0
  %1083 = vmatpush1.bf16.msra.mxu0 0
  %1084 = vmatprep.subr.bf16.mxu0 0
  %1085 = vmatpush1.bf16.msra.mxu0 0
  %1086 = vmatprep.subr.bf16.mxu0 0
  %1087 = vmatpush1.bf16.msra.mxu0 0
  %1088 = vmatprep.subr.bf16.mxu0 0
  %1089 = vmatpush1.bf16.msra.mxu0 0
  %1090 = vmatprep.subr.bf16.mxu0 0
  %1091 = vmatpush1.bf16.msra.mxu0 0
  %1092 = vmatprep.subr.bf16.mxu0 0
  %1093 = vmatpush1.bf16.msra.mxu0 0
  %1094 = vmatprep.subr.bf16.mxu0 0
  %1095 = vmatpush1.bf16.msra.mxu0 0
  %1096 = vmatprep.subr.bf16.mxu0 0
  %1097 = vmatpush1.bf16.msra.mxu0 0
  %1098 = vmatprep.subr.bf16.mxu0 0
  %1099 = vmatpush1.bf16.msra.mxu0 0
  %1100 = vmatprep.mubr.bf16.mxu0 0
  %1101 = vmatmul.mubr.bf16.gmra.mrb[0].mxu0 %v1066
  %v1102 = vpop.f32.mrb[0].mxu0
  %v1103 = vadd.f32 %v1045, %v1102
  %v1104 = vpop.f32.mrb[0].mxu0
  %v1105 = vpop.f32.mrb[0].mxu0
  %v1106 = vpop.f32.mrb[0].mxu0
  %1107 = vdwg.mxu0
  %v1108 = vld [vmem:[%s3] sm:$0x1]
  %v1110 = vlaneseq
  %v1111 = vshrl.u32 %v1110, 7
  %v1112 = vsub.s32 0, %v1111
  %v1113 = vrot.slane %v1108, %v1112
  %v1115 = vadd.f32 %v1103, %v1113
  %v1116 = vld [vmem:[%s266] sm:$0xff]
  %v1117 = vsub.f32 0.0, %v1115
  %v1118 = vmul.f32 %v1117, 1.442695
  %v1119 = vpow.pop %v1118
  %v1120 = vadd.f32 %v1119, 1.0
  %v1121 = vrcp.pop %v1120
  %v1122 = vmul.f32 1.0, %v1121
  %v1123 = vtanh.pop %v1115
  %1125 = vrot.lane.b32.xlu0 %v1116, 32
  %v1126 = vpop.permute.xlu0 %1125
  %v1128 = vmul.f32 %v1122, %v1126
  %1130 = vrot.lane.b32.xlu0 %v1123, 64
  %v1131 = vpop.permute.xlu0 %1130
  %v1133 = vmul.f32 %v1122, %v1131
  %1135 = vrot.lane.b32.xlu0 %v1133, 32
  %v1136 = vpop.permute.xlu0 %1135
  %v1138 = vadd.f32 %v1128, %v1136
  %v1139 = vtanh.pop %v1138
  %1141 = vrot.lane.b32.xlu0 %v1139, 64
  %v1142 = vpop.permute.xlu0 %1141
  %v1144 = vmul.f32 %v1122, %v1142
  %1146 = vrot.lane.b32.xlu0 %v1144, 32
  %v1147 = vpop.permute.xlu0 %1146
  %1149 = vst.msk [vmem:[%s142] sm:$0xff] %vm49, %v1147
  %1151 = vrot.lane.b32.xlu0 %v1138, 96
  %v1152 = vpop.permute.xlu0 %1151
  %1154 = vst.msk [vmem:[%s266] sm:$0xff] %vm49, %v1152
  %v1155 = vpack.c.bf16 %v1144, %v1144
  %v1157 = vunpack.c.l.b16 %v1155
  %v1158 = vpack.c.b16 %v1157, %v1157
  %1159 = vrot.lane.b32.xlu0 %v1158, 32
  %v1160 = vpop.permute.xlu0 %1159
  %s1162 = scalar_lea.vmem %s4, 12
  %1163 = vst.msk [vmem:[%s1162] sm:$0xf] %vm313, %v1160
  %s1164 = scalar_lea.vmem %s0, 32
  %v1165 = vld [vmem:[%s1164] sm:$0xff]
  %v1166 = vld [vmem:[#allocation2] sm:$0xff]
  %v1167 = vpack.c.bf16 %v1166, %v1166
  %v1168 = vld [vmem:[%s1] sm:$0xf]
  %v1169 = vld [vmem:[%s1 + $0x4] sm:$0xf]
  %v1170 = vld [vmem:[%s1 + $0x8] sm:$0xf]
  %v1171 = vld [vmem:[%s1 + $0xc] sm:$0xf]
  %v1176 = vunpack.c.l.b16 %v1168
  %v1177 = vunpack.c.l.b16 %v1169
  %v1178 = vunpack.c.l.b16 %v1170
  %v1179 = vunpack.c.l.b16 %v1171
  %v1180 = vpack.c.b16 %v1177, %v1176
  %v1181 = vpack.c.b16 %v1179, %v1178
  %v1185 = vsel %vm49, %v1167, 0
  %1187 = vmatprep.subr.bf16.mxu0 0
  %1188 = vmatpush1.bf16.msra.mxu0 %v1180
  %1189 = vmatprep.subr.bf16.mxu0 0
  %1190 = vmatpush1.bf16.msra.mxu0 %v1181
  %1191 = vmatprep.subr.bf16.mxu0 0
  %1192 = vmatpush1.bf16.msra.mxu0 0
  %1193 = vmatprep.subr.bf16.mxu0 0
  %1194 = vmatpush1.bf16.msra.mxu0 0
  %1195 = vmatprep.subr.bf16.mxu0 0
  %1196 = vmatpush1.bf16.msra.mxu0 0
  %1197 = vmatprep.subr.bf16.mxu0 0
  %1198 = vmatpush1.bf16.msra.mxu0 0
  %1199 = vmatprep.subr.bf16.mxu0 0
  %1200 = vmatpush1.bf16.msra.mxu0 0
  %1201 = vmatprep.subr.bf16.mxu0 0
  %1202 = vmatpush1.bf16.msra.mxu0 0
  %1203 = vmatprep.subr.bf16.mxu0 0
  %1204 = vmatpush1.bf16.msra.mxu0 0
  %1205 = vmatprep.subr.bf16.mxu0 0
  %1206 = vmatpush1.bf16.msra.mxu0 0
  %1207 = vmatprep.subr.bf16.mxu0 0
  %1208 = vmatpush1.bf16.msra.mxu0 0
  %1209 = vmatprep.subr.bf16.mxu0 0
  %1210 = vmatpush1.bf16.msra.mxu0 0
  %1211 = vmatprep.subr.bf16.mxu0 0
  %1212 = vmatpush1.bf16.msra.mxu0 0
  %1213 = vmatprep.subr.bf16.mxu0 0
  %1214 = vmatpush1.bf16.msra.mxu0 0
  %1215 = vmatprep.subr.bf16.mxu0 0
  %1216 = vmatpush1.bf16.msra.mxu0 0
  %1217 = vmatprep.subr.bf16.mxu0 0
  %1218 = vmatpush1.bf16.msra.mxu0 0
  %1219 = vmatprep.mubr.bf16.mxu0 0
  %1220 = vmatmul.mubr.bf16.gmra.mrb[0].mxu0 %v1185
  %v1221 = vpop.f32.mrb[0].mxu0
  %v1222 = vadd.f32 0.0, %v1221
  %v1223 = vpop.f32.mrb[0].mxu0
  %v1224 = vpop.f32.mrb[0].mxu0
  %v1225 = vpop.f32.mrb[0].mxu0
  %1226 = vdwg.mxu0
  %v1227 = vadd.f32 %v1165, %v1222
  %v1228 = vld [vmem:[#allocation3] sm:$0xff]
  %v1229 = vsub.f32 0.0, %v1227
  %v1230 = vmul.f32 %v1229, 1.442695
  %v1231 = vpow.pop %v1230
  %v1232 = vadd.f32 %v1231, 1.0
  %v1233 = vrcp.pop %v1232
  %v1234 = vmul.f32 1.0, %v1233
  %v1235 = vtanh.pop %v1227
  %1237 = vrot.lane.b32.xlu0 %v1228, 32
  %v1238 = vpop.permute.xlu0 %1237
  %v1240 = vmul.f32 %v1234, %v1238
  %1242 = vrot.lane.b32.xlu0 %v1235, 64
  %v1243 = vpop.permute.xlu0 %1242
  %v1245 = vmul.f32 %v1234, %v1243
  %1247 = vrot.lane.b32.xlu0 %v1245, 32
  %v1248 = vpop.permute.xlu0 %1247
  %v1250 = vadd.f32 %v1240, %v1248
  %v1251 = vtanh.pop %v1250
  %1253 = vrot.lane.b32.xlu0 %v1251, 64
  %v1254 = vpop.permute.xlu0 %1253
  %v1256 = vmul.f32 %v1234, %v1254
  %1258 = vrot.lane.b32.xlu0 %v1256, 32
  %v1259 = vpop.permute.xlu0 %1258
  %1261 = vst.msk [vmem:[#allocation2] sm:$0xff] %vm49, %v1259
  %1263 = vrot.lane.b32.xlu0 %v1250, 96
  %v1264 = vpop.permute.xlu0 %1263
  %1266 = vst.msk [vmem:[#allocation3] sm:$0xff] %vm49, %v1264
  %v1267 = vld [vmem:[%s2] sm:$0xf]
  %v1268 = vld [vmem:[%s2 + $0x4] sm:$0xf]
  %v1269 = vld [vmem:[%s2 + $0x8] sm:$0xf]
  %v1270 = vld [vmem:[%s2 + $0xc] sm:$0xf]
  %v1271 = vld [vmem:[%s2 + $0x10] sm:$0xf]
  %v1272 = vld [vmem:[%s2 + $0x14] sm:$0xf]
  %v1273 = vld [vmem:[%s2 + $0x18] sm:$0xf]
  %v1274 = vld [vmem:[%s2 + $0x1c] sm:$0xf]
  %v1275 = vpack.c.bf16 %v1256, %v1256
  %v1276 = vld [vmem:[%s142] sm:$0xff]
  %v1277 = vpack.c.bf16 %v1276, %v1276
  %v1282 = vunpack.c.l.b16 %v1271
  %v1283 = vunpack.c.l.b16 %v1272
  %v1284 = vunpack.c.l.b16 %v1273
  %v1285 = vunpack.c.l.b16 %v1274
  %v1286 = vpack.c.b16 %v1283, %v1282
  %v1287 = vpack.c.b16 %v1285, %v1284
  %v1291 = vsel %vm49, %v1277, 0
  %1293 = vmatprep.subr.bf16.mxu0 0
  %1294 = vmatpush1.bf16.msra.mxu0 %v1286
  %1295 = vmatprep.subr.bf16.mxu0 0
  %1296 = vmatpush1.bf16.msra.mxu0 %v1287
  %1297 = vmatprep.subr.bf16.mxu0 0
  %1298 = vmatpush1.bf16.msra.mxu0 0
  %1299 = vmatprep.subr.bf16.mxu0 0
  %1300 = vmatpush1.bf16.msra.mxu0 0
  %1301 = vmatprep.subr.bf16.mxu0 0
  %1302 = vmatpush1.bf16.msra.mxu0 0
  %1303 = vmatprep.subr.bf16.mxu0 0
  %1304 = vmatpush1.bf16.msra.mxu0 0
  %1305 = vmatprep.subr.bf16.mxu0 0
  %1306 = vmatpush1.bf16.msra.mxu0 0
  %1307 = vmatprep.subr.bf16.mxu0 0
  %1308 = vmatpush1.bf16.msra.mxu0 0
  %1309 = vmatprep.subr.bf16.mxu0 0
  %1310 = vmatpush1.bf16.msra.mxu0 0
  %1311 = vmatprep.subr.bf16.mxu0 0
  %1312 = vmatpush1.bf16.msra.mxu0 0
  %1313 = vmatprep.subr.bf16.mxu0 0
  %1314 = vmatpush1.bf16.msra.mxu0 0
  %1315 = vmatprep.subr.bf16.mxu0 0
  %1316 = vmatpush1.bf16.msra.mxu0 0
  %1317 = vmatprep.subr.bf16.mxu0 0
  %1318 = vmatpush1.bf16.msra.mxu0 0
  %1319 = vmatprep.subr.bf16.mxu0 0
  %1320 = vmatpush1.bf16.msra.mxu0 0
  %1321 = vmatprep.subr.bf16.mxu0 0
  %1322 = vmatpush1.bf16.msra.mxu0 0
  %1323 = vmatprep.subr.bf16.mxu0 0
  %1324 = vmatpush1.bf16.msra.mxu0 0
  %1325 = vmatprep.mubr.bf16.mxu0 0
  %1326 = vmatmul.mubr.bf16.gmra.mrb[0].mxu0 %v1291
  %v1327 = vpop.f32.mrb[0].mxu0
  %v1328 = vadd.f32 0.0, %v1327
  %v1329 = vpop.f32.mrb[0].mxu0
  %v1330 = vpop.f32.mrb[0].mxu0
  %v1331 = vpop.f32.mrb[0].mxu0
  %1332 = vdwg.mxu0
  %1334 = vrot.lane.b32.xlu0 %v1275, 32
  %v1335 = vpop.permute.xlu0 %1334
  %v1340 = vunpack.c.l.b16 %v1267
  %v1341 = vunpack.c.l.b16 %v1268
  %v1342 = vunpack.c.l.b16 %v1269
  %v1343 = vunpack.c.l.b16 %v1270
  %v1344 = vpack.c.b16 %v1341, %v1340
  %v1345 = vpack.c.b16 %v1343, %v1342
  %v1349 = vsel %vm49, %v1335, 0
  %1351 = vmatprep.subr.bf16.mxu0 0
  %1352 = vmatpush1.bf16.msra.mxu0 %v1344
  %1353 = vmatprep.subr.bf16.mxu0 0
  %1354 = vmatpush1.bf16.msra.mxu0 %v1345
  %1355 = vmatprep.subr.bf16.mxu0 0
  %1356 = vmatpush1.bf16.msra.mxu0 0
  %1357 = vmatprep.subr.bf16.mxu0 0
  %1358 = vmatpush1.bf16.msra.mxu0 0
  %1359 = vmatprep.subr.bf16.mxu0 0
  %1360 = vmatpush1.bf16.msra.mxu0 0
  %1361 = vmatprep.subr.bf16.mxu0 0
  %1362 = vmatpush1.bf16.msra.mxu0 0
  %1363 = vmatprep.subr.bf16.mxu0 0
  %1364 = vmatpush1.bf16.msra.mxu0 0
  %1365 = vmatprep.subr.bf16.mxu0 0
  %1366 = vmatpush1.bf16.msra.mxu0 0
  %1367 = vmatprep.subr.bf16.mxu0 0
  %1368 = vmatpush1.bf16.msra.mxu0 0
  %1369 = vmatprep.subr.bf16.mxu0 0
  %1370 = vmatpush1.bf16.msra.mxu0 0
  %1371 = vmatprep.subr.bf16.mxu0 0
  %1372 = vmatpush1.bf16.msra.mxu0 0
  %1373 = vmatprep.subr.bf16.mxu0 0
  %1374 = vmatpush1.bf16.msra.mxu0 0
  %1375 = vmatprep.subr.bf16.mxu0 0
  %1376 = vmatpush1.bf16.msra.mxu0 0
  %1377 = vmatprep.subr.bf16.mxu0 0
  %1378 = vmatpush1.bf16.msra.mxu0 0
  %1379 = vmatprep.subr.bf16.mxu0 0
  %1380 = vmatpush1.bf16.msra.mxu0 0
  %1381 = vmatprep.subr.bf16.mxu0 0
  %1382 = vmatpush1.bf16.msra.mxu0 0
  %1383 = vmatprep.mubr.bf16.mxu0 0
  %1384 = vmatmul.mubr.bf16.gmra.mrb[0].mxu0 %v1349
  %v1385 = vpop.f32.mrb[0].mxu0
  %v1386 = vadd.f32 %v1328, %v1385
  %v1387 = vpop.f32.mrb[0].mxu0
  %v1388 = vpop.f32.mrb[0].mxu0
  %v1389 = vpop.f32.mrb[0].mxu0
  %1390 = vdwg.mxu0
  %v1391 = vld [vmem:[%s3] sm:$0x1]
  %v1393 = vlaneseq
  %v1394 = vshrl.u32 %v1393, 7
  %v1395 = vsub.s32 0, %v1394
  %v1396 = vrot.slane %v1391, %v1395
  %v1398 = vadd.f32 %v1386, %v1396
  %v1399 = vld [vmem:[%s266] sm:$0xff]
  %v1400 = vsub.f32 0.0, %v1398
  %v1401 = vmul.f32 %v1400, 1.442695
  %v1402 = vpow.pop %v1401
  %v1403 = vadd.f32 %v1402, 1.0
  %v1404 = vrcp.pop %v1403
  %v1405 = vmul.f32 1.0, %v1404
  %v1406 = vtanh.pop %v1398
  %1408 = vrot.lane.b32.xlu0 %v1399, 32
  %v1409 = vpop.permute.xlu0 %1408
  %v1411 = vmul.f32 %v1405, %v1409
  %1413 = vrot.lane.b32.xlu0 %v1406, 64
  %v1414 = vpop.permute.xlu0 %1413
  %v1416 = vmul.f32 %v1405, %v1414
  %1418 = vrot.lane.b32.xlu0 %v1416, 32
  %v1419 = vpop.permute.xlu0 %1418
  %v1421 = vadd.f32 %v1411, %v1419
  %v1422 = vtanh.pop %v1421
  %1424 = vrot.lane.b32.xlu0 %v1422, 64
  %v1425 = vpop.permute.xlu0 %1424
  %v1427 = vmul.f32 %v1405, %v1425
  %1429 = vrot.lane.b32.xlu0 %v1427, 32
  %v1430 = vpop.permute.xlu0 %1429
  %1432 = vst.msk [vmem:[%s142] sm:$0xff] %vm49, %v1430
  %1434 = vrot.lane.b32.xlu0 %v1421, 96
  %v1435 = vpop.permute.xlu0 %1434
  %1437 = vst.msk [vmem:[%s266] sm:$0xff] %vm49, %v1435
  %v1438 = vpack.c.bf16 %v1427, %v1427
  %v1440 = vunpack.c.l.b16 %v1438
  %v1441 = vpack.c.b16 %v1440, %v1440
  %1442 = vrot.lane.b32.xlu0 %v1441, 32
  %v1443 = vpop.permute.xlu0 %1442
  %s1445 = scalar_lea.vmem %s4, 16
  %1446 = vst.msk [vmem:[%s1445] sm:$0xf] %vm313, %v1443
  %s1447 = scalar_lea.vmem %s0, 40
  %v1448 = vld [vmem:[%s1447] sm:$0xff]
  %v1449 = vld [vmem:[#allocation2] sm:$0xff]
  %v1450 = vpack.c.bf16 %v1449, %v1449
  %v1451 = vld [vmem:[%s1] sm:$0xf]
  %v1452 = vld [vmem:[%s1 + $0x4] sm:$0xf]
  %v1453 = vld [vmem:[%s1 + $0x8] sm:$0xf]
  %v1454 = vld [vmem:[%s1 + $0xc] sm:$0xf]
  %v1459 = vunpack.c.l.b16 %v1451
  %v1460 = vunpack.c.l.b16 %v1452
  %v1461 = vunpack.c.l.b16 %v1453
  %v1462 = vunpack.c.l.b16 %v1454
  %v1463 = vpack.c.b16 %v1460, %v1459
  %v1464 = vpack.c.b16 %v1462, %v1461
  %v1468 = vsel %vm49, %v1450, 0
  %1470 = vmatprep.subr.bf16.mxu0 0
  %1471 = vmatpush1.bf16.msra.mxu0 %v1463
  %1472 = vmatprep.subr.bf16.mxu0 0
  %1473 = vmatpush1.bf16.msra.mxu0 %v1464
  %1474 = vmatprep.subr.bf16.mxu0 0
  %1475 = vmatpush1.bf16.msra.mxu0 0
  %1476 = vmatprep.subr.bf16.mxu0 0
  %1477 = vmatpush1.bf16.msra.mxu0 0
  %1478 = vmatprep.subr.bf16.mxu0 0
  %1479 = vmatpush1.bf16.msra.mxu0 0
  %1480 = vmatprep.subr.bf16.mxu0 0
  %1481 = vmatpush1.bf16.msra.mxu0 0
  %1482 = vmatprep.subr.bf16.mxu0 0
  %1483 = vmatpush1.bf16.msra.mxu0 0
  %1484 = vmatprep.subr.bf16.mxu0 0
  %1485 = vmatpush1.bf16.msra.mxu0 0
  %1486 = vmatprep.subr.bf16.mxu0 0
  %1487 = vmatpush1.bf16.msra.mxu0 0
  %1488 = vmatprep.subr.bf16.mxu0 0
  %1489 = vmatpush1.bf16.msra.mxu0 0
  %1490 = vmatprep.subr.bf16.mxu0 0
  %1491 = vmatpush1.bf16.msra.mxu0 0
  %1492 = vmatprep.subr.bf16.mxu0 0
  %1493 = vmatpush1.bf16.msra.mxu0 0
  %1494 = vmatprep.subr.bf16.mxu0 0
  %1495 = vmatpush1.bf16.msra.mxu0 0
  %1496 = vmatprep.subr.bf16.mxu0 0
  %1497 = vmatpush1.bf16.msra.mxu0 0
  %1498 = vmatprep.subr.bf16.mxu0 0
  %1499 = vmatpush1.bf16.msra.mxu0 0
  %1500 = vmatprep.subr.bf16.mxu0 0
  %1501 = vmatpush1.bf16.msra.mxu0 0
  %1502 = vmatprep.mubr.bf16.mxu0 0
  %1503 = vmatmul.mubr.bf16.gmra.mrb[0].mxu0 %v1468
  %v1504 = vpop.f32.mrb[0].mxu0
  %v1505 = vadd.f32 0.0, %v1504
  %v1506 = vpop.f32.mrb[0].mxu0
  %v1507 = vpop.f32.mrb[0].mxu0
  %v1508 = vpop.f32.mrb[0].mxu0
  %1509 = vdwg.mxu0
  %v1510 = vadd.f32 %v1448, %v1505
  %v1511 = vld [vmem:[#allocation3] sm:$0xff]
  %v1512 = vsub.f32 0.0, %v1510
  %v1513 = vmul.f32 %v1512, 1.442695
  %v1514 = vpow.pop %v1513
  %v1515 = vadd.f32 %v1514, 1.0
  %v1516 = vrcp.pop %v1515
  %v1517 = vmul.f32 1.0, %v1516
  %v1518 = vtanh.pop %v1510
  %1520 = vrot.lane.b32.xlu0 %v1511, 32
  %v1521 = vpop.permute.xlu0 %1520
  %v1523 = vmul.f32 %v1517, %v1521
  %1525 = vrot.lane.b32.xlu0 %v1518, 64
  %v1526 = vpop.permute.xlu0 %1525
  %v1528 = vmul.f32 %v1517, %v1526
  %1530 = vrot.lane.b32.xlu0 %v1528, 32
  %v1531 = vpop.permute.xlu0 %1530
  %v1533 = vadd.f32 %v1523, %v1531
  %v1534 = vtanh.pop %v1533
  %1536 = vrot.lane.b32.xlu0 %v1534, 64
  %v1537 = vpop.permute.xlu0 %1536
  %v1539 = vmul.f32 %v1517, %v1537
  %1541 = vrot.lane.b32.xlu0 %v1539, 32
  %v1542 = vpop.permute.xlu0 %1541
  %1544 = vst.msk [vmem:[#allocation2] sm:$0xff] %vm49, %v1542
  %1546 = vrot.lane.b32.xlu0 %v1533, 96
  %v1547 = vpop.permute.xlu0 %1546
  %1549 = vst.msk [vmem:[#allocation3] sm:$0xff] %vm49, %v1547
  %v1550 = vld [vmem:[%s2] sm:$0xf]
  %v1551 = vld [vmem:[%s2 + $0x4] sm:$0xf]
  %v1552 = vld [vmem:[%s2 + $0x8] sm:$0xf]
  %v1553 = vld [vmem:[%s2 + $0xc] sm:$0xf]
  %v1554 = vld [vmem:[%s2 + $0x10] sm:$0xf]
  %v1555 = vld [vmem:[%s2 + $0x14] sm:$0xf]
  %v1556 = vld [vmem:[%s2 + $0x18] sm:$0xf]
  %v1557 = vld [vmem:[%s2 + $0x1c] sm:$0xf]
  %v1558 = vpack.c.bf16 %v1539, %v1539
  %v1559 = vld [vmem:[%s142] sm:$0xff]
  %v1560 = vpack.c.bf16 %v1559, %v1559
  %v1565 = vunpack.c.l.b16 %v1554
  %v1566 = vunpack.c.l.b16 %v1555
  %v1567 = vunpack.c.l.b16 %v1556
  %v1568 = vunpack.c.l.b16 %v1557
  %v1569 = vpack.c.b16 %v1566, %v1565
  %v1570 = vpack.c.b16 %v1568, %v1567
  %v1574 = vsel %vm49, %v1560, 0
  %1576 = vmatprep.subr.bf16.mxu0 0
  %1577 = vmatpush1.bf16.msra.mxu0 %v1569
  %1578 = vmatprep.subr.bf16.mxu0 0
  %1579 = vmatpush1.bf16.msra.mxu0 %v1570
  %1580 = vmatprep.subr.bf16.mxu0 0
  %1581 = vmatpush1.bf16.msra.mxu0 0
  %1582 = vmatprep.subr.bf16.mxu0 0
  %1583 = vmatpush1.bf16.msra.mxu0 0
  %1584 = vmatprep.subr.bf16.mxu0 0
  %1585 = vmatpush1.bf16.msra.mxu0 0
  %1586 = vmatprep.subr.bf16.mxu0 0
  %1587 = vmatpush1.bf16.msra.mxu0 0
  %1588 = vmatprep.subr.bf16.mxu0 0
  %1589 = vmatpush1.bf16.msra.mxu0 0
  %1590 = vmatprep.subr.bf16.mxu0 0
  %1591 = vmatpush1.bf16.msra.mxu0 0
  %1592 = vmatprep.subr.bf16.mxu0 0
  %1593 = vmatpush1.bf16.msra.mxu0 0
  %1594 = vmatprep.subr.bf16.mxu0 0
  %1595 = vmatpush1.bf16.msra.mxu0 0
  %1596 = vmatprep.subr.bf16.mxu0 0
  %1597 = vmatpush1.bf16.msra.mxu0 0
  %1598 = vmatprep.subr.bf16.mxu0 0
  %1599 = vmatpush1.bf16.msra.mxu0 0
  %1600 = vmatprep.subr.bf16.mxu0 0
  %1601 = vmatpush1.bf16.msra.mxu0 0
  %1602 = vmatprep.subr.bf16.mxu0 0
  %1603 = vmatpush1.bf16.msra.mxu0 0
  %1604 = vmatprep.subr.bf16.mxu0 0
  %1605 = vmatpush1.bf16.msra.mxu0 0
  %1606 = vmatprep.subr.bf16.mxu0 0
  %1607 = vmatpush1.bf16.msra.mxu0 0
  %1608 = vmatprep.mubr.bf16.mxu0 0
  %1609 = vmatmul.mubr.bf16.gmra.mrb[0].mxu0 %v1574
  %v1610 = vpop.f32.mrb[0].mxu0
  %v1611 = vadd.f32 0.0, %v1610
  %v1612 = vpop.f32.mrb[0].mxu0
  %v1613 = vpop.f32.mrb[0].mxu0
  %v1614 = vpop.f32.mrb[0].mxu0
  %1615 = vdwg.mxu0
  %1617 = vrot.lane.b32.xlu0 %v1558, 32
  %v1618 = vpop.permute.xlu0 %1617
  %v1623 = vunpack.c.l.b16 %v1550
  %v1624 = vunpack.c.l.b16 %v1551
  %v1625 = vunpack.c.l.b16 %v1552
  %v1626 = vunpack.c.l.b16 %v1553
  %v1627 = vpack.c.b16 %v1624, %v1623
  %v1628 = vpack.c.b16 %v1626, %v1625
  %v1632 = vsel %vm49, %v1618, 0
  %1634 = vmatprep.subr.bf16.mxu0 0
  %1635 = vmatpush1.bf16.msra.mxu0 %v1627
  %1636 = vmatprep.subr.bf16.mxu0 0
  %1637 = vmatpush1.bf16.msra.mxu0 %v1628
  %1638 = vmatprep.subr.bf16.mxu0 0
  %1639 = vmatpush1.bf16.msra.mxu0 0
  %1640 = vmatprep.subr.bf16.mxu0 0
  %1641 = vmatpush1.bf16.msra.mxu0 0
  %1642 = vmatprep.subr.bf16.mxu0 0
  %1643 = vmatpush1.bf16.msra.mxu0 0
  %1644 = vmatprep.subr.bf16.mxu0 0
  %1645 = vmatpush1.bf16.msra.mxu0 0
  %1646 = vmatprep.subr.bf16.mxu0 0
  %1647 = vmatpush1.bf16.msra.mxu0 0
  %1648 = vmatprep.subr.bf16.mxu0 0
  %1649 = vmatpush1.bf16.msra.mxu0 0
  %1650 = vmatprep.subr.bf16.mxu0 0
  %1651 = vmatpush1.bf16.msra.mxu0 0
  %1652 = vmatprep.subr.bf16.mxu0 0
  %1653 = vmatpush1.bf16.msra.mxu0 0
  %1654 = vmatprep.subr.bf16.mxu0 0
  %1655 = vmatpush1.bf16.msra.mxu0 0
  %1656 = vmatprep.subr.bf16.mxu0 0
  %1657 = vmatpush1.bf16.msra.mxu0 0
  %1658 = vmatprep.subr.bf16.mxu0 0
  %1659 = vmatpush1.bf16.msra.mxu0 0
  %1660 = vmatprep.subr.bf16.mxu0 0
  %1661 = vmatpush1.bf16.msra.mxu0 0
  %1662 = vmatprep.subr.bf16.mxu0 0
  %1663 = vmatpush1.bf16.msra.mxu0 0
  %1664 = vmatprep.subr.bf16.mxu0 0
  %1665 = vmatpush1.bf16.msra.mxu0 0
  %1666 = vmatprep.mubr.bf16.mxu0 0
  %1667 = vmatmul.mubr.bf16.gmra.mrb[0].mxu0 %v1632
  %v1668 = vpop.f32.mrb[0].mxu0
  %v1669 = vadd.f32 %v1611, %v1668
  %v1670 = vpop.f32.mrb[0].mxu0
  %v1671 = vpop.f32.mrb[0].mxu0
  %v1672 = vpop.f32.mrb[0].mxu0
  %1673 = vdwg.mxu0
  %v1674 = vld [vmem:[%s3] sm:$0x1]
  %v1676 = vlaneseq
  %v1677 = vshrl.u32 %v1676, 7
  %v1678 = vsub.s32 0, %v1677
  %v1679 = vrot.slane %v1674, %v1678
  %v1681 = vadd.f32 %v1669, %v1679
  %v1682 = vld [vmem:[%s266] sm:$0xff]
  %v1683 = vsub.f32 0.0, %v1681
  %v1684 = vmul.f32 %v1683, 1.442695
  %v1685 = vpow.pop %v1684
  %v1686 = vadd.f32 %v1685, 1.0
  %v1687 = vrcp.pop %v1686
  %v1688 = vmul.f32 1.0, %v1687
  %v1689 = vtanh.pop %v1681
  %1691 = vrot.lane.b32.xlu0 %v1682, 32
  %v1692 = vpop.permute.xlu0 %1691
  %v1694 = vmul.f32 %v1688, %v1692
  %1696 = vrot.lane.b32.xlu0 %v1689, 64
  %v1697 = vpop.permute.xlu0 %1696
  %v1699 = vmul.f32 %v1688, %v1697
  %1701 = vrot.lane.b32.xlu0 %v1699, 32
  %v1702 = vpop.permute.xlu0 %1701
  %v1704 = vadd.f32 %v1694, %v1702
  %v1705 = vtanh.pop %v1704
  %1707 = vrot.lane.b32.xlu0 %v1705, 64
  %v1708 = vpop.permute.xlu0 %1707
  %v1710 = vmul.f32 %v1688, %v1708
  %1712 = vrot.lane.b32.xlu0 %v1710, 32
  %v1713 = vpop.permute.xlu0 %1712
  %1715 = vst.msk [vmem:[%s142] sm:$0xff] %vm49, %v1713
  %1717 = vrot.lane.b32.xlu0 %v1704, 96
  %v1718 = vpop.permute.xlu0 %1717
  %1720 = vst.msk [vmem:[%s266] sm:$0xff] %vm49, %v1718
  %v1721 = vpack.c.bf16 %v1710, %v1710
  %v1723 = vunpack.c.l.b16 %v1721
  %v1724 = vpack.c.b16 %v1723, %v1723
  %1725 = vrot.lane.b32.xlu0 %v1724, 32
  %v1726 = vpop.permute.xlu0 %1725
  %s1728 = scalar_lea.vmem %s4, 20
  %1729 = vst.msk [vmem:[%s1728] sm:$0xf] %vm313, %v1726
  %s1730 = scalar_lea.vmem %s0, 48
  %v1731 = vld [vmem:[%s1730] sm:$0xff]
  %v1732 = vld [vmem:[#allocation2] sm:$0xff]
  %v1733 = vpack.c.bf16 %v1732, %v1732
  %v1734 = vld [vmem:[%s1] sm:$0xf]
  %v1735 = vld [vmem:[%s1 + $0x4] sm:$0xf]
  %v1736 = vld [vmem:[%s1 + $0x8] sm:$0xf]
  %v1737 = vld [vmem:[%s1 + $0xc] sm:$0xf]
  %v1742 = vunpack.c.l.b16 %v1734
  %v1743 = vunpack.c.l.b16 %v1735
  %v1744 = vunpack.c.l.b16 %v1736
  %v1745 = vunpack.c.l.b16 %v1737
  %v1746 = vpack.c.b16 %v1743, %v1742
  %v1747 = vpack.c.b16 %v1745, %v1744
  %v1751 = vsel %vm49, %v1733, 0
  %1753 = vmatprep.subr.bf16.mxu0 0
  %1754 = vmatpush1.bf16.msra.mxu0 %v1746
  %1755 = vmatprep.subr.bf16.mxu0 0
  %1756 = vmatpush1.bf16.msra.mxu0 %v1747
  %1757 = vmatprep.subr.bf16.mxu0 0
  %1758 = vmatpush1.bf16.msra.mxu0 0
  %1759 = vmatprep.subr.bf16.mxu0 0
  %1760 = vmatpush1.bf16.msra.mxu0 0
  %1761 = vmatprep.subr.bf16.mxu0 0
  %1762 = vmatpush1.bf16.msra.mxu0 0
  %1763 = vmatprep.subr.bf16.mxu0 0
  %1764 = vmatpush1.bf16.msra.mxu0 0
  %1765 = vmatprep.subr.bf16.mxu0 0
  %1766 = vmatpush1.bf16.msra.mxu0 0
  %1767 = vmatprep.subr.bf16.mxu0 0
  %1768 = vmatpush1.bf16.msra.mxu0 0
  %1769 = vmatprep.subr.bf16.mxu0 0
  %1770 = vmatpush1.bf16.msra.mxu0 0
  %1771 = vmatprep.subr.bf16.mxu0 0
  %1772 = vmatpush1.bf16.msra.mxu0 0
  %1773 = vmatprep.subr.bf16.mxu0 0
  %1774 = vmatpush1.bf16.msra.mxu0 0
  %1775 = vmatprep.subr.bf16.mxu0 0
  %1776 = vmatpush1.bf16.msra.mxu0 0
  %1777 = vmatprep.subr.bf16.mxu0 0
  %1778 = vmatpush1.bf16.msra.mxu0 0
  %1779 = vmatprep.subr.bf16.mxu0 0
  %1780 = vmatpush1.bf16.msra.mxu0 0
  %1781 = vmatprep.subr.bf16.mxu0 0
  %1782 = vmatpush1.bf16.msra.mxu0 0
  %1783 = vmatprep.subr.bf16.mxu0 0
  %1784 = vmatpush1.bf16.msra.mxu0 0
  %1785 = vmatprep.mubr.bf16.mxu0 0
  %1786 = vmatmul.mubr.bf16.gmra.mrb[0].mxu0 %v1751
  %v1787 = vpop.f32.mrb[0].mxu0
  %v1788 = vadd.f32 0.0, %v1787
  %v1789 = vpop.f32.mrb[0].mxu0
  %v1790 = vpop.f32.mrb[0].mxu0
  %v1791 = vpop.f32.mrb[0].mxu0
  %1792 = vdwg.mxu0
  %v1793 = vadd.f32 %v1731, %v1788
  %v1794 = vld [vmem:[#allocation3] sm:$0xff]
  %v1795 = vsub.f32 0.0, %v1793
  %v1796 = vmul.f32 %v1795, 1.442695
  %v1797 = vpow.pop %v1796
  %v1798 = vadd.f32 %v1797, 1.0
  %v1799 = vrcp.pop %v1798
  %v1800 = vmul.f32 1.0, %v1799
  %v1801 = vtanh.pop %v1793
  %1803 = vrot.lane.b32.xlu0 %v1794, 32
  %v1804 = vpop.permute.xlu0 %1803
  %v1806 = vmul.f32 %v1800, %v1804
  %1808 = vrot.lane.b32.xlu0 %v1801, 64
  %v1809 = vpop.permute.xlu0 %1808
  %v1811 = vmul.f32 %v1800, %v1809
  %1813 = vrot.lane.b32.xlu0 %v1811, 32
  %v1814 = vpop.permute.xlu0 %1813
  %v1816 = vadd.f32 %v1806, %v1814
  %v1817 = vtanh.pop %v1816
  %1819 = vrot.lane.b32.xlu0 %v1817, 64
  %v1820 = vpop.permute.xlu0 %1819
  %v1822 = vmul.f32 %v1800, %v1820
  %1824 = vrot.lane.b32.xlu0 %v1822, 32
  %v1825 = vpop.permute.xlu0 %1824
  %1827 = vst.msk [vmem:[#allocation2] sm:$0xff] %vm49, %v1825
  %1829 = vrot.lane.b32.xlu0 %v1816, 96
  %v1830 = vpop.permute.xlu0 %1829
  %1832 = vst.msk [vmem:[#allocation3] sm:$0xff] %vm49, %v1830
  %v1833 = vld [vmem:[%s2] sm:$0xf]
  %v1834 = vld [vmem:[%s2 + $0x4] sm:$0xf]
  %v1835 = vld [vmem:[%s2 + $0x8] sm:$0xf]
  %v1836 = vld [vmem:[%s2 + $0xc] sm:$0xf]
  %v1837 = vld [vmem:[%s2 + $0x10] sm:$0xf]
  %v1838 = vld [vmem:[%s2 + $0x14] sm:$0xf]
  %v1839 = vld [vmem:[%s2 + $0x18] sm:$0xf]
  %v1840 = vld [vmem:[%s2 + $0x1c] sm:$0xf]
  %v1841 = vpack.c.bf16 %v1822, %v1822
  %v1842 = vld [vmem:[%s142] sm:$0xff]
  %v1843 = vpack.c.bf16 %v1842, %v1842
  %v1848 = vunpack.c.l.b16 %v1837
  %v1849 = vunpack.c.l.b16 %v1838
  %v1850 = vunpack.c.l.b16 %v1839
  %v1851 = vunpack.c.l.b16 %v1840
  %v1852 = vpack.c.b16 %v1849, %v1848
  %v1853 = vpack.c.b16 %v1851, %v1850
  %v1857 = vsel %vm49, %v1843, 0
  %1859 = vmatprep.subr.bf16.mxu0 0
  %1860 = vmatpush1.bf16.msra.mxu0 %v1852
  %1861 = vmatprep.subr.bf16.mxu0 0
  %1862 = vmatpush1.bf16.msra.mxu0 %v1853
  %1863 = vmatprep.subr.bf16.mxu0 0
  %1864 = vmatpush1.bf16.msra.mxu0 0
  %1865 = vmatprep.subr.bf16.mxu0 0
  %1866 = vmatpush1.bf16.msra.mxu0 0
  %1867 = vmatprep.subr.bf16.mxu0 0
  %1868 = vmatpush1.bf16.msra.mxu0 0
  %1869 = vmatprep.subr.bf16.mxu0 0
  %1870 = vmatpush1.bf16.msra.mxu0 0
  %1871 = vmatprep.subr.bf16.mxu0 0
  %1872 = vmatpush1.bf16.msra.mxu0 0
  %1873 = vmatprep.subr.bf16.mxu0 0
  %1874 = vmatpush1.bf16.msra.mxu0 0
  %1875 = vmatprep.subr.bf16.mxu0 0
  %1876 = vmatpush1.bf16.msra.mxu0 0
  %1877 = vmatprep.subr.bf16.mxu0 0
  %1878 = vmatpush1.bf16.msra.mxu0 0
  %1879 = vmatprep.subr.bf16.mxu0 0
  %1880 = vmatpush1.bf16.msra.mxu0 0
  %1881 = vmatprep.subr.bf16.mxu0 0
  %1882 = vmatpush1.bf16.msra.mxu0 0
  %1883 = vmatprep.subr.bf16.mxu0 0
  %1884 = vmatpush1.bf16.msra.mxu0 0
  %1885 = vmatprep.subr.bf16.mxu0 0
  %1886 = vmatpush1.bf16.msra.mxu0 0
  %1887 = vmatprep.subr.bf16.mxu0 0
  %1888 = vmatpush1.bf16.msra.mxu0 0
  %1889 = vmatprep.subr.bf16.mxu0 0
  %1890 = vmatpush1.bf16.msra.mxu0 0
  %1891 = vmatprep.mubr.bf16.mxu0 0
  %1892 = vmatmul.mubr.bf16.gmra.mrb[0].mxu0 %v1857
  %v1893 = vpop.f32.mrb[0].mxu0
  %v1894 = vadd.f32 0.0, %v1893
  %v1895 = vpop.f32.mrb[0].mxu0
  %v1896 = vpop.f32.mrb[0].mxu0
  %v1897 = vpop.f32.mrb[0].mxu0
  %1898 = vdwg.mxu0
  %1900 = vrot.lane.b32.xlu0 %v1841, 32
  %v1901 = vpop.permute.xlu0 %1900
  %v1906 = vunpack.c.l.b16 %v1833
  %v1907 = vunpack.c.l.b16 %v1834
  %v1908 = vunpack.c.l.b16 %v1835
  %v1909 = vunpack.c.l.b16 %v1836
  %v1910 = vpack.c.b16 %v1907, %v1906
  %v1911 = vpack.c.b16 %v1909, %v1908
  %v1915 = vsel %vm49, %v1901, 0
  %1917 = vmatprep.subr.bf16.mxu0 0
  %1918 = vmatpush1.bf16.msra.mxu0 %v1910
  %1919 = vmatprep.subr.bf16.mxu0 0
  %1920 = vmatpush1.bf16.msra.mxu0 %v1911
  %1921 = vmatprep.subr.bf16.mxu0 0
  %1922 = vmatpush1.bf16.msra.mxu0 0
  %1923 = vmatprep.subr.bf16.mxu0 0
  %1924 = vmatpush1.bf16.msra.mxu0 0
  %1925 = vmatprep.subr.bf16.mxu0 0
  %1926 = vmatpush1.bf16.msra.mxu0 0
  %1927 = vmatprep.subr.bf16.mxu0 0
  %1928 = vmatpush1.bf16.msra.mxu0 0
  %1929 = vmatprep.subr.bf16.mxu0 0
  %1930 = vmatpush1.bf16.msra.mxu0 0
  %1931 = vmatprep.subr.bf16.mxu0 0
  %1932 = vmatpush1.bf16.msra.mxu0 0
  %1933 = vmatprep.subr.bf16.mxu0 0
  %1934 = vmatpush1.bf16.msra.mxu0 0
  %1935 = vmatprep.subr.bf16.mxu0 0
  %1936 = vmatpush1.bf16.msra.mxu0 0
  %1937 = vmatprep.subr.bf16.mxu0 0
  %1938 = vmatpush1.bf16.msra.mxu0 0
  %1939 = vmatprep.subr.bf16.mxu0 0
  %1940 = vmatpush1.bf16.msra.mxu0 0
  %1941 = vmatprep.subr.bf16.mxu0 0
  %1942 = vmatpush1.bf16.msra.mxu0 0
  %1943 = vmatprep.subr.bf16.mxu0 0
  %1944 = vmatpush1.bf16.msra.mxu0 0
  %1945 = vmatprep.subr.bf16.mxu0 0
  %1946 = vmatpush1.bf16.msra.mxu0 0
  %1947 = vmatprep.subr.bf16.mxu0 0
  %1948 = vmatpush1.bf16.msra.mxu0 0
  %1949 = vmatprep.mubr.bf16.mxu0 0
  %1950 = vmatmul.mubr.bf16.gmra.mrb[0].mxu0 %v1915
  %v1951 = vpop.f32.mrb[0].mxu0
  %v1952 = vadd.f32 %v1894, %v1951
  %v1953 = vpop.f32.mrb[0].mxu0
  %v1954 = vpop.f32.mrb[0].mxu0
  %v1955 = vpop.f32.mrb[0].mxu0
  %1956 = vdwg.mxu0
  %v1957 = vld [vmem:[%s3] sm:$0x1]
  %v1959 = vlaneseq
  %v1960 = vshrl.u32 %v1959, 7
  %v1961 = vsub.s32 0, %v1960
  %v1962 = vrot.slane %v1957, %v1961
  %v1964 = vadd.f32 %v1952, %v1962
  %v1965 = vld [vmem:[%s266] sm:$0xff]
  %v1966 = vsub.f32 0.0, %v1964
  %v1967 = vmul.f32 %v1966, 1.442695
  %v1968 = vpow.pop %v1967
  %v1969 = vadd.f32 %v1968, 1.0
  %v1970 = vrcp.pop %v1969
  %v1971 = vmul.f32 1.0, %v1970
  %v1972 = vtanh.pop %v1964
  %1974 = vrot.lane.b32.xlu0 %v1965, 32
  %v1975 = vpop.permute.xlu0 %1974
  %v1977 = vmul.f32 %v1971, %v1975
  %1979 = vrot.lane.b32.xlu0 %v1972, 64
  %v1980 = vpop.permute.xlu0 %1979
  %v1982 = vmul.f32 %v1971, %v1980
  %1984 = vrot.lane.b32.xlu0 %v1982, 32
  %v1985 = vpop.permute.xlu0 %1984
  %v1987 = vadd.f32 %v1977, %v1985
  %v1988 = vtanh.pop %v1987
  %1990 = vrot.lane.b32.xlu0 %v1988, 64
  %v1991 = vpop.permute.xlu0 %1990
  %v1993 = vmul.f32 %v1971, %v1991
  %1995 = vrot.lane.b32.xlu0 %v1993, 32
  %v1996 = vpop.permute.xlu0 %1995
  %1998 = vst.msk [vmem:[%s142] sm:$0xff] %vm49, %v1996
  %2000 = vrot.lane.b32.xlu0 %v1987, 96
  %v2001 = vpop.permute.xlu0 %2000
  %2003 = vst.msk [vmem:[%s266] sm:$0xff] %vm49, %v2001
  %v2004 = vpack.c.bf16 %v1993, %v1993
  %v2006 = vunpack.c.l.b16 %v2004
  %v2007 = vpack.c.b16 %v2006, %v2006
  %2008 = vrot.lane.b32.xlu0 %v2007, 32
  %v2009 = vpop.permute.xlu0 %2008
  %s2011 = scalar_lea.vmem %s4, 24
  %2012 = vst.msk [vmem:[%s2011] sm:$0xf] %vm313, %v2009
  %s2013 = scalar_lea.vmem %s0, 56
  %v2014 = vld [vmem:[%s2013] sm:$0xff]
  %v2015 = vld [vmem:[#allocation2] sm:$0xff]
  %v2016 = vpack.c.bf16 %v2015, %v2015
  %v2017 = vld [vmem:[%s1] sm:$0xf]
  %v2018 = vld [vmem:[%s1 + $0x4] sm:$0xf]
  %v2019 = vld [vmem:[%s1 + $0x8] sm:$0xf]
  %v2020 = vld [vmem:[%s1 + $0xc] sm:$0xf]
  %v2025 = vunpack.c.l.b16 %v2017
  %v2026 = vunpack.c.l.b16 %v2018
  %v2027 = vunpack.c.l.b16 %v2019
  %v2028 = vunpack.c.l.b16 %v2020
  %v2029 = vpack.c.b16 %v2026, %v2025
  %v2030 = vpack.c.b16 %v2028, %v2027
  %v2034 = vsel %vm49, %v2016, 0
  %2036 = vmatprep.subr.bf16.mxu0 0
  %2037 = vmatpush1.bf16.msra.mxu0 %v2029
  %2038 = vmatprep.subr.bf16.mxu0 0
  %2039 = vmatpush1.bf16.msra.mxu0 %v2030
  %2040 = vmatprep.subr.bf16.mxu0 0
  %2041 = vmatpush1.bf16.msra.mxu0 0
  %2042 = vmatprep.subr.bf16.mxu0 0
  %2043 = vmatpush1.bf16.msra.mxu0 0
  %2044 = vmatprep.subr.bf16.mxu0 0
  %2045 = vmatpush1.bf16.msra.mxu0 0
  %2046 = vmatprep.subr.bf16.mxu0 0
  %2047 = vmatpush1.bf16.msra.mxu0 0
  %2048 = vmatprep.subr.bf16.mxu0 0
  %2049 = vmatpush1.bf16.msra.mxu0 0
  %2050 = vmatprep.subr.bf16.mxu0 0
  %2051 = vmatpush1.bf16.msra.mxu0 0
  %2052 = vmatprep.subr.bf16.mxu0 0
  %2053 = vmatpush1.bf16.msra.mxu0 0
  %2054 = vmatprep.subr.bf16.mxu0 0
  %2055 = vmatpush1.bf16.msra.mxu0 0
  %2056 = vmatprep.subr.bf16.mxu0 0
  %2057 = vmatpush1.bf16.msra.mxu0 0
  %2058 = vmatprep.subr.bf16.mxu0 0
  %2059 = vmatpush1.bf16.msra.mxu0 0
  %2060 = vmatprep.subr.bf16.mxu0 0
  %2061 = vmatpush1.bf16.msra.mxu0 0
  %2062 = vmatprep.subr.bf16.mxu0 0
  %2063 = vmatpush1.bf16.msra.mxu0 0
  %2064 = vmatprep.subr.bf16.mxu0 0
  %2065 = vmatpush1.bf16.msra.mxu0 0
  %2066 = vmatprep.subr.bf16.mxu0 0
  %2067 = vmatpush1.bf16.msra.mxu0 0
  %2068 = vmatprep.mubr.bf16.mxu0 0
  %2069 = vmatmul.mubr.bf16.gmra.mrb[0].mxu0 %v2034
  %v2070 = vpop.f32.mrb[0].mxu0
  %v2071 = vadd.f32 0.0, %v2070
  %v2072 = vpop.f32.mrb[0].mxu0
  %v2073 = vpop.f32.mrb[0].mxu0
  %v2074 = vpop.f32.mrb[0].mxu0
  %2075 = vdwg.mxu0
  %v2076 = vadd.f32 %v2014, %v2071
  %v2077 = vld [vmem:[#allocation3] sm:$0xff]
  %v2078 = vsub.f32 0.0, %v2076
  %v2079 = vmul.f32 %v2078, 1.442695
  %v2080 = vpow.pop %v2079
  %v2081 = vadd.f32 %v2080, 1.0
  %v2082 = vrcp.pop %v2081
  %v2083 = vmul.f32 1.0, %v2082
  %v2084 = vtanh.pop %v2076
  %2086 = vrot.lane.b32.xlu0 %v2077, 32
  %v2087 = vpop.permute.xlu0 %2086
  %v2089 = vmul.f32 %v2083, %v2087
  %2091 = vrot.lane.b32.xlu0 %v2084, 64
  %v2092 = vpop.permute.xlu0 %2091
  %v2094 = vmul.f32 %v2083, %v2092
  %2096 = vrot.lane.b32.xlu0 %v2094, 32
  %v2097 = vpop.permute.xlu0 %2096
  %v2099 = vadd.f32 %v2089, %v2097
  %v2100 = vtanh.pop %v2099
  %2102 = vrot.lane.b32.xlu0 %v2100, 64
  %v2103 = vpop.permute.xlu0 %2102
  %v2105 = vmul.f32 %v2083, %v2103
  %2107 = vrot.lane.b32.xlu0 %v2105, 32
  %v2108 = vpop.permute.xlu0 %2107
  %2110 = vst.msk [vmem:[#allocation2] sm:$0xff] %vm49, %v2108
  %2112 = vrot.lane.b32.xlu0 %v2099, 96
  %v2113 = vpop.permute.xlu0 %2112
  %2115 = vst.msk [vmem:[#allocation3] sm:$0xff] %vm49, %v2113
  %v2116 = vld [vmem:[%s2] sm:$0xf]
  %v2117 = vld [vmem:[%s2 + $0x4] sm:$0xf]
  %v2118 = vld [vmem:[%s2 + $0x8] sm:$0xf]
  %v2119 = vld [vmem:[%s2 + $0xc] sm:$0xf]
  %v2120 = vld [vmem:[%s2 + $0x10] sm:$0xf]
  %v2121 = vld [vmem:[%s2 + $0x14] sm:$0xf]
  %v2122 = vld [vmem:[%s2 + $0x18] sm:$0xf]
  %v2123 = vld [vmem:[%s2 + $0x1c] sm:$0xf]
  %v2124 = vpack.c.bf16 %v2105, %v2105
  %v2125 = vld [vmem:[%s142] sm:$0xff]
  %v2126 = vpack.c.bf16 %v2125, %v2125
  %v2131 = vunpack.c.l.b16 %v2120
  %v2132 = vunpack.c.l.b16 %v2121
  %v2133 = vunpack.c.l.b16 %v2122
  %v2134 = vunpack.c.l.b16 %v2123
  %v2135 = vpack.c.b16 %v2132, %v2131
  %v2136 = vpack.c.b16 %v2134, %v2133
  %v2140 = vsel %vm49, %v2126, 0
  %2142 = vmatprep.subr.bf16.mxu0 0
  %2143 = vmatpush1.bf16.msra.mxu0 %v2135
  %2144 = vmatprep.subr.bf16.mxu0 0
  %2145 = vmatpush1.bf16.msra.mxu0 %v2136
  %2146 = vmatprep.subr.bf16.mxu0 0
  %2147 = vmatpush1.bf16.msra.mxu0 0
  %2148 = vmatprep.subr.bf16.mxu0 0
  %2149 = vmatpush1.bf16.msra.mxu0 0
  %2150 = vmatprep.subr.bf16.mxu0 0
  %2151 = vmatpush1.bf16.msra.mxu0 0
  %2152 = vmatprep.subr.bf16.mxu0 0
  %2153 = vmatpush1.bf16.msra.mxu0 0
  %2154 = vmatprep.subr.bf16.mxu0 0
  %2155 = vmatpush1.bf16.msra.mxu0 0
  %2156 = vmatprep.subr.bf16.mxu0 0
  %2157 = vmatpush1.bf16.msra.mxu0 0
  %2158 = vmatprep.subr.bf16.mxu0 0
  %2159 = vmatpush1.bf16.msra.mxu0 0
  %2160 = vmatprep.subr.bf16.mxu0 0
  %2161 = vmatpush1.bf16.msra.mxu0 0
  %2162 = vmatprep.subr.bf16.mxu0 0
  %2163 = vmatpush1.bf16.msra.mxu0 0
  %2164 = vmatprep.subr.bf16.mxu0 0
  %2165 = vmatpush1.bf16.msra.mxu0 0
  %2166 = vmatprep.subr.bf16.mxu0 0
  %2167 = vmatpush1.bf16.msra.mxu0 0
  %2168 = vmatprep.subr.bf16.mxu0 0
  %2169 = vmatpush1.bf16.msra.mxu0 0
  %2170 = vmatprep.subr.bf16.mxu0 0
  %2171 = vmatpush1.bf16.msra.mxu0 0
  %2172 = vmatprep.subr.bf16.mxu0 0
  %2173 = vmatpush1.bf16.msra.mxu0 0
  %2174 = vmatprep.mubr.bf16.mxu0 0
  %2175 = vmatmul.mubr.bf16.gmra.mrb[0].mxu0 %v2140
  %v2176 = vpop.f32.mrb[0].mxu0
  %v2177 = vadd.f32 0.0, %v2176
  %v2178 = vpop.f32.mrb[0].mxu0
  %v2179 = vpop.f32.mrb[0].mxu0
  %v2180 = vpop.f32.mrb[0].mxu0
  %2181 = vdwg.mxu0
  %2183 = vrot.lane.b32.xlu0 %v2124, 32
  %v2184 = vpop.permute.xlu0 %2183
  %v2189 = vunpack.c.l.b16 %v2116
  %v2190 = vunpack.c.l.b16 %v2117
  %v2191 = vunpack.c.l.b16 %v2118
  %v2192 = vunpack.c.l.b16 %v2119
  %v2193 = vpack.c.b16 %v2190, %v2189
  %v2194 = vpack.c.b16 %v2192, %v2191
  %v2198 = vsel %vm49, %v2184, 0
  %2200 = vmatprep.subr.bf16.mxu0 0
  %2201 = vmatpush1.bf16.msra.mxu0 %v2193
  %2202 = vmatprep.subr.bf16.mxu0 0
  %2203 = vmatpush1.bf16.msra.mxu0 %v2194
  %2204 = vmatprep.subr.bf16.mxu0 0
  %2205 = vmatpush1.bf16.msra.mxu0 0
  %2206 = vmatprep.subr.bf16.mxu0 0
  %2207 = vmatpush1.bf16.msra.mxu0 0
  %2208 = vmatprep.subr.bf16.mxu0 0
  %2209 = vmatpush1.bf16.msra.mxu0 0
  %2210 = vmatprep.subr.bf16.mxu0 0
  %2211 = vmatpush1.bf16.msra.mxu0 0
  %2212 = vmatprep.subr.bf16.mxu0 0
  %2213 = vmatpush1.bf16.msra.mxu0 0
  %2214 = vmatprep.subr.bf16.mxu0 0
  %2215 = vmatpush1.bf16.msra.mxu0 0
  %2216 = vmatprep.subr.bf16.mxu0 0
  %2217 = vmatpush1.bf16.msra.mxu0 0
  %2218 = vmatprep.subr.bf16.mxu0 0
  %2219 = vmatpush1.bf16.msra.mxu0 0
  %2220 = vmatprep.subr.bf16.mxu0 0
  %2221 = vmatpush1.bf16.msra.mxu0 0
  %2222 = vmatprep.subr.bf16.mxu0 0
  %2223 = vmatpush1.bf16.msra.mxu0 0
  %2224 = vmatprep.subr.bf16.mxu0 0
  %2225 = vmatpush1.bf16.msra.mxu0 0
  %2226 = vmatprep.subr.bf16.mxu0 0
  %2227 = vmatpush1.bf16.msra.mxu0 0
  %2228 = vmatprep.subr.bf16.mxu0 0
  %2229 = vmatpush1.bf16.msra.mxu0 0
  %2230 = vmatprep.subr.bf16.mxu0 0
  %2231 = vmatpush1.bf16.msra.mxu0 0
  %2232 = vmatprep.mubr.bf16.mxu0 0
  %2233 = vmatmul.mubr.bf16.gmra.mrb[0].mxu0 %v2198
  %v2234 = vpop.f32.mrb[0].mxu0
  %v2235 = vadd.f32 %v2177, %v2234
  %v2236 = vpop.f32.mrb[0].mxu0
  %v2237 = vpop.f32.mrb[0].mxu0
  %v2238 = vpop.f32.mrb[0].mxu0
  %2239 = vdwg.mxu0
  %v2240 = vld [vmem:[%s3] sm:$0x1]
  %v2242 = vlaneseq
  %v2243 = vshrl.u32 %v2242, 7
  %v2244 = vsub.s32 0, %v2243
  %v2245 = vrot.slane %v2240, %v2244
  %v2247 = vadd.f32 %v2235, %v2245
  %v2248 = vld [vmem:[%s266] sm:$0xff]
  %v2249 = vsub.f32 0.0, %v2247
  %v2250 = vmul.f32 %v2249, 1.442695
  %v2251 = vpow.pop %v2250
  %v2252 = vadd.f32 %v2251, 1.0
  %v2253 = vrcp.pop %v2252
  %v2254 = vmul.f32 1.0, %v2253
  %v2255 = vtanh.pop %v2247
  %2257 = vrot.lane.b32.xlu0 %v2248, 32
  %v2258 = vpop.permute.xlu0 %2257
  %v2260 = vmul.f32 %v2254, %v2258
  %2262 = vrot.lane.b32.xlu0 %v2255, 64
  %v2263 = vpop.permute.xlu0 %2262
  %v2265 = vmul.f32 %v2254, %v2263
  %2267 = vrot.lane.b32.xlu0 %v2265, 32
  %v2268 = vpop.permute.xlu0 %2267
  %v2270 = vadd.f32 %v2260, %v2268
  %v2271 = vtanh.pop %v2270
  %2273 = vrot.lane.b32.xlu0 %v2271, 64
  %v2274 = vpop.permute.xlu0 %2273
  %v2276 = vmul.f32 %v2254, %v2274
  %2278 = vrot.lane.b32.xlu0 %v2276, 32
  %v2279 = vpop.permute.xlu0 %2278
  %2281 = vst.msk [vmem:[%s142] sm:$0xff] %vm49, %v2279
  %2283 = vrot.lane.b32.xlu0 %v2270, 96
  %v2284 = vpop.permute.xlu0 %2283
  %2286 = vst.msk [vmem:[%s266] sm:$0xff] %vm49, %v2284
  %v2287 = vpack.c.bf16 %v2276, %v2276
  %v2289 = vunpack.c.l.b16 %v2287
  %v2290 = vpack.c.b16 %v2289, %v2289
  %2291 = vrot.lane.b32.xlu0 %v2290, 32
  %v2292 = vpop.permute.xlu0 %2291
  %s2294 = scalar_lea.vmem %s4, 28
  %2295 = vst.msk [vmem:[%s2294] sm:$0xf] %vm313, %v2292
  // Predicated region
  $region22: #{lstm_att_forward.10} parent=0 // pred_check
    %p2296 = pneg %p21
  $region23: #{lstm_att_forward.10} parent=0 // pred_check_branch
    %2298 = sbr.rel (%p2296) target = $region25
  $region24: #{lstm_att_forward.10} parent=0 // pred_region
    %v2299 = vld [vmem:[#allocation2] sm:$0xff]
    %v2300 = vld [vmem:[#allocation2 + $0x8] sm:$0xff]
    %2301 = vst.msk [vmem:[%s5] sm:$0xff] %vm49, %v2299
    %2302 = vst.msk [vmem:[%s5 + $0x8] sm:$0xff] %vm49, %v2300
    %v2303 = vld [vmem:[#allocation3] sm:$0xff]
    %v2304 = vld [vmem:[#allocation3 + $0x8] sm:$0xff]
    %2305 = vst.msk [vmem:[%s6] sm:$0xff] %vm49, %v2303
    %2306 = vst.msk [vmem:[%s6 + $0x8] sm:$0xff] %vm49, %v2304
  $region25: #{lstm_att_forward.10} parent=0 // pred_fallthru
    _
  // Predicated region
  $region26: #{lstm_att_forward.10} parent=0 // pred_check
    _
  $region27: #{lstm_att_forward.10} parent=0 // pred_check_branch
    %2308 = sbr.rel (0) target = $region29
  $region28: #{lstm_att_forward.10} parent=0 // pred_region
    _
  $region29: #{lstm_att_forward.10} parent=0 // pred_fallthru
    _
  // Predicated region
  $region30: #{lstm_att_forward.10} parent=0 // pred_check
    _
  $region31: #{lstm_att_forward.10} parent=0 // pred_check_branch
    %2310 = sbr.rel (0) target = $region33
  $region32: #{lstm_att_forward.10} parent=0 // pred_region
    _
  $region33: #{lstm_att_forward.10} parent=0 // pred_fallthru
    _
  // Predicated region
  $region34: #{lstm_att_forward.10} parent=0 // pred_check
    _
  $region35: #{lstm_att_forward.10} parent=0 // pred_check_branch
    %2312 = sbr.rel (0) target = $region37
  $region36: #{lstm_att_forward.10} parent=0 // pred_region
    _
  $region37: #{lstm_att_forward.10} parent=0 // pred_fallthru
    _
  // Predicated region
  $region38: #{lstm_att_forward.10} parent=0 // pred_check
    _
  $region39: #{lstm_att_forward.10} parent=0 // pred_check_branch
    %2314 = sbr.rel (0) target = $region41
  $region40: #{lstm_att_forward.10} parent=0 // pred_region
    _
  $region41: #{lstm_att_forward.10} parent=0 // pred_fallthru
    _
  // Predicated region
  $region42: #{lstm_att_forward.10} parent=0 // pred_check
    _
  $region43: #{lstm_att_forward.10} parent=0 // pred_check_branch
    %2316 = sbr.rel (0) target = $region45
  $region44: #{lstm_att_forward.10} parent=0 // pred_region
    _
  $region45: #{lstm_att_forward.10} parent=0 // pred_fallthru
    _
  // Predicated region
  $region46: #{lstm_att_forward.10} parent=0 // pred_check
    _
  $region47: #{lstm_att_forward.10} parent=0 // pred_check_branch
    %2318 = sbr.rel (0) target = $region49
  $region48: #{lstm_att_forward.10} parent=0 // pred_region
    _
  $region49: #{lstm_att_forward.10} parent=0 // pred_fallthru
    _

</llo_original>
